<compile_context>
chip_gen: v7x
topology: tpu7x:2x2x1
jax: 0.10.0
libtpu: 0.0.40
codegen_flags: <defaults>
</compile_context>

<pallas_src>
import functools
import math

import jax
import jax.numpy as jnp
from jax import lax
from jax.experimental import pallas as pl
from jax.experimental.pallas import tpu as pltpu

# pl.reciprocal(approx=True) uses the EUP vrcp slot on real TPUs; fall back to a
# plain divide if the default backend is ever not TPU (e.g. CPU interpret runs).
_ON_TPU = jax.default_backend() == "tpu"


# ---------------------------------------------------------------------------
# Fused Pallas kernel: pairwise-MLP logits + averaged gumbel softmax + row norm
# ---------------------------------------------------------------------------
def _support_kernel(a_ref, c_ref, w1_ref, g_ref, out_ref, *, sample_num):
    # Lane-dense relu intermediate: n columns on the lane axis, H on sublanes.
    #   fc2([x_i, x_j]) + b2 = a[i, :] + c[:, j]   (a, c precomputed in wrapper)
    hidden = jnp.maximum(a_ref[...][:, :, None] + c_ref[...][None, :, :], 0.0)  # (TB, H, N)
    # fc1 contraction over H (sublane axis); 1/temperature already folded into w1.
    logits = jnp.sum(hidden * w1_ref[...][None, :, :], axis=1)                  # (TB, N)

    acc = jnp.zeros_like(logits)
    for s in range(sample_num):                     # static unroll (small constant)
        z = logits + g_ref[s]                       # gumbel noise pre-scaled by 1/T
        z = z - jnp.max(z, axis=-1, keepdims=True)
        e = jnp.exp(z)
        denom = jnp.sum(e, axis=-1, keepdims=True)
        if _ON_TPU:
            p = e * pl.reciprocal(denom, approx=True)   # EUP vrcp, off the VALU
        else:
            p = e / denom                               # interpret/CPU fallback
        acc = acc + p

    # 1/sample_num cancels in the final normalisation; exact division so output
    # rows sum to 1 regardless of the approximate per-sample reciprocals.
    out_ref[...] = acc / jnp.sum(acc, axis=-1, keepdims=True)


def _num_tensorcores():
    # v7x-class chips expose 2 TensorCores per chip; v5e/v6e have 1.
    try:
        kind = (getattr(jax.devices()[0], "device_kind", "") or "").lower()
    except Exception:
        kind = ""
    return 2 if "v7" in kind else 1


def _pick_row_tile(n, h, sample_num, num_cores):
    """Largest row tile whose per-step VMEM footprint stays under ~4 MiB while
    keeping at least one grid step per TensorCore (so the 'parallel' grid axis
    can use both cores on v7x).  Fewer, bigger steps win on single-TC chips."""
    budget = 4 << 20
    cands = [tb for tb in (512, 256, 128, 64, 32, 16, 8) if tb <= n and n % tb == 0]
    if not cands:
        return n                                     # tiny n: one full block
    for tb in cands:                                 # largest-first
        tmp = tb * h * n * 4                         # (TB, H, n) relu intermediate
        io = 2 * (sample_num + 1) * tb * n * 4       # double-buffered noise + out blocks
        if tmp + io <= budget and n // tb >= num_cores:
            return tb
    return cands[-1]


def repeat_conv_support(x, fc2_w, fc2_b, fc1_w, fc1_b, uniforms,
                        *, temperature=0.1, eps=1e-10):
    """Fused steps 2-5: returns the row-normalized averaged gumbel-softmax
    support matrix of shape (n, n).  x: (n, H) node features."""
    n, h = x.shape
    sample_num = int(uniforms.shape[0])
    inv_temp = jnp.float32(1.0 / temperature)

    x = x.astype(jnp.float32)
    w2_t = fc2_w.T.astype(jnp.float32)                                  # (2H, H)
    # fc2([x_i, x_j]) = x_i @ W2_sent + x_j @ W2_revi + b2 ; hoist both tiny
    # matmuls (and b2) out of the kernel — they are grid-invariant.
    a_full = x @ w2_t[:h] + fc2_b.astype(jnp.float32)[None, :]          # (n, H)
    c = (x @ w2_t[h:]).T                                                # (H, n) lane-dense
    # fc1 bias cancels in the softmax; fold 1/temperature into the fc1 weight.
    w1s = fc1_w.reshape(h, 1).astype(jnp.float32) * inv_temp            # (H, 1)
    # Gumbel noise precomputed with XLA (2 logs/elem/sample off the kernel EUP),
    # already scaled by 1/temperature.
    u = uniforms.astype(jnp.float32)
    g = (-jnp.log(-jnp.log(u + eps) + eps)) * inv_temp                  # (S, n, n)

    tb = _pick_row_tile(n, h, sample_num, _num_tensorcores())
    kernel = functools.partial(_support_kernel, sample_num=sample_num)

    return pl.pallas_call(
        kernel,
        out_shape=jax.ShapeDtypeStruct((n, n), jnp.float32),
        grid=(n // tb,),
        in_specs=[
            pl.BlockSpec((tb, h), lambda i: (i, 0)),                 # a rows of this block
            pl.BlockSpec((h, n), lambda i: (0, 0)),                  # c (resident, lane-dense)
            pl.BlockSpec((h, 1), lambda i: (0, 0)),                  # fc1 weight * 1/T
            pl.BlockSpec((sample_num, tb, n), lambda i: (0, i, 0)),  # pre-scaled gumbel noise
        ],
        # Lane-dense output: full rows of width n per step (unmasked vst).
        out_specs=pl.BlockSpec((tb, n), lambda i: (i, 0)),
        compiler_params=pltpu.CompilerParams(
            dimension_semantics=("parallel",)),  # independent row blocks -> 2 TCs on v7x
    )(a_full, c, w1s, g)


# ---------------------------------------------------------------------------
# Tiny front-end (plain JAX): Conv1d -> relu -> BN, twice, then fc -> relu -> BN
# ---------------------------------------------------------------------------
def _conv1d_valid(x, w, b):
    # x: (N, Cin, L), w: (Cout, Cin, K) -> (N, Cout, L-K+1); cross-correlation
    k = w.shape[-1]
    lout = x.shape[-1] - k + 1
    cols = jnp.stack([x[:, :, i:i + lout] for i in range(k)], axis=-1)  # (N,Cin,Lout,K)
    return jnp.einsum("nclk,ock->nol", cols, w) + b[None, :, None]


def _bn_ncl(x, gamma, beta, eps=1e-5):      # BatchNorm1d on (N, C, L), batch stats
    mean = jnp.mean(x, axis=(0, 2), keepdims=True)
    var = jnp.mean(jnp.square(x - mean), axis=(0, 2), keepdims=True)
    return gamma[None, :, None] * (x - mean) * lax.rsqrt(var + eps) + beta[None, :, None]


def _bn_nc(x, gamma, beta, eps=1e-5):       # BatchNorm1d on (N, C), batch stats
    mean = jnp.mean(x, axis=0, keepdims=True)
    var = jnp.mean(jnp.square(x - mean), axis=0, keepdims=True)
    return gamma[None, :] * (x - mean) * lax.rsqrt(var + eps) + beta[None, :]


def nf_frontend(node_fea, p):
    t, n = node_fea.shape
    x = node_fea.T.reshape(n, 1, t)
    x = _conv1d_valid(x, p["conv1_w"], p["conv1_b"])
    x = jnp.maximum(x, 0.0)
    x = _bn_ncl(x, p["bn1_g"], p["bn1_b"])
    x = _conv1d_valid(x, p["conv2_w"], p["conv2_b"])
    x = jnp.maximum(x, 0.0)
    x = _bn_ncl(x, p["bn2_g"], p["bn2_b"])
    x = x.reshape(n, -1)
    x = x @ p["fc_w"].T + p["fc_b"]
    x = jnp.maximum(x, 0.0)
    x = _bn_nc(x, p["bn3_g"], p["bn3_b"])
    return x                                   # (n, hidden_size_st)


def nf_encode_forward(node_fea, params, uniforms):
    x = nf_frontend(node_fea, params)
    return repeat_conv_support(x, params["fc2_w"], params["fc2_b"],
                               params["fc1_w"], params["fc1_b"], uniforms)


# ---------------------------------------------------------------------------
# Parameter init (torch-Linear/Conv style uniform ranges) and a pure-JAX reference
# ---------------------------------------------------------------------------
def init_params(key, hidden_size_st, fc_dim):
    H = hidden_size_st
    ks = jax.random.split(key, 10)

    def lin(kw, kb, fan_in, shape_w, shape_b):
        lim = 1.0 / math.sqrt(fan_in)
        return (jax.random.uniform(kw, shape_w, jnp.float32, -lim, lim),
                jax.random.uniform(kb, shape_b, jnp.float32, -lim, lim))

    conv1_w, conv1_b = lin(ks[0], ks[1], 1 * 10, (8, 1, 10), (8,))
    conv2_w, conv2_b = lin(ks[2], ks[3], 8 * 10, (16, 8, 10), (16,))
    fc_w, fc_b = lin(ks[4], ks[5], fc_dim, (H, fc_dim), (H,))
    fc2_w, fc2_b = lin(ks[6], ks[7], 2 * H, (H, 2 * H), (H,))
    fc1_w, fc1_b = lin(ks[8], ks[9], H, (1, H), (1,))
    return dict(
        conv1_w=conv1_w, conv1_b=conv1_b, bn1_g=jnp.ones((8,), jnp.float32),
        bn1_b=jnp.zeros((8,), jnp.float32),
        conv2_w=conv2_w, conv2_b=conv2_b, bn2_g=jnp.ones((16,), jnp.float32),
        bn2_b=jnp.zeros((16,), jnp.float32),
        fc_w=fc_w, fc_b=fc_b, bn3_g=jnp.ones((H,), jnp.float32),
        bn3_b=jnp.zeros((H,), jnp.float32),
        fc2_w=fc2_w, fc2_b=fc2_b, fc1_w=fc1_w, fc1_b=fc1_b,
    )


def support_reference(x, fc2_w, fc2_b, fc1_w, fc1_b, uniforms,
                      temperature=0.1, eps=1e-10):
    """Pure-jnp reference written the 'torch way' (materializes y)."""
    n, H = x.shape
    y = jnp.concatenate([jnp.broadcast_to(x[:, None, :], (n, n, H)),
                         jnp.broadcast_to(x[None, :, :], (n, n, H))], axis=-1)
    h = jnp.maximum(y @ fc2_w.T + fc2_b, 0.0)
    logits = (h @ fc1_w.T + fc1_b)[..., 0]
    g = -jnp.log(-jnp.log(uniforms + eps) + eps)
    p = jax.nn.softmax((logits[None] + g) / temperature, axis=-1)
    support = jnp.mean(p, axis=0)
    return support / jnp.sum(support, axis=1, keepdims=True)


# ---------------------------------------------------------------------------
if __name__ == "__main__":
    t, n = 24, 128              # node_fea: (t, n);  t >= 19 for the two convs
    hidden_size_st = 32
    sample_num = 4
    fc_dim = 16 * (t - 18)      # = flattened size after the two valid convs

    key = jax.random.PRNGKey(0)
    k_fea, k_par, k_u = jax.random.split(key, 3)
    node_fea = jax.random.normal(k_fea, (t, n), dtype=jnp.float32)
    params = init_params(k_par, hidden_size_st, fc_dim)
    # stand-in for torch.rand(sample_num, n, n) inside gumbel_softmax_sample
    uniforms = jax.random.uniform(k_u, (sample_num, n, n), dtype=jnp.float32)

    forward = jax.jit(nf_encode_forward)
    support = jax.block_until_ready(forward(node_fea, params, uniforms))

    assert support.shape == (n, n)
    assert bool(jnp.all(jnp.isfinite(support)))
    assert bool(jnp.all(support >= 0.0))
    # row normalization at the end => every row sums to 1
    assert bool(jnp.allclose(jnp.sum(support, axis=-1), 1.0, atol=1e-4))

    # cross-check the fused kernel against the pure-JAX reference
    x_feat = nf_frontend(node_fea, params)
    ref = support_reference(x_feat, params["fc2_w"], params["fc2_b"],
                            params["fc1_w"], params["fc1_b"], uniforms)
    assert bool(jnp.max(jnp.abs(support - ref)) < 2e-2)

    print("KERNEL_OK")
</pallas_src>

<mosaic_0001>
module attributes {stable_mosaic.version = 11 : i64} {
  func.func @_support_kernel(%arg0: i32, %arg1: memref<128x32xf32, #tpu.memory_space<vmem>>, %arg2: memref<32x128xf32, #tpu.memory_space<vmem>>, %arg3: memref<32x1xf32, #tpu.memory_space<vmem>>, %arg4: memref<4x128x128xf32, #tpu.memory_space<vmem>>, %arg5: memref<128x128xf32, #tpu.memory_space<vmem>>) attributes {dimension_semantics = [#tpu.dimension_semantics<parallel>], iteration_bounds = array<i64: 1>, scalar_prefetch = 0 : i64, scratch_operands = 0 : i64, tpu.core_type = #tpu.core_type<tc>, window_params = [{transform_indices = @transform_0, window_bounds = array<i64: 128, 32>}, {pipeline_mode = #tpu.pipeline_mode<synchronous>, transform_indices = @transform_1, window_bounds = array<i64: 32, 128>}, {pipeline_mode = #tpu.pipeline_mode<synchronous>, transform_indices = @transform_2, window_bounds = array<i64: 32, 1>}, {transform_indices = @transform_3, window_bounds = array<i64: 4, 128, 128>}, {transform_indices = @transform_4, window_bounds = array<i64: 128, 128>}]} {
    %c0 = arith.constant 0 : index
    %c0_0 = arith.constant 0 : index
    %0 = vector.load %arg1[%c0, %c0_0] : memref<128x32xf32, #tpu.memory_space<vmem>>, vector<128x32xf32>
    %1 = vector.shape_cast %0 : vector<128x32xf32> to vector<128x32x1xf32>
    %c0_1 = arith.constant 0 : index
    %c0_2 = arith.constant 0 : index
    %2 = vector.load %arg2[%c0_1, %c0_2] : memref<32x128xf32, #tpu.memory_space<vmem>>, vector<32x128xf32>
    %3 = vector.shape_cast %2 : vector<32x128xf32> to vector<1x32x128xf32>
    %4 = vector.broadcast %1 : vector<128x32x1xf32> to vector<128x32x128xf32>
    %5 = vector.broadcast %3 : vector<1x32x128xf32> to vector<128x32x128xf32>
    %6 = arith.addf %4, %5 : vector<128x32x128xf32>
    %cst = arith.constant 0.000000e+00 : f32
    %7 = vector.broadcast %cst : f32 to vector<128x32x128xf32>
    %8 = arith.maximumf %6, %7 : vector<128x32x128xf32>
    %c0_3 = arith.constant 0 : index
    %c0_4 = arith.constant 0 : index
    %9 = vector.load %arg3[%c0_3, %c0_4] : memref<32x1xf32, #tpu.memory_space<vmem>>, vector<32x1xf32>
    %10 = vector.shape_cast %9 : vector<32x1xf32> to vector<1x32x1xf32>
    %11 = vector.broadcast %10 : vector<1x32x1xf32> to vector<128x32x128xf32>
    %12 = arith.mulf %8, %11 : vector<128x32x128xf32>
    %cst_5 = arith.constant dense<0.000000e+00> : vector<128x128xf32>
    %13 = vector.multi_reduction <add>, %12, %cst_5 [1] : vector<128x32x128xf32> to vector<128x128xf32>
    %cst_6 = arith.constant 0.000000e+00 : f32
    %14 = vector.broadcast %cst_6 : f32 to vector<128x128xf32>
    %c0_7 = arith.constant 0 : index
    %c0_8 = arith.constant 0 : index
    %c0_9 = arith.constant 0 : index
    %15 = vector.load %arg4[%c0_7, %c0_8, %c0_9] : memref<4x128x128xf32, #tpu.memory_space<vmem>>, vector<1x128x128xf32>
    %16 = vector.shape_cast %15 : vector<1x128x128xf32> to vector<128x128xf32>
    %17 = arith.addf %13, %16 : vector<128x128xf32>
    %cst_10 = arith.constant dense<0xFF800000> : vector<128xf32>
    %18 = vector.multi_reduction <maximumf>, %17, %cst_10 [1] : vector<128x128xf32> to vector<128xf32>
    %19 = vector.shape_cast %18 : vector<128xf32> to vector<128x1xf32>
    %20 = vector.broadcast %19 : vector<128x1xf32> to vector<128x128xf32>
    %21 = arith.subf %17, %20 : vector<128x128xf32>
    %22 = math.exp %21 : vector<128x128xf32>
    %cst_11 = arith.constant dense<0.000000e+00> : vector<128xf32>
    %23 = vector.multi_reduction <add>, %22, %cst_11 [1] : vector<128x128xf32> to vector<128xf32>
    %24 = vector.shape_cast %23 : vector<128xf32> to vector<128x1xf32>
    %25 = vector.broadcast %24 : vector<128x1xf32> to vector<128x128xf32>
    %26 = arith.divf %22, %25 : vector<128x128xf32>
    %27 = arith.addf %14, %26 : vector<128x128xf32>
    %c1 = arith.constant 1 : index
    %c0_12 = arith.constant 0 : index
    %c0_13 = arith.constant 0 : index
    %28 = vector.load %arg4[%c1, %c0_12, %c0_13] : memref<4x128x128xf32, #tpu.memory_space<vmem>>, vector<1x128x128xf32>
    %29 = vector.shape_cast %28 : vector<1x128x128xf32> to vector<128x128xf32>
    %30 = arith.addf %13, %29 : vector<128x128xf32>
    %cst_14 = arith.constant dense<0xFF800000> : vector<128xf32>
    %31 = vector.multi_reduction <maximumf>, %30, %cst_14 [1] : vector<128x128xf32> to vector<128xf32>
    %32 = vector.shape_cast %31 : vector<128xf32> to vector<128x1xf32>
    %33 = vector.broadcast %32 : vector<128x1xf32> to vector<128x128xf32>
    %34 = arith.subf %30, %33 : vector<128x128xf32>
    %35 = math.exp %34 : vector<128x128xf32>
    %cst_15 = arith.constant dense<0.000000e+00> : vector<128xf32>
    %36 = vector.multi_reduction <add>, %35, %cst_15 [1] : vector<128x128xf32> to vector<128xf32>
    %37 = vector.shape_cast %36 : vector<128xf32> to vector<128x1xf32>
    %38 = vector.broadcast %37 : vector<128x1xf32> to vector<128x128xf32>
    %39 = arith.divf %35, %38 : vector<128x128xf32>
    %40 = arith.addf %27, %39 : vector<128x128xf32>
    %c2 = arith.constant 2 : index
    %c0_16 = arith.constant 0 : index
    %c0_17 = arith.constant 0 : index
    %41 = vector.load %arg4[%c2, %c0_16, %c0_17] : memref<4x128x128xf32, #tpu.memory_space<vmem>>, vector<1x128x128xf32>
    %42 = vector.shape_cast %41 : vector<1x128x128xf32> to vector<128x128xf32>
    %43 = arith.addf %13, %42 : vector<128x128xf32>
    %cst_18 = arith.constant dense<0xFF800000> : vector<128xf32>
    %44 = vector.multi_reduction <maximumf>, %43, %cst_18 [1] : vector<128x128xf32> to vector<128xf32>
    %45 = vector.shape_cast %44 : vector<128xf32> to vector<128x1xf32>
    %46 = vector.broadcast %45 : vector<128x1xf32> to vector<128x128xf32>
    %47 = arith.subf %43, %46 : vector<128x128xf32>
    %48 = math.exp %47 : vector<128x128xf32>
    %cst_19 = arith.constant dense<0.000000e+00> : vector<128xf32>
    %49 = vector.multi_reduction <add>, %48, %cst_19 [1] : vector<128x128xf32> to vector<128xf32>
    %50 = vector.shape_cast %49 : vector<128xf32> to vector<128x1xf32>
    %51 = vector.broadcast %50 : vector<128x1xf32> to vector<128x128xf32>
    %52 = arith.divf %48, %51 : vector<128x128xf32>
    %53 = arith.addf %40, %52 : vector<128x128xf32>
    %c3 = arith.constant 3 : index
    %c0_20 = arith.constant 0 : index
    %c0_21 = arith.constant 0 : index
    %54 = vector.load %arg4[%c3, %c0_20, %c0_21] : memref<4x128x128xf32, #tpu.memory_space<vmem>>, vector<1x128x128xf32>
    %55 = vector.shape_cast %54 : vector<1x128x128xf32> to vector<128x128xf32>
    %56 = arith.addf %13, %55 : vector<128x128xf32>
    %cst_22 = arith.constant dense<0xFF800000> : vector<128xf32>
    %57 = vector.multi_reduction <maximumf>, %56, %cst_22 [1] : vector<128x128xf32> to vector<128xf32>
    %58 = vector.shape_cast %57 : vector<128xf32> to vector<128x1xf32>
    %59 = vector.broadcast %58 : vector<128x1xf32> to vector<128x128xf32>
    %60 = arith.subf %56, %59 : vector<128x128xf32>
    %61 = math.exp %60 : vector<128x128xf32>
    %cst_23 = arith.constant dense<0.000000e+00> : vector<128xf32>
    %62 = vector.multi_reduction <add>, %61, %cst_23 [1] : vector<128x128xf32> to vector<128xf32>
    %63 = vector.shape_cast %62 : vector<128xf32> to vector<128x1xf32>
    %64 = vector.broadcast %63 : vector<128x1xf32> to vector<128x128xf32>
    %65 = arith.divf %61, %64 : vector<128x128xf32>
    %66 = arith.addf %53, %65 : vector<128x128xf32>
    %cst_24 = arith.constant dense<0.000000e+00> : vector<128xf32>
    %67 = vector.multi_reduction <add>, %66, %cst_24 [1] : vector<128x128xf32> to vector<128xf32>
    %68 = vector.shape_cast %67 : vector<128xf32> to vector<128x1xf32>
    %69 = vector.broadcast %68 : vector<128x1xf32> to vector<128x128xf32>
    %70 = arith.divf %66, %69 : vector<128x128xf32>
    %c0_25 = arith.constant 0 : index
    %c0_26 = arith.constant 0 : index
    %71 = vector.load %arg5[%c0_25, %c0_26] : memref<128x128xf32, #tpu.memory_space<vmem>>, vector<128x128xf32>
    tpu.vector_store %arg5[%c0_25, %c0_26], %70 {strides = array<i32>} : memref<128x128xf32, #tpu.memory_space<vmem>>, vector<128x128xf32>,
    return
  }
  func.func @transform_0(%arg0: i32) -> (i32, i32) {
    %c0_i32 = arith.constant 0 : i32
    %c0_i32_0 = arith.constant 0 : i32
    return %arg0, %c0_i32 : i32, i32
  }
  func.func @transform_1(%arg0: i32) -> (i32, i32) {
    %c0_i32 = arith.constant 0 : i32
    %c0_i32_0 = arith.constant 0 : i32
    %c0_i32_1 = arith.constant 0 : i32
    return %c0_i32, %c0_i32_0 : i32, i32
  }
  func.func @transform_2(%arg0: i32) -> (i32, i32) {
    %c0_i32 = arith.constant 0 : i32
    %c0_i32_0 = arith.constant 0 : i32
    %c0_i32_1 = arith.constant 0 : i32
    return %c0_i32, %c0_i32_0 : i32, i32
  }
  func.func @transform_3(%arg0: i32) -> (i32, i32, i32) {
    %c0_i32 = arith.constant 0 : i32
    %c0_i32_0 = arith.constant 0 : i32
    %c0_i32_1 = arith.constant 0 : i32
    return %c0_i32, %arg0, %c0_i32_0 : i32, i32, i32
  }
  func.func @transform_4(%arg0: i32) -> (i32, i32) {
    %c0_i32 = arith.constant 0 : i32
    %c0_i32_0 = arith.constant 0 : i32
    return %arg0, %c0_i32 : i32, i32
  }
}

</mosaic_0001>

<llo_original>
// kernel: nf_encode_forward.1
$region0: #{nf_encode_forward.1}
  #allocation0 [shape = 'u32[]', space=smem, size = 0x4, offset = 0x4, fixed_abs, tag = 'smem constant byte address 0x4 - core index']
  #allocation1 [shape = 'u32[144,128]{1,0:T(1,128)}', space=vmem, size = 0x12000, scoped, tag = 'internal scratch']
  %s0 = inlined_call_operand.vmem [shape: f32[128,32], index: 0, kind: input, shape index: {}]
  %s1 = inlined_call_operand.vmem [shape: f32[32,128], index: 1, kind: input, shape index: {}]
  %s2 = inlined_call_operand.vmem [shape: f32[32,1], index: 2, kind: input, shape index: {}]
  %s3 = inlined_call_operand.vmem [shape: f32[4,128,128], index: 3, kind: input, shape index: {}]
  %s4 = inlined_call_operand.hbm [shape: f32[128,128], index: 4, kind: output, shape index: {}]
  %s5 = sld [smem:[#allocation0]]
  $region26: #{nf_encode_forward.1} parent=0
    _
  %s7 = ssub.s32 1, %s5
  %s8 = scalar_select 0, %s7, %s5
  $region1: #{nf_encode_forward.1} parent=0
    #allocation2 [shape = 'u8[65536]{0}', space=vmem, size = 0x10000, scoped, tag = 'output window, operand 0, single buffered']
    #allocation3 [shape = 's32[1]{0}', space=sflag, size = 0x4, scoped, tag = 'scoped memory for nf_encode_forward.1']
    %9 = vsyncpa [#allocation3], 0
    // Predicated region
    $region2: #{nf_encode_forward.1} parent=1 // pred_check
      _
    $region3: #{nf_encode_forward.1} parent=1 // pred_check_branch
      %11 = sbr.rel (0) target = $region5
    $region4: #{nf_encode_forward.1} parent=1 // pred_region
      _
    $region5: #{nf_encode_forward.1} parent=1 // pred_fallthru
      _
    // Predicated region
    $region6: #{nf_encode_forward.1} parent=1 // pred_check
      _
    $region7: #{nf_encode_forward.1} parent=1 // pred_check_branch
      %13 = sbr.rel (0) target = $region9
    $region8: #{nf_encode_forward.1} parent=1 // pred_region
      _
    $region9: #{nf_encode_forward.1} parent=1 // pred_fallthru
      _
    // Predicated region
    $region10: #{nf_encode_forward.1} parent=1 // pred_check
      _
    $region11: #{nf_encode_forward.1} parent=1 // pred_check_branch
      %15 = sbr.rel (0) target = $region13
    $region12: #{nf_encode_forward.1} parent=1 // pred_region
      _
    $region13: #{nf_encode_forward.1} parent=1 // pred_fallthru
      _
    // Predicated region
    $region14: #{nf_encode_forward.1} parent=1 // pred_check
      _
    $region15: #{nf_encode_forward.1} parent=1 // pred_check_branch
      %17 = sbr.rel (0) target = $region17
    $region16: #{nf_encode_forward.1} parent=1 // pred_region
      _
    $region17: #{nf_encode_forward.1} parent=1 // pred_fallthru
      _
    %v18 = vld [vmem:[%s0] sm:$0xff]
    %v19 = vld [vmem:[%s0 + $0x8] sm:$0xff]
    %v20 = vld [vmem:[%s0 + $0x10] sm:$0xff]
    %v21 = vld [vmem:[%s0 + $0x18] sm:$0xff]
    %v22 = vld [vmem:[%s0 + $0x20] sm:$0xff]
    %v23 = vld [vmem:[%s0 + $0x28] sm:$0xff]
    %v24 = vld [vmem:[%s0 + $0x30] sm:$0xff]
    %v25 = vld [vmem:[%s0 + $0x38] sm:$0xff]
    %v26 = vld [vmem:[%s0 + $0x40] sm:$0xff]
    %v27 = vld [vmem:[%s0 + $0x48] sm:$0xff]
    %v28 = vld [vmem:[%s0 + $0x50] sm:$0xff]
    %v29 = vld [vmem:[%s0 + $0x58] sm:$0xff]
    %v30 = vld [vmem:[%s0 + $0x60] sm:$0xff]
    %v31 = vld [vmem:[%s0 + $0x68] sm:$0xff]
    %v32 = vld [vmem:[%s0 + $0x70] sm:$0xff]
    %v33 = vld [vmem:[%s0 + $0x78] sm:$0xff]
    %v34 = vlaneseq
    %v35 = vshrl.u32 %v34, 7
    %v36 = vsub.s32 0, %v35
    %v37 = vrot.slane %v18, %v36
    %39 = vbcast.lane.b32.xlu0 %v37, 256
    %v40 = vpop.permute.xlu0 %39
    %s42 = sor.u32 256, 8
    %43 = vbcast.lane.b32.xlu0 %v37, %s42
    %v44 = vpop.permute.xlu0 %43
    %s46 = sor.u32 256, 16
    %47 = vbcast.lane.b32.xlu0 %v37, %s46
    %v48 = vpop.permute.xlu0 %47
    %s50 = sor.u32 256, 24
    %51 = vbcast.lane.b32.xlu0 %v37, %s50
    %v52 = vpop.permute.xlu0 %51
    %v53 = vlaneseq
    %v54 = vshrl.u32 %v53, 7
    %v55 = vsub.s32 1, %v54
    %v56 = vrot.slane %v18, %v55
    %58 = vbcast.lane.b32.xlu0 %v56, 256
    %v59 = vpop.permute.xlu0 %58
    %s61 = sor.u32 256, 8
    %62 = vbcast.lane.b32.xlu0 %v56, %s61
    %v63 = vpop.permute.xlu0 %62
    %s65 = sor.u32 256, 16
    %66 = vbcast.lane.b32.xlu0 %v56, %s65
    %v67 = vpop.permute.xlu0 %66
    %s69 = sor.u32 256, 24
    %70 = vbcast.lane.b32.xlu0 %v56, %s69
    %v71 = vpop.permute.xlu0 %70
    %v72 = vlaneseq
    %v73 = vshrl.u32 %v72, 7
    %v74 = vsub.s32 2, %v73
    %v75 = vrot.slane %v18, %v74
    %77 = vbcast.lane.b32.xlu0 %v75, 256
    %v78 = vpop.permute.xlu0 %77
    %s80 = sor.u32 256, 8
    %81 = vbcast.lane.b32.xlu0 %v75, %s80
    %v82 = vpop.permute.xlu0 %81
    %s84 = sor.u32 256, 16
    %85 = vbcast.lane.b32.xlu0 %v75, %s84
    %v86 = vpop.permute.xlu0 %85
    %s88 = sor.u32 256, 24
    %89 = vbcast.lane.b32.xlu0 %v75, %s88
    %v90 = vpop.permute.xlu0 %89
    %v91 = vlaneseq
    %v92 = vshrl.u32 %v91, 7
    %v93 = vsub.s32 3, %v92
    %v94 = vrot.slane %v18, %v93
    %96 = vbcast.lane.b32.xlu0 %v94, 256
    %v97 = vpop.permute.xlu0 %96
    %s99 = sor.u32 256, 8
    %100 = vbcast.lane.b32.xlu0 %v94, %s99
    %v101 = vpop.permute.xlu0 %100
    %s103 = sor.u32 256, 16
    %104 = vbcast.lane.b32.xlu0 %v94, %s103
    %v105 = vpop.permute.xlu0 %104
    %s107 = sor.u32 256, 24
    %108 = vbcast.lane.b32.xlu0 %v94, %s107
    %v109 = vpop.permute.xlu0 %108
    %v110 = vlaneseq
    %v111 = vshrl.u32 %v110, 7
    %v112 = vsub.s32 4, %v111
    %v113 = vrot.slane %v18, %v112
    %115 = vbcast.lane.b32.xlu0 %v113, 256
    %v116 = vpop.permute.xlu0 %115
    %s118 = sor.u32 256, 8
    %119 = vbcast.lane.b32.xlu0 %v113, %s118
    %v120 = vpop.permute.xlu0 %119
    %s122 = sor.u32 256, 16
    %123 = vbcast.lane.b32.xlu0 %v113, %s122
    %v124 = vpop.permute.xlu0 %123
    %s126 = sor.u32 256, 24
    %127 = vbcast.lane.b32.xlu0 %v113, %s126
    %v128 = vpop.permute.xlu0 %127
    %v129 = vlaneseq
    %v130 = vshrl.u32 %v129, 7
    %v131 = vsub.s32 5, %v130
    %v132 = vrot.slane %v18, %v131
    %134 = vbcast.lane.b32.xlu0 %v132, 256
    %v135 = vpop.permute.xlu0 %134
    %s137 = sor.u32 256, 8
    %138 = vbcast.lane.b32.xlu0 %v132, %s137
    %v139 = vpop.permute.xlu0 %138
    %s141 = sor.u32 256, 16
    %142 = vbcast.lane.b32.xlu0 %v132, %s141
    %v143 = vpop.permute.xlu0 %142
    %s145 = sor.u32 256, 24
    %146 = vbcast.lane.b32.xlu0 %v132, %s145
    %v147 = vpop.permute.xlu0 %146
    %v148 = vlaneseq
    %v149 = vshrl.u32 %v148, 7
    %v150 = vsub.s32 6, %v149
    %v151 = vrot.slane %v18, %v150
    %153 = vbcast.lane.b32.xlu0 %v151, 256
    %v154 = vpop.permute.xlu0 %153
    %s156 = sor.u32 256, 8
    %157 = vbcast.lane.b32.xlu0 %v151, %s156
    %v158 = vpop.permute.xlu0 %157
    %s160 = sor.u32 256, 16
    %161 = vbcast.lane.b32.xlu0 %v151, %s160
    %v162 = vpop.permute.xlu0 %161
    %s164 = sor.u32 256, 24
    %165 = vbcast.lane.b32.xlu0 %v151, %s164
    %v166 = vpop.permute.xlu0 %165
    %v167 = vlaneseq
    %v168 = vshrl.u32 %v167, 7
    %v169 = vsub.s32 7, %v168
    %v170 = vrot.slane %v18, %v169
    %172 = vbcast.lane.b32.xlu0 %v170, 256
    %v173 = vpop.permute.xlu0 %172
    %s175 = sor.u32 256, 8
    %176 = vbcast.lane.b32.xlu0 %v170, %s175
    %v177 = vpop.permute.xlu0 %176
    %s179 = sor.u32 256, 16
    %180 = vbcast.lane.b32.xlu0 %v170, %s179
    %v181 = vpop.permute.xlu0 %180
    %s183 = sor.u32 256, 24
    %184 = vbcast.lane.b32.xlu0 %v170, %s183
    %v185 = vpop.permute.xlu0 %184
    %v186 = vlaneseq
    %v187 = vshrl.u32 %v186, 7
    %v188 = vsub.s32 0, %v187
    %v189 = vrot.slane %v19, %v188
    %191 = vbcast.lane.b32.xlu0 %v189, 256
    %v192 = vpop.permute.xlu0 %191
    %s194 = sor.u32 256, 8
    %195 = vbcast.lane.b32.xlu0 %v189, %s194
    %v196 = vpop.permute.xlu0 %195
    %s198 = sor.u32 256, 16
    %199 = vbcast.lane.b32.xlu0 %v189, %s198
    %v200 = vpop.permute.xlu0 %199
    %s202 = sor.u32 256, 24
    %203 = vbcast.lane.b32.xlu0 %v189, %s202
    %v204 = vpop.permute.xlu0 %203
    %v205 = vlaneseq
    %v206 = vshrl.u32 %v205, 7
    %v207 = vsub.s32 1, %v206
    %v208 = vrot.slane %v19, %v207
    %210 = vbcast.lane.b32.xlu0 %v208, 256
    %v211 = vpop.permute.xlu0 %210
    %s213 = sor.u32 256, 8
    %214 = vbcast.lane.b32.xlu0 %v208, %s213
    %v215 = vpop.permute.xlu0 %214
    %s217 = sor.u32 256, 16
    %218 = vbcast.lane.b32.xlu0 %v208, %s217
    %v219 = vpop.permute.xlu0 %218
    %s221 = sor.u32 256, 24
    %222 = vbcast.lane.b32.xlu0 %v208, %s221
    %v223 = vpop.permute.xlu0 %222
    %v224 = vlaneseq
    %v225 = vshrl.u32 %v224, 7
    %v226 = vsub.s32 2, %v225
    %v227 = vrot.slane %v19, %v226
    %229 = vbcast.lane.b32.xlu0 %v227, 256
    %v230 = vpop.permute.xlu0 %229
    %s232 = sor.u32 256, 8
    %233 = vbcast.lane.b32.xlu0 %v227, %s232
    %v234 = vpop.permute.xlu0 %233
    %s236 = sor.u32 256, 16
    %237 = vbcast.lane.b32.xlu0 %v227, %s236
    %v238 = vpop.permute.xlu0 %237
    %s240 = sor.u32 256, 24
    %241 = vbcast.lane.b32.xlu0 %v227, %s240
    %v242 = vpop.permute.xlu0 %241
    %v243 = vlaneseq
    %v244 = vshrl.u32 %v243, 7
    %v245 = vsub.s32 3, %v244
    %v246 = vrot.slane %v19, %v245
    %248 = vbcast.lane.b32.xlu0 %v246, 256
    %v249 = vpop.permute.xlu0 %248
    %s251 = sor.u32 256, 8
    %252 = vbcast.lane.b32.xlu0 %v246, %s251
    %v253 = vpop.permute.xlu0 %252
    %s255 = sor.u32 256, 16
    %256 = vbcast.lane.b32.xlu0 %v246, %s255
    %v257 = vpop.permute.xlu0 %256
    %s259 = sor.u32 256, 24
    %260 = vbcast.lane.b32.xlu0 %v246, %s259
    %v261 = vpop.permute.xlu0 %260
    %v262 = vlaneseq
    %v263 = vshrl.u32 %v262, 7
    %v264 = vsub.s32 4, %v263
    %v265 = vrot.slane %v19, %v264
    %267 = vbcast.lane.b32.xlu0 %v265, 256
    %v268 = vpop.permute.xlu0 %267
    %s270 = sor.u32 256, 8
    %271 = vbcast.lane.b32.xlu0 %v265, %s270
    %v272 = vpop.permute.xlu0 %271
    %s274 = sor.u32 256, 16
    %275 = vbcast.lane.b32.xlu0 %v265, %s274
    %v276 = vpop.permute.xlu0 %275
    %s278 = sor.u32 256, 24
    %279 = vbcast.lane.b32.xlu0 %v265, %s278
    %v280 = vpop.permute.xlu0 %279
    %v281 = vlaneseq
    %v282 = vshrl.u32 %v281, 7
    %v283 = vsub.s32 5, %v282
    %v284 = vrot.slane %v19, %v283
    %286 = vbcast.lane.b32.xlu0 %v284, 256
    %v287 = vpop.permute.xlu0 %286
    %s289 = sor.u32 256, 8
    %290 = vbcast.lane.b32.xlu0 %v284, %s289
    %v291 = vpop.permute.xlu0 %290
    %s293 = sor.u32 256, 16
    %294 = vbcast.lane.b32.xlu0 %v284, %s293
    %v295 = vpop.permute.xlu0 %294
    %s297 = sor.u32 256, 24
    %298 = vbcast.lane.b32.xlu0 %v284, %s297
    %v299 = vpop.permute.xlu0 %298
    %v300 = vlaneseq
    %v301 = vshrl.u32 %v300, 7
    %v302 = vsub.s32 6, %v301
    %v303 = vrot.slane %v19, %v302
    %305 = vbcast.lane.b32.xlu0 %v303, 256
    %v306 = vpop.permute.xlu0 %305
    %s308 = sor.u32 256, 8
    %309 = vbcast.lane.b32.xlu0 %v303, %s308
    %v310 = vpop.permute.xlu0 %309
    %s312 = sor.u32 256, 16
    %313 = vbcast.lane.b32.xlu0 %v303, %s312
    %v314 = vpop.permute.xlu0 %313
    %s316 = sor.u32 256, 24
    %317 = vbcast.lane.b32.xlu0 %v303, %s316
    %v318 = vpop.permute.xlu0 %317
    %v319 = vlaneseq
    %v320 = vshrl.u32 %v319, 7
    %v321 = vsub.s32 7, %v320
    %v322 = vrot.slane %v19, %v321
    %324 = vbcast.lane.b32.xlu0 %v322, 256
    %v325 = vpop.permute.xlu0 %324
    %s327 = sor.u32 256, 8
    %328 = vbcast.lane.b32.xlu0 %v322, %s327
    %v329 = vpop.permute.xlu0 %328
    %s331 = sor.u32 256, 16
    %332 = vbcast.lane.b32.xlu0 %v322, %s331
    %v333 = vpop.permute.xlu0 %332
    %s335 = sor.u32 256, 24
    %336 = vbcast.lane.b32.xlu0 %v322, %s335
    %v337 = vpop.permute.xlu0 %336
    %v338 = vlaneseq
    %v339 = vshrl.u32 %v338, 7
    %v340 = vsub.s32 0, %v339
    %v341 = vrot.slane %v20, %v340
    %343 = vbcast.lane.b32.xlu0 %v341, 256
    %v344 = vpop.permute.xlu0 %343
    %s346 = sor.u32 256, 8
    %347 = vbcast.lane.b32.xlu0 %v341, %s346
    %v348 = vpop.permute.xlu0 %347
    %s350 = sor.u32 256, 16
    %351 = vbcast.lane.b32.xlu0 %v341, %s350
    %v352 = vpop.permute.xlu0 %351
    %s354 = sor.u32 256, 24
    %355 = vbcast.lane.b32.xlu0 %v341, %s354
    %v356 = vpop.permute.xlu0 %355
    %v357 = vlaneseq
    %v358 = vshrl.u32 %v357, 7
    %v359 = vsub.s32 1, %v358
    %v360 = vrot.slane %v20, %v359
    %362 = vbcast.lane.b32.xlu0 %v360, 256
    %v363 = vpop.permute.xlu0 %362
    %s365 = sor.u32 256, 8
    %366 = vbcast.lane.b32.xlu0 %v360, %s365
    %v367 = vpop.permute.xlu0 %366
    %s369 = sor.u32 256, 16
    %370 = vbcast.lane.b32.xlu0 %v360, %s369
    %v371 = vpop.permute.xlu0 %370
    %s373 = sor.u32 256, 24
    %374 = vbcast.lane.b32.xlu0 %v360, %s373
    %v375 = vpop.permute.xlu0 %374
    %v376 = vlaneseq
    %v377 = vshrl.u32 %v376, 7
    %v378 = vsub.s32 2, %v377
    %v379 = vrot.slane %v20, %v378
    %381 = vbcast.lane.b32.xlu0 %v379, 256
    %v382 = vpop.permute.xlu0 %381
    %s384 = sor.u32 256, 8
    %385 = vbcast.lane.b32.xlu0 %v379, %s384
    %v386 = vpop.permute.xlu0 %385
    %s388 = sor.u32 256, 16
    %389 = vbcast.lane.b32.xlu0 %v379, %s388
    %v390 = vpop.permute.xlu0 %389
    %s392 = sor.u32 256, 24
    %393 = vbcast.lane.b32.xlu0 %v379, %s392
    %v394 = vpop.permute.xlu0 %393
    %v395 = vlaneseq
    %v396 = vshrl.u32 %v395, 7
    %v397 = vsub.s32 3, %v396
    %v398 = vrot.slane %v20, %v397
    %400 = vbcast.lane.b32.xlu0 %v398, 256
    %v401 = vpop.permute.xlu0 %400
    %s403 = sor.u32 256, 8
    %404 = vbcast.lane.b32.xlu0 %v398, %s403
    %v405 = vpop.permute.xlu0 %404
    %s407 = sor.u32 256, 16
    %408 = vbcast.lane.b32.xlu0 %v398, %s407
    %v409 = vpop.permute.xlu0 %408
    %s411 = sor.u32 256, 24
    %412 = vbcast.lane.b32.xlu0 %v398, %s411
    %v413 = vpop.permute.xlu0 %412
    %v414 = vlaneseq
    %v415 = vshrl.u32 %v414, 7
    %v416 = vsub.s32 4, %v415
    %v417 = vrot.slane %v20, %v416
    %419 = vbcast.lane.b32.xlu0 %v417, 256
    %v420 = vpop.permute.xlu0 %419
    %s422 = sor.u32 256, 8
    %423 = vbcast.lane.b32.xlu0 %v417, %s422
    %v424 = vpop.permute.xlu0 %423
    %s426 = sor.u32 256, 16
    %427 = vbcast.lane.b32.xlu0 %v417, %s426
    %v428 = vpop.permute.xlu0 %427
    %s430 = sor.u32 256, 24
    %431 = vbcast.lane.b32.xlu0 %v417, %s430
    %v432 = vpop.permute.xlu0 %431
    %v433 = vlaneseq
    %v434 = vshrl.u32 %v433, 7
    %v435 = vsub.s32 5, %v434
    %v436 = vrot.slane %v20, %v435
    %438 = vbcast.lane.b32.xlu0 %v436, 256
    %v439 = vpop.permute.xlu0 %438
    %s441 = sor.u32 256, 8
    %442 = vbcast.lane.b32.xlu0 %v436, %s441
    %v443 = vpop.permute.xlu0 %442
    %s445 = sor.u32 256, 16
    %446 = vbcast.lane.b32.xlu0 %v436, %s445
    %v447 = vpop.permute.xlu0 %446
    %s449 = sor.u32 256, 24
    %450 = vbcast.lane.b32.xlu0 %v436, %s449
    %v451 = vpop.permute.xlu0 %450
    %v452 = vlaneseq
    %v453 = vshrl.u32 %v452, 7
    %v454 = vsub.s32 6, %v453
    %v455 = vrot.slane %v20, %v454
    %457 = vbcast.lane.b32.xlu0 %v455, 256
    %v458 = vpop.permute.xlu0 %457
    %s460 = sor.u32 256, 8
    %461 = vbcast.lane.b32.xlu0 %v455, %s460
    %v462 = vpop.permute.xlu0 %461
    %s464 = sor.u32 256, 16
    %465 = vbcast.lane.b32.xlu0 %v455, %s464
    %v466 = vpop.permute.xlu0 %465
    %s468 = sor.u32 256, 24
    %469 = vbcast.lane.b32.xlu0 %v455, %s468
    %v470 = vpop.permute.xlu0 %469
    %v471 = vlaneseq
    %v472 = vshrl.u32 %v471, 7
    %v473 = vsub.s32 7, %v472
    %v474 = vrot.slane %v20, %v473
    %476 = vbcast.lane.b32.xlu0 %v474, 256
    %v477 = vpop.permute.xlu0 %476
    %s479 = sor.u32 256, 8
    %480 = vbcast.lane.b32.xlu0 %v474, %s479
    %v481 = vpop.permute.xlu0 %480
    %s483 = sor.u32 256, 16
    %484 = vbcast.lane.b32.xlu0 %v474, %s483
    %v485 = vpop.permute.xlu0 %484
    %s487 = sor.u32 256, 24
    %488 = vbcast.lane.b32.xlu0 %v474, %s487
    %v489 = vpop.permute.xlu0 %488
    %v490 = vlaneseq
    %v491 = vshrl.u32 %v490, 7
    %v492 = vsub.s32 0, %v491
    %v493 = vrot.slane %v21, %v492
    %495 = vbcast.lane.b32.xlu0 %v493, 256
    %v496 = vpop.permute.xlu0 %495
    %s498 = sor.u32 256, 8
    %499 = vbcast.lane.b32.xlu0 %v493, %s498
    %v500 = vpop.permute.xlu0 %499
    %s502 = sor.u32 256, 16
    %503 = vbcast.lane.b32.xlu0 %v493, %s502
    %v504 = vpop.permute.xlu0 %503
    %s506 = sor.u32 256, 24
    %507 = vbcast.lane.b32.xlu0 %v493, %s506
    %v508 = vpop.permute.xlu0 %507
    %v509 = vlaneseq
    %v510 = vshrl.u32 %v509, 7
    %v511 = vsub.s32 1, %v510
    %v512 = vrot.slane %v21, %v511
    %514 = vbcast.lane.b32.xlu0 %v512, 256
    %v515 = vpop.permute.xlu0 %514
    %s517 = sor.u32 256, 8
    %518 = vbcast.lane.b32.xlu0 %v512, %s517
    %v519 = vpop.permute.xlu0 %518
    %s521 = sor.u32 256, 16
    %522 = vbcast.lane.b32.xlu0 %v512, %s521
    %v523 = vpop.permute.xlu0 %522
    %s525 = sor.u32 256, 24
    %526 = vbcast.lane.b32.xlu0 %v512, %s525
    %v527 = vpop.permute.xlu0 %526
    %v528 = vlaneseq
    %v529 = vshrl.u32 %v528, 7
    %v530 = vsub.s32 2, %v529
    %v531 = vrot.slane %v21, %v530
    %533 = vbcast.lane.b32.xlu0 %v531, 256
    %v534 = vpop.permute.xlu0 %533
    %s536 = sor.u32 256, 8
    %537 = vbcast.lane.b32.xlu0 %v531, %s536
    %v538 = vpop.permute.xlu0 %537
    %s540 = sor.u32 256, 16
    %541 = vbcast.lane.b32.xlu0 %v531, %s540
    %v542 = vpop.permute.xlu0 %541
    %s544 = sor.u32 256, 24
    %545 = vbcast.lane.b32.xlu0 %v531, %s544
    %v546 = vpop.permute.xlu0 %545
    %v547 = vlaneseq
    %v548 = vshrl.u32 %v547, 7
    %v549 = vsub.s32 3, %v548
    %v550 = vrot.slane %v21, %v549
    %552 = vbcast.lane.b32.xlu0 %v550, 256
    %v553 = vpop.permute.xlu0 %552
    %s555 = sor.u32 256, 8
    %556 = vbcast.lane.b32.xlu0 %v550, %s555
    %v557 = vpop.permute.xlu0 %556
    %s559 = sor.u32 256, 16
    %560 = vbcast.lane.b32.xlu0 %v550, %s559
    %v561 = vpop.permute.xlu0 %560
    %s563 = sor.u32 256, 24
    %564 = vbcast.lane.b32.xlu0 %v550, %s563
    %v565 = vpop.permute.xlu0 %564
    %v566 = vlaneseq
    %v567 = vshrl.u32 %v566, 7
    %v568 = vsub.s32 4, %v567
    %v569 = vrot.slane %v21, %v568
    %571 = vbcast.lane.b32.xlu0 %v569, 256
    %v572 = vpop.permute.xlu0 %571
    %s574 = sor.u32 256, 8
    %575 = vbcast.lane.b32.xlu0 %v569, %s574
    %v576 = vpop.permute.xlu0 %575
    %s578 = sor.u32 256, 16
    %579 = vbcast.lane.b32.xlu0 %v569, %s578
    %v580 = vpop.permute.xlu0 %579
    %s582 = sor.u32 256, 24
    %583 = vbcast.lane.b32.xlu0 %v569, %s582
    %v584 = vpop.permute.xlu0 %583
    %v585 = vlaneseq
    %v586 = vshrl.u32 %v585, 7
    %v587 = vsub.s32 5, %v586
    %v588 = vrot.slane %v21, %v587
    %590 = vbcast.lane.b32.xlu0 %v588, 256
    %v591 = vpop.permute.xlu0 %590
    %s593 = sor.u32 256, 8
    %594 = vbcast.lane.b32.xlu0 %v588, %s593
    %v595 = vpop.permute.xlu0 %594
    %s597 = sor.u32 256, 16
    %598 = vbcast.lane.b32.xlu0 %v588, %s597
    %v599 = vpop.permute.xlu0 %598
    %s601 = sor.u32 256, 24
    %602 = vbcast.lane.b32.xlu0 %v588, %s601
    %v603 = vpop.permute.xlu0 %602
    %v604 = vlaneseq
    %v605 = vshrl.u32 %v604, 7
    %v606 = vsub.s32 6, %v605
    %v607 = vrot.slane %v21, %v606
    %609 = vbcast.lane.b32.xlu0 %v607, 256
    %v610 = vpop.permute.xlu0 %609
    %s612 = sor.u32 256, 8
    %613 = vbcast.lane.b32.xlu0 %v607, %s612
    %v614 = vpop.permute.xlu0 %613
    %s616 = sor.u32 256, 16
    %617 = vbcast.lane.b32.xlu0 %v607, %s616
    %v618 = vpop.permute.xlu0 %617
    %s620 = sor.u32 256, 24
    %621 = vbcast.lane.b32.xlu0 %v607, %s620
    %v622 = vpop.permute.xlu0 %621
    %v623 = vlaneseq
    %v624 = vshrl.u32 %v623, 7
    %v625 = vsub.s32 7, %v624
    %v626 = vrot.slane %v21, %v625
    %628 = vbcast.lane.b32.xlu0 %v626, 256
    %v629 = vpop.permute.xlu0 %628
    %s631 = sor.u32 256, 8
    %632 = vbcast.lane.b32.xlu0 %v626, %s631
    %v633 = vpop.permute.xlu0 %632
    %s635 = sor.u32 256, 16
    %636 = vbcast.lane.b32.xlu0 %v626, %s635
    %v637 = vpop.permute.xlu0 %636
    %s639 = sor.u32 256, 24
    %640 = vbcast.lane.b32.xlu0 %v626, %s639
    %v641 = vpop.permute.xlu0 %640
    %v642 = vlaneseq
    %v643 = vshrl.u32 %v642, 7
    %v644 = vsub.s32 0, %v643
    %v645 = vrot.slane %v22, %v644
    %647 = vbcast.lane.b32.xlu0 %v645, 256
    %v648 = vpop.permute.xlu0 %647
    %s650 = sor.u32 256, 8
    %651 = vbcast.lane.b32.xlu0 %v645, %s650
    %v652 = vpop.permute.xlu0 %651
    %s654 = sor.u32 256, 16
    %655 = vbcast.lane.b32.xlu0 %v645, %s654
    %v656 = vpop.permute.xlu0 %655
    %s658 = sor.u32 256, 24
    %659 = vbcast.lane.b32.xlu0 %v645, %s658
    %v660 = vpop.permute.xlu0 %659
    %v661 = vlaneseq
    %v662 = vshrl.u32 %v661, 7
    %v663 = vsub.s32 1, %v662
    %v664 = vrot.slane %v22, %v663
    %666 = vbcast.lane.b32.xlu0 %v664, 256
    %v667 = vpop.permute.xlu0 %666
    %s669 = sor.u32 256, 8
    %670 = vbcast.lane.b32.xlu0 %v664, %s669
    %v671 = vpop.permute.xlu0 %670
    %s673 = sor.u32 256, 16
    %674 = vbcast.lane.b32.xlu0 %v664, %s673
    %v675 = vpop.permute.xlu0 %674
    %s677 = sor.u32 256, 24
    %678 = vbcast.lane.b32.xlu0 %v664, %s677
    %v679 = vpop.permute.xlu0 %678
    %v680 = vlaneseq
    %v681 = vshrl.u32 %v680, 7
    %v682 = vsub.s32 2, %v681
    %v683 = vrot.slane %v22, %v682
    %685 = vbcast.lane.b32.xlu0 %v683, 256
    %v686 = vpop.permute.xlu0 %685
    %s688 = sor.u32 256, 8
    %689 = vbcast.lane.b32.xlu0 %v683, %s688
    %v690 = vpop.permute.xlu0 %689
    %s692 = sor.u32 256, 16
    %693 = vbcast.lane.b32.xlu0 %v683, %s692
    %v694 = vpop.permute.xlu0 %693
    %s696 = sor.u32 256, 24
    %697 = vbcast.lane.b32.xlu0 %v683, %s696
    %v698 = vpop.permute.xlu0 %697
    %v699 = vlaneseq
    %v700 = vshrl.u32 %v699, 7
    %v701 = vsub.s32 3, %v700
    %v702 = vrot.slane %v22, %v701
    %704 = vbcast.lane.b32.xlu0 %v702, 256
    %v705 = vpop.permute.xlu0 %704
    %s707 = sor.u32 256, 8
    %708 = vbcast.lane.b32.xlu0 %v702, %s707
    %v709 = vpop.permute.xlu0 %708
    %s711 = sor.u32 256, 16
    %712 = vbcast.lane.b32.xlu0 %v702, %s711
    %v713 = vpop.permute.xlu0 %712
    %s715 = sor.u32 256, 24
    %716 = vbcast.lane.b32.xlu0 %v702, %s715
    %v717 = vpop.permute.xlu0 %716
    %v718 = vlaneseq
    %v719 = vshrl.u32 %v718, 7
    %v720 = vsub.s32 4, %v719
    %v721 = vrot.slane %v22, %v720
    %723 = vbcast.lane.b32.xlu0 %v721, 256
    %v724 = vpop.permute.xlu0 %723
    %s726 = sor.u32 256, 8
    %727 = vbcast.lane.b32.xlu0 %v721, %s726
    %v728 = vpop.permute.xlu0 %727
    %s730 = sor.u32 256, 16
    %731 = vbcast.lane.b32.xlu0 %v721, %s730
    %v732 = vpop.permute.xlu0 %731
    %s734 = sor.u32 256, 24
    %735 = vbcast.lane.b32.xlu0 %v721, %s734
    %v736 = vpop.permute.xlu0 %735
    %v737 = vlaneseq
    %v738 = vshrl.u32 %v737, 7
    %v739 = vsub.s32 5, %v738
    %v740 = vrot.slane %v22, %v739
    %742 = vbcast.lane.b32.xlu0 %v740, 256
    %v743 = vpop.permute.xlu0 %742
    %s745 = sor.u32 256, 8
    %746 = vbcast.lane.b32.xlu0 %v740, %s745
    %v747 = vpop.permute.xlu0 %746
    %s749 = sor.u32 256, 16
    %750 = vbcast.lane.b32.xlu0 %v740, %s749
    %v751 = vpop.permute.xlu0 %750
    %s753 = sor.u32 256, 24
    %754 = vbcast.lane.b32.xlu0 %v740, %s753
    %v755 = vpop.permute.xlu0 %754
    %v756 = vlaneseq
    %v757 = vshrl.u32 %v756, 7
    %v758 = vsub.s32 6, %v757
    %v759 = vrot.slane %v22, %v758
    %761 = vbcast.lane.b32.xlu0 %v759, 256
    %v762 = vpop.permute.xlu0 %761
    %s764 = sor.u32 256, 8
    %765 = vbcast.lane.b32.xlu0 %v759, %s764
    %v766 = vpop.permute.xlu0 %765
    %s768 = sor.u32 256, 16
    %769 = vbcast.lane.b32.xlu0 %v759, %s768
    %v770 = vpop.permute.xlu0 %769
    %s772 = sor.u32 256, 24
    %773 = vbcast.lane.b32.xlu0 %v759, %s772
    %v774 = vpop.permute.xlu0 %773
    %v775 = vlaneseq
    %v776 = vshrl.u32 %v775, 7
    %v777 = vsub.s32 7, %v776
    %v778 = vrot.slane %v22, %v777
    %780 = vbcast.lane.b32.xlu0 %v778, 256
    %v781 = vpop.permute.xlu0 %780
    %s783 = sor.u32 256, 8
    %784 = vbcast.lane.b32.xlu0 %v778, %s783
    %v785 = vpop.permute.xlu0 %784
    %s787 = sor.u32 256, 16
    %788 = vbcast.lane.b32.xlu0 %v778, %s787
    %v789 = vpop.permute.xlu0 %788
    %s791 = sor.u32 256, 24
    %792 = vbcast.lane.b32.xlu0 %v778, %s791
    %v793 = vpop.permute.xlu0 %792
    %v794 = vlaneseq
    %v795 = vshrl.u32 %v794, 7
    %v796 = vsub.s32 0, %v795
    %v797 = vrot.slane %v23, %v796
    %799 = vbcast.lane.b32.xlu0 %v797, 256
    %v800 = vpop.permute.xlu0 %799
    %s802 = sor.u32 256, 8
    %803 = vbcast.lane.b32.xlu0 %v797, %s802
    %v804 = vpop.permute.xlu0 %803
    %s806 = sor.u32 256, 16
    %807 = vbcast.lane.b32.xlu0 %v797, %s806
    %v808 = vpop.permute.xlu0 %807
    %s810 = sor.u32 256, 24
    %811 = vbcast.lane.b32.xlu0 %v797, %s810
    %v812 = vpop.permute.xlu0 %811
    %v813 = vlaneseq
    %v814 = vshrl.u32 %v813, 7
    %v815 = vsub.s32 1, %v814
    %v816 = vrot.slane %v23, %v815
    %818 = vbcast.lane.b32.xlu0 %v816, 256
    %v819 = vpop.permute.xlu0 %818
    %s821 = sor.u32 256, 8
    %822 = vbcast.lane.b32.xlu0 %v816, %s821
    %v823 = vpop.permute.xlu0 %822
    %s825 = sor.u32 256, 16
    %826 = vbcast.lane.b32.xlu0 %v816, %s825
    %v827 = vpop.permute.xlu0 %826
    %s829 = sor.u32 256, 24
    %830 = vbcast.lane.b32.xlu0 %v816, %s829
    %v831 = vpop.permute.xlu0 %830
    %v832 = vlaneseq
    %v833 = vshrl.u32 %v832, 7
    %v834 = vsub.s32 2, %v833
    %v835 = vrot.slane %v23, %v834
    %837 = vbcast.lane.b32.xlu0 %v835, 256
    %v838 = vpop.permute.xlu0 %837
    %s840 = sor.u32 256, 8
    %841 = vbcast.lane.b32.xlu0 %v835, %s840
    %v842 = vpop.permute.xlu0 %841
    %s844 = sor.u32 256, 16
    %845 = vbcast.lane.b32.xlu0 %v835, %s844
    %v846 = vpop.permute.xlu0 %845
    %s848 = sor.u32 256, 24
    %849 = vbcast.lane.b32.xlu0 %v835, %s848
    %v850 = vpop.permute.xlu0 %849
    %v851 = vlaneseq
    %v852 = vshrl.u32 %v851, 7
    %v853 = vsub.s32 3, %v852
    %v854 = vrot.slane %v23, %v853
    %856 = vbcast.lane.b32.xlu0 %v854, 256
    %v857 = vpop.permute.xlu0 %856
    %s859 = sor.u32 256, 8
    %860 = vbcast.lane.b32.xlu0 %v854, %s859
    %v861 = vpop.permute.xlu0 %860
    %s863 = sor.u32 256, 16
    %864 = vbcast.lane.b32.xlu0 %v854, %s863
    %v865 = vpop.permute.xlu0 %864
    %s867 = sor.u32 256, 24
    %868 = vbcast.lane.b32.xlu0 %v854, %s867
    %v869 = vpop.permute.xlu0 %868
    %v870 = vlaneseq
    %v871 = vshrl.u32 %v870, 7
    %v872 = vsub.s32 4, %v871
    %v873 = vrot.slane %v23, %v872
    %875 = vbcast.lane.b32.xlu0 %v873, 256
    %v876 = vpop.permute.xlu0 %875
    %s878 = sor.u32 256, 8
    %879 = vbcast.lane.b32.xlu0 %v873, %s878
    %v880 = vpop.permute.xlu0 %879
    %s882 = sor.u32 256, 16
    %883 = vbcast.lane.b32.xlu0 %v873, %s882
    %v884 = vpop.permute.xlu0 %883
    %s886 = sor.u32 256, 24
    %887 = vbcast.lane.b32.xlu0 %v873, %s886
    %v888 = vpop.permute.xlu0 %887
    %v889 = vlaneseq
    %v890 = vshrl.u32 %v889, 7
    %v891 = vsub.s32 5, %v890
    %v892 = vrot.slane %v23, %v891
    %894 = vbcast.lane.b32.xlu0 %v892, 256
    %v895 = vpop.permute.xlu0 %894
    %s897 = sor.u32 256, 8
    %898 = vbcast.lane.b32.xlu0 %v892, %s897
    %v899 = vpop.permute.xlu0 %898
    %s901 = sor.u32 256, 16
    %902 = vbcast.lane.b32.xlu0 %v892, %s901
    %v903 = vpop.permute.xlu0 %902
    %s905 = sor.u32 256, 24
    %906 = vbcast.lane.b32.xlu0 %v892, %s905
    %v907 = vpop.permute.xlu0 %906
    %v908 = vlaneseq
    %v909 = vshrl.u32 %v908, 7
    %v910 = vsub.s32 6, %v909
    %v911 = vrot.slane %v23, %v910
    %913 = vbcast.lane.b32.xlu0 %v911, 256
    %v914 = vpop.permute.xlu0 %913
    %s916 = sor.u32 256, 8
    %917 = vbcast.lane.b32.xlu0 %v911, %s916
    %v918 = vpop.permute.xlu0 %917
    %s920 = sor.u32 256, 16
    %921 = vbcast.lane.b32.xlu0 %v911, %s920
    %v922 = vpop.permute.xlu0 %921
    %s924 = sor.u32 256, 24
    %925 = vbcast.lane.b32.xlu0 %v911, %s924
    %v926 = vpop.permute.xlu0 %925
    %v927 = vlaneseq
    %v928 = vshrl.u32 %v927, 7
    %v929 = vsub.s32 7, %v928
    %v930 = vrot.slane %v23, %v929
    %932 = vbcast.lane.b32.xlu0 %v930, 256
    %v933 = vpop.permute.xlu0 %932
    %s935 = sor.u32 256, 8
    %936 = vbcast.lane.b32.xlu0 %v930, %s935
    %v937 = vpop.permute.xlu0 %936
    %s939 = sor.u32 256, 16
    %940 = vbcast.lane.b32.xlu0 %v930, %s939
    %v941 = vpop.permute.xlu0 %940
    %s943 = sor.u32 256, 24
    %944 = vbcast.lane.b32.xlu0 %v930, %s943
    %v945 = vpop.permute.xlu0 %944
    %v946 = vlaneseq
    %v947 = vshrl.u32 %v946, 7
    %v948 = vsub.s32 0, %v947
    %v949 = vrot.slane %v24, %v948
    %951 = vbcast.lane.b32.xlu0 %v949, 256
    %v952 = vpop.permute.xlu0 %951
    %s954 = sor.u32 256, 8
    %955 = vbcast.lane.b32.xlu0 %v949, %s954
    %v956 = vpop.permute.xlu0 %955
    %s958 = sor.u32 256, 16
    %959 = vbcast.lane.b32.xlu0 %v949, %s958
    %v960 = vpop.permute.xlu0 %959
    %s962 = sor.u32 256, 24
    %963 = vbcast.lane.b32.xlu0 %v949, %s962
    %v964 = vpop.permute.xlu0 %963
    %v965 = vlaneseq
    %v966 = vshrl.u32 %v965, 7
    %v967 = vsub.s32 1, %v966
    %v968 = vrot.slane %v24, %v967
    %970 = vbcast.lane.b32.xlu0 %v968, 256
    %v971 = vpop.permute.xlu0 %970
    %s973 = sor.u32 256, 8
    %974 = vbcast.lane.b32.xlu0 %v968, %s973
    %v975 = vpop.permute.xlu0 %974
    %s977 = sor.u32 256, 16
    %978 = vbcast.lane.b32.xlu0 %v968, %s977
    %v979 = vpop.permute.xlu0 %978
    %s981 = sor.u32 256, 24
    %982 = vbcast.lane.b32.xlu0 %v968, %s981
    %v983 = vpop.permute.xlu0 %982
    %v984 = vlaneseq
    %v985 = vshrl.u32 %v984, 7
    %v986 = vsub.s32 2, %v985
    %v987 = vrot.slane %v24, %v986
    %989 = vbcast.lane.b32.xlu0 %v987, 256
    %v990 = vpop.permute.xlu0 %989
    %s992 = sor.u32 256, 8
    %993 = vbcast.lane.b32.xlu0 %v987, %s992
    %v994 = vpop.permute.xlu0 %993
    %s996 = sor.u32 256, 16
    %997 = vbcast.lane.b32.xlu0 %v987, %s996
    %v998 = vpop.permute.xlu0 %997
    %s1000 = sor.u32 256, 24
    %1001 = vbcast.lane.b32.xlu0 %v987, %s1000
    %v1002 = vpop.permute.xlu0 %1001
    %v1003 = vlaneseq
    %v1004 = vshrl.u32 %v1003, 7
    %v1005 = vsub.s32 3, %v1004
    %v1006 = vrot.slane %v24, %v1005
    %1008 = vbcast.lane.b32.xlu0 %v1006, 256
    %v1009 = vpop.permute.xlu0 %1008
    %s1011 = sor.u32 256, 8
    %1012 = vbcast.lane.b32.xlu0 %v1006, %s1011
    %v1013 = vpop.permute.xlu0 %1012
    %s1015 = sor.u32 256, 16
    %1016 = vbcast.lane.b32.xlu0 %v1006, %s1015
    %v1017 = vpop.permute.xlu0 %1016
    %s1019 = sor.u32 256, 24
    %1020 = vbcast.lane.b32.xlu0 %v1006, %s1019
    %v1021 = vpop.permute.xlu0 %1020
    %v1022 = vlaneseq
    %v1023 = vshrl.u32 %v1022, 7
    %v1024 = vsub.s32 4, %v1023
    %v1025 = vrot.slane %v24, %v1024
    %1027 = vbcast.lane.b32.xlu0 %v1025, 256
    %v1028 = vpop.permute.xlu0 %1027
    %s1030 = sor.u32 256, 8
    %1031 = vbcast.lane.b32.xlu0 %v1025, %s1030
    %v1032 = vpop.permute.xlu0 %1031
    %s1034 = sor.u32 256, 16
    %1035 = vbcast.lane.b32.xlu0 %v1025, %s1034
    %v1036 = vpop.permute.xlu0 %1035
    %s1038 = sor.u32 256, 24
    %1039 = vbcast.lane.b32.xlu0 %v1025, %s1038
    %v1040 = vpop.permute.xlu0 %1039
    %v1041 = vlaneseq
    %v1042 = vshrl.u32 %v1041, 7
    %v1043 = vsub.s32 5, %v1042
    %v1044 = vrot.slane %v24, %v1043
    %1046 = vbcast.lane.b32.xlu0 %v1044, 256
    %v1047 = vpop.permute.xlu0 %1046
    %s1049 = sor.u32 256, 8
    %1050 = vbcast.lane.b32.xlu0 %v1044, %s1049
    %v1051 = vpop.permute.xlu0 %1050
    %s1053 = sor.u32 256, 16
    %1054 = vbcast.lane.b32.xlu0 %v1044, %s1053
    %v1055 = vpop.permute.xlu0 %1054
    %s1057 = sor.u32 256, 24
    %1058 = vbcast.lane.b32.xlu0 %v1044, %s1057
    %v1059 = vpop.permute.xlu0 %1058
    %v1060 = vlaneseq
    %v1061 = vshrl.u32 %v1060, 7
    %v1062 = vsub.s32 6, %v1061
    %v1063 = vrot.slane %v24, %v1062
    %1065 = vbcast.lane.b32.xlu0 %v1063, 256
    %v1066 = vpop.permute.xlu0 %1065
    %s1068 = sor.u32 256, 8
    %1069 = vbcast.lane.b32.xlu0 %v1063, %s1068
    %v1070 = vpop.permute.xlu0 %1069
    %s1072 = sor.u32 256, 16
    %1073 = vbcast.lane.b32.xlu0 %v1063, %s1072
    %v1074 = vpop.permute.xlu0 %1073
    %s1076 = sor.u32 256, 24
    %1077 = vbcast.lane.b32.xlu0 %v1063, %s1076
    %v1078 = vpop.permute.xlu0 %1077
    %v1079 = vlaneseq
    %v1080 = vshrl.u32 %v1079, 7
    %v1081 = vsub.s32 7, %v1080
    %v1082 = vrot.slane %v24, %v1081
    %1084 = vbcast.lane.b32.xlu0 %v1082, 256
    %v1085 = vpop.permute.xlu0 %1084
    %s1087 = sor.u32 256, 8
    %1088 = vbcast.lane.b32.xlu0 %v1082, %s1087
    %v1089 = vpop.permute.xlu0 %1088
    %s1091 = sor.u32 256, 16
    %1092 = vbcast.lane.b32.xlu0 %v1082, %s1091
    %v1093 = vpop.permute.xlu0 %1092
    %s1095 = sor.u32 256, 24
    %1096 = vbcast.lane.b32.xlu0 %v1082, %s1095
    %v1097 = vpop.permute.xlu0 %1096
    %v1098 = vlaneseq
    %v1099 = vshrl.u32 %v1098, 7
    %v1100 = vsub.s32 0, %v1099
    %v1101 = vrot.slane %v25, %v1100
    %1103 = vbcast.lane.b32.xlu0 %v1101, 256
    %v1104 = vpop.permute.xlu0 %1103
    %s1106 = sor.u32 256, 8
    %1107 = vbcast.lane.b32.xlu0 %v1101, %s1106
    %v1108 = vpop.permute.xlu0 %1107
    %s1110 = sor.u32 256, 16
    %1111 = vbcast.lane.b32.xlu0 %v1101, %s1110
    %v1112 = vpop.permute.xlu0 %1111
    %s1114 = sor.u32 256, 24
    %1115 = vbcast.lane.b32.xlu0 %v1101, %s1114
    %v1116 = vpop.permute.xlu0 %1115
    %v1117 = vlaneseq
    %v1118 = vshrl.u32 %v1117, 7
    %v1119 = vsub.s32 1, %v1118
    %v1120 = vrot.slane %v25, %v1119
    %1122 = vbcast.lane.b32.xlu0 %v1120, 256
    %v1123 = vpop.permute.xlu0 %1122
    %s1125 = sor.u32 256, 8
    %1126 = vbcast.lane.b32.xlu0 %v1120, %s1125
    %v1127 = vpop.permute.xlu0 %1126
    %s1129 = sor.u32 256, 16
    %1130 = vbcast.lane.b32.xlu0 %v1120, %s1129
    %v1131 = vpop.permute.xlu0 %1130
    %s1133 = sor.u32 256, 24
    %1134 = vbcast.lane.b32.xlu0 %v1120, %s1133
    %v1135 = vpop.permute.xlu0 %1134
    %v1136 = vlaneseq
    %v1137 = vshrl.u32 %v1136, 7
    %v1138 = vsub.s32 2, %v1137
    %v1139 = vrot.slane %v25, %v1138
    %1141 = vbcast.lane.b32.xlu0 %v1139, 256
    %v1142 = vpop.permute.xlu0 %1141
    %s1144 = sor.u32 256, 8
    %1145 = vbcast.lane.b32.xlu0 %v1139, %s1144
    %v1146 = vpop.permute.xlu0 %1145
    %s1148 = sor.u32 256, 16
    %1149 = vbcast.lane.b32.xlu0 %v1139, %s1148
    %v1150 = vpop.permute.xlu0 %1149
    %s1152 = sor.u32 256, 24
    %1153 = vbcast.lane.b32.xlu0 %v1139, %s1152
    %v1154 = vpop.permute.xlu0 %1153
    %v1155 = vlaneseq
    %v1156 = vshrl.u32 %v1155, 7
    %v1157 = vsub.s32 3, %v1156
    %v1158 = vrot.slane %v25, %v1157
    %1160 = vbcast.lane.b32.xlu0 %v1158, 256
    %v1161 = vpop.permute.xlu0 %1160
    %s1163 = sor.u32 256, 8
    %1164 = vbcast.lane.b32.xlu0 %v1158, %s1163
    %v1165 = vpop.permute.xlu0 %1164
    %s1167 = sor.u32 256, 16
    %1168 = vbcast.lane.b32.xlu0 %v1158, %s1167
    %v1169 = vpop.permute.xlu0 %1168
    %s1171 = sor.u32 256, 24
    %1172 = vbcast.lane.b32.xlu0 %v1158, %s1171
    %v1173 = vpop.permute.xlu0 %1172
    %v1174 = vlaneseq
    %v1175 = vshrl.u32 %v1174, 7
    %v1176 = vsub.s32 4, %v1175
    %v1177 = vrot.slane %v25, %v1176
    %1179 = vbcast.lane.b32.xlu0 %v1177, 256
    %v1180 = vpop.permute.xlu0 %1179
    %s1182 = sor.u32 256, 8
    %1183 = vbcast.lane.b32.xlu0 %v1177, %s1182
    %v1184 = vpop.permute.xlu0 %1183
    %s1186 = sor.u32 256, 16
    %1187 = vbcast.lane.b32.xlu0 %v1177, %s1186
    %v1188 = vpop.permute.xlu0 %1187
    %s1190 = sor.u32 256, 24
    %1191 = vbcast.lane.b32.xlu0 %v1177, %s1190
    %v1192 = vpop.permute.xlu0 %1191
    %v1193 = vlaneseq
    %v1194 = vshrl.u32 %v1193, 7
    %v1195 = vsub.s32 5, %v1194
    %v1196 = vrot.slane %v25, %v1195
    %1198 = vbcast.lane.b32.xlu0 %v1196, 256
    %v1199 = vpop.permute.xlu0 %1198
    %s1201 = sor.u32 256, 8
    %1202 = vbcast.lane.b32.xlu0 %v1196, %s1201
    %v1203 = vpop.permute.xlu0 %1202
    %s1205 = sor.u32 256, 16
    %1206 = vbcast.lane.b32.xlu0 %v1196, %s1205
    %v1207 = vpop.permute.xlu0 %1206
    %s1209 = sor.u32 256, 24
    %1210 = vbcast.lane.b32.xlu0 %v1196, %s1209
    %v1211 = vpop.permute.xlu0 %1210
    %v1212 = vlaneseq
    %v1213 = vshrl.u32 %v1212, 7
    %v1214 = vsub.s32 6, %v1213
    %v1215 = vrot.slane %v25, %v1214
    %1217 = vbcast.lane.b32.xlu0 %v1215, 256
    %v1218 = vpop.permute.xlu0 %1217
    %s1220 = sor.u32 256, 8
    %1221 = vbcast.lane.b32.xlu0 %v1215, %s1220
    %v1222 = vpop.permute.xlu0 %1221
    %s1224 = sor.u32 256, 16
    %1225 = vbcast.lane.b32.xlu0 %v1215, %s1224
    %v1226 = vpop.permute.xlu0 %1225
    %s1228 = sor.u32 256, 24
    %1229 = vbcast.lane.b32.xlu0 %v1215, %s1228
    %v1230 = vpop.permute.xlu0 %1229
    %v1231 = vlaneseq
    %v1232 = vshrl.u32 %v1231, 7
    %v1233 = vsub.s32 7, %v1232
    %v1234 = vrot.slane %v25, %v1233
    %1236 = vbcast.lane.b32.xlu0 %v1234, 256
    %v1237 = vpop.permute.xlu0 %1236
    %s1239 = sor.u32 256, 8
    %1240 = vbcast.lane.b32.xlu0 %v1234, %s1239
    %v1241 = vpop.permute.xlu0 %1240
    %s1243 = sor.u32 256, 16
    %1244 = vbcast.lane.b32.xlu0 %v1234, %s1243
    %v1245 = vpop.permute.xlu0 %1244
    %s1247 = sor.u32 256, 24
    %1248 = vbcast.lane.b32.xlu0 %v1234, %s1247
    %v1249 = vpop.permute.xlu0 %1248
    %v1250 = vlaneseq
    %v1251 = vshrl.u32 %v1250, 7
    %v1252 = vsub.s32 0, %v1251
    %v1253 = vrot.slane %v26, %v1252
    %1255 = vbcast.lane.b32.xlu0 %v1253, 256
    %v1256 = vpop.permute.xlu0 %1255
    %s1258 = sor.u32 256, 8
    %1259 = vbcast.lane.b32.xlu0 %v1253, %s1258
    %v1260 = vpop.permute.xlu0 %1259
    %s1262 = sor.u32 256, 16
    %1263 = vbcast.lane.b32.xlu0 %v1253, %s1262
    %v1264 = vpop.permute.xlu0 %1263
    %s1266 = sor.u32 256, 24
    %1267 = vbcast.lane.b32.xlu0 %v1253, %s1266
    %v1268 = vpop.permute.xlu0 %1267
    %v1269 = vlaneseq
    %v1270 = vshrl.u32 %v1269, 7
    %v1271 = vsub.s32 1, %v1270
    %v1272 = vrot.slane %v26, %v1271
    %1274 = vbcast.lane.b32.xlu0 %v1272, 256
    %v1275 = vpop.permute.xlu0 %1274
    %s1277 = sor.u32 256, 8
    %1278 = vbcast.lane.b32.xlu0 %v1272, %s1277
    %v1279 = vpop.permute.xlu0 %1278
    %s1281 = sor.u32 256, 16
    %1282 = vbcast.lane.b32.xlu0 %v1272, %s1281
    %v1283 = vpop.permute.xlu0 %1282
    %s1285 = sor.u32 256, 24
    %1286 = vbcast.lane.b32.xlu0 %v1272, %s1285
    %v1287 = vpop.permute.xlu0 %1286
    %v1288 = vlaneseq
    %v1289 = vshrl.u32 %v1288, 7
    %v1290 = vsub.s32 2, %v1289
    %v1291 = vrot.slane %v26, %v1290
    %1293 = vbcast.lane.b32.xlu0 %v1291, 256
    %v1294 = vpop.permute.xlu0 %1293
    %s1296 = sor.u32 256, 8
    %1297 = vbcast.lane.b32.xlu0 %v1291, %s1296
    %v1298 = vpop.permute.xlu0 %1297
    %s1300 = sor.u32 256, 16
    %1301 = vbcast.lane.b32.xlu0 %v1291, %s1300
    %v1302 = vpop.permute.xlu0 %1301
    %s1304 = sor.u32 256, 24
    %1305 = vbcast.lane.b32.xlu0 %v1291, %s1304
    %v1306 = vpop.permute.xlu0 %1305
    %v1307 = vlaneseq
    %v1308 = vshrl.u32 %v1307, 7
    %v1309 = vsub.s32 3, %v1308
    %v1310 = vrot.slane %v26, %v1309
    %1312 = vbcast.lane.b32.xlu0 %v1310, 256
    %v1313 = vpop.permute.xlu0 %1312
    %s1315 = sor.u32 256, 8
    %1316 = vbcast.lane.b32.xlu0 %v1310, %s1315
    %v1317 = vpop.permute.xlu0 %1316
    %s1319 = sor.u32 256, 16
    %1320 = vbcast.lane.b32.xlu0 %v1310, %s1319
    %v1321 = vpop.permute.xlu0 %1320
    %s1323 = sor.u32 256, 24
    %1324 = vbcast.lane.b32.xlu0 %v1310, %s1323
    %v1325 = vpop.permute.xlu0 %1324
    %v1326 = vlaneseq
    %v1327 = vshrl.u32 %v1326, 7
    %v1328 = vsub.s32 4, %v1327
    %v1329 = vrot.slane %v26, %v1328
    %1331 = vbcast.lane.b32.xlu0 %v1329, 256
    %v1332 = vpop.permute.xlu0 %1331
    %s1334 = sor.u32 256, 8
    %1335 = vbcast.lane.b32.xlu0 %v1329, %s1334
    %v1336 = vpop.permute.xlu0 %1335
    %s1338 = sor.u32 256, 16
    %1339 = vbcast.lane.b32.xlu0 %v1329, %s1338
    %v1340 = vpop.permute.xlu0 %1339
    %s1342 = sor.u32 256, 24
    %1343 = vbcast.lane.b32.xlu0 %v1329, %s1342
    %v1344 = vpop.permute.xlu0 %1343
    %v1345 = vlaneseq
    %v1346 = vshrl.u32 %v1345, 7
    %v1347 = vsub.s32 5, %v1346
    %v1348 = vrot.slane %v26, %v1347
    %1350 = vbcast.lane.b32.xlu0 %v1348, 256
    %v1351 = vpop.permute.xlu0 %1350
    %s1353 = sor.u32 256, 8
    %1354 = vbcast.lane.b32.xlu0 %v1348, %s1353
    %v1355 = vpop.permute.xlu0 %1354
    %s1357 = sor.u32 256, 16
    %1358 = vbcast.lane.b32.xlu0 %v1348, %s1357
    %v1359 = vpop.permute.xlu0 %1358
    %s1361 = sor.u32 256, 24
    %1362 = vbcast.lane.b32.xlu0 %v1348, %s1361
    %v1363 = vpop.permute.xlu0 %1362
    %v1364 = vlaneseq
    %v1365 = vshrl.u32 %v1364, 7
    %v1366 = vsub.s32 6, %v1365
    %v1367 = vrot.slane %v26, %v1366
    %1369 = vbcast.lane.b32.xlu0 %v1367, 256
    %v1370 = vpop.permute.xlu0 %1369
    %s1372 = sor.u32 256, 8
    %1373 = vbcast.lane.b32.xlu0 %v1367, %s1372
    %v1374 = vpop.permute.xlu0 %1373
    %s1376 = sor.u32 256, 16
    %1377 = vbcast.lane.b32.xlu0 %v1367, %s1376
    %v1378 = vpop.permute.xlu0 %1377
    %s1380 = sor.u32 256, 24
    %1381 = vbcast.lane.b32.xlu0 %v1367, %s1380
    %v1382 = vpop.permute.xlu0 %1381
    %v1383 = vlaneseq
    %v1384 = vshrl.u32 %v1383, 7
    %v1385 = vsub.s32 7, %v1384
    %v1386 = vrot.slane %v26, %v1385
    %1388 = vbcast.lane.b32.xlu0 %v1386, 256
    %v1389 = vpop.permute.xlu0 %1388
    %s1391 = sor.u32 256, 8
    %1392 = vbcast.lane.b32.xlu0 %v1386, %s1391
    %v1393 = vpop.permute.xlu0 %1392
    %s1395 = sor.u32 256, 16
    %1396 = vbcast.lane.b32.xlu0 %v1386, %s1395
    %v1397 = vpop.permute.xlu0 %1396
    %s1399 = sor.u32 256, 24
    %1400 = vbcast.lane.b32.xlu0 %v1386, %s1399
    %v1401 = vpop.permute.xlu0 %1400
    %v1402 = vlaneseq
    %v1403 = vshrl.u32 %v1402, 7
    %v1404 = vsub.s32 0, %v1403
    %v1405 = vrot.slane %v27, %v1404
    %1407 = vbcast.lane.b32.xlu0 %v1405, 256
    %v1408 = vpop.permute.xlu0 %1407
    %s1410 = sor.u32 256, 8
    %1411 = vbcast.lane.b32.xlu0 %v1405, %s1410
    %v1412 = vpop.permute.xlu0 %1411
    %s1414 = sor.u32 256, 16
    %1415 = vbcast.lane.b32.xlu0 %v1405, %s1414
    %v1416 = vpop.permute.xlu0 %1415
    %s1418 = sor.u32 256, 24
    %1419 = vbcast.lane.b32.xlu0 %v1405, %s1418
    %v1420 = vpop.permute.xlu0 %1419
    %v1421 = vlaneseq
    %v1422 = vshrl.u32 %v1421, 7
    %v1423 = vsub.s32 1, %v1422
    %v1424 = vrot.slane %v27, %v1423
    %1426 = vbcast.lane.b32.xlu0 %v1424, 256
    %v1427 = vpop.permute.xlu0 %1426
    %s1429 = sor.u32 256, 8
    %1430 = vbcast.lane.b32.xlu0 %v1424, %s1429
    %v1431 = vpop.permute.xlu0 %1430
    %s1433 = sor.u32 256, 16
    %1434 = vbcast.lane.b32.xlu0 %v1424, %s1433
    %v1435 = vpop.permute.xlu0 %1434
    %s1437 = sor.u32 256, 24
    %1438 = vbcast.lane.b32.xlu0 %v1424, %s1437
    %v1439 = vpop.permute.xlu0 %1438
    %v1440 = vlaneseq
    %v1441 = vshrl.u32 %v1440, 7
    %v1442 = vsub.s32 2, %v1441
    %v1443 = vrot.slane %v27, %v1442
    %1445 = vbcast.lane.b32.xlu0 %v1443, 256
    %v1446 = vpop.permute.xlu0 %1445
    %s1448 = sor.u32 256, 8
    %1449 = vbcast.lane.b32.xlu0 %v1443, %s1448
    %v1450 = vpop.permute.xlu0 %1449
    %s1452 = sor.u32 256, 16
    %1453 = vbcast.lane.b32.xlu0 %v1443, %s1452
    %v1454 = vpop.permute.xlu0 %1453
    %s1456 = sor.u32 256, 24
    %1457 = vbcast.lane.b32.xlu0 %v1443, %s1456
    %v1458 = vpop.permute.xlu0 %1457
    %v1459 = vlaneseq
    %v1460 = vshrl.u32 %v1459, 7
    %v1461 = vsub.s32 3, %v1460
    %v1462 = vrot.slane %v27, %v1461
    %1464 = vbcast.lane.b32.xlu0 %v1462, 256
    %v1465 = vpop.permute.xlu0 %1464
    %s1467 = sor.u32 256, 8
    %1468 = vbcast.lane.b32.xlu0 %v1462, %s1467
    %v1469 = vpop.permute.xlu0 %1468
    %s1471 = sor.u32 256, 16
    %1472 = vbcast.lane.b32.xlu0 %v1462, %s1471
    %v1473 = vpop.permute.xlu0 %1472
    %s1475 = sor.u32 256, 24
    %1476 = vbcast.lane.b32.xlu0 %v1462, %s1475
    %v1477 = vpop.permute.xlu0 %1476
    %v1478 = vlaneseq
    %v1479 = vshrl.u32 %v1478, 7
    %v1480 = vsub.s32 4, %v1479
    %v1481 = vrot.slane %v27, %v1480
    %1483 = vbcast.lane.b32.xlu0 %v1481, 256
    %v1484 = vpop.permute.xlu0 %1483
    %s1486 = sor.u32 256, 8
    %1487 = vbcast.lane.b32.xlu0 %v1481, %s1486
    %v1488 = vpop.permute.xlu0 %1487
    %s1490 = sor.u32 256, 16
    %1491 = vbcast.lane.b32.xlu0 %v1481, %s1490
    %v1492 = vpop.permute.xlu0 %1491
    %s1494 = sor.u32 256, 24
    %1495 = vbcast.lane.b32.xlu0 %v1481, %s1494
    %v1496 = vpop.permute.xlu0 %1495
    %v1497 = vlaneseq
    %v1498 = vshrl.u32 %v1497, 7
    %v1499 = vsub.s32 5, %v1498
    %v1500 = vrot.slane %v27, %v1499
    %1502 = vbcast.lane.b32.xlu0 %v1500, 256
    %v1503 = vpop.permute.xlu0 %1502
    %s1505 = sor.u32 256, 8
    %1506 = vbcast.lane.b32.xlu0 %v1500, %s1505
    %v1507 = vpop.permute.xlu0 %1506
    %s1509 = sor.u32 256, 16
    %1510 = vbcast.lane.b32.xlu0 %v1500, %s1509
    %v1511 = vpop.permute.xlu0 %1510
    %s1513 = sor.u32 256, 24
    %1514 = vbcast.lane.b32.xlu0 %v1500, %s1513
    %v1515 = vpop.permute.xlu0 %1514
    %v1516 = vlaneseq
    %v1517 = vshrl.u32 %v1516, 7
    %v1518 = vsub.s32 6, %v1517
    %v1519 = vrot.slane %v27, %v1518
    %1521 = vbcast.lane.b32.xlu0 %v1519, 256
    %v1522 = vpop.permute.xlu0 %1521
    %s1524 = sor.u32 256, 8
    %1525 = vbcast.lane.b32.xlu0 %v1519, %s1524
    %v1526 = vpop.permute.xlu0 %1525
    %s1528 = sor.u32 256, 16
    %1529 = vbcast.lane.b32.xlu0 %v1519, %s1528
    %v1530 = vpop.permute.xlu0 %1529
    %s1532 = sor.u32 256, 24
    %1533 = vbcast.lane.b32.xlu0 %v1519, %s1532
    %v1534 = vpop.permute.xlu0 %1533
    %v1535 = vlaneseq
    %v1536 = vshrl.u32 %v1535, 7
    %v1537 = vsub.s32 7, %v1536
    %v1538 = vrot.slane %v27, %v1537
    %1540 = vbcast.lane.b32.xlu0 %v1538, 256
    %v1541 = vpop.permute.xlu0 %1540
    %s1543 = sor.u32 256, 8
    %1544 = vbcast.lane.b32.xlu0 %v1538, %s1543
    %v1545 = vpop.permute.xlu0 %1544
    %s1547 = sor.u32 256, 16
    %1548 = vbcast.lane.b32.xlu0 %v1538, %s1547
    %v1549 = vpop.permute.xlu0 %1548
    %s1551 = sor.u32 256, 24
    %1552 = vbcast.lane.b32.xlu0 %v1538, %s1551
    %v1553 = vpop.permute.xlu0 %1552
    %v1554 = vlaneseq
    %v1555 = vshrl.u32 %v1554, 7
    %v1556 = vsub.s32 0, %v1555
    %v1557 = vrot.slane %v28, %v1556
    %1559 = vbcast.lane.b32.xlu0 %v1557, 256
    %v1560 = vpop.permute.xlu0 %1559
    %s1562 = sor.u32 256, 8
    %1563 = vbcast.lane.b32.xlu0 %v1557, %s1562
    %v1564 = vpop.permute.xlu0 %1563
    %s1566 = sor.u32 256, 16
    %1567 = vbcast.lane.b32.xlu0 %v1557, %s1566
    %v1568 = vpop.permute.xlu0 %1567
    %s1570 = sor.u32 256, 24
    %1571 = vbcast.lane.b32.xlu0 %v1557, %s1570
    %v1572 = vpop.permute.xlu0 %1571
    %v1573 = vlaneseq
    %v1574 = vshrl.u32 %v1573, 7
    %v1575 = vsub.s32 1, %v1574
    %v1576 = vrot.slane %v28, %v1575
    %1578 = vbcast.lane.b32.xlu0 %v1576, 256
    %v1579 = vpop.permute.xlu0 %1578
    %s1581 = sor.u32 256, 8
    %1582 = vbcast.lane.b32.xlu0 %v1576, %s1581
    %v1583 = vpop.permute.xlu0 %1582
    %s1585 = sor.u32 256, 16
    %1586 = vbcast.lane.b32.xlu0 %v1576, %s1585
    %v1587 = vpop.permute.xlu0 %1586
    %s1589 = sor.u32 256, 24
    %1590 = vbcast.lane.b32.xlu0 %v1576, %s1589
    %v1591 = vpop.permute.xlu0 %1590
    %v1592 = vlaneseq
    %v1593 = vshrl.u32 %v1592, 7
    %v1594 = vsub.s32 2, %v1593
    %v1595 = vrot.slane %v28, %v1594
    %1597 = vbcast.lane.b32.xlu0 %v1595, 256
    %v1598 = vpop.permute.xlu0 %1597
    %s1600 = sor.u32 256, 8
    %1601 = vbcast.lane.b32.xlu0 %v1595, %s1600
    %v1602 = vpop.permute.xlu0 %1601
    %s1604 = sor.u32 256, 16
    %1605 = vbcast.lane.b32.xlu0 %v1595, %s1604
    %v1606 = vpop.permute.xlu0 %1605
    %s1608 = sor.u32 256, 24
    %1609 = vbcast.lane.b32.xlu0 %v1595, %s1608
    %v1610 = vpop.permute.xlu0 %1609
    %v1611 = vlaneseq
    %v1612 = vshrl.u32 %v1611, 7
    %v1613 = vsub.s32 3, %v1612
    %v1614 = vrot.slane %v28, %v1613
    %1616 = vbcast.lane.b32.xlu0 %v1614, 256
    %v1617 = vpop.permute.xlu0 %1616
    %s1619 = sor.u32 256, 8
    %1620 = vbcast.lane.b32.xlu0 %v1614, %s1619
    %v1621 = vpop.permute.xlu0 %1620
    %s1623 = sor.u32 256, 16
    %1624 = vbcast.lane.b32.xlu0 %v1614, %s1623
    %v1625 = vpop.permute.xlu0 %1624
    %s1627 = sor.u32 256, 24
    %1628 = vbcast.lane.b32.xlu0 %v1614, %s1627
    %v1629 = vpop.permute.xlu0 %1628
    %v1630 = vlaneseq
    %v1631 = vshrl.u32 %v1630, 7
    %v1632 = vsub.s32 4, %v1631
    %v1633 = vrot.slane %v28, %v1632
    %1635 = vbcast.lane.b32.xlu0 %v1633, 256
    %v1636 = vpop.permute.xlu0 %1635
    %s1638 = sor.u32 256, 8
    %1639 = vbcast.lane.b32.xlu0 %v1633, %s1638
    %v1640 = vpop.permute.xlu0 %1639
    %s1642 = sor.u32 256, 16
    %1643 = vbcast.lane.b32.xlu0 %v1633, %s1642
    %v1644 = vpop.permute.xlu0 %1643
    %s1646 = sor.u32 256, 24
    %1647 = vbcast.lane.b32.xlu0 %v1633, %s1646
    %v1648 = vpop.permute.xlu0 %1647
    %v1649 = vlaneseq
    %v1650 = vshrl.u32 %v1649, 7
    %v1651 = vsub.s32 5, %v1650
    %v1652 = vrot.slane %v28, %v1651
    %1654 = vbcast.lane.b32.xlu0 %v1652, 256
    %v1655 = vpop.permute.xlu0 %1654
    %s1657 = sor.u32 256, 8
    %1658 = vbcast.lane.b32.xlu0 %v1652, %s1657
    %v1659 = vpop.permute.xlu0 %1658
    %s1661 = sor.u32 256, 16
    %1662 = vbcast.lane.b32.xlu0 %v1652, %s1661
    %v1663 = vpop.permute.xlu0 %1662
    %s1665 = sor.u32 256, 24
    %1666 = vbcast.lane.b32.xlu0 %v1652, %s1665
    %v1667 = vpop.permute.xlu0 %1666
    %v1668 = vlaneseq
    %v1669 = vshrl.u32 %v1668, 7
    %v1670 = vsub.s32 6, %v1669
    %v1671 = vrot.slane %v28, %v1670
    %1673 = vbcast.lane.b32.xlu0 %v1671, 256
    %v1674 = vpop.permute.xlu0 %1673
    %s1676 = sor.u32 256, 8
    %1677 = vbcast.lane.b32.xlu0 %v1671, %s1676
    %v1678 = vpop.permute.xlu0 %1677
    %s1680 = sor.u32 256, 16
    %1681 = vbcast.lane.b32.xlu0 %v1671, %s1680
    %v1682 = vpop.permute.xlu0 %1681
    %s1684 = sor.u32 256, 24
    %1685 = vbcast.lane.b32.xlu0 %v1671, %s1684
    %v1686 = vpop.permute.xlu0 %1685
    %v1687 = vlaneseq
    %v1688 = vshrl.u32 %v1687, 7
    %v1689 = vsub.s32 7, %v1688
    %v1690 = vrot.slane %v28, %v1689
    %1692 = vbcast.lane.b32.xlu0 %v1690, 256
    %v1693 = vpop.permute.xlu0 %1692
    %s1695 = sor.u32 256, 8
    %1696 = vbcast.lane.b32.xlu0 %v1690, %s1695
    %v1697 = vpop.permute.xlu0 %1696
    %s1699 = sor.u32 256, 16
    %1700 = vbcast.lane.b32.xlu0 %v1690, %s1699
    %v1701 = vpop.permute.xlu0 %1700
    %s1703 = sor.u32 256, 24
    %1704 = vbcast.lane.b32.xlu0 %v1690, %s1703
    %v1705 = vpop.permute.xlu0 %1704
    %v1706 = vlaneseq
    %v1707 = vshrl.u32 %v1706, 7
    %v1708 = vsub.s32 0, %v1707
    %v1709 = vrot.slane %v29, %v1708
    %1711 = vbcast.lane.b32.xlu0 %v1709, 256
    %v1712 = vpop.permute.xlu0 %1711
    %s1714 = sor.u32 256, 8
    %1715 = vbcast.lane.b32.xlu0 %v1709, %s1714
    %v1716 = vpop.permute.xlu0 %1715
    %s1718 = sor.u32 256, 16
    %1719 = vbcast.lane.b32.xlu0 %v1709, %s1718
    %v1720 = vpop.permute.xlu0 %1719
    %s1722 = sor.u32 256, 24
    %1723 = vbcast.lane.b32.xlu0 %v1709, %s1722
    %v1724 = vpop.permute.xlu0 %1723
    %v1725 = vlaneseq
    %v1726 = vshrl.u32 %v1725, 7
    %v1727 = vsub.s32 1, %v1726
    %v1728 = vrot.slane %v29, %v1727
    %1730 = vbcast.lane.b32.xlu0 %v1728, 256
    %v1731 = vpop.permute.xlu0 %1730
    %s1733 = sor.u32 256, 8
    %1734 = vbcast.lane.b32.xlu0 %v1728, %s1733
    %v1735 = vpop.permute.xlu0 %1734
    %s1737 = sor.u32 256, 16
    %1738 = vbcast.lane.b32.xlu0 %v1728, %s1737
    %v1739 = vpop.permute.xlu0 %1738
    %s1741 = sor.u32 256, 24
    %1742 = vbcast.lane.b32.xlu0 %v1728, %s1741
    %v1743 = vpop.permute.xlu0 %1742
    %v1744 = vlaneseq
    %v1745 = vshrl.u32 %v1744, 7
    %v1746 = vsub.s32 2, %v1745
    %v1747 = vrot.slane %v29, %v1746
    %1749 = vbcast.lane.b32.xlu0 %v1747, 256
    %v1750 = vpop.permute.xlu0 %1749
    %s1752 = sor.u32 256, 8
    %1753 = vbcast.lane.b32.xlu0 %v1747, %s1752
    %v1754 = vpop.permute.xlu0 %1753
    %s1756 = sor.u32 256, 16
    %1757 = vbcast.lane.b32.xlu0 %v1747, %s1756
    %v1758 = vpop.permute.xlu0 %1757
    %s1760 = sor.u32 256, 24
    %1761 = vbcast.lane.b32.xlu0 %v1747, %s1760
    %v1762 = vpop.permute.xlu0 %1761
    %v1763 = vlaneseq
    %v1764 = vshrl.u32 %v1763, 7
    %v1765 = vsub.s32 3, %v1764
    %v1766 = vrot.slane %v29, %v1765
    %1768 = vbcast.lane.b32.xlu0 %v1766, 256
    %v1769 = vpop.permute.xlu0 %1768
    %s1771 = sor.u32 256, 8
    %1772 = vbcast.lane.b32.xlu0 %v1766, %s1771
    %v1773 = vpop.permute.xlu0 %1772
    %s1775 = sor.u32 256, 16
    %1776 = vbcast.lane.b32.xlu0 %v1766, %s1775
    %v1777 = vpop.permute.xlu0 %1776
    %s1779 = sor.u32 256, 24
    %1780 = vbcast.lane.b32.xlu0 %v1766, %s1779
    %v1781 = vpop.permute.xlu0 %1780
    %v1782 = vlaneseq
    %v1783 = vshrl.u32 %v1782, 7
    %v1784 = vsub.s32 4, %v1783
    %v1785 = vrot.slane %v29, %v1784
    %1787 = vbcast.lane.b32.xlu0 %v1785, 256
    %v1788 = vpop.permute.xlu0 %1787
    %s1790 = sor.u32 256, 8
    %1791 = vbcast.lane.b32.xlu0 %v1785, %s1790
    %v1792 = vpop.permute.xlu0 %1791
    %s1794 = sor.u32 256, 16
    %1795 = vbcast.lane.b32.xlu0 %v1785, %s1794
    %v1796 = vpop.permute.xlu0 %1795
    %s1798 = sor.u32 256, 24
    %1799 = vbcast.lane.b32.xlu0 %v1785, %s1798
    %v1800 = vpop.permute.xlu0 %1799
    %v1801 = vlaneseq
    %v1802 = vshrl.u32 %v1801, 7
    %v1803 = vsub.s32 5, %v1802
    %v1804 = vrot.slane %v29, %v1803
    %1806 = vbcast.lane.b32.xlu0 %v1804, 256
    %v1807 = vpop.permute.xlu0 %1806
    %s1809 = sor.u32 256, 8
    %1810 = vbcast.lane.b32.xlu0 %v1804, %s1809
    %v1811 = vpop.permute.xlu0 %1810
    %s1813 = sor.u32 256, 16
    %1814 = vbcast.lane.b32.xlu0 %v1804, %s1813
    %v1815 = vpop.permute.xlu0 %1814
    %s1817 = sor.u32 256, 24
    %1818 = vbcast.lane.b32.xlu0 %v1804, %s1817
    %v1819 = vpop.permute.xlu0 %1818
    %v1820 = vlaneseq
    %v1821 = vshrl.u32 %v1820, 7
    %v1822 = vsub.s32 6, %v1821
    %v1823 = vrot.slane %v29, %v1822
    %1825 = vbcast.lane.b32.xlu0 %v1823, 256
    %v1826 = vpop.permute.xlu0 %1825
    %s1828 = sor.u32 256, 8
    %1829 = vbcast.lane.b32.xlu0 %v1823, %s1828
    %v1830 = vpop.permute.xlu0 %1829
    %s1832 = sor.u32 256, 16
    %1833 = vbcast.lane.b32.xlu0 %v1823, %s1832
    %v1834 = vpop.permute.xlu0 %1833
    %s1836 = sor.u32 256, 24
    %1837 = vbcast.lane.b32.xlu0 %v1823, %s1836
    %v1838 = vpop.permute.xlu0 %1837
    %v1839 = vlaneseq
    %v1840 = vshrl.u32 %v1839, 7
    %v1841 = vsub.s32 7, %v1840
    %v1842 = vrot.slane %v29, %v1841
    %1844 = vbcast.lane.b32.xlu0 %v1842, 256
    %v1845 = vpop.permute.xlu0 %1844
    %s1847 = sor.u32 256, 8
    %1848 = vbcast.lane.b32.xlu0 %v1842, %s1847
    %v1849 = vpop.permute.xlu0 %1848
    %s1851 = sor.u32 256, 16
    %1852 = vbcast.lane.b32.xlu0 %v1842, %s1851
    %v1853 = vpop.permute.xlu0 %1852
    %s1855 = sor.u32 256, 24
    %1856 = vbcast.lane.b32.xlu0 %v1842, %s1855
    %v1857 = vpop.permute.xlu0 %1856
    %v1858 = vlaneseq
    %v1859 = vshrl.u32 %v1858, 7
    %v1860 = vsub.s32 0, %v1859
    %v1861 = vrot.slane %v30, %v1860
    %1863 = vbcast.lane.b32.xlu0 %v1861, 256
    %v1864 = vpop.permute.xlu0 %1863
    %s1866 = sor.u32 256, 8
    %1867 = vbcast.lane.b32.xlu0 %v1861, %s1866
    %v1868 = vpop.permute.xlu0 %1867
    %s1870 = sor.u32 256, 16
    %1871 = vbcast.lane.b32.xlu0 %v1861, %s1870
    %v1872 = vpop.permute.xlu0 %1871
    %s1874 = sor.u32 256, 24
    %1875 = vbcast.lane.b32.xlu0 %v1861, %s1874
    %v1876 = vpop.permute.xlu0 %1875
    %v1877 = vlaneseq
    %v1878 = vshrl.u32 %v1877, 7
    %v1879 = vsub.s32 1, %v1878
    %v1880 = vrot.slane %v30, %v1879
    %1882 = vbcast.lane.b32.xlu0 %v1880, 256
    %v1883 = vpop.permute.xlu0 %1882
    %s1885 = sor.u32 256, 8
    %1886 = vbcast.lane.b32.xlu0 %v1880, %s1885
    %v1887 = vpop.permute.xlu0 %1886
    %s1889 = sor.u32 256, 16
    %1890 = vbcast.lane.b32.xlu0 %v1880, %s1889
    %v1891 = vpop.permute.xlu0 %1890
    %s1893 = sor.u32 256, 24
    %1894 = vbcast.lane.b32.xlu0 %v1880, %s1893
    %v1895 = vpop.permute.xlu0 %1894
    %v1896 = vlaneseq
    %v1897 = vshrl.u32 %v1896, 7
    %v1898 = vsub.s32 2, %v1897
    %v1899 = vrot.slane %v30, %v1898
    %1901 = vbcast.lane.b32.xlu0 %v1899, 256
    %v1902 = vpop.permute.xlu0 %1901
    %s1904 = sor.u32 256, 8
    %1905 = vbcast.lane.b32.xlu0 %v1899, %s1904
    %v1906 = vpop.permute.xlu0 %1905
    %s1908 = sor.u32 256, 16
    %1909 = vbcast.lane.b32.xlu0 %v1899, %s1908
    %v1910 = vpop.permute.xlu0 %1909
    %s1912 = sor.u32 256, 24
    %1913 = vbcast.lane.b32.xlu0 %v1899, %s1912
    %v1914 = vpop.permute.xlu0 %1913
    %v1915 = vlaneseq
    %v1916 = vshrl.u32 %v1915, 7
    %v1917 = vsub.s32 3, %v1916
    %v1918 = vrot.slane %v30, %v1917
    %1920 = vbcast.lane.b32.xlu0 %v1918, 256
    %v1921 = vpop.permute.xlu0 %1920
    %s1923 = sor.u32 256, 8
    %1924 = vbcast.lane.b32.xlu0 %v1918, %s1923
    %v1925 = vpop.permute.xlu0 %1924
    %s1927 = sor.u32 256, 16
    %1928 = vbcast.lane.b32.xlu0 %v1918, %s1927
    %v1929 = vpop.permute.xlu0 %1928
    %s1931 = sor.u32 256, 24
    %1932 = vbcast.lane.b32.xlu0 %v1918, %s1931
    %v1933 = vpop.permute.xlu0 %1932
    %v1934 = vlaneseq
    %v1935 = vshrl.u32 %v1934, 7
    %v1936 = vsub.s32 4, %v1935
    %v1937 = vrot.slane %v30, %v1936
    %1939 = vbcast.lane.b32.xlu0 %v1937, 256
    %v1940 = vpop.permute.xlu0 %1939
    %s1942 = sor.u32 256, 8
    %1943 = vbcast.lane.b32.xlu0 %v1937, %s1942
    %v1944 = vpop.permute.xlu0 %1943
    %s1946 = sor.u32 256, 16
    %1947 = vbcast.lane.b32.xlu0 %v1937, %s1946
    %v1948 = vpop.permute.xlu0 %1947
    %s1950 = sor.u32 256, 24
    %1951 = vbcast.lane.b32.xlu0 %v1937, %s1950
    %v1952 = vpop.permute.xlu0 %1951
    %v1953 = vlaneseq
    %v1954 = vshrl.u32 %v1953, 7
    %v1955 = vsub.s32 5, %v1954
    %v1956 = vrot.slane %v30, %v1955
    %1958 = vbcast.lane.b32.xlu0 %v1956, 256
    %v1959 = vpop.permute.xlu0 %1958
    %s1961 = sor.u32 256, 8
    %1962 = vbcast.lane.b32.xlu0 %v1956, %s1961
    %v1963 = vpop.permute.xlu0 %1962
    %s1965 = sor.u32 256, 16
    %1966 = vbcast.lane.b32.xlu0 %v1956, %s1965
    %v1967 = vpop.permute.xlu0 %1966
    %s1969 = sor.u32 256, 24
    %1970 = vbcast.lane.b32.xlu0 %v1956, %s1969
    %v1971 = vpop.permute.xlu0 %1970
    %v1972 = vlaneseq
    %v1973 = vshrl.u32 %v1972, 7
    %v1974 = vsub.s32 6, %v1973
    %v1975 = vrot.slane %v30, %v1974
    %1977 = vbcast.lane.b32.xlu0 %v1975, 256
    %v1978 = vpop.permute.xlu0 %1977
    %s1980 = sor.u32 256, 8
    %1981 = vbcast.lane.b32.xlu0 %v1975, %s1980
    %v1982 = vpop.permute.xlu0 %1981
    %s1984 = sor.u32 256, 16
    %1985 = vbcast.lane.b32.xlu0 %v1975, %s1984
    %v1986 = vpop.permute.xlu0 %1985
    %s1988 = sor.u32 256, 24
    %1989 = vbcast.lane.b32.xlu0 %v1975, %s1988
    %v1990 = vpop.permute.xlu0 %1989
    %v1991 = vlaneseq
    %v1992 = vshrl.u32 %v1991, 7
    %v1993 = vsub.s32 7, %v1992
    %v1994 = vrot.slane %v30, %v1993
    %1996 = vbcast.lane.b32.xlu0 %v1994, 256
    %v1997 = vpop.permute.xlu0 %1996
    %s1999 = sor.u32 256, 8
    %2000 = vbcast.lane.b32.xlu0 %v1994, %s1999
    %v2001 = vpop.permute.xlu0 %2000
    %s2003 = sor.u32 256, 16
    %2004 = vbcast.lane.b32.xlu0 %v1994, %s2003
    %v2005 = vpop.permute.xlu0 %2004
    %s2007 = sor.u32 256, 24
    %2008 = vbcast.lane.b32.xlu0 %v1994, %s2007
    %v2009 = vpop.permute.xlu0 %2008
    %v2010 = vlaneseq
    %v2011 = vshrl.u32 %v2010, 7
    %v2012 = vsub.s32 0, %v2011
    %v2013 = vrot.slane %v31, %v2012
    %2015 = vbcast.lane.b32.xlu0 %v2013, 256
    %v2016 = vpop.permute.xlu0 %2015
    %s2018 = sor.u32 256, 8
    %2019 = vbcast.lane.b32.xlu0 %v2013, %s2018
    %v2020 = vpop.permute.xlu0 %2019
    %s2022 = sor.u32 256, 16
    %2023 = vbcast.lane.b32.xlu0 %v2013, %s2022
    %v2024 = vpop.permute.xlu0 %2023
    %s2026 = sor.u32 256, 24
    %2027 = vbcast.lane.b32.xlu0 %v2013, %s2026
    %v2028 = vpop.permute.xlu0 %2027
    %v2029 = vlaneseq
    %v2030 = vshrl.u32 %v2029, 7
    %v2031 = vsub.s32 1, %v2030
    %v2032 = vrot.slane %v31, %v2031
    %2034 = vbcast.lane.b32.xlu0 %v2032, 256
    %v2035 = vpop.permute.xlu0 %2034
    %s2037 = sor.u32 256, 8
    %2038 = vbcast.lane.b32.xlu0 %v2032, %s2037
    %v2039 = vpop.permute.xlu0 %2038
    %s2041 = sor.u32 256, 16
    %2042 = vbcast.lane.b32.xlu0 %v2032, %s2041
    %v2043 = vpop.permute.xlu0 %2042
    %s2045 = sor.u32 256, 24
    %2046 = vbcast.lane.b32.xlu0 %v2032, %s2045
    %v2047 = vpop.permute.xlu0 %2046
    %v2048 = vlaneseq
    %v2049 = vshrl.u32 %v2048, 7
    %v2050 = vsub.s32 2, %v2049
    %v2051 = vrot.slane %v31, %v2050
    %2053 = vbcast.lane.b32.xlu0 %v2051, 256
    %v2054 = vpop.permute.xlu0 %2053
    %s2056 = sor.u32 256, 8
    %2057 = vbcast.lane.b32.xlu0 %v2051, %s2056
    %v2058 = vpop.permute.xlu0 %2057
    %s2060 = sor.u32 256, 16
    %2061 = vbcast.lane.b32.xlu0 %v2051, %s2060
    %v2062 = vpop.permute.xlu0 %2061
    %s2064 = sor.u32 256, 24
    %2065 = vbcast.lane.b32.xlu0 %v2051, %s2064
    %v2066 = vpop.permute.xlu0 %2065
    %v2067 = vlaneseq
    %v2068 = vshrl.u32 %v2067, 7
    %v2069 = vsub.s32 3, %v2068
    %v2070 = vrot.slane %v31, %v2069
    %2072 = vbcast.lane.b32.xlu0 %v2070, 256
    %v2073 = vpop.permute.xlu0 %2072
    %s2075 = sor.u32 256, 8
    %2076 = vbcast.lane.b32.xlu0 %v2070, %s2075
    %v2077 = vpop.permute.xlu0 %2076
    %s2079 = sor.u32 256, 16
    %2080 = vbcast.lane.b32.xlu0 %v2070, %s2079
    %v2081 = vpop.permute.xlu0 %2080
    %s2083 = sor.u32 256, 24
    %2084 = vbcast.lane.b32.xlu0 %v2070, %s2083
    %v2085 = vpop.permute.xlu0 %2084
    %v2086 = vlaneseq
    %v2087 = vshrl.u32 %v2086, 7
    %v2088 = vsub.s32 4, %v2087
    %v2089 = vrot.slane %v31, %v2088
    %2091 = vbcast.lane.b32.xlu0 %v2089, 256
    %v2092 = vpop.permute.xlu0 %2091
    %s2094 = sor.u32 256, 8
    %2095 = vbcast.lane.b32.xlu0 %v2089, %s2094
    %v2096 = vpop.permute.xlu0 %2095
    %s2098 = sor.u32 256, 16
    %2099 = vbcast.lane.b32.xlu0 %v2089, %s2098
    %v2100 = vpop.permute.xlu0 %2099
    %s2102 = sor.u32 256, 24
    %2103 = vbcast.lane.b32.xlu0 %v2089, %s2102
    %v2104 = vpop.permute.xlu0 %2103
    %v2105 = vlaneseq
    %v2106 = vshrl.u32 %v2105, 7
    %v2107 = vsub.s32 5, %v2106
    %v2108 = vrot.slane %v31, %v2107
    %2110 = vbcast.lane.b32.xlu0 %v2108, 256
    %v2111 = vpop.permute.xlu0 %2110
    %s2113 = sor.u32 256, 8
    %2114 = vbcast.lane.b32.xlu0 %v2108, %s2113
    %v2115 = vpop.permute.xlu0 %2114
    %s2117 = sor.u32 256, 16
    %2118 = vbcast.lane.b32.xlu0 %v2108, %s2117
    %v2119 = vpop.permute.xlu0 %2118
    %s2121 = sor.u32 256, 24
    %2122 = vbcast.lane.b32.xlu0 %v2108, %s2121
    %v2123 = vpop.permute.xlu0 %2122
    %v2124 = vlaneseq
    %v2125 = vshrl.u32 %v2124, 7
    %v2126 = vsub.s32 6, %v2125
    %v2127 = vrot.slane %v31, %v2126
    %2129 = vbcast.lane.b32.xlu0 %v2127, 256
    %v2130 = vpop.permute.xlu0 %2129
    %s2132 = sor.u32 256, 8
    %2133 = vbcast.lane.b32.xlu0 %v2127, %s2132
    %v2134 = vpop.permute.xlu0 %2133
    %s2136 = sor.u32 256, 16
    %2137 = vbcast.lane.b32.xlu0 %v2127, %s2136
    %v2138 = vpop.permute.xlu0 %2137
    %s2140 = sor.u32 256, 24
    %2141 = vbcast.lane.b32.xlu0 %v2127, %s2140
    %v2142 = vpop.permute.xlu0 %2141
    %v2143 = vlaneseq
    %v2144 = vshrl.u32 %v2143, 7
    %v2145 = vsub.s32 7, %v2144
    %v2146 = vrot.slane %v31, %v2145
    %2148 = vbcast.lane.b32.xlu0 %v2146, 256
    %v2149 = vpop.permute.xlu0 %2148
    %s2151 = sor.u32 256, 8
    %2152 = vbcast.lane.b32.xlu0 %v2146, %s2151
    %v2153 = vpop.permute.xlu0 %2152
    %s2155 = sor.u32 256, 16
    %2156 = vbcast.lane.b32.xlu0 %v2146, %s2155
    %v2157 = vpop.permute.xlu0 %2156
    %s2159 = sor.u32 256, 24
    %2160 = vbcast.lane.b32.xlu0 %v2146, %s2159
    %v2161 = vpop.permute.xlu0 %2160
    %v2162 = vlaneseq
    %v2163 = vshrl.u32 %v2162, 7
    %v2164 = vsub.s32 0, %v2163
    %v2165 = vrot.slane %v32, %v2164
    %2167 = vbcast.lane.b32.xlu0 %v2165, 256
    %v2168 = vpop.permute.xlu0 %2167
    %s2170 = sor.u32 256, 8
    %2171 = vbcast.lane.b32.xlu0 %v2165, %s2170
    %v2172 = vpop.permute.xlu0 %2171
    %s2174 = sor.u32 256, 16
    %2175 = vbcast.lane.b32.xlu0 %v2165, %s2174
    %v2176 = vpop.permute.xlu0 %2175
    %s2178 = sor.u32 256, 24
    %2179 = vbcast.lane.b32.xlu0 %v2165, %s2178
    %v2180 = vpop.permute.xlu0 %2179
    %v2181 = vlaneseq
    %v2182 = vshrl.u32 %v2181, 7
    %v2183 = vsub.s32 1, %v2182
    %v2184 = vrot.slane %v32, %v2183
    %2186 = vbcast.lane.b32.xlu0 %v2184, 256
    %v2187 = vpop.permute.xlu0 %2186
    %s2189 = sor.u32 256, 8
    %2190 = vbcast.lane.b32.xlu0 %v2184, %s2189
    %v2191 = vpop.permute.xlu0 %2190
    %s2193 = sor.u32 256, 16
    %2194 = vbcast.lane.b32.xlu0 %v2184, %s2193
    %v2195 = vpop.permute.xlu0 %2194
    %s2197 = sor.u32 256, 24
    %2198 = vbcast.lane.b32.xlu0 %v2184, %s2197
    %v2199 = vpop.permute.xlu0 %2198
    %v2200 = vlaneseq
    %v2201 = vshrl.u32 %v2200, 7
    %v2202 = vsub.s32 2, %v2201
    %v2203 = vrot.slane %v32, %v2202
    %2205 = vbcast.lane.b32.xlu0 %v2203, 256
    %v2206 = vpop.permute.xlu0 %2205
    %s2208 = sor.u32 256, 8
    %2209 = vbcast.lane.b32.xlu0 %v2203, %s2208
    %v2210 = vpop.permute.xlu0 %2209
    %s2212 = sor.u32 256, 16
    %2213 = vbcast.lane.b32.xlu0 %v2203, %s2212
    %v2214 = vpop.permute.xlu0 %2213
    %s2216 = sor.u32 256, 24
    %2217 = vbcast.lane.b32.xlu0 %v2203, %s2216
    %v2218 = vpop.permute.xlu0 %2217
    %v2219 = vlaneseq
    %v2220 = vshrl.u32 %v2219, 7
    %v2221 = vsub.s32 3, %v2220
    %v2222 = vrot.slane %v32, %v2221
    %2224 = vbcast.lane.b32.xlu0 %v2222, 256
    %v2225 = vpop.permute.xlu0 %2224
    %s2227 = sor.u32 256, 8
    %2228 = vbcast.lane.b32.xlu0 %v2222, %s2227
    %v2229 = vpop.permute.xlu0 %2228
    %s2231 = sor.u32 256, 16
    %2232 = vbcast.lane.b32.xlu0 %v2222, %s2231
    %v2233 = vpop.permute.xlu0 %2232
    %s2235 = sor.u32 256, 24
    %2236 = vbcast.lane.b32.xlu0 %v2222, %s2235
    %v2237 = vpop.permute.xlu0 %2236
    %v2238 = vlaneseq
    %v2239 = vshrl.u32 %v2238, 7
    %v2240 = vsub.s32 4, %v2239
    %v2241 = vrot.slane %v32, %v2240
    %2243 = vbcast.lane.b32.xlu0 %v2241, 256
    %v2244 = vpop.permute.xlu0 %2243
    %s2246 = sor.u32 256, 8
    %2247 = vbcast.lane.b32.xlu0 %v2241, %s2246
    %v2248 = vpop.permute.xlu0 %2247
    %s2250 = sor.u32 256, 16
    %2251 = vbcast.lane.b32.xlu0 %v2241, %s2250
    %v2252 = vpop.permute.xlu0 %2251
    %s2254 = sor.u32 256, 24
    %2255 = vbcast.lane.b32.xlu0 %v2241, %s2254
    %v2256 = vpop.permute.xlu0 %2255
    %v2257 = vlaneseq
    %v2258 = vshrl.u32 %v2257, 7
    %v2259 = vsub.s32 5, %v2258
    %v2260 = vrot.slane %v32, %v2259
    %2262 = vbcast.lane.b32.xlu0 %v2260, 256
    %v2263 = vpop.permute.xlu0 %2262
    %s2265 = sor.u32 256, 8
    %2266 = vbcast.lane.b32.xlu0 %v2260, %s2265
    %v2267 = vpop.permute.xlu0 %2266
    %s2269 = sor.u32 256, 16
    %2270 = vbcast.lane.b32.xlu0 %v2260, %s2269
    %v2271 = vpop.permute.xlu0 %2270
    %s2273 = sor.u32 256, 24
    %2274 = vbcast.lane.b32.xlu0 %v2260, %s2273
    %v2275 = vpop.permute.xlu0 %2274
    %v2276 = vlaneseq
    %v2277 = vshrl.u32 %v2276, 7
    %v2278 = vsub.s32 6, %v2277
    %v2279 = vrot.slane %v32, %v2278
    %2281 = vbcast.lane.b32.xlu0 %v2279, 256
    %v2282 = vpop.permute.xlu0 %2281
    %s2284 = sor.u32 256, 8
    %2285 = vbcast.lane.b32.xlu0 %v2279, %s2284
    %v2286 = vpop.permute.xlu0 %2285
    %s2288 = sor.u32 256, 16
    %2289 = vbcast.lane.b32.xlu0 %v2279, %s2288
    %v2290 = vpop.permute.xlu0 %2289
    %s2292 = sor.u32 256, 24
    %2293 = vbcast.lane.b32.xlu0 %v2279, %s2292
    %v2294 = vpop.permute.xlu0 %2293
    %v2295 = vlaneseq
    %v2296 = vshrl.u32 %v2295, 7
    %v2297 = vsub.s32 7, %v2296
    %v2298 = vrot.slane %v32, %v2297
    %2300 = vbcast.lane.b32.xlu0 %v2298, 256
    %v2301 = vpop.permute.xlu0 %2300
    %s2303 = sor.u32 256, 8
    %2304 = vbcast.lane.b32.xlu0 %v2298, %s2303
    %v2305 = vpop.permute.xlu0 %2304
    %s2307 = sor.u32 256, 16
    %2308 = vbcast.lane.b32.xlu0 %v2298, %s2307
    %v2309 = vpop.permute.xlu0 %2308
    %s2311 = sor.u32 256, 24
    %2312 = vbcast.lane.b32.xlu0 %v2298, %s2311
    %v2313 = vpop.permute.xlu0 %2312
    %v2314 = vlaneseq
    %v2315 = vshrl.u32 %v2314, 7
    %v2316 = vsub.s32 0, %v2315
    %v2317 = vrot.slane %v33, %v2316
    %2319 = vbcast.lane.b32.xlu0 %v2317, 256
    %v2320 = vpop.permute.xlu0 %2319
    %s2322 = sor.u32 256, 8
    %2323 = vbcast.lane.b32.xlu0 %v2317, %s2322
    %v2324 = vpop.permute.xlu0 %2323
    %s2326 = sor.u32 256, 16
    %2327 = vbcast.lane.b32.xlu0 %v2317, %s2326
    %v2328 = vpop.permute.xlu0 %2327
    %s2330 = sor.u32 256, 24
    %2331 = vbcast.lane.b32.xlu0 %v2317, %s2330
    %v2332 = vpop.permute.xlu0 %2331
    %v2333 = vlaneseq
    %v2334 = vshrl.u32 %v2333, 7
    %v2335 = vsub.s32 1, %v2334
    %v2336 = vrot.slane %v33, %v2335
    %2338 = vbcast.lane.b32.xlu0 %v2336, 256
    %v2339 = vpop.permute.xlu0 %2338
    %s2341 = sor.u32 256, 8
    %2342 = vbcast.lane.b32.xlu0 %v2336, %s2341
    %v2343 = vpop.permute.xlu0 %2342
    %s2345 = sor.u32 256, 16
    %2346 = vbcast.lane.b32.xlu0 %v2336, %s2345
    %v2347 = vpop.permute.xlu0 %2346
    %s2349 = sor.u32 256, 24
    %2350 = vbcast.lane.b32.xlu0 %v2336, %s2349
    %v2351 = vpop.permute.xlu0 %2350
    %v2352 = vlaneseq
    %v2353 = vshrl.u32 %v2352, 7
    %v2354 = vsub.s32 2, %v2353
    %v2355 = vrot.slane %v33, %v2354
    %2357 = vbcast.lane.b32.xlu0 %v2355, 256
    %v2358 = vpop.permute.xlu0 %2357
    %s2360 = sor.u32 256, 8
    %2361 = vbcast.lane.b32.xlu0 %v2355, %s2360
    %v2362 = vpop.permute.xlu0 %2361
    %s2364 = sor.u32 256, 16
    %2365 = vbcast.lane.b32.xlu0 %v2355, %s2364
    %v2366 = vpop.permute.xlu0 %2365
    %s2368 = sor.u32 256, 24
    %2369 = vbcast.lane.b32.xlu0 %v2355, %s2368
    %v2370 = vpop.permute.xlu0 %2369
    %v2371 = vlaneseq
    %v2372 = vshrl.u32 %v2371, 7
    %v2373 = vsub.s32 3, %v2372
    %v2374 = vrot.slane %v33, %v2373
    %2376 = vbcast.lane.b32.xlu0 %v2374, 256
    %v2377 = vpop.permute.xlu0 %2376
    %s2379 = sor.u32 256, 8
    %2380 = vbcast.lane.b32.xlu0 %v2374, %s2379
    %v2381 = vpop.permute.xlu0 %2380
    %s2383 = sor.u32 256, 16
    %2384 = vbcast.lane.b32.xlu0 %v2374, %s2383
    %v2385 = vpop.permute.xlu0 %2384
    %s2387 = sor.u32 256, 24
    %2388 = vbcast.lane.b32.xlu0 %v2374, %s2387
    %v2389 = vpop.permute.xlu0 %2388
    %v2390 = vlaneseq
    %v2391 = vshrl.u32 %v2390, 7
    %v2392 = vsub.s32 4, %v2391
    %v2393 = vrot.slane %v33, %v2392
    %2395 = vbcast.lane.b32.xlu0 %v2393, 256
    %v2396 = vpop.permute.xlu0 %2395
    %s2398 = sor.u32 256, 8
    %2399 = vbcast.lane.b32.xlu0 %v2393, %s2398
    %v2400 = vpop.permute.xlu0 %2399
    %s2402 = sor.u32 256, 16
    %2403 = vbcast.lane.b32.xlu0 %v2393, %s2402
    %v2404 = vpop.permute.xlu0 %2403
    %s2406 = sor.u32 256, 24
    %2407 = vbcast.lane.b32.xlu0 %v2393, %s2406
    %v2408 = vpop.permute.xlu0 %2407
    %v2409 = vlaneseq
    %v2410 = vshrl.u32 %v2409, 7
    %v2411 = vsub.s32 5, %v2410
    %v2412 = vrot.slane %v33, %v2411
    %2414 = vbcast.lane.b32.xlu0 %v2412, 256
    %v2415 = vpop.permute.xlu0 %2414
    %s2417 = sor.u32 256, 8
    %2418 = vbcast.lane.b32.xlu0 %v2412, %s2417
    %v2419 = vpop.permute.xlu0 %2418
    %s2421 = sor.u32 256, 16
    %2422 = vbcast.lane.b32.xlu0 %v2412, %s2421
    %v2423 = vpop.permute.xlu0 %2422
    %s2425 = sor.u32 256, 24
    %2426 = vbcast.lane.b32.xlu0 %v2412, %s2425
    %v2427 = vpop.permute.xlu0 %2426
    %v2428 = vlaneseq
    %v2429 = vshrl.u32 %v2428, 7
    %v2430 = vsub.s32 6, %v2429
    %v2431 = vrot.slane %v33, %v2430
    %2433 = vbcast.lane.b32.xlu0 %v2431, 256
    %v2434 = vpop.permute.xlu0 %2433
    %s2436 = sor.u32 256, 8
    %2437 = vbcast.lane.b32.xlu0 %v2431, %s2436
    %v2438 = vpop.permute.xlu0 %2437
    %s2440 = sor.u32 256, 16
    %2441 = vbcast.lane.b32.xlu0 %v2431, %s2440
    %v2442 = vpop.permute.xlu0 %2441
    %s2444 = sor.u32 256, 24
    %2445 = vbcast.lane.b32.xlu0 %v2431, %s2444
    %v2446 = vpop.permute.xlu0 %2445
    %v2447 = vlaneseq
    %v2448 = vshrl.u32 %v2447, 7
    %v2449 = vsub.s32 7, %v2448
    %v2450 = vrot.slane %v33, %v2449
    %2452 = vbcast.lane.b32.xlu0 %v2450, 256
    %v2453 = vpop.permute.xlu0 %2452
    %s2455 = sor.u32 256, 8
    %2456 = vbcast.lane.b32.xlu0 %v2450, %s2455
    %v2457 = vpop.permute.xlu0 %2456
    %s2459 = sor.u32 256, 16
    %2460 = vbcast.lane.b32.xlu0 %v2450, %s2459
    %v2461 = vpop.permute.xlu0 %2460
    %s2463 = sor.u32 256, 24
    %2464 = vbcast.lane.b32.xlu0 %v2450, %s2463
    %v2465 = vpop.permute.xlu0 %2464
    %v2466 = vld [vmem:[%s1] sm:$0xff]
    %v2467 = vld [vmem:[%s1 + $0x8] sm:$0xff]
    %v2468 = vld [vmem:[%s1 + $0x10] sm:$0xff]
    %v2469 = vld [vmem:[%s1 + $0x18] sm:$0xff]
    %v2470 = vadd.f32 %v40, %v2466
    %v2471 = vadd.f32 %v44, %v2467
    %v2472 = vadd.f32 %v48, %v2468
    %v2473 = vadd.f32 %v52, %v2469
    %v2474 = vadd.f32 %v59, %v2466
    %v2475 = vadd.f32 %v63, %v2467
    %v2476 = vadd.f32 %v67, %v2468
    %v2477 = vadd.f32 %v71, %v2469
    %v2478 = vadd.f32 %v78, %v2466
    %v2479 = vadd.f32 %v82, %v2467
    %v2480 = vadd.f32 %v86, %v2468
    %v2481 = vadd.f32 %v90, %v2469
    %v2482 = vadd.f32 %v97, %v2466
    %v2483 = vadd.f32 %v101, %v2467
    %v2484 = vadd.f32 %v105, %v2468
    %v2485 = vadd.f32 %v109, %v2469
    %v2486 = vadd.f32 %v116, %v2466
    %v2487 = vadd.f32 %v120, %v2467
    %v2488 = vadd.f32 %v124, %v2468
    %v2489 = vadd.f32 %v128, %v2469
    %v2490 = vadd.f32 %v135, %v2466
    %v2491 = vadd.f32 %v139, %v2467
    %v2492 = vadd.f32 %v143, %v2468
    %v2493 = vadd.f32 %v147, %v2469
    %v2494 = vadd.f32 %v154, %v2466
    %v2495 = vadd.f32 %v158, %v2467
    %v2496 = vadd.f32 %v162, %v2468
    %v2497 = vadd.f32 %v166, %v2469
    %v2498 = vadd.f32 %v173, %v2466
    %v2499 = vadd.f32 %v177, %v2467
    %v2500 = vadd.f32 %v181, %v2468
    %v2501 = vadd.f32 %v185, %v2469
    %v2502 = vadd.f32 %v192, %v2466
    %v2503 = vadd.f32 %v196, %v2467
    %v2504 = vadd.f32 %v200, %v2468
    %v2505 = vadd.f32 %v204, %v2469
    %v2506 = vadd.f32 %v211, %v2466
    %v2507 = vadd.f32 %v215, %v2467
    %v2508 = vadd.f32 %v219, %v2468
    %v2509 = vadd.f32 %v223, %v2469
    %v2510 = vadd.f32 %v230, %v2466
    %v2511 = vadd.f32 %v234, %v2467
    %v2512 = vadd.f32 %v238, %v2468
    %v2513 = vadd.f32 %v242, %v2469
    %v2514 = vadd.f32 %v249, %v2466
    %v2515 = vadd.f32 %v253, %v2467
    %v2516 = vadd.f32 %v257, %v2468
    %v2517 = vadd.f32 %v261, %v2469
    %v2518 = vadd.f32 %v268, %v2466
    %v2519 = vadd.f32 %v272, %v2467
    %v2520 = vadd.f32 %v276, %v2468
    %v2521 = vadd.f32 %v280, %v2469
    %v2522 = vadd.f32 %v287, %v2466
    %v2523 = vadd.f32 %v291, %v2467
    %v2524 = vadd.f32 %v295, %v2468
    %v2525 = vadd.f32 %v299, %v2469
    %v2526 = vadd.f32 %v306, %v2466
    %v2527 = vadd.f32 %v310, %v2467
    %v2528 = vadd.f32 %v314, %v2468
    %v2529 = vadd.f32 %v318, %v2469
    %v2530 = vadd.f32 %v325, %v2466
    %v2531 = vadd.f32 %v329, %v2467
    %v2532 = vadd.f32 %v333, %v2468
    %v2533 = vadd.f32 %v337, %v2469
    %v2534 = vadd.f32 %v344, %v2466
    %v2535 = vadd.f32 %v348, %v2467
    %v2536 = vadd.f32 %v352, %v2468
    %v2537 = vadd.f32 %v356, %v2469
    %v2538 = vadd.f32 %v363, %v2466
    %v2539 = vadd.f32 %v367, %v2467
    %v2540 = vadd.f32 %v371, %v2468
    %v2541 = vadd.f32 %v375, %v2469
    %v2542 = vadd.f32 %v382, %v2466
    %v2543 = vadd.f32 %v386, %v2467
    %v2544 = vadd.f32 %v390, %v2468
    %v2545 = vadd.f32 %v394, %v2469
    %v2546 = vadd.f32 %v401, %v2466
    %v2547 = vadd.f32 %v405, %v2467
    %v2548 = vadd.f32 %v409, %v2468
    %v2549 = vadd.f32 %v413, %v2469
    %v2550 = vadd.f32 %v420, %v2466
    %v2551 = vadd.f32 %v424, %v2467
    %v2552 = vadd.f32 %v428, %v2468
    %v2553 = vadd.f32 %v432, %v2469
    %v2554 = vadd.f32 %v439, %v2466
    %v2555 = vadd.f32 %v443, %v2467
    %v2556 = vadd.f32 %v447, %v2468
    %v2557 = vadd.f32 %v451, %v2469
    %v2558 = vadd.f32 %v458, %v2466
    %v2559 = vadd.f32 %v462, %v2467
    %v2560 = vadd.f32 %v466, %v2468
    %v2561 = vadd.f32 %v470, %v2469
    %v2562 = vadd.f32 %v477, %v2466
    %v2563 = vadd.f32 %v481, %v2467
    %v2564 = vadd.f32 %v485, %v2468
    %v2565 = vadd.f32 %v489, %v2469
    %v2566 = vadd.f32 %v496, %v2466
    %v2567 = vadd.f32 %v500, %v2467
    %v2568 = vadd.f32 %v504, %v2468
    %v2569 = vadd.f32 %v508, %v2469
    %v2570 = vadd.f32 %v515, %v2466
    %v2571 = vadd.f32 %v519, %v2467
    %v2572 = vadd.f32 %v523, %v2468
    %v2573 = vadd.f32 %v527, %v2469
    %v2574 = vadd.f32 %v534, %v2466
    %v2575 = vadd.f32 %v538, %v2467
    %v2576 = vadd.f32 %v542, %v2468
    %v2577 = vadd.f32 %v546, %v2469
    %v2578 = vadd.f32 %v553, %v2466
    %v2579 = vadd.f32 %v557, %v2467
    %v2580 = vadd.f32 %v561, %v2468
    %v2581 = vadd.f32 %v565, %v2469
    %v2582 = vadd.f32 %v572, %v2466
    %v2583 = vadd.f32 %v576, %v2467
    %v2584 = vadd.f32 %v580, %v2468
    %v2585 = vadd.f32 %v584, %v2469
    %v2586 = vadd.f32 %v591, %v2466
    %v2587 = vadd.f32 %v595, %v2467
    %v2588 = vadd.f32 %v599, %v2468
    %v2589 = vadd.f32 %v603, %v2469
    %v2590 = vadd.f32 %v610, %v2466
    %v2591 = vadd.f32 %v614, %v2467
    %v2592 = vadd.f32 %v618, %v2468
    %v2593 = vadd.f32 %v622, %v2469
    %v2594 = vadd.f32 %v629, %v2466
    %v2595 = vadd.f32 %v633, %v2467
    %v2596 = vadd.f32 %v637, %v2468
    %v2597 = vadd.f32 %v641, %v2469
    %v2598 = vadd.f32 %v648, %v2466
    %v2599 = vadd.f32 %v652, %v2467
    %v2600 = vadd.f32 %v656, %v2468
    %v2601 = vadd.f32 %v660, %v2469
    %v2602 = vadd.f32 %v667, %v2466
    %v2603 = vadd.f32 %v671, %v2467
    %v2604 = vadd.f32 %v675, %v2468
    %v2605 = vadd.f32 %v679, %v2469
    %v2606 = vadd.f32 %v686, %v2466
    %v2607 = vadd.f32 %v690, %v2467
    %v2608 = vadd.f32 %v694, %v2468
    %v2609 = vadd.f32 %v698, %v2469
    %v2610 = vadd.f32 %v705, %v2466
    %v2611 = vadd.f32 %v709, %v2467
    %v2612 = vadd.f32 %v713, %v2468
    %v2613 = vadd.f32 %v717, %v2469
    %v2614 = vadd.f32 %v724, %v2466
    %v2615 = vadd.f32 %v728, %v2467
    %v2616 = vadd.f32 %v732, %v2468
    %v2617 = vadd.f32 %v736, %v2469
    %v2618 = vadd.f32 %v743, %v2466
    %v2619 = vadd.f32 %v747, %v2467
    %v2620 = vadd.f32 %v751, %v2468
    %v2621 = vadd.f32 %v755, %v2469
    %v2622 = vadd.f32 %v762, %v2466
    %v2623 = vadd.f32 %v766, %v2467
    %v2624 = vadd.f32 %v770, %v2468
    %v2625 = vadd.f32 %v774, %v2469
    %v2626 = vadd.f32 %v781, %v2466
    %v2627 = vadd.f32 %v785, %v2467
    %v2628 = vadd.f32 %v789, %v2468
    %v2629 = vadd.f32 %v793, %v2469
    %v2630 = vadd.f32 %v800, %v2466
    %v2631 = vadd.f32 %v804, %v2467
    %v2632 = vadd.f32 %v808, %v2468
    %v2633 = vadd.f32 %v812, %v2469
    %v2634 = vadd.f32 %v819, %v2466
    %v2635 = vadd.f32 %v823, %v2467
    %v2636 = vadd.f32 %v827, %v2468
    %v2637 = vadd.f32 %v831, %v2469
    %v2638 = vadd.f32 %v838, %v2466
    %v2639 = vadd.f32 %v842, %v2467
    %v2640 = vadd.f32 %v846, %v2468
    %v2641 = vadd.f32 %v850, %v2469
    %v2642 = vadd.f32 %v857, %v2466
    %v2643 = vadd.f32 %v861, %v2467
    %v2644 = vadd.f32 %v865, %v2468
    %v2645 = vadd.f32 %v869, %v2469
    %v2646 = vadd.f32 %v876, %v2466
    %v2647 = vadd.f32 %v880, %v2467
    %v2648 = vadd.f32 %v884, %v2468
    %v2649 = vadd.f32 %v888, %v2469
    %v2650 = vadd.f32 %v895, %v2466
    %v2651 = vadd.f32 %v899, %v2467
    %v2652 = vadd.f32 %v903, %v2468
    %v2653 = vadd.f32 %v907, %v2469
    %v2654 = vadd.f32 %v914, %v2466
    %v2655 = vadd.f32 %v918, %v2467
    %v2656 = vadd.f32 %v922, %v2468
    %v2657 = vadd.f32 %v926, %v2469
    %v2658 = vadd.f32 %v933, %v2466
    %v2659 = vadd.f32 %v937, %v2467
    %v2660 = vadd.f32 %v941, %v2468
    %v2661 = vadd.f32 %v945, %v2469
    %v2662 = vadd.f32 %v952, %v2466
    %v2663 = vadd.f32 %v956, %v2467
    %v2664 = vadd.f32 %v960, %v2468
    %v2665 = vadd.f32 %v964, %v2469
    %v2666 = vadd.f32 %v971, %v2466
    %v2667 = vadd.f32 %v975, %v2467
    %v2668 = vadd.f32 %v979, %v2468
    %v2669 = vadd.f32 %v983, %v2469
    %v2670 = vadd.f32 %v990, %v2466
    %v2671 = vadd.f32 %v994, %v2467
    %v2672 = vadd.f32 %v998, %v2468
    %v2673 = vadd.f32 %v1002, %v2469
    %v2674 = vadd.f32 %v1009, %v2466
    %v2675 = vadd.f32 %v1013, %v2467
    %v2676 = vadd.f32 %v1017, %v2468
    %v2677 = vadd.f32 %v1021, %v2469
    %v2678 = vadd.f32 %v1028, %v2466
    %v2679 = vadd.f32 %v1032, %v2467
    %v2680 = vadd.f32 %v1036, %v2468
    %v2681 = vadd.f32 %v1040, %v2469
    %v2682 = vadd.f32 %v1047, %v2466
    %v2683 = vadd.f32 %v1051, %v2467
    %v2684 = vadd.f32 %v1055, %v2468
    %v2685 = vadd.f32 %v1059, %v2469
    %v2686 = vadd.f32 %v1066, %v2466
    %v2687 = vadd.f32 %v1070, %v2467
    %v2688 = vadd.f32 %v1074, %v2468
    %v2689 = vadd.f32 %v1078, %v2469
    %v2690 = vadd.f32 %v1085, %v2466
    %v2691 = vadd.f32 %v1089, %v2467
    %v2692 = vadd.f32 %v1093, %v2468
    %v2693 = vadd.f32 %v1097, %v2469
    %v2694 = vadd.f32 %v1104, %v2466
    %v2695 = vadd.f32 %v1108, %v2467
    %v2696 = vadd.f32 %v1112, %v2468
    %v2697 = vadd.f32 %v1116, %v2469
    %v2698 = vadd.f32 %v1123, %v2466
    %v2699 = vadd.f32 %v1127, %v2467
    %v2700 = vadd.f32 %v1131, %v2468
    %v2701 = vadd.f32 %v1135, %v2469
    %v2702 = vadd.f32 %v1142, %v2466
    %v2703 = vadd.f32 %v1146, %v2467
    %v2704 = vadd.f32 %v1150, %v2468
    %v2705 = vadd.f32 %v1154, %v2469
    %v2706 = vadd.f32 %v1161, %v2466
    %v2707 = vadd.f32 %v1165, %v2467
    %v2708 = vadd.f32 %v1169, %v2468
    %v2709 = vadd.f32 %v1173, %v2469
    %v2710 = vadd.f32 %v1180, %v2466
    %v2711 = vadd.f32 %v1184, %v2467
    %v2712 = vadd.f32 %v1188, %v2468
    %v2713 = vadd.f32 %v1192, %v2469
    %v2714 = vadd.f32 %v1199, %v2466
    %v2715 = vadd.f32 %v1203, %v2467
    %v2716 = vadd.f32 %v1207, %v2468
    %v2717 = vadd.f32 %v1211, %v2469
    %v2718 = vadd.f32 %v1218, %v2466
    %v2719 = vadd.f32 %v1222, %v2467
    %v2720 = vadd.f32 %v1226, %v2468
    %v2721 = vadd.f32 %v1230, %v2469
    %v2722 = vadd.f32 %v1237, %v2466
    %v2723 = vadd.f32 %v1241, %v2467
    %v2724 = vadd.f32 %v1245, %v2468
    %v2725 = vadd.f32 %v1249, %v2469
    %v2726 = vadd.f32 %v1256, %v2466
    %v2727 = vadd.f32 %v1260, %v2467
    %v2728 = vadd.f32 %v1264, %v2468
    %v2729 = vadd.f32 %v1268, %v2469
    %v2730 = vadd.f32 %v1275, %v2466
    %v2731 = vadd.f32 %v1279, %v2467
    %v2732 = vadd.f32 %v1283, %v2468
    %v2733 = vadd.f32 %v1287, %v2469
    %v2734 = vadd.f32 %v1294, %v2466
    %v2735 = vadd.f32 %v1298, %v2467
    %v2736 = vadd.f32 %v1302, %v2468
    %v2737 = vadd.f32 %v1306, %v2469
    %v2738 = vadd.f32 %v1313, %v2466
    %v2739 = vadd.f32 %v1317, %v2467
    %v2740 = vadd.f32 %v1321, %v2468
    %v2741 = vadd.f32 %v1325, %v2469
    %v2742 = vadd.f32 %v1332, %v2466
    %v2743 = vadd.f32 %v1336, %v2467
    %v2744 = vadd.f32 %v1340, %v2468
    %v2745 = vadd.f32 %v1344, %v2469
    %v2746 = vadd.f32 %v1351, %v2466
    %v2747 = vadd.f32 %v1355, %v2467
    %v2748 = vadd.f32 %v1359, %v2468
    %v2749 = vadd.f32 %v1363, %v2469
    %v2750 = vadd.f32 %v1370, %v2466
    %v2751 = vadd.f32 %v1374, %v2467
    %v2752 = vadd.f32 %v1378, %v2468
    %v2753 = vadd.f32 %v1382, %v2469
    %v2754 = vadd.f32 %v1389, %v2466
    %v2755 = vadd.f32 %v1393, %v2467
    %v2756 = vadd.f32 %v1397, %v2468
    %v2757 = vadd.f32 %v1401, %v2469
    %v2758 = vadd.f32 %v1408, %v2466
    %v2759 = vadd.f32 %v1412, %v2467
    %v2760 = vadd.f32 %v1416, %v2468
    %v2761 = vadd.f32 %v1420, %v2469
    %v2762 = vadd.f32 %v1427, %v2466
    %v2763 = vadd.f32 %v1431, %v2467
    %v2764 = vadd.f32 %v1435, %v2468
    %v2765 = vadd.f32 %v1439, %v2469
    %v2766 = vadd.f32 %v1446, %v2466
    %v2767 = vadd.f32 %v1450, %v2467
    %v2768 = vadd.f32 %v1454, %v2468
    %v2769 = vadd.f32 %v1458, %v2469
    %v2770 = vadd.f32 %v1465, %v2466
    %v2771 = vadd.f32 %v1469, %v2467
    %v2772 = vadd.f32 %v1473, %v2468
    %v2773 = vadd.f32 %v1477, %v2469
    %v2774 = vadd.f32 %v1484, %v2466
    %v2775 = vadd.f32 %v1488, %v2467
    %v2776 = vadd.f32 %v1492, %v2468
    %v2777 = vadd.f32 %v1496, %v2469
    %v2778 = vadd.f32 %v1503, %v2466
    %v2779 = vadd.f32 %v1507, %v2467
    %v2780 = vadd.f32 %v1511, %v2468
    %v2781 = vadd.f32 %v1515, %v2469
    %v2782 = vadd.f32 %v1522, %v2466
    %v2783 = vadd.f32 %v1526, %v2467
    %v2784 = vadd.f32 %v1530, %v2468
    %v2785 = vadd.f32 %v1534, %v2469
    %v2786 = vadd.f32 %v1541, %v2466
    %v2787 = vadd.f32 %v1545, %v2467
    %v2788 = vadd.f32 %v1549, %v2468
    %v2789 = vadd.f32 %v1553, %v2469
    %v2790 = vadd.f32 %v1560, %v2466
    %v2791 = vadd.f32 %v1564, %v2467
    %v2792 = vadd.f32 %v1568, %v2468
    %v2793 = vadd.f32 %v1572, %v2469
    %v2794 = vadd.f32 %v1579, %v2466
    %v2795 = vadd.f32 %v1583, %v2467
    %v2796 = vadd.f32 %v1587, %v2468
    %v2797 = vadd.f32 %v1591, %v2469
    %v2798 = vadd.f32 %v1598, %v2466
    %v2799 = vadd.f32 %v1602, %v2467
    %v2800 = vadd.f32 %v1606, %v2468
    %v2801 = vadd.f32 %v1610, %v2469
    %v2802 = vadd.f32 %v1617, %v2466
    %v2803 = vadd.f32 %v1621, %v2467
    %v2804 = vadd.f32 %v1625, %v2468
    %v2805 = vadd.f32 %v1629, %v2469
    %v2806 = vadd.f32 %v1636, %v2466
    %v2807 = vadd.f32 %v1640, %v2467
    %v2808 = vadd.f32 %v1644, %v2468
    %v2809 = vadd.f32 %v1648, %v2469
    %v2810 = vadd.f32 %v1655, %v2466
    %v2811 = vadd.f32 %v1659, %v2467
    %v2812 = vadd.f32 %v1663, %v2468
    %v2813 = vadd.f32 %v1667, %v2469
    %v2814 = vadd.f32 %v1674, %v2466
    %v2815 = vadd.f32 %v1678, %v2467
    %v2816 = vadd.f32 %v1682, %v2468
    %v2817 = vadd.f32 %v1686, %v2469
    %v2818 = vadd.f32 %v1693, %v2466
    %v2819 = vadd.f32 %v1697, %v2467
    %v2820 = vadd.f32 %v1701, %v2468
    %v2821 = vadd.f32 %v1705, %v2469
    %v2822 = vadd.f32 %v1712, %v2466
    %v2823 = vadd.f32 %v1716, %v2467
    %v2824 = vadd.f32 %v1720, %v2468
    %v2825 = vadd.f32 %v1724, %v2469
    %v2826 = vadd.f32 %v1731, %v2466
    %v2827 = vadd.f32 %v1735, %v2467
    %v2828 = vadd.f32 %v1739, %v2468
    %v2829 = vadd.f32 %v1743, %v2469
    %v2830 = vadd.f32 %v1750, %v2466
    %v2831 = vadd.f32 %v1754, %v2467
    %v2832 = vadd.f32 %v1758, %v2468
    %v2833 = vadd.f32 %v1762, %v2469
    %v2834 = vadd.f32 %v1769, %v2466
    %v2835 = vadd.f32 %v1773, %v2467
    %v2836 = vadd.f32 %v1777, %v2468
    %v2837 = vadd.f32 %v1781, %v2469
    %v2838 = vadd.f32 %v1788, %v2466
    %v2839 = vadd.f32 %v1792, %v2467
    %v2840 = vadd.f32 %v1796, %v2468
    %v2841 = vadd.f32 %v1800, %v2469
    %v2842 = vadd.f32 %v1807, %v2466
    %v2843 = vadd.f32 %v1811, %v2467
    %v2844 = vadd.f32 %v1815, %v2468
    %v2845 = vadd.f32 %v1819, %v2469
    %v2846 = vadd.f32 %v1826, %v2466
    %v2847 = vadd.f32 %v1830, %v2467
    %v2848 = vadd.f32 %v1834, %v2468
    %v2849 = vadd.f32 %v1838, %v2469
    %v2850 = vadd.f32 %v1845, %v2466
    %v2851 = vadd.f32 %v1849, %v2467
    %v2852 = vadd.f32 %v1853, %v2468
    %v2853 = vadd.f32 %v1857, %v2469
    %v2854 = vadd.f32 %v1864, %v2466
    %v2855 = vadd.f32 %v1868, %v2467
    %v2856 = vadd.f32 %v1872, %v2468
    %v2857 = vadd.f32 %v1876, %v2469
    %v2858 = vadd.f32 %v1883, %v2466
    %v2859 = vadd.f32 %v1887, %v2467
    %v2860 = vadd.f32 %v1891, %v2468
    %v2861 = vadd.f32 %v1895, %v2469
    %v2862 = vadd.f32 %v1902, %v2466
    %v2863 = vadd.f32 %v1906, %v2467
    %v2864 = vadd.f32 %v1910, %v2468
    %v2865 = vadd.f32 %v1914, %v2469
    %v2866 = vadd.f32 %v1921, %v2466
    %v2867 = vadd.f32 %v1925, %v2467
    %v2868 = vadd.f32 %v1929, %v2468
    %v2869 = vadd.f32 %v1933, %v2469
    %v2870 = vadd.f32 %v1940, %v2466
    %v2871 = vadd.f32 %v1944, %v2467
    %v2872 = vadd.f32 %v1948, %v2468
    %v2873 = vadd.f32 %v1952, %v2469
    %v2874 = vadd.f32 %v1959, %v2466
    %v2875 = vadd.f32 %v1963, %v2467
    %v2876 = vadd.f32 %v1967, %v2468
    %v2877 = vadd.f32 %v1971, %v2469
    %v2878 = vadd.f32 %v1978, %v2466
    %v2879 = vadd.f32 %v1982, %v2467
    %v2880 = vadd.f32 %v1986, %v2468
    %v2881 = vadd.f32 %v1990, %v2469
    %v2882 = vadd.f32 %v1997, %v2466
    %v2883 = vadd.f32 %v2001, %v2467
    %v2884 = vadd.f32 %v2005, %v2468
    %v2885 = vadd.f32 %v2009, %v2469
    %v2886 = vadd.f32 %v2016, %v2466
    %v2887 = vadd.f32 %v2020, %v2467
    %v2888 = vadd.f32 %v2024, %v2468
    %v2889 = vadd.f32 %v2028, %v2469
    %v2890 = vadd.f32 %v2035, %v2466
    %v2891 = vadd.f32 %v2039, %v2467
    %v2892 = vadd.f32 %v2043, %v2468
    %v2893 = vadd.f32 %v2047, %v2469
    %v2894 = vadd.f32 %v2054, %v2466
    %v2895 = vadd.f32 %v2058, %v2467
    %v2896 = vadd.f32 %v2062, %v2468
    %v2897 = vadd.f32 %v2066, %v2469
    %v2898 = vadd.f32 %v2073, %v2466
    %v2899 = vadd.f32 %v2077, %v2467
    %v2900 = vadd.f32 %v2081, %v2468
    %v2901 = vadd.f32 %v2085, %v2469
    %v2902 = vadd.f32 %v2092, %v2466
    %v2903 = vadd.f32 %v2096, %v2467
    %v2904 = vadd.f32 %v2100, %v2468
    %v2905 = vadd.f32 %v2104, %v2469
    %v2906 = vadd.f32 %v2111, %v2466
    %v2907 = vadd.f32 %v2115, %v2467
    %v2908 = vadd.f32 %v2119, %v2468
    %v2909 = vadd.f32 %v2123, %v2469
    %v2910 = vadd.f32 %v2130, %v2466
    %v2911 = vadd.f32 %v2134, %v2467
    %v2912 = vadd.f32 %v2138, %v2468
    %v2913 = vadd.f32 %v2142, %v2469
    %v2914 = vadd.f32 %v2149, %v2466
    %v2915 = vadd.f32 %v2153, %v2467
    %v2916 = vadd.f32 %v2157, %v2468
    %v2917 = vadd.f32 %v2161, %v2469
    %v2918 = vadd.f32 %v2168, %v2466
    %v2919 = vadd.f32 %v2172, %v2467
    %v2920 = vadd.f32 %v2176, %v2468
    %v2921 = vadd.f32 %v2180, %v2469
    %v2922 = vadd.f32 %v2187, %v2466
    %v2923 = vadd.f32 %v2191, %v2467
    %v2924 = vadd.f32 %v2195, %v2468
    %v2925 = vadd.f32 %v2199, %v2469
    %v2926 = vadd.f32 %v2206, %v2466
    %v2927 = vadd.f32 %v2210, %v2467
    %v2928 = vadd.f32 %v2214, %v2468
    %v2929 = vadd.f32 %v2218, %v2469
    %v2930 = vadd.f32 %v2225, %v2466
    %v2931 = vadd.f32 %v2229, %v2467
    %v2932 = vadd.f32 %v2233, %v2468
    %v2933 = vadd.f32 %v2237, %v2469
    %v2934 = vadd.f32 %v2244, %v2466
    %v2935 = vadd.f32 %v2248, %v2467
    %v2936 = vadd.f32 %v2252, %v2468
    %v2937 = vadd.f32 %v2256, %v2469
    %v2938 = vadd.f32 %v2263, %v2466
    %v2939 = vadd.f32 %v2267, %v2467
    %v2940 = vadd.f32 %v2271, %v2468
    %v2941 = vadd.f32 %v2275, %v2469
    %v2942 = vadd.f32 %v2282, %v2466
    %v2943 = vadd.f32 %v2286, %v2467
    %v2944 = vadd.f32 %v2290, %v2468
    %v2945 = vadd.f32 %v2294, %v2469
    %v2946 = vadd.f32 %v2301, %v2466
    %v2947 = vadd.f32 %v2305, %v2467
    %v2948 = vadd.f32 %v2309, %v2468
    %v2949 = vadd.f32 %v2313, %v2469
    %v2950 = vadd.f32 %v2320, %v2466
    %v2951 = vadd.f32 %v2324, %v2467
    %v2952 = vadd.f32 %v2328, %v2468
    %v2953 = vadd.f32 %v2332, %v2469
    %v2954 = vadd.f32 %v2339, %v2466
    %v2955 = vadd.f32 %v2343, %v2467
    %v2956 = vadd.f32 %v2347, %v2468
    %v2957 = vadd.f32 %v2351, %v2469
    %v2958 = vadd.f32 %v2358, %v2466
    %v2959 = vadd.f32 %v2362, %v2467
    %v2960 = vadd.f32 %v2366, %v2468
    %v2961 = vadd.f32 %v2370, %v2469
    %v2962 = vadd.f32 %v2377, %v2466
    %v2963 = vadd.f32 %v2381, %v2467
    %v2964 = vadd.f32 %v2385, %v2468
    %v2965 = vadd.f32 %v2389, %v2469
    %v2966 = vadd.f32 %v2396, %v2466
    %v2967 = vadd.f32 %v2400, %v2467
    %v2968 = vadd.f32 %v2404, %v2468
    %v2969 = vadd.f32 %v2408, %v2469
    %v2970 = vadd.f32 %v2415, %v2466
    %v2971 = vadd.f32 %v2419, %v2467
    %v2972 = vadd.f32 %v2423, %v2468
    %v2973 = vadd.f32 %v2427, %v2469
    %v2974 = vadd.f32 %v2434, %v2466
    %v2975 = vadd.f32 %v2438, %v2467
    %v2976 = vadd.f32 %v2442, %v2468
    %v2977 = vadd.f32 %v2446, %v2469
    %v2978 = vadd.f32 %v2453, %v2466
    %v2979 = vadd.f32 %v2457, %v2467
    %v2980 = vadd.f32 %v2461, %v2468
    %v2981 = vadd.f32 %v2465, %v2469
    %v2982 = vmax.f32 %v2470, 0.0
    %v2983 = vmax.f32 %v2471, 0.0
    %v2984 = vmax.f32 %v2472, 0.0
    %v2985 = vmax.f32 %v2473, 0.0
    %v2986 = vmax.f32 %v2474, 0.0
    %v2987 = vmax.f32 %v2475, 0.0
    %v2988 = vmax.f32 %v2476, 0.0
    %v2989 = vmax.f32 %v2477, 0.0
    %v2990 = vmax.f32 %v2478, 0.0
    %v2991 = vmax.f32 %v2479, 0.0
    %v2992 = vmax.f32 %v2480, 0.0
    %v2993 = vmax.f32 %v2481, 0.0
    %v2994 = vmax.f32 %v2482, 0.0
    %v2995 = vmax.f32 %v2483, 0.0
    %v2996 = vmax.f32 %v2484, 0.0
    %v2997 = vmax.f32 %v2485, 0.0
    %v2998 = vmax.f32 %v2486, 0.0
    %v2999 = vmax.f32 %v2487, 0.0
    %v3000 = vmax.f32 %v2488, 0.0
    %v3001 = vmax.f32 %v2489, 0.0
    %v3002 = vmax.f32 %v2490, 0.0
    %v3003 = vmax.f32 %v2491, 0.0
    %v3004 = vmax.f32 %v2492, 0.0
    %v3005 = vmax.f32 %v2493, 0.0
    %v3006 = vmax.f32 %v2494, 0.0
    %v3007 = vmax.f32 %v2495, 0.0
    %v3008 = vmax.f32 %v2496, 0.0
    %v3009 = vmax.f32 %v2497, 0.0
    %v3010 = vmax.f32 %v2498, 0.0
    %v3011 = vmax.f32 %v2499, 0.0
    %v3012 = vmax.f32 %v2500, 0.0
    %v3013 = vmax.f32 %v2501, 0.0
    %v3014 = vmax.f32 %v2502, 0.0
    %v3015 = vmax.f32 %v2503, 0.0
    %v3016 = vmax.f32 %v2504, 0.0
    %v3017 = vmax.f32 %v2505, 0.0
    %v3018 = vmax.f32 %v2506, 0.0
    %v3019 = vmax.f32 %v2507, 0.0
    %v3020 = vmax.f32 %v2508, 0.0
    %v3021 = vmax.f32 %v2509, 0.0
    %v3022 = vmax.f32 %v2510, 0.0
    %v3023 = vmax.f32 %v2511, 0.0
    %v3024 = vmax.f32 %v2512, 0.0
    %v3025 = vmax.f32 %v2513, 0.0
    %v3026 = vmax.f32 %v2514, 0.0
    %v3027 = vmax.f32 %v2515, 0.0
    %v3028 = vmax.f32 %v2516, 0.0
    %v3029 = vmax.f32 %v2517, 0.0
    %v3030 = vmax.f32 %v2518, 0.0
    %v3031 = vmax.f32 %v2519, 0.0
    %v3032 = vmax.f32 %v2520, 0.0
    %v3033 = vmax.f32 %v2521, 0.0
    %v3034 = vmax.f32 %v2522, 0.0
    %v3035 = vmax.f32 %v2523, 0.0
    %v3036 = vmax.f32 %v2524, 0.0
    %v3037 = vmax.f32 %v2525, 0.0
    %v3038 = vmax.f32 %v2526, 0.0
    %v3039 = vmax.f32 %v2527, 0.0
    %v3040 = vmax.f32 %v2528, 0.0
    %v3041 = vmax.f32 %v2529, 0.0
    %v3042 = vmax.f32 %v2530, 0.0
    %v3043 = vmax.f32 %v2531, 0.0
    %v3044 = vmax.f32 %v2532, 0.0
    %v3045 = vmax.f32 %v2533, 0.0
    %v3046 = vmax.f32 %v2534, 0.0
    %v3047 = vmax.f32 %v2535, 0.0
    %v3048 = vmax.f32 %v2536, 0.0
    %v3049 = vmax.f32 %v2537, 0.0
    %v3050 = vmax.f32 %v2538, 0.0
    %v3051 = vmax.f32 %v2539, 0.0
    %v3052 = vmax.f32 %v2540, 0.0
    %v3053 = vmax.f32 %v2541, 0.0
    %v3054 = vmax.f32 %v2542, 0.0
    %v3055 = vmax.f32 %v2543, 0.0
    %v3056 = vmax.f32 %v2544, 0.0
    %v3057 = vmax.f32 %v2545, 0.0
    %v3058 = vmax.f32 %v2546, 0.0
    %v3059 = vmax.f32 %v2547, 0.0
    %v3060 = vmax.f32 %v2548, 0.0
    %v3061 = vmax.f32 %v2549, 0.0
    %v3062 = vmax.f32 %v2550, 0.0
    %v3063 = vmax.f32 %v2551, 0.0
    %v3064 = vmax.f32 %v2552, 0.0
    %v3065 = vmax.f32 %v2553, 0.0
    %v3066 = vmax.f32 %v2554, 0.0
    %v3067 = vmax.f32 %v2555, 0.0
    %v3068 = vmax.f32 %v2556, 0.0
    %v3069 = vmax.f32 %v2557, 0.0
    %v3070 = vmax.f32 %v2558, 0.0
    %v3071 = vmax.f32 %v2559, 0.0
    %v3072 = vmax.f32 %v2560, 0.0
    %v3073 = vmax.f32 %v2561, 0.0
    %v3074 = vmax.f32 %v2562, 0.0
    %v3075 = vmax.f32 %v2563, 0.0
    %v3076 = vmax.f32 %v2564, 0.0
    %v3077 = vmax.f32 %v2565, 0.0
    %v3078 = vmax.f32 %v2566, 0.0
    %v3079 = vmax.f32 %v2567, 0.0
    %v3080 = vmax.f32 %v2568, 0.0
    %v3081 = vmax.f32 %v2569, 0.0
    %v3082 = vmax.f32 %v2570, 0.0
    %v3083 = vmax.f32 %v2571, 0.0
    %v3084 = vmax.f32 %v2572, 0.0
    %v3085 = vmax.f32 %v2573, 0.0
    %v3086 = vmax.f32 %v2574, 0.0
    %v3087 = vmax.f32 %v2575, 0.0
    %v3088 = vmax.f32 %v2576, 0.0
    %v3089 = vmax.f32 %v2577, 0.0
    %v3090 = vmax.f32 %v2578, 0.0
    %v3091 = vmax.f32 %v2579, 0.0
    %v3092 = vmax.f32 %v2580, 0.0
    %v3093 = vmax.f32 %v2581, 0.0
    %v3094 = vmax.f32 %v2582, 0.0
    %v3095 = vmax.f32 %v2583, 0.0
    %v3096 = vmax.f32 %v2584, 0.0
    %v3097 = vmax.f32 %v2585, 0.0
    %v3098 = vmax.f32 %v2586, 0.0
    %v3099 = vmax.f32 %v2587, 0.0
    %v3100 = vmax.f32 %v2588, 0.0
    %v3101 = vmax.f32 %v2589, 0.0
    %v3102 = vmax.f32 %v2590, 0.0
    %v3103 = vmax.f32 %v2591, 0.0
    %v3104 = vmax.f32 %v2592, 0.0
    %v3105 = vmax.f32 %v2593, 0.0
    %v3106 = vmax.f32 %v2594, 0.0
    %v3107 = vmax.f32 %v2595, 0.0
    %v3108 = vmax.f32 %v2596, 0.0
    %v3109 = vmax.f32 %v2597, 0.0
    %v3110 = vmax.f32 %v2598, 0.0
    %v3111 = vmax.f32 %v2599, 0.0
    %v3112 = vmax.f32 %v2600, 0.0
    %v3113 = vmax.f32 %v2601, 0.0
    %v3114 = vmax.f32 %v2602, 0.0
    %v3115 = vmax.f32 %v2603, 0.0
    %v3116 = vmax.f32 %v2604, 0.0
    %v3117 = vmax.f32 %v2605, 0.0
    %v3118 = vmax.f32 %v2606, 0.0
    %v3119 = vmax.f32 %v2607, 0.0
    %v3120 = vmax.f32 %v2608, 0.0
    %v3121 = vmax.f32 %v2609, 0.0
    %v3122 = vmax.f32 %v2610, 0.0
    %v3123 = vmax.f32 %v2611, 0.0
    %v3124 = vmax.f32 %v2612, 0.0
    %v3125 = vmax.f32 %v2613, 0.0
    %v3126 = vmax.f32 %v2614, 0.0
    %v3127 = vmax.f32 %v2615, 0.0
    %v3128 = vmax.f32 %v2616, 0.0
    %v3129 = vmax.f32 %v2617, 0.0
    %v3130 = vmax.f32 %v2618, 0.0
    %v3131 = vmax.f32 %v2619, 0.0
    %v3132 = vmax.f32 %v2620, 0.0
    %v3133 = vmax.f32 %v2621, 0.0
    %v3134 = vmax.f32 %v2622, 0.0
    %v3135 = vmax.f32 %v2623, 0.0
    %v3136 = vmax.f32 %v2624, 0.0
    %v3137 = vmax.f32 %v2625, 0.0
    %v3138 = vmax.f32 %v2626, 0.0
    %v3139 = vmax.f32 %v2627, 0.0
    %v3140 = vmax.f32 %v2628, 0.0
    %v3141 = vmax.f32 %v2629, 0.0
    %v3142 = vmax.f32 %v2630, 0.0
    %v3143 = vmax.f32 %v2631, 0.0
    %v3144 = vmax.f32 %v2632, 0.0
    %v3145 = vmax.f32 %v2633, 0.0
    %v3146 = vmax.f32 %v2634, 0.0
    %v3147 = vmax.f32 %v2635, 0.0
    %v3148 = vmax.f32 %v2636, 0.0
    %v3149 = vmax.f32 %v2637, 0.0
    %v3150 = vmax.f32 %v2638, 0.0
    %v3151 = vmax.f32 %v2639, 0.0
    %v3152 = vmax.f32 %v2640, 0.0
    %v3153 = vmax.f32 %v2641, 0.0
    %v3154 = vmax.f32 %v2642, 0.0
    %v3155 = vmax.f32 %v2643, 0.0
    %v3156 = vmax.f32 %v2644, 0.0
    %v3157 = vmax.f32 %v2645, 0.0
    %v3158 = vmax.f32 %v2646, 0.0
    %v3159 = vmax.f32 %v2647, 0.0
    %v3160 = vmax.f32 %v2648, 0.0
    %v3161 = vmax.f32 %v2649, 0.0
    %v3162 = vmax.f32 %v2650, 0.0
    %v3163 = vmax.f32 %v2651, 0.0
    %v3164 = vmax.f32 %v2652, 0.0
    %v3165 = vmax.f32 %v2653, 0.0
    %v3166 = vmax.f32 %v2654, 0.0
    %v3167 = vmax.f32 %v2655, 0.0
    %v3168 = vmax.f32 %v2656, 0.0
    %v3169 = vmax.f32 %v2657, 0.0
    %v3170 = vmax.f32 %v2658, 0.0
    %v3171 = vmax.f32 %v2659, 0.0
    %v3172 = vmax.f32 %v2660, 0.0
    %v3173 = vmax.f32 %v2661, 0.0
    %v3174 = vmax.f32 %v2662, 0.0
    %v3175 = vmax.f32 %v2663, 0.0
    %v3176 = vmax.f32 %v2664, 0.0
    %v3177 = vmax.f32 %v2665, 0.0
    %v3178 = vmax.f32 %v2666, 0.0
    %v3179 = vmax.f32 %v2667, 0.0
    %v3180 = vmax.f32 %v2668, 0.0
    %v3181 = vmax.f32 %v2669, 0.0
    %v3182 = vmax.f32 %v2670, 0.0
    %v3183 = vmax.f32 %v2671, 0.0
    %v3184 = vmax.f32 %v2672, 0.0
    %v3185 = vmax.f32 %v2673, 0.0
    %v3186 = vmax.f32 %v2674, 0.0
    %v3187 = vmax.f32 %v2675, 0.0
    %v3188 = vmax.f32 %v2676, 0.0
    %v3189 = vmax.f32 %v2677, 0.0
    %v3190 = vmax.f32 %v2678, 0.0
    %v3191 = vmax.f32 %v2679, 0.0
    %v3192 = vmax.f32 %v2680, 0.0
    %v3193 = vmax.f32 %v2681, 0.0
    %v3194 = vmax.f32 %v2682, 0.0
    %v3195 = vmax.f32 %v2683, 0.0
    %v3196 = vmax.f32 %v2684, 0.0
    %v3197 = vmax.f32 %v2685, 0.0
    %v3198 = vmax.f32 %v2686, 0.0
    %v3199 = vmax.f32 %v2687, 0.0
    %v3200 = vmax.f32 %v2688, 0.0
    %v3201 = vmax.f32 %v2689, 0.0
    %v3202 = vmax.f32 %v2690, 0.0
    %v3203 = vmax.f32 %v2691, 0.0
    %v3204 = vmax.f32 %v2692, 0.0
    %v3205 = vmax.f32 %v2693, 0.0
    %v3206 = vmax.f32 %v2694, 0.0
    %v3207 = vmax.f32 %v2695, 0.0
    %v3208 = vmax.f32 %v2696, 0.0
    %v3209 = vmax.f32 %v2697, 0.0
    %v3210 = vmax.f32 %v2698, 0.0
    %v3211 = vmax.f32 %v2699, 0.0
    %v3212 = vmax.f32 %v2700, 0.0
    %v3213 = vmax.f32 %v2701, 0.0
    %v3214 = vmax.f32 %v2702, 0.0
    %v3215 = vmax.f32 %v2703, 0.0
    %v3216 = vmax.f32 %v2704, 0.0
    %v3217 = vmax.f32 %v2705, 0.0
    %v3218 = vmax.f32 %v2706, 0.0
    %v3219 = vmax.f32 %v2707, 0.0
    %v3220 = vmax.f32 %v2708, 0.0
    %v3221 = vmax.f32 %v2709, 0.0
    %v3222 = vmax.f32 %v2710, 0.0
    %v3223 = vmax.f32 %v2711, 0.0
    %v3224 = vmax.f32 %v2712, 0.0
    %v3225 = vmax.f32 %v2713, 0.0
    %v3226 = vmax.f32 %v2714, 0.0
    %v3227 = vmax.f32 %v2715, 0.0
    %v3228 = vmax.f32 %v2716, 0.0
    %v3229 = vmax.f32 %v2717, 0.0
    %v3230 = vmax.f32 %v2718, 0.0
    %v3231 = vmax.f32 %v2719, 0.0
    %v3232 = vmax.f32 %v2720, 0.0
    %v3233 = vmax.f32 %v2721, 0.0
    %v3234 = vmax.f32 %v2722, 0.0
    %v3235 = vmax.f32 %v2723, 0.0
    %v3236 = vmax.f32 %v2724, 0.0
    %v3237 = vmax.f32 %v2725, 0.0
    %v3238 = vmax.f32 %v2726, 0.0
    %v3239 = vmax.f32 %v2727, 0.0
    %v3240 = vmax.f32 %v2728, 0.0
    %v3241 = vmax.f32 %v2729, 0.0
    %v3242 = vmax.f32 %v2730, 0.0
    %v3243 = vmax.f32 %v2731, 0.0
    %v3244 = vmax.f32 %v2732, 0.0
    %v3245 = vmax.f32 %v2733, 0.0
    %v3246 = vmax.f32 %v2734, 0.0
    %v3247 = vmax.f32 %v2735, 0.0
    %v3248 = vmax.f32 %v2736, 0.0
    %v3249 = vmax.f32 %v2737, 0.0
    %v3250 = vmax.f32 %v2738, 0.0
    %v3251 = vmax.f32 %v2739, 0.0
    %v3252 = vmax.f32 %v2740, 0.0
    %v3253 = vmax.f32 %v2741, 0.0
    %v3254 = vmax.f32 %v2742, 0.0
    %v3255 = vmax.f32 %v2743, 0.0
    %v3256 = vmax.f32 %v2744, 0.0
    %v3257 = vmax.f32 %v2745, 0.0
    %v3258 = vmax.f32 %v2746, 0.0
    %v3259 = vmax.f32 %v2747, 0.0
    %v3260 = vmax.f32 %v2748, 0.0
    %v3261 = vmax.f32 %v2749, 0.0
    %v3262 = vmax.f32 %v2750, 0.0
    %v3263 = vmax.f32 %v2751, 0.0
    %v3264 = vmax.f32 %v2752, 0.0
    %v3265 = vmax.f32 %v2753, 0.0
    %v3266 = vmax.f32 %v2754, 0.0
    %v3267 = vmax.f32 %v2755, 0.0
    %v3268 = vmax.f32 %v2756, 0.0
    %v3269 = vmax.f32 %v2757, 0.0
    %v3270 = vmax.f32 %v2758, 0.0
    %v3271 = vmax.f32 %v2759, 0.0
    %v3272 = vmax.f32 %v2760, 0.0
    %v3273 = vmax.f32 %v2761, 0.0
    %v3274 = vmax.f32 %v2762, 0.0
    %v3275 = vmax.f32 %v2763, 0.0
    %v3276 = vmax.f32 %v2764, 0.0
    %v3277 = vmax.f32 %v2765, 0.0
    %v3278 = vmax.f32 %v2766, 0.0
    %v3279 = vmax.f32 %v2767, 0.0
    %v3280 = vmax.f32 %v2768, 0.0
    %v3281 = vmax.f32 %v2769, 0.0
    %v3282 = vmax.f32 %v2770, 0.0
    %v3283 = vmax.f32 %v2771, 0.0
    %v3284 = vmax.f32 %v2772, 0.0
    %v3285 = vmax.f32 %v2773, 0.0
    %v3286 = vmax.f32 %v2774, 0.0
    %v3287 = vmax.f32 %v2775, 0.0
    %v3288 = vmax.f32 %v2776, 0.0
    %v3289 = vmax.f32 %v2777, 0.0
    %v3290 = vmax.f32 %v2778, 0.0
    %v3291 = vmax.f32 %v2779, 0.0
    %v3292 = vmax.f32 %v2780, 0.0
    %v3293 = vmax.f32 %v2781, 0.0
    %v3294 = vmax.f32 %v2782, 0.0
    %v3295 = vmax.f32 %v2783, 0.0
    %v3296 = vmax.f32 %v2784, 0.0
    %v3297 = vmax.f32 %v2785, 0.0
    %v3298 = vmax.f32 %v2786, 0.0
    %v3299 = vmax.f32 %v2787, 0.0
    %v3300 = vmax.f32 %v2788, 0.0
    %v3301 = vmax.f32 %v2789, 0.0
    %v3302 = vmax.f32 %v2790, 0.0
    %v3303 = vmax.f32 %v2791, 0.0
    %v3304 = vmax.f32 %v2792, 0.0
    %v3305 = vmax.f32 %v2793, 0.0
    %v3306 = vmax.f32 %v2794, 0.0
    %v3307 = vmax.f32 %v2795, 0.0
    %v3308 = vmax.f32 %v2796, 0.0
    %v3309 = vmax.f32 %v2797, 0.0
    %v3310 = vmax.f32 %v2798, 0.0
    %v3311 = vmax.f32 %v2799, 0.0
    %v3312 = vmax.f32 %v2800, 0.0
    %v3313 = vmax.f32 %v2801, 0.0
    %v3314 = vmax.f32 %v2802, 0.0
    %v3315 = vmax.f32 %v2803, 0.0
    %v3316 = vmax.f32 %v2804, 0.0
    %v3317 = vmax.f32 %v2805, 0.0
    %v3318 = vmax.f32 %v2806, 0.0
    %v3319 = vmax.f32 %v2807, 0.0
    %v3320 = vmax.f32 %v2808, 0.0
    %v3321 = vmax.f32 %v2809, 0.0
    %v3322 = vmax.f32 %v2810, 0.0
    %v3323 = vmax.f32 %v2811, 0.0
    %v3324 = vmax.f32 %v2812, 0.0
    %v3325 = vmax.f32 %v2813, 0.0
    %v3326 = vmax.f32 %v2814, 0.0
    %v3327 = vmax.f32 %v2815, 0.0
    %v3328 = vmax.f32 %v2816, 0.0
    %v3329 = vmax.f32 %v2817, 0.0
    %v3330 = vmax.f32 %v2818, 0.0
    %v3331 = vmax.f32 %v2819, 0.0
    %v3332 = vmax.f32 %v2820, 0.0
    %v3333 = vmax.f32 %v2821, 0.0
    %v3334 = vmax.f32 %v2822, 0.0
    %v3335 = vmax.f32 %v2823, 0.0
    %v3336 = vmax.f32 %v2824, 0.0
    %v3337 = vmax.f32 %v2825, 0.0
    %v3338 = vmax.f32 %v2826, 0.0
    %v3339 = vmax.f32 %v2827, 0.0
    %v3340 = vmax.f32 %v2828, 0.0
    %v3341 = vmax.f32 %v2829, 0.0
    %v3342 = vmax.f32 %v2830, 0.0
    %v3343 = vmax.f32 %v2831, 0.0
    %v3344 = vmax.f32 %v2832, 0.0
    %v3345 = vmax.f32 %v2833, 0.0
    %v3346 = vmax.f32 %v2834, 0.0
    %v3347 = vmax.f32 %v2835, 0.0
    %v3348 = vmax.f32 %v2836, 0.0
    %v3349 = vmax.f32 %v2837, 0.0
    %v3350 = vmax.f32 %v2838, 0.0
    %v3351 = vmax.f32 %v2839, 0.0
    %v3352 = vmax.f32 %v2840, 0.0
    %v3353 = vmax.f32 %v2841, 0.0
    %v3354 = vmax.f32 %v2842, 0.0
    %v3355 = vmax.f32 %v2843, 0.0
    %v3356 = vmax.f32 %v2844, 0.0
    %v3357 = vmax.f32 %v2845, 0.0
    %v3358 = vmax.f32 %v2846, 0.0
    %v3359 = vmax.f32 %v2847, 0.0
    %v3360 = vmax.f32 %v2848, 0.0
    %v3361 = vmax.f32 %v2849, 0.0
    %v3362 = vmax.f32 %v2850, 0.0
    %v3363 = vmax.f32 %v2851, 0.0
    %v3364 = vmax.f32 %v2852, 0.0
    %v3365 = vmax.f32 %v2853, 0.0
    %v3366 = vmax.f32 %v2854, 0.0
    %v3367 = vmax.f32 %v2855, 0.0
    %v3368 = vmax.f32 %v2856, 0.0
    %v3369 = vmax.f32 %v2857, 0.0
    %v3370 = vmax.f32 %v2858, 0.0
    %v3371 = vmax.f32 %v2859, 0.0
    %v3372 = vmax.f32 %v2860, 0.0
    %v3373 = vmax.f32 %v2861, 0.0
    %v3374 = vmax.f32 %v2862, 0.0
    %v3375 = vmax.f32 %v2863, 0.0
    %v3376 = vmax.f32 %v2864, 0.0
    %v3377 = vmax.f32 %v2865, 0.0
    %v3378 = vmax.f32 %v2866, 0.0
    %v3379 = vmax.f32 %v2867, 0.0
    %v3380 = vmax.f32 %v2868, 0.0
    %v3381 = vmax.f32 %v2869, 0.0
    %v3382 = vmax.f32 %v2870, 0.0
    %v3383 = vmax.f32 %v2871, 0.0
    %v3384 = vmax.f32 %v2872, 0.0
    %v3385 = vmax.f32 %v2873, 0.0
    %v3386 = vmax.f32 %v2874, 0.0
    %v3387 = vmax.f32 %v2875, 0.0
    %v3388 = vmax.f32 %v2876, 0.0
    %v3389 = vmax.f32 %v2877, 0.0
    %v3390 = vmax.f32 %v2878, 0.0
    %v3391 = vmax.f32 %v2879, 0.0
    %v3392 = vmax.f32 %v2880, 0.0
    %v3393 = vmax.f32 %v2881, 0.0
    %v3394 = vmax.f32 %v2882, 0.0
    %v3395 = vmax.f32 %v2883, 0.0
    %v3396 = vmax.f32 %v2884, 0.0
    %v3397 = vmax.f32 %v2885, 0.0
    %v3398 = vmax.f32 %v2886, 0.0
    %v3399 = vmax.f32 %v2887, 0.0
    %v3400 = vmax.f32 %v2888, 0.0
    %v3401 = vmax.f32 %v2889, 0.0
    %v3402 = vmax.f32 %v2890, 0.0
    %v3403 = vmax.f32 %v2891, 0.0
    %v3404 = vmax.f32 %v2892, 0.0
    %v3405 = vmax.f32 %v2893, 0.0
    %v3406 = vmax.f32 %v2894, 0.0
    %v3407 = vmax.f32 %v2895, 0.0
    %v3408 = vmax.f32 %v2896, 0.0
    %v3409 = vmax.f32 %v2897, 0.0
    %v3410 = vmax.f32 %v2898, 0.0
    %v3411 = vmax.f32 %v2899, 0.0
    %v3412 = vmax.f32 %v2900, 0.0
    %v3413 = vmax.f32 %v2901, 0.0
    %v3414 = vmax.f32 %v2902, 0.0
    %v3415 = vmax.f32 %v2903, 0.0
    %v3416 = vmax.f32 %v2904, 0.0
    %v3417 = vmax.f32 %v2905, 0.0
    %v3418 = vmax.f32 %v2906, 0.0
    %v3419 = vmax.f32 %v2907, 0.0
    %v3420 = vmax.f32 %v2908, 0.0
    %v3421 = vmax.f32 %v2909, 0.0
    %v3422 = vmax.f32 %v2910, 0.0
    %v3423 = vmax.f32 %v2911, 0.0
    %v3424 = vmax.f32 %v2912, 0.0
    %v3425 = vmax.f32 %v2913, 0.0
    %v3426 = vmax.f32 %v2914, 0.0
    %v3427 = vmax.f32 %v2915, 0.0
    %v3428 = vmax.f32 %v2916, 0.0
    %v3429 = vmax.f32 %v2917, 0.0
    %v3430 = vmax.f32 %v2918, 0.0
    %v3431 = vmax.f32 %v2919, 0.0
    %v3432 = vmax.f32 %v2920, 0.0
    %v3433 = vmax.f32 %v2921, 0.0
    %v3434 = vmax.f32 %v2922, 0.0
    %v3435 = vmax.f32 %v2923, 0.0
    %v3436 = vmax.f32 %v2924, 0.0
    %v3437 = vmax.f32 %v2925, 0.0
    %v3438 = vmax.f32 %v2926, 0.0
    %v3439 = vmax.f32 %v2927, 0.0
    %v3440 = vmax.f32 %v2928, 0.0
    %v3441 = vmax.f32 %v2929, 0.0
    %v3442 = vmax.f32 %v2930, 0.0
    %v3443 = vmax.f32 %v2931, 0.0
    %v3444 = vmax.f32 %v2932, 0.0
    %v3445 = vmax.f32 %v2933, 0.0
    %v3446 = vmax.f32 %v2934, 0.0
    %v3447 = vmax.f32 %v2935, 0.0
    %v3448 = vmax.f32 %v2936, 0.0
    %v3449 = vmax.f32 %v2937, 0.0
    %v3450 = vmax.f32 %v2938, 0.0
    %v3451 = vmax.f32 %v2939, 0.0
    %v3452 = vmax.f32 %v2940, 0.0
    %v3453 = vmax.f32 %v2941, 0.0
    %v3454 = vmax.f32 %v2942, 0.0
    %v3455 = vmax.f32 %v2943, 0.0
    %v3456 = vmax.f32 %v2944, 0.0
    %v3457 = vmax.f32 %v2945, 0.0
    %v3458 = vmax.f32 %v2946, 0.0
    %v3459 = vmax.f32 %v2947, 0.0
    %v3460 = vmax.f32 %v2948, 0.0
    %v3461 = vmax.f32 %v2949, 0.0
    %v3462 = vmax.f32 %v2950, 0.0
    %v3463 = vmax.f32 %v2951, 0.0
    %v3464 = vmax.f32 %v2952, 0.0
    %v3465 = vmax.f32 %v2953, 0.0
    %v3466 = vmax.f32 %v2954, 0.0
    %v3467 = vmax.f32 %v2955, 0.0
    %v3468 = vmax.f32 %v2956, 0.0
    %v3469 = vmax.f32 %v2957, 0.0
    %v3470 = vmax.f32 %v2958, 0.0
    %v3471 = vmax.f32 %v2959, 0.0
    %v3472 = vmax.f32 %v2960, 0.0
    %v3473 = vmax.f32 %v2961, 0.0
    %v3474 = vmax.f32 %v2962, 0.0
    %v3475 = vmax.f32 %v2963, 0.0
    %v3476 = vmax.f32 %v2964, 0.0
    %v3477 = vmax.f32 %v2965, 0.0
    %v3478 = vmax.f32 %v2966, 0.0
    %v3479 = vmax.f32 %v2967, 0.0
    %v3480 = vmax.f32 %v2968, 0.0
    %v3481 = vmax.f32 %v2969, 0.0
    %v3482 = vmax.f32 %v2970, 0.0
    %v3483 = vmax.f32 %v2971, 0.0
    %v3484 = vmax.f32 %v2972, 0.0
    %v3485 = vmax.f32 %v2973, 0.0
    %v3486 = vmax.f32 %v2974, 0.0
    %v3487 = vmax.f32 %v2975, 0.0
    %v3488 = vmax.f32 %v2976, 0.0
    %v3489 = vmax.f32 %v2977, 0.0
    %v3490 = vmax.f32 %v2978, 0.0
    %v3491 = vmax.f32 %v2979, 0.0
    %v3492 = vmax.f32 %v2980, 0.0
    %v3493 = vmax.f32 %v2981, 0.0
    %v3494 = vld [vmem:[%s2] sm:$0xff]
    %v3495 = vld [vmem:[%s2 + $0x8] sm:$0xff]
    %v3496 = vld [vmem:[%s2 + $0x10] sm:$0xff]
    %v3497 = vld [vmem:[%s2 + $0x18] sm:$0xff]
    %3499 = vset.pattern.permute.xlu0 0
    %3500 = vperm.xlu0 %3499, %v3494
    %v3501 = vpop.permute.xlu0 %3500
    %3504 = vset.pattern.permute.xlu0 0
    %3505 = vperm.xlu0 %3504, %v3495
    %v3506 = vpop.permute.xlu0 %3505
    %3509 = vset.pattern.permute.xlu0 0
    %3510 = vperm.xlu0 %3509, %v3496
    %v3511 = vpop.permute.xlu0 %3510
    %3514 = vset.pattern.permute.xlu0 0
    %3515 = vperm.xlu0 %3514, %v3497
    %v3516 = vpop.permute.xlu0 %3515
    %v3518 = vmul.f32 %v2982, %v3501
    %v3519 = vmul.f32 %v2983, %v3506
    %v3520 = vmul.f32 %v2984, %v3511
    %v3521 = vmul.f32 %v2985, %v3516
    %v3522 = vmul.f32 %v2986, %v3501
    %v3523 = vmul.f32 %v2987, %v3506
    %v3524 = vmul.f32 %v2988, %v3511
    %v3525 = vmul.f32 %v2989, %v3516
    %v3526 = vmul.f32 %v2990, %v3501
    %v3527 = vmul.f32 %v2991, %v3506
    %v3528 = vmul.f32 %v2992, %v3511
    %v3529 = vmul.f32 %v2993, %v3516
    %v3530 = vmul.f32 %v2994, %v3501
    %v3531 = vmul.f32 %v2995, %v3506
    %v3532 = vmul.f32 %v2996, %v3511
    %v3533 = vmul.f32 %v2997, %v3516
    %v3534 = vmul.f32 %v2998, %v3501
    %v3535 = vmul.f32 %v2999, %v3506
    %v3536 = vmul.f32 %v3000, %v3511
    %v3537 = vmul.f32 %v3001, %v3516
    %v3538 = vmul.f32 %v3002, %v3501
    %v3539 = vmul.f32 %v3003, %v3506
    %v3540 = vmul.f32 %v3004, %v3511
    %v3541 = vmul.f32 %v3005, %v3516
    %v3542 = vmul.f32 %v3006, %v3501
    %v3543 = vmul.f32 %v3007, %v3506
    %v3544 = vmul.f32 %v3008, %v3511
    %v3545 = vmul.f32 %v3009, %v3516
    %v3546 = vmul.f32 %v3010, %v3501
    %v3547 = vmul.f32 %v3011, %v3506
    %v3548 = vmul.f32 %v3012, %v3511
    %v3549 = vmul.f32 %v3013, %v3516
    %v3550 = vmul.f32 %v3014, %v3501
    %v3551 = vmul.f32 %v3015, %v3506
    %v3552 = vmul.f32 %v3016, %v3511
    %v3553 = vmul.f32 %v3017, %v3516
    %v3554 = vmul.f32 %v3018, %v3501
    %v3555 = vmul.f32 %v3019, %v3506
    %v3556 = vmul.f32 %v3020, %v3511
    %v3557 = vmul.f32 %v3021, %v3516
    %v3558 = vmul.f32 %v3022, %v3501
    %v3559 = vmul.f32 %v3023, %v3506
    %v3560 = vmul.f32 %v3024, %v3511
    %v3561 = vmul.f32 %v3025, %v3516
    %v3562 = vmul.f32 %v3026, %v3501
    %v3563 = vmul.f32 %v3027, %v3506
    %v3564 = vmul.f32 %v3028, %v3511
    %v3565 = vmul.f32 %v3029, %v3516
    %v3566 = vmul.f32 %v3030, %v3501
    %v3567 = vmul.f32 %v3031, %v3506
    %v3568 = vmul.f32 %v3032, %v3511
    %v3569 = vmul.f32 %v3033, %v3516
    %v3570 = vmul.f32 %v3034, %v3501
    %v3571 = vmul.f32 %v3035, %v3506
    %v3572 = vmul.f32 %v3036, %v3511
    %v3573 = vmul.f32 %v3037, %v3516
    %v3574 = vmul.f32 %v3038, %v3501
    %v3575 = vmul.f32 %v3039, %v3506
    %v3576 = vmul.f32 %v3040, %v3511
    %v3577 = vmul.f32 %v3041, %v3516
    %v3578 = vmul.f32 %v3042, %v3501
    %v3579 = vmul.f32 %v3043, %v3506
    %v3580 = vmul.f32 %v3044, %v3511
    %v3581 = vmul.f32 %v3045, %v3516
    %v3582 = vmul.f32 %v3046, %v3501
    %v3583 = vmul.f32 %v3047, %v3506
    %v3584 = vmul.f32 %v3048, %v3511
    %v3585 = vmul.f32 %v3049, %v3516
    %v3586 = vmul.f32 %v3050, %v3501
    %v3587 = vmul.f32 %v3051, %v3506
    %v3588 = vmul.f32 %v3052, %v3511
    %v3589 = vmul.f32 %v3053, %v3516
    %v3590 = vmul.f32 %v3054, %v3501
    %v3591 = vmul.f32 %v3055, %v3506
    %v3592 = vmul.f32 %v3056, %v3511
    %v3593 = vmul.f32 %v3057, %v3516
    %v3594 = vmul.f32 %v3058, %v3501
    %v3595 = vmul.f32 %v3059, %v3506
    %v3596 = vmul.f32 %v3060, %v3511
    %v3597 = vmul.f32 %v3061, %v3516
    %v3598 = vmul.f32 %v3062, %v3501
    %v3599 = vmul.f32 %v3063, %v3506
    %v3600 = vmul.f32 %v3064, %v3511
    %v3601 = vmul.f32 %v3065, %v3516
    %v3602 = vmul.f32 %v3066, %v3501
    %v3603 = vmul.f32 %v3067, %v3506
    %v3604 = vmul.f32 %v3068, %v3511
    %v3605 = vmul.f32 %v3069, %v3516
    %v3606 = vmul.f32 %v3070, %v3501
    %v3607 = vmul.f32 %v3071, %v3506
    %v3608 = vmul.f32 %v3072, %v3511
    %v3609 = vmul.f32 %v3073, %v3516
    %v3610 = vmul.f32 %v3074, %v3501
    %v3611 = vmul.f32 %v3075, %v3506
    %v3612 = vmul.f32 %v3076, %v3511
    %v3613 = vmul.f32 %v3077, %v3516
    %v3614 = vmul.f32 %v3078, %v3501
    %v3615 = vmul.f32 %v3079, %v3506
    %v3616 = vmul.f32 %v3080, %v3511
    %v3617 = vmul.f32 %v3081, %v3516
    %v3618 = vmul.f32 %v3082, %v3501
    %v3619 = vmul.f32 %v3083, %v3506
    %v3620 = vmul.f32 %v3084, %v3511
    %v3621 = vmul.f32 %v3085, %v3516
    %v3622 = vmul.f32 %v3086, %v3501
    %v3623 = vmul.f32 %v3087, %v3506
    %v3624 = vmul.f32 %v3088, %v3511
    %v3625 = vmul.f32 %v3089, %v3516
    %v3626 = vmul.f32 %v3090, %v3501
    %v3627 = vmul.f32 %v3091, %v3506
    %v3628 = vmul.f32 %v3092, %v3511
    %v3629 = vmul.f32 %v3093, %v3516
    %v3630 = vmul.f32 %v3094, %v3501
    %v3631 = vmul.f32 %v3095, %v3506
    %v3632 = vmul.f32 %v3096, %v3511
    %v3633 = vmul.f32 %v3097, %v3516
    %v3634 = vmul.f32 %v3098, %v3501
    %v3635 = vmul.f32 %v3099, %v3506
    %v3636 = vmul.f32 %v3100, %v3511
    %v3637 = vmul.f32 %v3101, %v3516
    %v3638 = vmul.f32 %v3102, %v3501
    %v3639 = vmul.f32 %v3103, %v3506
    %v3640 = vmul.f32 %v3104, %v3511
    %v3641 = vmul.f32 %v3105, %v3516
    %v3642 = vmul.f32 %v3106, %v3501
    %v3643 = vmul.f32 %v3107, %v3506
    %v3644 = vmul.f32 %v3108, %v3511
    %v3645 = vmul.f32 %v3109, %v3516
    %v3646 = vmul.f32 %v3110, %v3501
    %v3647 = vmul.f32 %v3111, %v3506
    %v3648 = vmul.f32 %v3112, %v3511
    %v3649 = vmul.f32 %v3113, %v3516
    %v3650 = vmul.f32 %v3114, %v3501
    %v3651 = vmul.f32 %v3115, %v3506
    %v3652 = vmul.f32 %v3116, %v3511
    %v3653 = vmul.f32 %v3117, %v3516
    %v3654 = vmul.f32 %v3118, %v3501
    %v3655 = vmul.f32 %v3119, %v3506
    %v3656 = vmul.f32 %v3120, %v3511
    %v3657 = vmul.f32 %v3121, %v3516
    %v3658 = vmul.f32 %v3122, %v3501
    %v3659 = vmul.f32 %v3123, %v3506
    %v3660 = vmul.f32 %v3124, %v3511
    %v3661 = vmul.f32 %v3125, %v3516
    %v3662 = vmul.f32 %v3126, %v3501
    %v3663 = vmul.f32 %v3127, %v3506
    %v3664 = vmul.f32 %v3128, %v3511
    %v3665 = vmul.f32 %v3129, %v3516
    %v3666 = vmul.f32 %v3130, %v3501
    %v3667 = vmul.f32 %v3131, %v3506
    %v3668 = vmul.f32 %v3132, %v3511
    %v3669 = vmul.f32 %v3133, %v3516
    %v3670 = vmul.f32 %v3134, %v3501
    %v3671 = vmul.f32 %v3135, %v3506
    %v3672 = vmul.f32 %v3136, %v3511
    %v3673 = vmul.f32 %v3137, %v3516
    %v3674 = vmul.f32 %v3138, %v3501
    %v3675 = vmul.f32 %v3139, %v3506
    %v3676 = vmul.f32 %v3140, %v3511
    %v3677 = vmul.f32 %v3141, %v3516
    %v3678 = vmul.f32 %v3142, %v3501
    %v3679 = vmul.f32 %v3143, %v3506
    %v3680 = vmul.f32 %v3144, %v3511
    %v3681 = vmul.f32 %v3145, %v3516
    %v3682 = vmul.f32 %v3146, %v3501
    %v3683 = vmul.f32 %v3147, %v3506
    %v3684 = vmul.f32 %v3148, %v3511
    %v3685 = vmul.f32 %v3149, %v3516
    %v3686 = vmul.f32 %v3150, %v3501
    %v3687 = vmul.f32 %v3151, %v3506
    %v3688 = vmul.f32 %v3152, %v3511
    %v3689 = vmul.f32 %v3153, %v3516
    %v3690 = vmul.f32 %v3154, %v3501
    %v3691 = vmul.f32 %v3155, %v3506
    %v3692 = vmul.f32 %v3156, %v3511
    %v3693 = vmul.f32 %v3157, %v3516
    %v3694 = vmul.f32 %v3158, %v3501
    %v3695 = vmul.f32 %v3159, %v3506
    %v3696 = vmul.f32 %v3160, %v3511
    %v3697 = vmul.f32 %v3161, %v3516
    %v3698 = vmul.f32 %v3162, %v3501
    %v3699 = vmul.f32 %v3163, %v3506
    %v3700 = vmul.f32 %v3164, %v3511
    %v3701 = vmul.f32 %v3165, %v3516
    %v3702 = vmul.f32 %v3166, %v3501
    %v3703 = vmul.f32 %v3167, %v3506
    %v3704 = vmul.f32 %v3168, %v3511
    %v3705 = vmul.f32 %v3169, %v3516
    %v3706 = vmul.f32 %v3170, %v3501
    %v3707 = vmul.f32 %v3171, %v3506
    %v3708 = vmul.f32 %v3172, %v3511
    %v3709 = vmul.f32 %v3173, %v3516
    %v3710 = vmul.f32 %v3174, %v3501
    %v3711 = vmul.f32 %v3175, %v3506
    %v3712 = vmul.f32 %v3176, %v3511
    %v3713 = vmul.f32 %v3177, %v3516
    %v3714 = vmul.f32 %v3178, %v3501
    %v3715 = vmul.f32 %v3179, %v3506
    %v3716 = vmul.f32 %v3180, %v3511
    %v3717 = vmul.f32 %v3181, %v3516
    %v3718 = vmul.f32 %v3182, %v3501
    %v3719 = vmul.f32 %v3183, %v3506
    %v3720 = vmul.f32 %v3184, %v3511
    %v3721 = vmul.f32 %v3185, %v3516
    %v3722 = vmul.f32 %v3186, %v3501
    %v3723 = vmul.f32 %v3187, %v3506
    %v3724 = vmul.f32 %v3188, %v3511
    %v3725 = vmul.f32 %v3189, %v3516
    %v3726 = vmul.f32 %v3190, %v3501
    %v3727 = vmul.f32 %v3191, %v3506
    %v3728 = vmul.f32 %v3192, %v3511
    %v3729 = vmul.f32 %v3193, %v3516
    %v3730 = vmul.f32 %v3194, %v3501
    %v3731 = vmul.f32 %v3195, %v3506
    %v3732 = vmul.f32 %v3196, %v3511
    %v3733 = vmul.f32 %v3197, %v3516
    %v3734 = vmul.f32 %v3198, %v3501
    %v3735 = vmul.f32 %v3199, %v3506
    %v3736 = vmul.f32 %v3200, %v3511
    %v3737 = vmul.f32 %v3201, %v3516
    %v3738 = vmul.f32 %v3202, %v3501
    %v3739 = vmul.f32 %v3203, %v3506
    %v3740 = vmul.f32 %v3204, %v3511
    %v3741 = vmul.f32 %v3205, %v3516
    %v3742 = vmul.f32 %v3206, %v3501
    %v3743 = vmul.f32 %v3207, %v3506
    %v3744 = vmul.f32 %v3208, %v3511
    %v3745 = vmul.f32 %v3209, %v3516
    %v3746 = vmul.f32 %v3210, %v3501
    %v3747 = vmul.f32 %v3211, %v3506
    %v3748 = vmul.f32 %v3212, %v3511
    %v3749 = vmul.f32 %v3213, %v3516
    %v3750 = vmul.f32 %v3214, %v3501
    %v3751 = vmul.f32 %v3215, %v3506
    %v3752 = vmul.f32 %v3216, %v3511
    %v3753 = vmul.f32 %v3217, %v3516
    %v3754 = vmul.f32 %v3218, %v3501
    %v3755 = vmul.f32 %v3219, %v3506
    %v3756 = vmul.f32 %v3220, %v3511
    %v3757 = vmul.f32 %v3221, %v3516
    %v3758 = vmul.f32 %v3222, %v3501
    %v3759 = vmul.f32 %v3223, %v3506
    %v3760 = vmul.f32 %v3224, %v3511
    %v3761 = vmul.f32 %v3225, %v3516
    %v3762 = vmul.f32 %v3226, %v3501
    %v3763 = vmul.f32 %v3227, %v3506
    %v3764 = vmul.f32 %v3228, %v3511
    %v3765 = vmul.f32 %v3229, %v3516
    %v3766 = vmul.f32 %v3230, %v3501
    %v3767 = vmul.f32 %v3231, %v3506
    %v3768 = vmul.f32 %v3232, %v3511
    %v3769 = vmul.f32 %v3233, %v3516
    %v3770 = vmul.f32 %v3234, %v3501
    %v3771 = vmul.f32 %v3235, %v3506
    %v3772 = vmul.f32 %v3236, %v3511
    %v3773 = vmul.f32 %v3237, %v3516
    %v3774 = vmul.f32 %v3238, %v3501
    %v3775 = vmul.f32 %v3239, %v3506
    %v3776 = vmul.f32 %v3240, %v3511
    %v3777 = vmul.f32 %v3241, %v3516
    %v3778 = vmul.f32 %v3242, %v3501
    %v3779 = vmul.f32 %v3243, %v3506
    %v3780 = vmul.f32 %v3244, %v3511
    %v3781 = vmul.f32 %v3245, %v3516
    %v3782 = vmul.f32 %v3246, %v3501
    %v3783 = vmul.f32 %v3247, %v3506
    %v3784 = vmul.f32 %v3248, %v3511
    %v3785 = vmul.f32 %v3249, %v3516
    %v3786 = vmul.f32 %v3250, %v3501
    %v3787 = vmul.f32 %v3251, %v3506
    %v3788 = vmul.f32 %v3252, %v3511
    %v3789 = vmul.f32 %v3253, %v3516
    %v3790 = vmul.f32 %v3254, %v3501
    %v3791 = vmul.f32 %v3255, %v3506
    %v3792 = vmul.f32 %v3256, %v3511
    %v3793 = vmul.f32 %v3257, %v3516
    %v3794 = vmul.f32 %v3258, %v3501
    %v3795 = vmul.f32 %v3259, %v3506
    %v3796 = vmul.f32 %v3260, %v3511
    %v3797 = vmul.f32 %v3261, %v3516
    %v3798 = vmul.f32 %v3262, %v3501
    %v3799 = vmul.f32 %v3263, %v3506
    %v3800 = vmul.f32 %v3264, %v3511
    %v3801 = vmul.f32 %v3265, %v3516
    %v3802 = vmul.f32 %v3266, %v3501
    %v3803 = vmul.f32 %v3267, %v3506
    %v3804 = vmul.f32 %v3268, %v3511
    %v3805 = vmul.f32 %v3269, %v3516
    %v3806 = vmul.f32 %v3270, %v3501
    %v3807 = vmul.f32 %v3271, %v3506
    %v3808 = vmul.f32 %v3272, %v3511
    %v3809 = vmul.f32 %v3273, %v3516
    %v3810 = vmul.f32 %v3274, %v3501
    %v3811 = vmul.f32 %v3275, %v3506
    %v3812 = vmul.f32 %v3276, %v3511
    %v3813 = vmul.f32 %v3277, %v3516
    %v3814 = vmul.f32 %v3278, %v3501
    %v3815 = vmul.f32 %v3279, %v3506
    %v3816 = vmul.f32 %v3280, %v3511
    %v3817 = vmul.f32 %v3281, %v3516
    %v3818 = vmul.f32 %v3282, %v3501
    %v3819 = vmul.f32 %v3283, %v3506
    %v3820 = vmul.f32 %v3284, %v3511
    %v3821 = vmul.f32 %v3285, %v3516
    %v3822 = vmul.f32 %v3286, %v3501
    %v3823 = vmul.f32 %v3287, %v3506
    %v3824 = vmul.f32 %v3288, %v3511
    %v3825 = vmul.f32 %v3289, %v3516
    %v3826 = vmul.f32 %v3290, %v3501
    %v3827 = vmul.f32 %v3291, %v3506
    %v3828 = vmul.f32 %v3292, %v3511
    %v3829 = vmul.f32 %v3293, %v3516
    %v3830 = vmul.f32 %v3294, %v3501
    %v3831 = vmul.f32 %v3295, %v3506
    %v3832 = vmul.f32 %v3296, %v3511
    %v3833 = vmul.f32 %v3297, %v3516
    %v3834 = vmul.f32 %v3298, %v3501
    %v3835 = vmul.f32 %v3299, %v3506
    %v3836 = vmul.f32 %v3300, %v3511
    %v3837 = vmul.f32 %v3301, %v3516
    %v3838 = vmul.f32 %v3302, %v3501
    %v3839 = vmul.f32 %v3303, %v3506
    %v3840 = vmul.f32 %v3304, %v3511
    %v3841 = vmul.f32 %v3305, %v3516
    %v3842 = vmul.f32 %v3306, %v3501
    %v3843 = vmul.f32 %v3307, %v3506
    %v3844 = vmul.f32 %v3308, %v3511
    %v3845 = vmul.f32 %v3309, %v3516
    %v3846 = vmul.f32 %v3310, %v3501
    %v3847 = vmul.f32 %v3311, %v3506
    %v3848 = vmul.f32 %v3312, %v3511
    %v3849 = vmul.f32 %v3313, %v3516
    %v3850 = vmul.f32 %v3314, %v3501
    %v3851 = vmul.f32 %v3315, %v3506
    %v3852 = vmul.f32 %v3316, %v3511
    %v3853 = vmul.f32 %v3317, %v3516
    %v3854 = vmul.f32 %v3318, %v3501
    %v3855 = vmul.f32 %v3319, %v3506
    %v3856 = vmul.f32 %v3320, %v3511
    %v3857 = vmul.f32 %v3321, %v3516
    %v3858 = vmul.f32 %v3322, %v3501
    %v3859 = vmul.f32 %v3323, %v3506
    %v3860 = vmul.f32 %v3324, %v3511
    %v3861 = vmul.f32 %v3325, %v3516
    %v3862 = vmul.f32 %v3326, %v3501
    %v3863 = vmul.f32 %v3327, %v3506
    %v3864 = vmul.f32 %v3328, %v3511
    %v3865 = vmul.f32 %v3329, %v3516
    %v3866 = vmul.f32 %v3330, %v3501
    %v3867 = vmul.f32 %v3331, %v3506
    %v3868 = vmul.f32 %v3332, %v3511
    %v3869 = vmul.f32 %v3333, %v3516
    %v3870 = vmul.f32 %v3334, %v3501
    %v3871 = vmul.f32 %v3335, %v3506
    %v3872 = vmul.f32 %v3336, %v3511
    %v3873 = vmul.f32 %v3337, %v3516
    %v3874 = vmul.f32 %v3338, %v3501
    %v3875 = vmul.f32 %v3339, %v3506
    %v3876 = vmul.f32 %v3340, %v3511
    %v3877 = vmul.f32 %v3341, %v3516
    %v3878 = vmul.f32 %v3342, %v3501
    %v3879 = vmul.f32 %v3343, %v3506
    %v3880 = vmul.f32 %v3344, %v3511
    %v3881 = vmul.f32 %v3345, %v3516
    %v3882 = vmul.f32 %v3346, %v3501
    %v3883 = vmul.f32 %v3347, %v3506
    %v3884 = vmul.f32 %v3348, %v3511
    %v3885 = vmul.f32 %v3349, %v3516
    %v3886 = vmul.f32 %v3350, %v3501
    %v3887 = vmul.f32 %v3351, %v3506
    %v3888 = vmul.f32 %v3352, %v3511
    %v3889 = vmul.f32 %v3353, %v3516
    %v3890 = vmul.f32 %v3354, %v3501
    %v3891 = vmul.f32 %v3355, %v3506
    %v3892 = vmul.f32 %v3356, %v3511
    %v3893 = vmul.f32 %v3357, %v3516
    %v3894 = vmul.f32 %v3358, %v3501
    %v3895 = vmul.f32 %v3359, %v3506
    %v3896 = vmul.f32 %v3360, %v3511
    %v3897 = vmul.f32 %v3361, %v3516
    %v3898 = vmul.f32 %v3362, %v3501
    %v3899 = vmul.f32 %v3363, %v3506
    %v3900 = vmul.f32 %v3364, %v3511
    %v3901 = vmul.f32 %v3365, %v3516
    %v3902 = vmul.f32 %v3366, %v3501
    %v3903 = vmul.f32 %v3367, %v3506
    %v3904 = vmul.f32 %v3368, %v3511
    %v3905 = vmul.f32 %v3369, %v3516
    %v3906 = vmul.f32 %v3370, %v3501
    %v3907 = vmul.f32 %v3371, %v3506
    %v3908 = vmul.f32 %v3372, %v3511
    %v3909 = vmul.f32 %v3373, %v3516
    %v3910 = vmul.f32 %v3374, %v3501
    %v3911 = vmul.f32 %v3375, %v3506
    %v3912 = vmul.f32 %v3376, %v3511
    %v3913 = vmul.f32 %v3377, %v3516
    %v3914 = vmul.f32 %v3378, %v3501
    %v3915 = vmul.f32 %v3379, %v3506
    %v3916 = vmul.f32 %v3380, %v3511
    %v3917 = vmul.f32 %v3381, %v3516
    %v3918 = vmul.f32 %v3382, %v3501
    %v3919 = vmul.f32 %v3383, %v3506
    %v3920 = vmul.f32 %v3384, %v3511
    %v3921 = vmul.f32 %v3385, %v3516
    %v3922 = vmul.f32 %v3386, %v3501
    %v3923 = vmul.f32 %v3387, %v3506
    %v3924 = vmul.f32 %v3388, %v3511
    %v3925 = vmul.f32 %v3389, %v3516
    %v3926 = vmul.f32 %v3390, %v3501
    %v3927 = vmul.f32 %v3391, %v3506
    %v3928 = vmul.f32 %v3392, %v3511
    %v3929 = vmul.f32 %v3393, %v3516
    %v3930 = vmul.f32 %v3394, %v3501
    %v3931 = vmul.f32 %v3395, %v3506
    %v3932 = vmul.f32 %v3396, %v3511
    %v3933 = vmul.f32 %v3397, %v3516
    %v3934 = vmul.f32 %v3398, %v3501
    %v3935 = vmul.f32 %v3399, %v3506
    %v3936 = vmul.f32 %v3400, %v3511
    %v3937 = vmul.f32 %v3401, %v3516
    %v3938 = vmul.f32 %v3402, %v3501
    %v3939 = vmul.f32 %v3403, %v3506
    %v3940 = vmul.f32 %v3404, %v3511
    %v3941 = vmul.f32 %v3405, %v3516
    %v3942 = vmul.f32 %v3406, %v3501
    %v3943 = vmul.f32 %v3407, %v3506
    %v3944 = vmul.f32 %v3408, %v3511
    %v3945 = vmul.f32 %v3409, %v3516
    %v3946 = vmul.f32 %v3410, %v3501
    %v3947 = vmul.f32 %v3411, %v3506
    %v3948 = vmul.f32 %v3412, %v3511
    %v3949 = vmul.f32 %v3413, %v3516
    %v3950 = vmul.f32 %v3414, %v3501
    %v3951 = vmul.f32 %v3415, %v3506
    %v3952 = vmul.f32 %v3416, %v3511
    %v3953 = vmul.f32 %v3417, %v3516
    %v3954 = vmul.f32 %v3418, %v3501
    %v3955 = vmul.f32 %v3419, %v3506
    %v3956 = vmul.f32 %v3420, %v3511
    %v3957 = vmul.f32 %v3421, %v3516
    %v3958 = vmul.f32 %v3422, %v3501
    %v3959 = vmul.f32 %v3423, %v3506
    %v3960 = vmul.f32 %v3424, %v3511
    %v3961 = vmul.f32 %v3425, %v3516
    %v3962 = vmul.f32 %v3426, %v3501
    %v3963 = vmul.f32 %v3427, %v3506
    %v3964 = vmul.f32 %v3428, %v3511
    %v3965 = vmul.f32 %v3429, %v3516
    %v3966 = vmul.f32 %v3430, %v3501
    %v3967 = vmul.f32 %v3431, %v3506
    %v3968 = vmul.f32 %v3432, %v3511
    %v3969 = vmul.f32 %v3433, %v3516
    %v3970 = vmul.f32 %v3434, %v3501
    %v3971 = vmul.f32 %v3435, %v3506
    %v3972 = vmul.f32 %v3436, %v3511
    %v3973 = vmul.f32 %v3437, %v3516
    %v3974 = vmul.f32 %v3438, %v3501
    %v3975 = vmul.f32 %v3439, %v3506
    %v3976 = vmul.f32 %v3440, %v3511
    %v3977 = vmul.f32 %v3441, %v3516
    %v3978 = vmul.f32 %v3442, %v3501
    %v3979 = vmul.f32 %v3443, %v3506
    %v3980 = vmul.f32 %v3444, %v3511
    %v3981 = vmul.f32 %v3445, %v3516
    %v3982 = vmul.f32 %v3446, %v3501
    %v3983 = vmul.f32 %v3447, %v3506
    %v3984 = vmul.f32 %v3448, %v3511
    %v3985 = vmul.f32 %v3449, %v3516
    %v3986 = vmul.f32 %v3450, %v3501
    %v3987 = vmul.f32 %v3451, %v3506
    %v3988 = vmul.f32 %v3452, %v3511
    %v3989 = vmul.f32 %v3453, %v3516
    %v3990 = vmul.f32 %v3454, %v3501
    %v3991 = vmul.f32 %v3455, %v3506
    %v3992 = vmul.f32 %v3456, %v3511
    %v3993 = vmul.f32 %v3457, %v3516
    %v3994 = vmul.f32 %v3458, %v3501
    %v3995 = vmul.f32 %v3459, %v3506
    %v3996 = vmul.f32 %v3460, %v3511
    %v3997 = vmul.f32 %v3461, %v3516
    %v3998 = vmul.f32 %v3462, %v3501
    %v3999 = vmul.f32 %v3463, %v3506
    %v4000 = vmul.f32 %v3464, %v3511
    %v4001 = vmul.f32 %v3465, %v3516
    %v4002 = vmul.f32 %v3466, %v3501
    %v4003 = vmul.f32 %v3467, %v3506
    %v4004 = vmul.f32 %v3468, %v3511
    %v4005 = vmul.f32 %v3469, %v3516
    %v4006 = vmul.f32 %v3470, %v3501
    %v4007 = vmul.f32 %v3471, %v3506
    %v4008 = vmul.f32 %v3472, %v3511
    %v4009 = vmul.f32 %v3473, %v3516
    %v4010 = vmul.f32 %v3474, %v3501
    %v4011 = vmul.f32 %v3475, %v3506
    %v4012 = vmul.f32 %v3476, %v3511
    %v4013 = vmul.f32 %v3477, %v3516
    %v4014 = vmul.f32 %v3478, %v3501
    %v4015 = vmul.f32 %v3479, %v3506
    %v4016 = vmul.f32 %v3480, %v3511
    %v4017 = vmul.f32 %v3481, %v3516
    %v4018 = vmul.f32 %v3482, %v3501
    %v4019 = vmul.f32 %v3483, %v3506
    %v4020 = vmul.f32 %v3484, %v3511
    %v4021 = vmul.f32 %v3485, %v3516
    %v4022 = vmul.f32 %v3486, %v3501
    %v4023 = vmul.f32 %v3487, %v3506
    %v4024 = vmul.f32 %v3488, %v3511
    %v4025 = vmul.f32 %v3489, %v3516
    %v4026 = vmul.f32 %v3490, %v3501
    %v4027 = vmul.f32 %v3491, %v3506
    %v4028 = vmul.f32 %v3492, %v3511
    %v4029 = vmul.f32 %v3493, %v3516
    %v4030 = vadd.f32 %v3518, %v3519
    %v4031 = vadd.f32 %v4030, %v3520
    %v4032 = vadd.f32 %v4031, %v3521
    %v4033 = vrot.slane %v4032, 4
    %v4034 = vadd.f32 %v4032, %v4033
    %v4035 = vrot.slane %v4034, 2
    %v4036 = vadd.f32 %v4034, %v4035
    %v4037 = vrot.slane %v4036, 1
    %v4038 = vadd.f32 %v4036, %v4037
    %v4039 = vadd.f32 %v3522, %v3523
    %v4040 = vadd.f32 %v4039, %v3524
    %v4041 = vadd.f32 %v4040, %v3525
    %v4042 = vrot.slane %v4041, 4
    %v4043 = vadd.f32 %v4041, %v4042
    %v4044 = vrot.slane %v4043, 2
    %v4045 = vadd.f32 %v4043, %v4044
    %v4046 = vrot.slane %v4045, 1
    %v4047 = vadd.f32 %v4045, %v4046
    %v4048 = vadd.f32 %v3526, %v3527
    %v4049 = vadd.f32 %v4048, %v3528
    %v4050 = vadd.f32 %v4049, %v3529
    %v4051 = vrot.slane %v4050, 4
    %v4052 = vadd.f32 %v4050, %v4051
    %v4053 = vrot.slane %v4052, 2
    %v4054 = vadd.f32 %v4052, %v4053
    %v4055 = vrot.slane %v4054, 1
    %v4056 = vadd.f32 %v4054, %v4055
    %v4057 = vadd.f32 %v3530, %v3531
    %v4058 = vadd.f32 %v4057, %v3532
    %v4059 = vadd.f32 %v4058, %v3533
    %v4060 = vrot.slane %v4059, 4
    %v4061 = vadd.f32 %v4059, %v4060
    %v4062 = vrot.slane %v4061, 2
    %v4063 = vadd.f32 %v4061, %v4062
    %v4064 = vrot.slane %v4063, 1
    %v4065 = vadd.f32 %v4063, %v4064
    %v4066 = vadd.f32 %v3534, %v3535
    %v4067 = vadd.f32 %v4066, %v3536
    %v4068 = vadd.f32 %v4067, %v3537
    %v4069 = vrot.slane %v4068, 4
    %v4070 = vadd.f32 %v4068, %v4069
    %v4071 = vrot.slane %v4070, 2
    %v4072 = vadd.f32 %v4070, %v4071
    %v4073 = vrot.slane %v4072, 1
    %v4074 = vadd.f32 %v4072, %v4073
    %v4075 = vadd.f32 %v3538, %v3539
    %v4076 = vadd.f32 %v4075, %v3540
    %v4077 = vadd.f32 %v4076, %v3541
    %v4078 = vrot.slane %v4077, 4
    %v4079 = vadd.f32 %v4077, %v4078
    %v4080 = vrot.slane %v4079, 2
    %v4081 = vadd.f32 %v4079, %v4080
    %v4082 = vrot.slane %v4081, 1
    %v4083 = vadd.f32 %v4081, %v4082
    %v4084 = vadd.f32 %v3542, %v3543
    %v4085 = vadd.f32 %v4084, %v3544
    %v4086 = vadd.f32 %v4085, %v3545
    %v4087 = vrot.slane %v4086, 4
    %v4088 = vadd.f32 %v4086, %v4087
    %v4089 = vrot.slane %v4088, 2
    %v4090 = vadd.f32 %v4088, %v4089
    %v4091 = vrot.slane %v4090, 1
    %v4092 = vadd.f32 %v4090, %v4091
    %v4093 = vadd.f32 %v3546, %v3547
    %v4094 = vadd.f32 %v4093, %v3548
    %v4095 = vadd.f32 %v4094, %v3549
    %v4096 = vrot.slane %v4095, 4
    %v4097 = vadd.f32 %v4095, %v4096
    %v4098 = vrot.slane %v4097, 2
    %v4099 = vadd.f32 %v4097, %v4098
    %v4100 = vrot.slane %v4099, 1
    %v4101 = vadd.f32 %v4099, %v4100
    %v4102 = vadd.f32 %v3550, %v3551
    %v4103 = vadd.f32 %v4102, %v3552
    %v4104 = vadd.f32 %v4103, %v3553
    %v4105 = vrot.slane %v4104, 4
    %v4106 = vadd.f32 %v4104, %v4105
    %v4107 = vrot.slane %v4106, 2
    %v4108 = vadd.f32 %v4106, %v4107
    %v4109 = vrot.slane %v4108, 1
    %v4110 = vadd.f32 %v4108, %v4109
    %v4111 = vadd.f32 %v3554, %v3555
    %v4112 = vadd.f32 %v4111, %v3556
    %v4113 = vadd.f32 %v4112, %v3557
    %v4114 = vrot.slane %v4113, 4
    %v4115 = vadd.f32 %v4113, %v4114
    %v4116 = vrot.slane %v4115, 2
    %v4117 = vadd.f32 %v4115, %v4116
    %v4118 = vrot.slane %v4117, 1
    %v4119 = vadd.f32 %v4117, %v4118
    %v4120 = vadd.f32 %v3558, %v3559
    %v4121 = vadd.f32 %v4120, %v3560
    %v4122 = vadd.f32 %v4121, %v3561
    %v4123 = vrot.slane %v4122, 4
    %v4124 = vadd.f32 %v4122, %v4123
    %v4125 = vrot.slane %v4124, 2
    %v4126 = vadd.f32 %v4124, %v4125
    %v4127 = vrot.slane %v4126, 1
    %v4128 = vadd.f32 %v4126, %v4127
    %v4129 = vadd.f32 %v3562, %v3563
    %v4130 = vadd.f32 %v4129, %v3564
    %v4131 = vadd.f32 %v4130, %v3565
    %v4132 = vrot.slane %v4131, 4
    %v4133 = vadd.f32 %v4131, %v4132
    %v4134 = vrot.slane %v4133, 2
    %v4135 = vadd.f32 %v4133, %v4134
    %v4136 = vrot.slane %v4135, 1
    %v4137 = vadd.f32 %v4135, %v4136
    %v4138 = vadd.f32 %v3566, %v3567
    %v4139 = vadd.f32 %v4138, %v3568
    %v4140 = vadd.f32 %v4139, %v3569
    %v4141 = vrot.slane %v4140, 4
    %v4142 = vadd.f32 %v4140, %v4141
    %v4143 = vrot.slane %v4142, 2
    %v4144 = vadd.f32 %v4142, %v4143
    %v4145 = vrot.slane %v4144, 1
    %v4146 = vadd.f32 %v4144, %v4145
    %v4147 = vadd.f32 %v3570, %v3571
    %v4148 = vadd.f32 %v4147, %v3572
    %v4149 = vadd.f32 %v4148, %v3573
    %v4150 = vrot.slane %v4149, 4
    %v4151 = vadd.f32 %v4149, %v4150
    %v4152 = vrot.slane %v4151, 2
    %v4153 = vadd.f32 %v4151, %v4152
    %v4154 = vrot.slane %v4153, 1
    %v4155 = vadd.f32 %v4153, %v4154
    %v4156 = vadd.f32 %v3574, %v3575
    %v4157 = vadd.f32 %v4156, %v3576
    %v4158 = vadd.f32 %v4157, %v3577
    %v4159 = vrot.slane %v4158, 4
    %v4160 = vadd.f32 %v4158, %v4159
    %v4161 = vrot.slane %v4160, 2
    %v4162 = vadd.f32 %v4160, %v4161
    %v4163 = vrot.slane %v4162, 1
    %v4164 = vadd.f32 %v4162, %v4163
    %v4165 = vadd.f32 %v3578, %v3579
    %v4166 = vadd.f32 %v4165, %v3580
    %v4167 = vadd.f32 %v4166, %v3581
    %v4168 = vrot.slane %v4167, 4
    %v4169 = vadd.f32 %v4167, %v4168
    %v4170 = vrot.slane %v4169, 2
    %v4171 = vadd.f32 %v4169, %v4170
    %v4172 = vrot.slane %v4171, 1
    %v4173 = vadd.f32 %v4171, %v4172
    %v4174 = vadd.f32 %v3582, %v3583
    %v4175 = vadd.f32 %v4174, %v3584
    %v4176 = vadd.f32 %v4175, %v3585
    %v4177 = vrot.slane %v4176, 4
    %v4178 = vadd.f32 %v4176, %v4177
    %v4179 = vrot.slane %v4178, 2
    %v4180 = vadd.f32 %v4178, %v4179
    %v4181 = vrot.slane %v4180, 1
    %v4182 = vadd.f32 %v4180, %v4181
    %v4183 = vadd.f32 %v3586, %v3587
    %v4184 = vadd.f32 %v4183, %v3588
    %v4185 = vadd.f32 %v4184, %v3589
    %v4186 = vrot.slane %v4185, 4
    %v4187 = vadd.f32 %v4185, %v4186
    %v4188 = vrot.slane %v4187, 2
    %v4189 = vadd.f32 %v4187, %v4188
    %v4190 = vrot.slane %v4189, 1
    %v4191 = vadd.f32 %v4189, %v4190
    %v4192 = vadd.f32 %v3590, %v3591
    %v4193 = vadd.f32 %v4192, %v3592
    %v4194 = vadd.f32 %v4193, %v3593
    %v4195 = vrot.slane %v4194, 4
    %v4196 = vadd.f32 %v4194, %v4195
    %v4197 = vrot.slane %v4196, 2
    %v4198 = vadd.f32 %v4196, %v4197
    %v4199 = vrot.slane %v4198, 1
    %v4200 = vadd.f32 %v4198, %v4199
    %v4201 = vadd.f32 %v3594, %v3595
    %v4202 = vadd.f32 %v4201, %v3596
    %v4203 = vadd.f32 %v4202, %v3597
    %v4204 = vrot.slane %v4203, 4
    %v4205 = vadd.f32 %v4203, %v4204
    %v4206 = vrot.slane %v4205, 2
    %v4207 = vadd.f32 %v4205, %v4206
    %v4208 = vrot.slane %v4207, 1
    %v4209 = vadd.f32 %v4207, %v4208
    %v4210 = vadd.f32 %v3598, %v3599
    %v4211 = vadd.f32 %v4210, %v3600
    %v4212 = vadd.f32 %v4211, %v3601
    %v4213 = vrot.slane %v4212, 4
    %v4214 = vadd.f32 %v4212, %v4213
    %v4215 = vrot.slane %v4214, 2
    %v4216 = vadd.f32 %v4214, %v4215
    %v4217 = vrot.slane %v4216, 1
    %v4218 = vadd.f32 %v4216, %v4217
    %v4219 = vadd.f32 %v3602, %v3603
    %v4220 = vadd.f32 %v4219, %v3604
    %v4221 = vadd.f32 %v4220, %v3605
    %v4222 = vrot.slane %v4221, 4
    %v4223 = vadd.f32 %v4221, %v4222
    %v4224 = vrot.slane %v4223, 2
    %v4225 = vadd.f32 %v4223, %v4224
    %v4226 = vrot.slane %v4225, 1
    %v4227 = vadd.f32 %v4225, %v4226
    %v4228 = vadd.f32 %v3606, %v3607
    %v4229 = vadd.f32 %v4228, %v3608
    %v4230 = vadd.f32 %v4229, %v3609
    %v4231 = vrot.slane %v4230, 4
    %v4232 = vadd.f32 %v4230, %v4231
    %v4233 = vrot.slane %v4232, 2
    %v4234 = vadd.f32 %v4232, %v4233
    %v4235 = vrot.slane %v4234, 1
    %v4236 = vadd.f32 %v4234, %v4235
    %v4237 = vadd.f32 %v3610, %v3611
    %v4238 = vadd.f32 %v4237, %v3612
    %v4239 = vadd.f32 %v4238, %v3613
    %v4240 = vrot.slane %v4239, 4
    %v4241 = vadd.f32 %v4239, %v4240
    %v4242 = vrot.slane %v4241, 2
    %v4243 = vadd.f32 %v4241, %v4242
    %v4244 = vrot.slane %v4243, 1
    %v4245 = vadd.f32 %v4243, %v4244
    %v4246 = vadd.f32 %v3614, %v3615
    %v4247 = vadd.f32 %v4246, %v3616
    %v4248 = vadd.f32 %v4247, %v3617
    %v4249 = vrot.slane %v4248, 4
    %v4250 = vadd.f32 %v4248, %v4249
    %v4251 = vrot.slane %v4250, 2
    %v4252 = vadd.f32 %v4250, %v4251
    %v4253 = vrot.slane %v4252, 1
    %v4254 = vadd.f32 %v4252, %v4253
    %v4255 = vadd.f32 %v3618, %v3619
    %v4256 = vadd.f32 %v4255, %v3620
    %v4257 = vadd.f32 %v4256, %v3621
    %v4258 = vrot.slane %v4257, 4
    %v4259 = vadd.f32 %v4257, %v4258
    %v4260 = vrot.slane %v4259, 2
    %v4261 = vadd.f32 %v4259, %v4260
    %v4262 = vrot.slane %v4261, 1
    %v4263 = vadd.f32 %v4261, %v4262
    %v4264 = vadd.f32 %v3622, %v3623
    %v4265 = vadd.f32 %v4264, %v3624
    %v4266 = vadd.f32 %v4265, %v3625
    %v4267 = vrot.slane %v4266, 4
    %v4268 = vadd.f32 %v4266, %v4267
    %v4269 = vrot.slane %v4268, 2
    %v4270 = vadd.f32 %v4268, %v4269
    %v4271 = vrot.slane %v4270, 1
    %v4272 = vadd.f32 %v4270, %v4271
    %v4273 = vadd.f32 %v3626, %v3627
    %v4274 = vadd.f32 %v4273, %v3628
    %v4275 = vadd.f32 %v4274, %v3629
    %v4276 = vrot.slane %v4275, 4
    %v4277 = vadd.f32 %v4275, %v4276
    %v4278 = vrot.slane %v4277, 2
    %v4279 = vadd.f32 %v4277, %v4278
    %v4280 = vrot.slane %v4279, 1
    %v4281 = vadd.f32 %v4279, %v4280
    %v4282 = vadd.f32 %v3630, %v3631
    %v4283 = vadd.f32 %v4282, %v3632
    %v4284 = vadd.f32 %v4283, %v3633
    %v4285 = vrot.slane %v4284, 4
    %v4286 = vadd.f32 %v4284, %v4285
    %v4287 = vrot.slane %v4286, 2
    %v4288 = vadd.f32 %v4286, %v4287
    %v4289 = vrot.slane %v4288, 1
    %v4290 = vadd.f32 %v4288, %v4289
    %v4291 = vadd.f32 %v3634, %v3635
    %v4292 = vadd.f32 %v4291, %v3636
    %v4293 = vadd.f32 %v4292, %v3637
    %v4294 = vrot.slane %v4293, 4
    %v4295 = vadd.f32 %v4293, %v4294
    %v4296 = vrot.slane %v4295, 2
    %v4297 = vadd.f32 %v4295, %v4296
    %v4298 = vrot.slane %v4297, 1
    %v4299 = vadd.f32 %v4297, %v4298
    %v4300 = vadd.f32 %v3638, %v3639
    %v4301 = vadd.f32 %v4300, %v3640
    %v4302 = vadd.f32 %v4301, %v3641
    %v4303 = vrot.slane %v4302, 4
    %v4304 = vadd.f32 %v4302, %v4303
    %v4305 = vrot.slane %v4304, 2
    %v4306 = vadd.f32 %v4304, %v4305
    %v4307 = vrot.slane %v4306, 1
    %v4308 = vadd.f32 %v4306, %v4307
    %v4309 = vadd.f32 %v3642, %v3643
    %v4310 = vadd.f32 %v4309, %v3644
    %v4311 = vadd.f32 %v4310, %v3645
    %v4312 = vrot.slane %v4311, 4
    %v4313 = vadd.f32 %v4311, %v4312
    %v4314 = vrot.slane %v4313, 2
    %v4315 = vadd.f32 %v4313, %v4314
    %v4316 = vrot.slane %v4315, 1
    %v4317 = vadd.f32 %v4315, %v4316
    %v4318 = vadd.f32 %v3646, %v3647
    %v4319 = vadd.f32 %v4318, %v3648
    %v4320 = vadd.f32 %v4319, %v3649
    %v4321 = vrot.slane %v4320, 4
    %v4322 = vadd.f32 %v4320, %v4321
    %v4323 = vrot.slane %v4322, 2
    %v4324 = vadd.f32 %v4322, %v4323
    %v4325 = vrot.slane %v4324, 1
    %v4326 = vadd.f32 %v4324, %v4325
    %v4327 = vadd.f32 %v3650, %v3651
    %v4328 = vadd.f32 %v4327, %v3652
    %v4329 = vadd.f32 %v4328, %v3653
    %v4330 = vrot.slane %v4329, 4
    %v4331 = vadd.f32 %v4329, %v4330
    %v4332 = vrot.slane %v4331, 2
    %v4333 = vadd.f32 %v4331, %v4332
    %v4334 = vrot.slane %v4333, 1
    %v4335 = vadd.f32 %v4333, %v4334
    %v4336 = vadd.f32 %v3654, %v3655
    %v4337 = vadd.f32 %v4336, %v3656
    %v4338 = vadd.f32 %v4337, %v3657
    %v4339 = vrot.slane %v4338, 4
    %v4340 = vadd.f32 %v4338, %v4339
    %v4341 = vrot.slane %v4340, 2
    %v4342 = vadd.f32 %v4340, %v4341
    %v4343 = vrot.slane %v4342, 1
    %v4344 = vadd.f32 %v4342, %v4343
    %v4345 = vadd.f32 %v3658, %v3659
    %v4346 = vadd.f32 %v4345, %v3660
    %v4347 = vadd.f32 %v4346, %v3661
    %v4348 = vrot.slane %v4347, 4
    %v4349 = vadd.f32 %v4347, %v4348
    %v4350 = vrot.slane %v4349, 2
    %v4351 = vadd.f32 %v4349, %v4350
    %v4352 = vrot.slane %v4351, 1
    %v4353 = vadd.f32 %v4351, %v4352
    %v4354 = vadd.f32 %v3662, %v3663
    %v4355 = vadd.f32 %v4354, %v3664
    %v4356 = vadd.f32 %v4355, %v3665
    %v4357 = vrot.slane %v4356, 4
    %v4358 = vadd.f32 %v4356, %v4357
    %v4359 = vrot.slane %v4358, 2
    %v4360 = vadd.f32 %v4358, %v4359
    %v4361 = vrot.slane %v4360, 1
    %v4362 = vadd.f32 %v4360, %v4361
    %v4363 = vadd.f32 %v3666, %v3667
    %v4364 = vadd.f32 %v4363, %v3668
    %v4365 = vadd.f32 %v4364, %v3669
    %v4366 = vrot.slane %v4365, 4
    %v4367 = vadd.f32 %v4365, %v4366
    %v4368 = vrot.slane %v4367, 2
    %v4369 = vadd.f32 %v4367, %v4368
    %v4370 = vrot.slane %v4369, 1
    %v4371 = vadd.f32 %v4369, %v4370
    %v4372 = vadd.f32 %v3670, %v3671
    %v4373 = vadd.f32 %v4372, %v3672
    %v4374 = vadd.f32 %v4373, %v3673
    %v4375 = vrot.slane %v4374, 4
    %v4376 = vadd.f32 %v4374, %v4375
    %v4377 = vrot.slane %v4376, 2
    %v4378 = vadd.f32 %v4376, %v4377
    %v4379 = vrot.slane %v4378, 1
    %v4380 = vadd.f32 %v4378, %v4379
    %v4381 = vadd.f32 %v3674, %v3675
    %v4382 = vadd.f32 %v4381, %v3676
    %v4383 = vadd.f32 %v4382, %v3677
    %v4384 = vrot.slane %v4383, 4
    %v4385 = vadd.f32 %v4383, %v4384
    %v4386 = vrot.slane %v4385, 2
    %v4387 = vadd.f32 %v4385, %v4386
    %v4388 = vrot.slane %v4387, 1
    %v4389 = vadd.f32 %v4387, %v4388
    %v4390 = vadd.f32 %v3678, %v3679
    %v4391 = vadd.f32 %v4390, %v3680
    %v4392 = vadd.f32 %v4391, %v3681
    %v4393 = vrot.slane %v4392, 4
    %v4394 = vadd.f32 %v4392, %v4393
    %v4395 = vrot.slane %v4394, 2
    %v4396 = vadd.f32 %v4394, %v4395
    %v4397 = vrot.slane %v4396, 1
    %v4398 = vadd.f32 %v4396, %v4397
    %v4399 = vadd.f32 %v3682, %v3683
    %v4400 = vadd.f32 %v4399, %v3684
    %v4401 = vadd.f32 %v4400, %v3685
    %v4402 = vrot.slane %v4401, 4
    %v4403 = vadd.f32 %v4401, %v4402
    %v4404 = vrot.slane %v4403, 2
    %v4405 = vadd.f32 %v4403, %v4404
    %v4406 = vrot.slane %v4405, 1
    %v4407 = vadd.f32 %v4405, %v4406
    %v4408 = vadd.f32 %v3686, %v3687
    %v4409 = vadd.f32 %v4408, %v3688
    %v4410 = vadd.f32 %v4409, %v3689
    %v4411 = vrot.slane %v4410, 4
    %v4412 = vadd.f32 %v4410, %v4411
    %v4413 = vrot.slane %v4412, 2
    %v4414 = vadd.f32 %v4412, %v4413
    %v4415 = vrot.slane %v4414, 1
    %v4416 = vadd.f32 %v4414, %v4415
    %v4417 = vadd.f32 %v3690, %v3691
    %v4418 = vadd.f32 %v4417, %v3692
    %v4419 = vadd.f32 %v4418, %v3693
    %v4420 = vrot.slane %v4419, 4
    %v4421 = vadd.f32 %v4419, %v4420
    %v4422 = vrot.slane %v4421, 2
    %v4423 = vadd.f32 %v4421, %v4422
    %v4424 = vrot.slane %v4423, 1
    %v4425 = vadd.f32 %v4423, %v4424
    %v4426 = vadd.f32 %v3694, %v3695
    %v4427 = vadd.f32 %v4426, %v3696
    %v4428 = vadd.f32 %v4427, %v3697
    %v4429 = vrot.slane %v4428, 4
    %v4430 = vadd.f32 %v4428, %v4429
    %v4431 = vrot.slane %v4430, 2
    %v4432 = vadd.f32 %v4430, %v4431
    %v4433 = vrot.slane %v4432, 1
    %v4434 = vadd.f32 %v4432, %v4433
    %v4435 = vadd.f32 %v3698, %v3699
    %v4436 = vadd.f32 %v4435, %v3700
    %v4437 = vadd.f32 %v4436, %v3701
    %v4438 = vrot.slane %v4437, 4
    %v4439 = vadd.f32 %v4437, %v4438
    %v4440 = vrot.slane %v4439, 2
    %v4441 = vadd.f32 %v4439, %v4440
    %v4442 = vrot.slane %v4441, 1
    %v4443 = vadd.f32 %v4441, %v4442
    %v4444 = vadd.f32 %v3702, %v3703
    %v4445 = vadd.f32 %v4444, %v3704
    %v4446 = vadd.f32 %v4445, %v3705
    %v4447 = vrot.slane %v4446, 4
    %v4448 = vadd.f32 %v4446, %v4447
    %v4449 = vrot.slane %v4448, 2
    %v4450 = vadd.f32 %v4448, %v4449
    %v4451 = vrot.slane %v4450, 1
    %v4452 = vadd.f32 %v4450, %v4451
    %v4453 = vadd.f32 %v3706, %v3707
    %v4454 = vadd.f32 %v4453, %v3708
    %v4455 = vadd.f32 %v4454, %v3709
    %v4456 = vrot.slane %v4455, 4
    %v4457 = vadd.f32 %v4455, %v4456
    %v4458 = vrot.slane %v4457, 2
    %v4459 = vadd.f32 %v4457, %v4458
    %v4460 = vrot.slane %v4459, 1
    %v4461 = vadd.f32 %v4459, %v4460
    %v4462 = vadd.f32 %v3710, %v3711
    %v4463 = vadd.f32 %v4462, %v3712
    %v4464 = vadd.f32 %v4463, %v3713
    %v4465 = vrot.slane %v4464, 4
    %v4466 = vadd.f32 %v4464, %v4465
    %v4467 = vrot.slane %v4466, 2
    %v4468 = vadd.f32 %v4466, %v4467
    %v4469 = vrot.slane %v4468, 1
    %v4470 = vadd.f32 %v4468, %v4469
    %v4471 = vadd.f32 %v3714, %v3715
    %v4472 = vadd.f32 %v4471, %v3716
    %v4473 = vadd.f32 %v4472, %v3717
    %v4474 = vrot.slane %v4473, 4
    %v4475 = vadd.f32 %v4473, %v4474
    %v4476 = vrot.slane %v4475, 2
    %v4477 = vadd.f32 %v4475, %v4476
    %v4478 = vrot.slane %v4477, 1
    %v4479 = vadd.f32 %v4477, %v4478
    %v4480 = vadd.f32 %v3718, %v3719
    %v4481 = vadd.f32 %v4480, %v3720
    %v4482 = vadd.f32 %v4481, %v3721
    %v4483 = vrot.slane %v4482, 4
    %v4484 = vadd.f32 %v4482, %v4483
    %v4485 = vrot.slane %v4484, 2
    %v4486 = vadd.f32 %v4484, %v4485
    %v4487 = vrot.slane %v4486, 1
    %v4488 = vadd.f32 %v4486, %v4487
    %v4489 = vadd.f32 %v3722, %v3723
    %v4490 = vadd.f32 %v4489, %v3724
    %v4491 = vadd.f32 %v4490, %v3725
    %v4492 = vrot.slane %v4491, 4
    %v4493 = vadd.f32 %v4491, %v4492
    %v4494 = vrot.slane %v4493, 2
    %v4495 = vadd.f32 %v4493, %v4494
    %v4496 = vrot.slane %v4495, 1
    %v4497 = vadd.f32 %v4495, %v4496
    %v4498 = vadd.f32 %v3726, %v3727
    %v4499 = vadd.f32 %v4498, %v3728
    %v4500 = vadd.f32 %v4499, %v3729
    %v4501 = vrot.slane %v4500, 4
    %v4502 = vadd.f32 %v4500, %v4501
    %v4503 = vrot.slane %v4502, 2
    %v4504 = vadd.f32 %v4502, %v4503
    %v4505 = vrot.slane %v4504, 1
    %v4506 = vadd.f32 %v4504, %v4505
    %v4507 = vadd.f32 %v3730, %v3731
    %v4508 = vadd.f32 %v4507, %v3732
    %v4509 = vadd.f32 %v4508, %v3733
    %v4510 = vrot.slane %v4509, 4
    %v4511 = vadd.f32 %v4509, %v4510
    %v4512 = vrot.slane %v4511, 2
    %v4513 = vadd.f32 %v4511, %v4512
    %v4514 = vrot.slane %v4513, 1
    %v4515 = vadd.f32 %v4513, %v4514
    %v4516 = vadd.f32 %v3734, %v3735
    %v4517 = vadd.f32 %v4516, %v3736
    %v4518 = vadd.f32 %v4517, %v3737
    %v4519 = vrot.slane %v4518, 4
    %v4520 = vadd.f32 %v4518, %v4519
    %v4521 = vrot.slane %v4520, 2
    %v4522 = vadd.f32 %v4520, %v4521
    %v4523 = vrot.slane %v4522, 1
    %v4524 = vadd.f32 %v4522, %v4523
    %v4525 = vadd.f32 %v3738, %v3739
    %v4526 = vadd.f32 %v4525, %v3740
    %v4527 = vadd.f32 %v4526, %v3741
    %v4528 = vrot.slane %v4527, 4
    %v4529 = vadd.f32 %v4527, %v4528
    %v4530 = vrot.slane %v4529, 2
    %v4531 = vadd.f32 %v4529, %v4530
    %v4532 = vrot.slane %v4531, 1
    %v4533 = vadd.f32 %v4531, %v4532
    %v4534 = vadd.f32 %v3742, %v3743
    %v4535 = vadd.f32 %v4534, %v3744
    %v4536 = vadd.f32 %v4535, %v3745
    %v4537 = vrot.slane %v4536, 4
    %v4538 = vadd.f32 %v4536, %v4537
    %v4539 = vrot.slane %v4538, 2
    %v4540 = vadd.f32 %v4538, %v4539
    %v4541 = vrot.slane %v4540, 1
    %v4542 = vadd.f32 %v4540, %v4541
    %v4543 = vadd.f32 %v3746, %v3747
    %v4544 = vadd.f32 %v4543, %v3748
    %v4545 = vadd.f32 %v4544, %v3749
    %v4546 = vrot.slane %v4545, 4
    %v4547 = vadd.f32 %v4545, %v4546
    %v4548 = vrot.slane %v4547, 2
    %v4549 = vadd.f32 %v4547, %v4548
    %v4550 = vrot.slane %v4549, 1
    %v4551 = vadd.f32 %v4549, %v4550
    %v4552 = vadd.f32 %v3750, %v3751
    %v4553 = vadd.f32 %v4552, %v3752
    %v4554 = vadd.f32 %v4553, %v3753
    %v4555 = vrot.slane %v4554, 4
    %v4556 = vadd.f32 %v4554, %v4555
    %v4557 = vrot.slane %v4556, 2
    %v4558 = vadd.f32 %v4556, %v4557
    %v4559 = vrot.slane %v4558, 1
    %v4560 = vadd.f32 %v4558, %v4559
    %v4561 = vadd.f32 %v3754, %v3755
    %v4562 = vadd.f32 %v4561, %v3756
    %v4563 = vadd.f32 %v4562, %v3757
    %v4564 = vrot.slane %v4563, 4
    %v4565 = vadd.f32 %v4563, %v4564
    %v4566 = vrot.slane %v4565, 2
    %v4567 = vadd.f32 %v4565, %v4566
    %v4568 = vrot.slane %v4567, 1
    %v4569 = vadd.f32 %v4567, %v4568
    %v4570 = vadd.f32 %v3758, %v3759
    %v4571 = vadd.f32 %v4570, %v3760
    %v4572 = vadd.f32 %v4571, %v3761
    %v4573 = vrot.slane %v4572, 4
    %v4574 = vadd.f32 %v4572, %v4573
    %v4575 = vrot.slane %v4574, 2
    %v4576 = vadd.f32 %v4574, %v4575
    %v4577 = vrot.slane %v4576, 1
    %v4578 = vadd.f32 %v4576, %v4577
    %v4579 = vadd.f32 %v3762, %v3763
    %v4580 = vadd.f32 %v4579, %v3764
    %v4581 = vadd.f32 %v4580, %v3765
    %v4582 = vrot.slane %v4581, 4
    %v4583 = vadd.f32 %v4581, %v4582
    %v4584 = vrot.slane %v4583, 2
    %v4585 = vadd.f32 %v4583, %v4584
    %v4586 = vrot.slane %v4585, 1
    %v4587 = vadd.f32 %v4585, %v4586
    %v4588 = vadd.f32 %v3766, %v3767
    %v4589 = vadd.f32 %v4588, %v3768
    %v4590 = vadd.f32 %v4589, %v3769
    %v4591 = vrot.slane %v4590, 4
    %v4592 = vadd.f32 %v4590, %v4591
    %v4593 = vrot.slane %v4592, 2
    %v4594 = vadd.f32 %v4592, %v4593
    %v4595 = vrot.slane %v4594, 1
    %v4596 = vadd.f32 %v4594, %v4595
    %v4597 = vadd.f32 %v3770, %v3771
    %v4598 = vadd.f32 %v4597, %v3772
    %v4599 = vadd.f32 %v4598, %v3773
    %v4600 = vrot.slane %v4599, 4
    %v4601 = vadd.f32 %v4599, %v4600
    %v4602 = vrot.slane %v4601, 2
    %v4603 = vadd.f32 %v4601, %v4602
    %v4604 = vrot.slane %v4603, 1
    %v4605 = vadd.f32 %v4603, %v4604
    %v4606 = vadd.f32 %v3774, %v3775
    %v4607 = vadd.f32 %v4606, %v3776
    %v4608 = vadd.f32 %v4607, %v3777
    %v4609 = vrot.slane %v4608, 4
    %v4610 = vadd.f32 %v4608, %v4609
    %v4611 = vrot.slane %v4610, 2
    %v4612 = vadd.f32 %v4610, %v4611
    %v4613 = vrot.slane %v4612, 1
    %v4614 = vadd.f32 %v4612, %v4613
    %v4615 = vadd.f32 %v3778, %v3779
    %v4616 = vadd.f32 %v4615, %v3780
    %v4617 = vadd.f32 %v4616, %v3781
    %v4618 = vrot.slane %v4617, 4
    %v4619 = vadd.f32 %v4617, %v4618
    %v4620 = vrot.slane %v4619, 2
    %v4621 = vadd.f32 %v4619, %v4620
    %v4622 = vrot.slane %v4621, 1
    %v4623 = vadd.f32 %v4621, %v4622
    %v4624 = vadd.f32 %v3782, %v3783
    %v4625 = vadd.f32 %v4624, %v3784
    %v4626 = vadd.f32 %v4625, %v3785
    %v4627 = vrot.slane %v4626, 4
    %v4628 = vadd.f32 %v4626, %v4627
    %v4629 = vrot.slane %v4628, 2
    %v4630 = vadd.f32 %v4628, %v4629
    %v4631 = vrot.slane %v4630, 1
    %v4632 = vadd.f32 %v4630, %v4631
    %v4633 = vadd.f32 %v3786, %v3787
    %v4634 = vadd.f32 %v4633, %v3788
    %v4635 = vadd.f32 %v4634, %v3789
    %v4636 = vrot.slane %v4635, 4
    %v4637 = vadd.f32 %v4635, %v4636
    %v4638 = vrot.slane %v4637, 2
    %v4639 = vadd.f32 %v4637, %v4638
    %v4640 = vrot.slane %v4639, 1
    %v4641 = vadd.f32 %v4639, %v4640
    %v4642 = vadd.f32 %v3790, %v3791
    %v4643 = vadd.f32 %v4642, %v3792
    %v4644 = vadd.f32 %v4643, %v3793
    %v4645 = vrot.slane %v4644, 4
    %v4646 = vadd.f32 %v4644, %v4645
    %v4647 = vrot.slane %v4646, 2
    %v4648 = vadd.f32 %v4646, %v4647
    %v4649 = vrot.slane %v4648, 1
    %v4650 = vadd.f32 %v4648, %v4649
    %v4651 = vadd.f32 %v3794, %v3795
    %v4652 = vadd.f32 %v4651, %v3796
    %v4653 = vadd.f32 %v4652, %v3797
    %v4654 = vrot.slane %v4653, 4
    %v4655 = vadd.f32 %v4653, %v4654
    %v4656 = vrot.slane %v4655, 2
    %v4657 = vadd.f32 %v4655, %v4656
    %v4658 = vrot.slane %v4657, 1
    %v4659 = vadd.f32 %v4657, %v4658
    %v4660 = vadd.f32 %v3798, %v3799
    %v4661 = vadd.f32 %v4660, %v3800
    %v4662 = vadd.f32 %v4661, %v3801
    %v4663 = vrot.slane %v4662, 4
    %v4664 = vadd.f32 %v4662, %v4663
    %v4665 = vrot.slane %v4664, 2
    %v4666 = vadd.f32 %v4664, %v4665
    %v4667 = vrot.slane %v4666, 1
    %v4668 = vadd.f32 %v4666, %v4667
    %v4669 = vadd.f32 %v3802, %v3803
    %v4670 = vadd.f32 %v4669, %v3804
    %v4671 = vadd.f32 %v4670, %v3805
    %v4672 = vrot.slane %v4671, 4
    %v4673 = vadd.f32 %v4671, %v4672
    %v4674 = vrot.slane %v4673, 2
    %v4675 = vadd.f32 %v4673, %v4674
    %v4676 = vrot.slane %v4675, 1
    %v4677 = vadd.f32 %v4675, %v4676
    %v4678 = vadd.f32 %v3806, %v3807
    %v4679 = vadd.f32 %v4678, %v3808
    %v4680 = vadd.f32 %v4679, %v3809
    %v4681 = vrot.slane %v4680, 4
    %v4682 = vadd.f32 %v4680, %v4681
    %v4683 = vrot.slane %v4682, 2
    %v4684 = vadd.f32 %v4682, %v4683
    %v4685 = vrot.slane %v4684, 1
    %v4686 = vadd.f32 %v4684, %v4685
    %v4687 = vadd.f32 %v3810, %v3811
    %v4688 = vadd.f32 %v4687, %v3812
    %v4689 = vadd.f32 %v4688, %v3813
    %v4690 = vrot.slane %v4689, 4
    %v4691 = vadd.f32 %v4689, %v4690
    %v4692 = vrot.slane %v4691, 2
    %v4693 = vadd.f32 %v4691, %v4692
    %v4694 = vrot.slane %v4693, 1
    %v4695 = vadd.f32 %v4693, %v4694
    %v4696 = vadd.f32 %v3814, %v3815
    %v4697 = vadd.f32 %v4696, %v3816
    %v4698 = vadd.f32 %v4697, %v3817
    %v4699 = vrot.slane %v4698, 4
    %v4700 = vadd.f32 %v4698, %v4699
    %v4701 = vrot.slane %v4700, 2
    %v4702 = vadd.f32 %v4700, %v4701
    %v4703 = vrot.slane %v4702, 1
    %v4704 = vadd.f32 %v4702, %v4703
    %v4705 = vadd.f32 %v3818, %v3819
    %v4706 = vadd.f32 %v4705, %v3820
    %v4707 = vadd.f32 %v4706, %v3821
    %v4708 = vrot.slane %v4707, 4
    %v4709 = vadd.f32 %v4707, %v4708
    %v4710 = vrot.slane %v4709, 2
    %v4711 = vadd.f32 %v4709, %v4710
    %v4712 = vrot.slane %v4711, 1
    %v4713 = vadd.f32 %v4711, %v4712
    %v4714 = vadd.f32 %v3822, %v3823
    %v4715 = vadd.f32 %v4714, %v3824
    %v4716 = vadd.f32 %v4715, %v3825
    %v4717 = vrot.slane %v4716, 4
    %v4718 = vadd.f32 %v4716, %v4717
    %v4719 = vrot.slane %v4718, 2
    %v4720 = vadd.f32 %v4718, %v4719
    %v4721 = vrot.slane %v4720, 1
    %v4722 = vadd.f32 %v4720, %v4721
    %v4723 = vadd.f32 %v3826, %v3827
    %v4724 = vadd.f32 %v4723, %v3828
    %v4725 = vadd.f32 %v4724, %v3829
    %v4726 = vrot.slane %v4725, 4
    %v4727 = vadd.f32 %v4725, %v4726
    %v4728 = vrot.slane %v4727, 2
    %v4729 = vadd.f32 %v4727, %v4728
    %v4730 = vrot.slane %v4729, 1
    %v4731 = vadd.f32 %v4729, %v4730
    %v4732 = vadd.f32 %v3830, %v3831
    %v4733 = vadd.f32 %v4732, %v3832
    %v4734 = vadd.f32 %v4733, %v3833
    %v4735 = vrot.slane %v4734, 4
    %v4736 = vadd.f32 %v4734, %v4735
    %v4737 = vrot.slane %v4736, 2
    %v4738 = vadd.f32 %v4736, %v4737
    %v4739 = vrot.slane %v4738, 1
    %v4740 = vadd.f32 %v4738, %v4739
    %v4741 = vadd.f32 %v3834, %v3835
    %v4742 = vadd.f32 %v4741, %v3836
    %v4743 = vadd.f32 %v4742, %v3837
    %v4744 = vrot.slane %v4743, 4
    %v4745 = vadd.f32 %v4743, %v4744
    %v4746 = vrot.slane %v4745, 2
    %v4747 = vadd.f32 %v4745, %v4746
    %v4748 = vrot.slane %v4747, 1
    %v4749 = vadd.f32 %v4747, %v4748
    %v4750 = vadd.f32 %v3838, %v3839
    %v4751 = vadd.f32 %v4750, %v3840
    %v4752 = vadd.f32 %v4751, %v3841
    %v4753 = vrot.slane %v4752, 4
    %v4754 = vadd.f32 %v4752, %v4753
    %v4755 = vrot.slane %v4754, 2
    %v4756 = vadd.f32 %v4754, %v4755
    %v4757 = vrot.slane %v4756, 1
    %v4758 = vadd.f32 %v4756, %v4757
    %v4759 = vadd.f32 %v3842, %v3843
    %v4760 = vadd.f32 %v4759, %v3844
    %v4761 = vadd.f32 %v4760, %v3845
    %v4762 = vrot.slane %v4761, 4
    %v4763 = vadd.f32 %v4761, %v4762
    %v4764 = vrot.slane %v4763, 2
    %v4765 = vadd.f32 %v4763, %v4764
    %v4766 = vrot.slane %v4765, 1
    %v4767 = vadd.f32 %v4765, %v4766
    %v4768 = vadd.f32 %v3846, %v3847
    %v4769 = vadd.f32 %v4768, %v3848
    %v4770 = vadd.f32 %v4769, %v3849
    %v4771 = vrot.slane %v4770, 4
    %v4772 = vadd.f32 %v4770, %v4771
    %v4773 = vrot.slane %v4772, 2
    %v4774 = vadd.f32 %v4772, %v4773
    %v4775 = vrot.slane %v4774, 1
    %v4776 = vadd.f32 %v4774, %v4775
    %v4777 = vadd.f32 %v3850, %v3851
    %v4778 = vadd.f32 %v4777, %v3852
    %v4779 = vadd.f32 %v4778, %v3853
    %v4780 = vrot.slane %v4779, 4
    %v4781 = vadd.f32 %v4779, %v4780
    %v4782 = vrot.slane %v4781, 2
    %v4783 = vadd.f32 %v4781, %v4782
    %v4784 = vrot.slane %v4783, 1
    %v4785 = vadd.f32 %v4783, %v4784
    %v4786 = vadd.f32 %v3854, %v3855
    %v4787 = vadd.f32 %v4786, %v3856
    %v4788 = vadd.f32 %v4787, %v3857
    %v4789 = vrot.slane %v4788, 4
    %v4790 = vadd.f32 %v4788, %v4789
    %v4791 = vrot.slane %v4790, 2
    %v4792 = vadd.f32 %v4790, %v4791
    %v4793 = vrot.slane %v4792, 1
    %v4794 = vadd.f32 %v4792, %v4793
    %v4795 = vadd.f32 %v3858, %v3859
    %v4796 = vadd.f32 %v4795, %v3860
    %v4797 = vadd.f32 %v4796, %v3861
    %v4798 = vrot.slane %v4797, 4
    %v4799 = vadd.f32 %v4797, %v4798
    %v4800 = vrot.slane %v4799, 2
    %v4801 = vadd.f32 %v4799, %v4800
    %v4802 = vrot.slane %v4801, 1
    %v4803 = vadd.f32 %v4801, %v4802
    %v4804 = vadd.f32 %v3862, %v3863
    %v4805 = vadd.f32 %v4804, %v3864
    %v4806 = vadd.f32 %v4805, %v3865
    %v4807 = vrot.slane %v4806, 4
    %v4808 = vadd.f32 %v4806, %v4807
    %v4809 = vrot.slane %v4808, 2
    %v4810 = vadd.f32 %v4808, %v4809
    %v4811 = vrot.slane %v4810, 1
    %v4812 = vadd.f32 %v4810, %v4811
    %v4813 = vadd.f32 %v3866, %v3867
    %v4814 = vadd.f32 %v4813, %v3868
    %v4815 = vadd.f32 %v4814, %v3869
    %v4816 = vrot.slane %v4815, 4
    %v4817 = vadd.f32 %v4815, %v4816
    %v4818 = vrot.slane %v4817, 2
    %v4819 = vadd.f32 %v4817, %v4818
    %v4820 = vrot.slane %v4819, 1
    %v4821 = vadd.f32 %v4819, %v4820
    %v4822 = vadd.f32 %v3870, %v3871
    %v4823 = vadd.f32 %v4822, %v3872
    %v4824 = vadd.f32 %v4823, %v3873
    %v4825 = vrot.slane %v4824, 4
    %v4826 = vadd.f32 %v4824, %v4825
    %v4827 = vrot.slane %v4826, 2
    %v4828 = vadd.f32 %v4826, %v4827
    %v4829 = vrot.slane %v4828, 1
    %v4830 = vadd.f32 %v4828, %v4829
    %v4831 = vadd.f32 %v3874, %v3875
    %v4832 = vadd.f32 %v4831, %v3876
    %v4833 = vadd.f32 %v4832, %v3877
    %v4834 = vrot.slane %v4833, 4
    %v4835 = vadd.f32 %v4833, %v4834
    %v4836 = vrot.slane %v4835, 2
    %v4837 = vadd.f32 %v4835, %v4836
    %v4838 = vrot.slane %v4837, 1
    %v4839 = vadd.f32 %v4837, %v4838
    %v4840 = vadd.f32 %v3878, %v3879
    %v4841 = vadd.f32 %v4840, %v3880
    %v4842 = vadd.f32 %v4841, %v3881
    %v4843 = vrot.slane %v4842, 4
    %v4844 = vadd.f32 %v4842, %v4843
    %v4845 = vrot.slane %v4844, 2
    %v4846 = vadd.f32 %v4844, %v4845
    %v4847 = vrot.slane %v4846, 1
    %v4848 = vadd.f32 %v4846, %v4847
    %v4849 = vadd.f32 %v3882, %v3883
    %v4850 = vadd.f32 %v4849, %v3884
    %v4851 = vadd.f32 %v4850, %v3885
    %v4852 = vrot.slane %v4851, 4
    %v4853 = vadd.f32 %v4851, %v4852
    %v4854 = vrot.slane %v4853, 2
    %v4855 = vadd.f32 %v4853, %v4854
    %v4856 = vrot.slane %v4855, 1
    %v4857 = vadd.f32 %v4855, %v4856
    %v4858 = vadd.f32 %v3886, %v3887
    %v4859 = vadd.f32 %v4858, %v3888
    %v4860 = vadd.f32 %v4859, %v3889
    %v4861 = vrot.slane %v4860, 4
    %v4862 = vadd.f32 %v4860, %v4861
    %v4863 = vrot.slane %v4862, 2
    %v4864 = vadd.f32 %v4862, %v4863
    %v4865 = vrot.slane %v4864, 1
    %v4866 = vadd.f32 %v4864, %v4865
    %v4867 = vadd.f32 %v3890, %v3891
    %v4868 = vadd.f32 %v4867, %v3892
    %v4869 = vadd.f32 %v4868, %v3893
    %v4870 = vrot.slane %v4869, 4
    %v4871 = vadd.f32 %v4869, %v4870
    %v4872 = vrot.slane %v4871, 2
    %v4873 = vadd.f32 %v4871, %v4872
    %v4874 = vrot.slane %v4873, 1
    %v4875 = vadd.f32 %v4873, %v4874
    %v4876 = vadd.f32 %v3894, %v3895
    %v4877 = vadd.f32 %v4876, %v3896
    %v4878 = vadd.f32 %v4877, %v3897
    %v4879 = vrot.slane %v4878, 4
    %v4880 = vadd.f32 %v4878, %v4879
    %v4881 = vrot.slane %v4880, 2
    %v4882 = vadd.f32 %v4880, %v4881
    %v4883 = vrot.slane %v4882, 1
    %v4884 = vadd.f32 %v4882, %v4883
    %v4885 = vadd.f32 %v3898, %v3899
    %v4886 = vadd.f32 %v4885, %v3900
    %v4887 = vadd.f32 %v4886, %v3901
    %v4888 = vrot.slane %v4887, 4
    %v4889 = vadd.f32 %v4887, %v4888
    %v4890 = vrot.slane %v4889, 2
    %v4891 = vadd.f32 %v4889, %v4890
    %v4892 = vrot.slane %v4891, 1
    %v4893 = vadd.f32 %v4891, %v4892
    %v4894 = vadd.f32 %v3902, %v3903
    %v4895 = vadd.f32 %v4894, %v3904
    %v4896 = vadd.f32 %v4895, %v3905
    %v4897 = vrot.slane %v4896, 4
    %v4898 = vadd.f32 %v4896, %v4897
    %v4899 = vrot.slane %v4898, 2
    %v4900 = vadd.f32 %v4898, %v4899
    %v4901 = vrot.slane %v4900, 1
    %v4902 = vadd.f32 %v4900, %v4901
    %v4903 = vadd.f32 %v3906, %v3907
    %v4904 = vadd.f32 %v4903, %v3908
    %v4905 = vadd.f32 %v4904, %v3909
    %v4906 = vrot.slane %v4905, 4
    %v4907 = vadd.f32 %v4905, %v4906
    %v4908 = vrot.slane %v4907, 2
    %v4909 = vadd.f32 %v4907, %v4908
    %v4910 = vrot.slane %v4909, 1
    %v4911 = vadd.f32 %v4909, %v4910
    %v4912 = vadd.f32 %v3910, %v3911
    %v4913 = vadd.f32 %v4912, %v3912
    %v4914 = vadd.f32 %v4913, %v3913
    %v4915 = vrot.slane %v4914, 4
    %v4916 = vadd.f32 %v4914, %v4915
    %v4917 = vrot.slane %v4916, 2
    %v4918 = vadd.f32 %v4916, %v4917
    %v4919 = vrot.slane %v4918, 1
    %v4920 = vadd.f32 %v4918, %v4919
    %v4921 = vadd.f32 %v3914, %v3915
    %v4922 = vadd.f32 %v4921, %v3916
    %v4923 = vadd.f32 %v4922, %v3917
    %v4924 = vrot.slane %v4923, 4
    %v4925 = vadd.f32 %v4923, %v4924
    %v4926 = vrot.slane %v4925, 2
    %v4927 = vadd.f32 %v4925, %v4926
    %v4928 = vrot.slane %v4927, 1
    %v4929 = vadd.f32 %v4927, %v4928
    %v4930 = vadd.f32 %v3918, %v3919
    %v4931 = vadd.f32 %v4930, %v3920
    %v4932 = vadd.f32 %v4931, %v3921
    %v4933 = vrot.slane %v4932, 4
    %v4934 = vadd.f32 %v4932, %v4933
    %v4935 = vrot.slane %v4934, 2
    %v4936 = vadd.f32 %v4934, %v4935
    %v4937 = vrot.slane %v4936, 1
    %v4938 = vadd.f32 %v4936, %v4937
    %v4939 = vadd.f32 %v3922, %v3923
    %v4940 = vadd.f32 %v4939, %v3924
    %v4941 = vadd.f32 %v4940, %v3925
    %v4942 = vrot.slane %v4941, 4
    %v4943 = vadd.f32 %v4941, %v4942
    %v4944 = vrot.slane %v4943, 2
    %v4945 = vadd.f32 %v4943, %v4944
    %v4946 = vrot.slane %v4945, 1
    %v4947 = vadd.f32 %v4945, %v4946
    %v4948 = vadd.f32 %v3926, %v3927
    %v4949 = vadd.f32 %v4948, %v3928
    %v4950 = vadd.f32 %v4949, %v3929
    %v4951 = vrot.slane %v4950, 4
    %v4952 = vadd.f32 %v4950, %v4951
    %v4953 = vrot.slane %v4952, 2
    %v4954 = vadd.f32 %v4952, %v4953
    %v4955 = vrot.slane %v4954, 1
    %v4956 = vadd.f32 %v4954, %v4955
    %v4957 = vadd.f32 %v3930, %v3931
    %v4958 = vadd.f32 %v4957, %v3932
    %v4959 = vadd.f32 %v4958, %v3933
    %v4960 = vrot.slane %v4959, 4
    %v4961 = vadd.f32 %v4959, %v4960
    %v4962 = vrot.slane %v4961, 2
    %v4963 = vadd.f32 %v4961, %v4962
    %v4964 = vrot.slane %v4963, 1
    %v4965 = vadd.f32 %v4963, %v4964
    %v4966 = vadd.f32 %v3934, %v3935
    %v4967 = vadd.f32 %v4966, %v3936
    %v4968 = vadd.f32 %v4967, %v3937
    %v4969 = vrot.slane %v4968, 4
    %v4970 = vadd.f32 %v4968, %v4969
    %v4971 = vrot.slane %v4970, 2
    %v4972 = vadd.f32 %v4970, %v4971
    %v4973 = vrot.slane %v4972, 1
    %v4974 = vadd.f32 %v4972, %v4973
    %v4975 = vadd.f32 %v3938, %v3939
    %v4976 = vadd.f32 %v4975, %v3940
    %v4977 = vadd.f32 %v4976, %v3941
    %v4978 = vrot.slane %v4977, 4
    %v4979 = vadd.f32 %v4977, %v4978
    %v4980 = vrot.slane %v4979, 2
    %v4981 = vadd.f32 %v4979, %v4980
    %v4982 = vrot.slane %v4981, 1
    %v4983 = vadd.f32 %v4981, %v4982
    %v4984 = vadd.f32 %v3942, %v3943
    %v4985 = vadd.f32 %v4984, %v3944
    %v4986 = vadd.f32 %v4985, %v3945
    %v4987 = vrot.slane %v4986, 4
    %v4988 = vadd.f32 %v4986, %v4987
    %v4989 = vrot.slane %v4988, 2
    %v4990 = vadd.f32 %v4988, %v4989
    %v4991 = vrot.slane %v4990, 1
    %v4992 = vadd.f32 %v4990, %v4991
    %v4993 = vadd.f32 %v3946, %v3947
    %v4994 = vadd.f32 %v4993, %v3948
    %v4995 = vadd.f32 %v4994, %v3949
    %v4996 = vrot.slane %v4995, 4
    %v4997 = vadd.f32 %v4995, %v4996
    %v4998 = vrot.slane %v4997, 2
    %v4999 = vadd.f32 %v4997, %v4998
    %v5000 = vrot.slane %v4999, 1
    %v5001 = vadd.f32 %v4999, %v5000
    %v5002 = vadd.f32 %v3950, %v3951
    %v5003 = vadd.f32 %v5002, %v3952
    %v5004 = vadd.f32 %v5003, %v3953
    %v5005 = vrot.slane %v5004, 4
    %v5006 = vadd.f32 %v5004, %v5005
    %v5007 = vrot.slane %v5006, 2
    %v5008 = vadd.f32 %v5006, %v5007
    %v5009 = vrot.slane %v5008, 1
    %v5010 = vadd.f32 %v5008, %v5009
    %v5011 = vadd.f32 %v3954, %v3955
    %v5012 = vadd.f32 %v5011, %v3956
    %v5013 = vadd.f32 %v5012, %v3957
    %v5014 = vrot.slane %v5013, 4
    %v5015 = vadd.f32 %v5013, %v5014
    %v5016 = vrot.slane %v5015, 2
    %v5017 = vadd.f32 %v5015, %v5016
    %v5018 = vrot.slane %v5017, 1
    %v5019 = vadd.f32 %v5017, %v5018
    %v5020 = vadd.f32 %v3958, %v3959
    %v5021 = vadd.f32 %v5020, %v3960
    %v5022 = vadd.f32 %v5021, %v3961
    %v5023 = vrot.slane %v5022, 4
    %v5024 = vadd.f32 %v5022, %v5023
    %v5025 = vrot.slane %v5024, 2
    %v5026 = vadd.f32 %v5024, %v5025
    %v5027 = vrot.slane %v5026, 1
    %v5028 = vadd.f32 %v5026, %v5027
    %v5029 = vadd.f32 %v3962, %v3963
    %v5030 = vadd.f32 %v5029, %v3964
    %v5031 = vadd.f32 %v5030, %v3965
    %v5032 = vrot.slane %v5031, 4
    %v5033 = vadd.f32 %v5031, %v5032
    %v5034 = vrot.slane %v5033, 2
    %v5035 = vadd.f32 %v5033, %v5034
    %v5036 = vrot.slane %v5035, 1
    %v5037 = vadd.f32 %v5035, %v5036
    %v5038 = vadd.f32 %v3966, %v3967
    %v5039 = vadd.f32 %v5038, %v3968
    %v5040 = vadd.f32 %v5039, %v3969
    %v5041 = vrot.slane %v5040, 4
    %v5042 = vadd.f32 %v5040, %v5041
    %v5043 = vrot.slane %v5042, 2
    %v5044 = vadd.f32 %v5042, %v5043
    %v5045 = vrot.slane %v5044, 1
    %v5046 = vadd.f32 %v5044, %v5045
    %v5047 = vadd.f32 %v3970, %v3971
    %v5048 = vadd.f32 %v5047, %v3972
    %v5049 = vadd.f32 %v5048, %v3973
    %v5050 = vrot.slane %v5049, 4
    %v5051 = vadd.f32 %v5049, %v5050
    %v5052 = vrot.slane %v5051, 2
    %v5053 = vadd.f32 %v5051, %v5052
    %v5054 = vrot.slane %v5053, 1
    %v5055 = vadd.f32 %v5053, %v5054
    %v5056 = vadd.f32 %v3974, %v3975
    %v5057 = vadd.f32 %v5056, %v3976
    %v5058 = vadd.f32 %v5057, %v3977
    %v5059 = vrot.slane %v5058, 4
    %v5060 = vadd.f32 %v5058, %v5059
    %v5061 = vrot.slane %v5060, 2
    %v5062 = vadd.f32 %v5060, %v5061
    %v5063 = vrot.slane %v5062, 1
    %v5064 = vadd.f32 %v5062, %v5063
    %v5065 = vadd.f32 %v3978, %v3979
    %v5066 = vadd.f32 %v5065, %v3980
    %v5067 = vadd.f32 %v5066, %v3981
    %v5068 = vrot.slane %v5067, 4
    %v5069 = vadd.f32 %v5067, %v5068
    %v5070 = vrot.slane %v5069, 2
    %v5071 = vadd.f32 %v5069, %v5070
    %v5072 = vrot.slane %v5071, 1
    %v5073 = vadd.f32 %v5071, %v5072
    %v5074 = vadd.f32 %v3982, %v3983
    %v5075 = vadd.f32 %v5074, %v3984
    %v5076 = vadd.f32 %v5075, %v3985
    %v5077 = vrot.slane %v5076, 4
    %v5078 = vadd.f32 %v5076, %v5077
    %v5079 = vrot.slane %v5078, 2
    %v5080 = vadd.f32 %v5078, %v5079
    %v5081 = vrot.slane %v5080, 1
    %v5082 = vadd.f32 %v5080, %v5081
    %v5083 = vadd.f32 %v3986, %v3987
    %v5084 = vadd.f32 %v5083, %v3988
    %v5085 = vadd.f32 %v5084, %v3989
    %v5086 = vrot.slane %v5085, 4
    %v5087 = vadd.f32 %v5085, %v5086
    %v5088 = vrot.slane %v5087, 2
    %v5089 = vadd.f32 %v5087, %v5088
    %v5090 = vrot.slane %v5089, 1
    %v5091 = vadd.f32 %v5089, %v5090
    %v5092 = vadd.f32 %v3990, %v3991
    %v5093 = vadd.f32 %v5092, %v3992
    %v5094 = vadd.f32 %v5093, %v3993
    %v5095 = vrot.slane %v5094, 4
    %v5096 = vadd.f32 %v5094, %v5095
    %v5097 = vrot.slane %v5096, 2
    %v5098 = vadd.f32 %v5096, %v5097
    %v5099 = vrot.slane %v5098, 1
    %v5100 = vadd.f32 %v5098, %v5099
    %v5101 = vadd.f32 %v3994, %v3995
    %v5102 = vadd.f32 %v5101, %v3996
    %v5103 = vadd.f32 %v5102, %v3997
    %v5104 = vrot.slane %v5103, 4
    %v5105 = vadd.f32 %v5103, %v5104
    %v5106 = vrot.slane %v5105, 2
    %v5107 = vadd.f32 %v5105, %v5106
    %v5108 = vrot.slane %v5107, 1
    %v5109 = vadd.f32 %v5107, %v5108
    %v5110 = vadd.f32 %v3998, %v3999
    %v5111 = vadd.f32 %v5110, %v4000
    %v5112 = vadd.f32 %v5111, %v4001
    %v5113 = vrot.slane %v5112, 4
    %v5114 = vadd.f32 %v5112, %v5113
    %v5115 = vrot.slane %v5114, 2
    %v5116 = vadd.f32 %v5114, %v5115
    %v5117 = vrot.slane %v5116, 1
    %v5118 = vadd.f32 %v5116, %v5117
    %v5119 = vadd.f32 %v4002, %v4003
    %v5120 = vadd.f32 %v5119, %v4004
    %v5121 = vadd.f32 %v5120, %v4005
    %v5122 = vrot.slane %v5121, 4
    %v5123 = vadd.f32 %v5121, %v5122
    %v5124 = vrot.slane %v5123, 2
    %v5125 = vadd.f32 %v5123, %v5124
    %v5126 = vrot.slane %v5125, 1
    %v5127 = vadd.f32 %v5125, %v5126
    %v5128 = vadd.f32 %v4006, %v4007
    %v5129 = vadd.f32 %v5128, %v4008
    %v5130 = vadd.f32 %v5129, %v4009
    %v5131 = vrot.slane %v5130, 4
    %v5132 = vadd.f32 %v5130, %v5131
    %v5133 = vrot.slane %v5132, 2
    %v5134 = vadd.f32 %v5132, %v5133
    %v5135 = vrot.slane %v5134, 1
    %v5136 = vadd.f32 %v5134, %v5135
    %v5137 = vadd.f32 %v4010, %v4011
    %v5138 = vadd.f32 %v5137, %v4012
    %v5139 = vadd.f32 %v5138, %v4013
    %v5140 = vrot.slane %v5139, 4
    %v5141 = vadd.f32 %v5139, %v5140
    %v5142 = vrot.slane %v5141, 2
    %v5143 = vadd.f32 %v5141, %v5142
    %v5144 = vrot.slane %v5143, 1
    %v5145 = vadd.f32 %v5143, %v5144
    %v5146 = vadd.f32 %v4014, %v4015
    %v5147 = vadd.f32 %v5146, %v4016
    %v5148 = vadd.f32 %v5147, %v4017
    %v5149 = vrot.slane %v5148, 4
    %v5150 = vadd.f32 %v5148, %v5149
    %v5151 = vrot.slane %v5150, 2
    %v5152 = vadd.f32 %v5150, %v5151
    %v5153 = vrot.slane %v5152, 1
    %v5154 = vadd.f32 %v5152, %v5153
    %v5155 = vadd.f32 %v4018, %v4019
    %v5156 = vadd.f32 %v5155, %v4020
    %v5157 = vadd.f32 %v5156, %v4021
    %v5158 = vrot.slane %v5157, 4
    %v5159 = vadd.f32 %v5157, %v5158
    %v5160 = vrot.slane %v5159, 2
    %v5161 = vadd.f32 %v5159, %v5160
    %v5162 = vrot.slane %v5161, 1
    %v5163 = vadd.f32 %v5161, %v5162
    %v5164 = vadd.f32 %v4022, %v4023
    %v5165 = vadd.f32 %v5164, %v4024
    %v5166 = vadd.f32 %v5165, %v4025
    %v5167 = vrot.slane %v5166, 4
    %v5168 = vadd.f32 %v5166, %v5167
    %v5169 = vrot.slane %v5168, 2
    %v5170 = vadd.f32 %v5168, %v5169
    %v5171 = vrot.slane %v5170, 1
    %v5172 = vadd.f32 %v5170, %v5171
    %v5173 = vadd.f32 %v4026, %v4027
    %v5174 = vadd.f32 %v5173, %v4028
    %v5175 = vadd.f32 %v5174, %v4029
    %v5176 = vrot.slane %v5175, 4
    %v5177 = vadd.f32 %v5175, %v5176
    %v5178 = vrot.slane %v5177, 2
    %v5179 = vadd.f32 %v5177, %v5178
    %v5180 = vrot.slane %v5179, 1
    %v5181 = vadd.f32 %v5179, %v5180
    %v5182 = vld [vmem:[%s3] sm:$0xff]
    %v5183 = vld [vmem:[%s3 + $0x8] sm:$0xff]
    %v5184 = vld [vmem:[%s3 + $0x10] sm:$0xff]
    %v5185 = vld [vmem:[%s3 + $0x18] sm:$0xff]
    %v5186 = vld [vmem:[%s3 + $0x20] sm:$0xff]
    %v5187 = vld [vmem:[%s3 + $0x28] sm:$0xff]
    %v5188 = vld [vmem:[%s3 + $0x30] sm:$0xff]
    %v5189 = vld [vmem:[%s3 + $0x38] sm:$0xff]
    %v5190 = vld [vmem:[%s3 + $0x40] sm:$0xff]
    %v5191 = vld [vmem:[%s3 + $0x48] sm:$0xff]
    %v5192 = vld [vmem:[%s3 + $0x50] sm:$0xff]
    %v5193 = vld [vmem:[%s3 + $0x58] sm:$0xff]
    %v5194 = vld [vmem:[%s3 + $0x60] sm:$0xff]
    %v5195 = vld [vmem:[%s3 + $0x68] sm:$0xff]
    %v5196 = vld [vmem:[%s3 + $0x70] sm:$0xff]
    %v5197 = vld [vmem:[%s3 + $0x78] sm:$0xff]
    %v5214 = vrot.slane %v5182, 1
    %v5215 = vrot.slane %v5182, 2
    %v5216 = vrot.slane %v5182, 3
    %v5217 = vrot.slane %v5182, 4
    %v5218 = vrot.slane %v5182, 5
    %v5219 = vrot.slane %v5182, 6
    %v5220 = vrot.slane %v5182, 7
    %v5221 = vrot.slane %v5183, 1
    %v5222 = vrot.slane %v5183, 2
    %v5223 = vrot.slane %v5183, 3
    %v5224 = vrot.slane %v5183, 4
    %v5225 = vrot.slane %v5183, 5
    %v5226 = vrot.slane %v5183, 6
    %v5227 = vrot.slane %v5183, 7
    %v5228 = vrot.slane %v5184, 1
    %v5229 = vrot.slane %v5184, 2
    %v5230 = vrot.slane %v5184, 3
    %v5231 = vrot.slane %v5184, 4
    %v5232 = vrot.slane %v5184, 5
    %v5233 = vrot.slane %v5184, 6
    %v5234 = vrot.slane %v5184, 7
    %v5235 = vrot.slane %v5185, 1
    %v5236 = vrot.slane %v5185, 2
    %v5237 = vrot.slane %v5185, 3
    %v5238 = vrot.slane %v5185, 4
    %v5239 = vrot.slane %v5185, 5
    %v5240 = vrot.slane %v5185, 6
    %v5241 = vrot.slane %v5185, 7
    %v5242 = vrot.slane %v5186, 1
    %v5243 = vrot.slane %v5186, 2
    %v5244 = vrot.slane %v5186, 3
    %v5245 = vrot.slane %v5186, 4
    %v5246 = vrot.slane %v5186, 5
    %v5247 = vrot.slane %v5186, 6
    %v5248 = vrot.slane %v5186, 7
    %v5249 = vrot.slane %v5187, 1
    %v5250 = vrot.slane %v5187, 2
    %v5251 = vrot.slane %v5187, 3
    %v5252 = vrot.slane %v5187, 4
    %v5253 = vrot.slane %v5187, 5
    %v5254 = vrot.slane %v5187, 6
    %v5255 = vrot.slane %v5187, 7
    %v5256 = vrot.slane %v5188, 1
    %v5257 = vrot.slane %v5188, 2
    %v5258 = vrot.slane %v5188, 3
    %v5259 = vrot.slane %v5188, 4
    %v5260 = vrot.slane %v5188, 5
    %v5261 = vrot.slane %v5188, 6
    %v5262 = vrot.slane %v5188, 7
    %v5263 = vrot.slane %v5189, 1
    %v5264 = vrot.slane %v5189, 2
    %v5265 = vrot.slane %v5189, 3
    %v5266 = vrot.slane %v5189, 4
    %v5267 = vrot.slane %v5189, 5
    %v5268 = vrot.slane %v5189, 6
    %v5269 = vrot.slane %v5189, 7
    %v5270 = vrot.slane %v5190, 1
    %v5271 = vrot.slane %v5190, 2
    %v5272 = vrot.slane %v5190, 3
    %v5273 = vrot.slane %v5190, 4
    %v5274 = vrot.slane %v5190, 5
    %v5275 = vrot.slane %v5190, 6
    %v5276 = vrot.slane %v5190, 7
    %v5277 = vrot.slane %v5191, 1
    %v5278 = vrot.slane %v5191, 2
    %v5279 = vrot.slane %v5191, 3
    %v5280 = vrot.slane %v5191, 4
    %v5281 = vrot.slane %v5191, 5
    %v5282 = vrot.slane %v5191, 6
    %v5283 = vrot.slane %v5191, 7
    %v5284 = vrot.slane %v5192, 1
    %v5285 = vrot.slane %v5192, 2
    %v5286 = vrot.slane %v5192, 3
    %v5287 = vrot.slane %v5192, 4
    %v5288 = vrot.slane %v5192, 5
    %v5289 = vrot.slane %v5192, 6
    %v5290 = vrot.slane %v5192, 7
    %v5291 = vrot.slane %v5193, 1
    %v5292 = vrot.slane %v5193, 2
    %v5293 = vrot.slane %v5193, 3
    %v5294 = vrot.slane %v5193, 4
    %v5295 = vrot.slane %v5193, 5
    %v5296 = vrot.slane %v5193, 6
    %v5297 = vrot.slane %v5193, 7
    %v5298 = vrot.slane %v5194, 1
    %v5299 = vrot.slane %v5194, 2
    %v5300 = vrot.slane %v5194, 3
    %v5301 = vrot.slane %v5194, 4
    %v5302 = vrot.slane %v5194, 5
    %v5303 = vrot.slane %v5194, 6
    %v5304 = vrot.slane %v5194, 7
    %v5305 = vrot.slane %v5195, 1
    %v5306 = vrot.slane %v5195, 2
    %v5307 = vrot.slane %v5195, 3
    %v5308 = vrot.slane %v5195, 4
    %v5309 = vrot.slane %v5195, 5
    %v5310 = vrot.slane %v5195, 6
    %v5311 = vrot.slane %v5195, 7
    %v5312 = vrot.slane %v5196, 1
    %v5313 = vrot.slane %v5196, 2
    %v5314 = vrot.slane %v5196, 3
    %v5315 = vrot.slane %v5196, 4
    %v5316 = vrot.slane %v5196, 5
    %v5317 = vrot.slane %v5196, 6
    %v5318 = vrot.slane %v5196, 7
    %v5319 = vrot.slane %v5197, 1
    %v5320 = vrot.slane %v5197, 2
    %v5321 = vrot.slane %v5197, 3
    %v5322 = vrot.slane %v5197, 4
    %v5323 = vrot.slane %v5197, 5
    %v5324 = vrot.slane %v5197, 6
    %v5325 = vrot.slane %v5197, 7
    %v5454 = vadd.f32 %v4038, %v5182
    %v5455 = vadd.f32 %v4047, %v5214
    %v5456 = vadd.f32 %v4056, %v5215
    %v5457 = vadd.f32 %v4065, %v5216
    %v5458 = vadd.f32 %v4074, %v5217
    %v5459 = vadd.f32 %v4083, %v5218
    %v5460 = vadd.f32 %v4092, %v5219
    %v5461 = vadd.f32 %v4101, %v5220
    %v5462 = vadd.f32 %v4110, %v5183
    %v5463 = vadd.f32 %v4119, %v5221
    %v5464 = vadd.f32 %v4128, %v5222
    %v5465 = vadd.f32 %v4137, %v5223
    %v5466 = vadd.f32 %v4146, %v5224
    %v5467 = vadd.f32 %v4155, %v5225
    %v5468 = vadd.f32 %v4164, %v5226
    %v5469 = vadd.f32 %v4173, %v5227
    %v5470 = vadd.f32 %v4182, %v5184
    %v5471 = vadd.f32 %v4191, %v5228
    %v5472 = vadd.f32 %v4200, %v5229
    %v5473 = vadd.f32 %v4209, %v5230
    %v5474 = vadd.f32 %v4218, %v5231
    %v5475 = vadd.f32 %v4227, %v5232
    %v5476 = vadd.f32 %v4236, %v5233
    %v5477 = vadd.f32 %v4245, %v5234
    %v5478 = vadd.f32 %v4254, %v5185
    %v5479 = vadd.f32 %v4263, %v5235
    %v5480 = vadd.f32 %v4272, %v5236
    %v5481 = vadd.f32 %v4281, %v5237
    %v5482 = vadd.f32 %v4290, %v5238
    %v5483 = vadd.f32 %v4299, %v5239
    %v5484 = vadd.f32 %v4308, %v5240
    %v5485 = vadd.f32 %v4317, %v5241
    %v5486 = vadd.f32 %v4326, %v5186
    %v5487 = vadd.f32 %v4335, %v5242
    %v5488 = vadd.f32 %v4344, %v5243
    %v5489 = vadd.f32 %v4353, %v5244
    %v5490 = vadd.f32 %v4362, %v5245
    %v5491 = vadd.f32 %v4371, %v5246
    %v5492 = vadd.f32 %v4380, %v5247
    %v5493 = vadd.f32 %v4389, %v5248
    %v5494 = vadd.f32 %v4398, %v5187
    %v5495 = vadd.f32 %v4407, %v5249
    %v5496 = vadd.f32 %v4416, %v5250
    %v5497 = vadd.f32 %v4425, %v5251
    %v5498 = vadd.f32 %v4434, %v5252
    %v5499 = vadd.f32 %v4443, %v5253
    %v5500 = vadd.f32 %v4452, %v5254
    %v5501 = vadd.f32 %v4461, %v5255
    %v5502 = vadd.f32 %v4470, %v5188
    %v5503 = vadd.f32 %v4479, %v5256
    %v5504 = vadd.f32 %v4488, %v5257
    %v5505 = vadd.f32 %v4497, %v5258
    %v5506 = vadd.f32 %v4506, %v5259
    %v5507 = vadd.f32 %v4515, %v5260
    %v5508 = vadd.f32 %v4524, %v5261
    %v5509 = vadd.f32 %v4533, %v5262
    %v5510 = vadd.f32 %v4542, %v5189
    %v5511 = vadd.f32 %v4551, %v5263
    %v5512 = vadd.f32 %v4560, %v5264
    %v5513 = vadd.f32 %v4569, %v5265
    %v5514 = vadd.f32 %v4578, %v5266
    %v5515 = vadd.f32 %v4587, %v5267
    %v5516 = vadd.f32 %v4596, %v5268
    %v5517 = vadd.f32 %v4605, %v5269
    %v5518 = vadd.f32 %v4614, %v5190
    %v5519 = vadd.f32 %v4623, %v5270
    %v5520 = vadd.f32 %v4632, %v5271
    %v5521 = vadd.f32 %v4641, %v5272
    %v5522 = vadd.f32 %v4650, %v5273
    %v5523 = vadd.f32 %v4659, %v5274
    %v5524 = vadd.f32 %v4668, %v5275
    %v5525 = vadd.f32 %v4677, %v5276
    %v5526 = vadd.f32 %v4686, %v5191
    %v5527 = vadd.f32 %v4695, %v5277
    %v5528 = vadd.f32 %v4704, %v5278
    %v5529 = vadd.f32 %v4713, %v5279
    %v5530 = vadd.f32 %v4722, %v5280
    %v5531 = vadd.f32 %v4731, %v5281
    %v5532 = vadd.f32 %v4740, %v5282
    %v5533 = vadd.f32 %v4749, %v5283
    %v5534 = vadd.f32 %v4758, %v5192
    %v5535 = vadd.f32 %v4767, %v5284
    %v5536 = vadd.f32 %v4776, %v5285
    %v5537 = vadd.f32 %v4785, %v5286
    %v5538 = vadd.f32 %v4794, %v5287
    %v5539 = vadd.f32 %v4803, %v5288
    %v5540 = vadd.f32 %v4812, %v5289
    %v5541 = vadd.f32 %v4821, %v5290
    %v5542 = vadd.f32 %v4830, %v5193
    %v5543 = vadd.f32 %v4839, %v5291
    %v5544 = vadd.f32 %v4848, %v5292
    %v5545 = vadd.f32 %v4857, %v5293
    %v5546 = vadd.f32 %v4866, %v5294
    %v5547 = vadd.f32 %v4875, %v5295
    %v5548 = vadd.f32 %v4884, %v5296
    %v5549 = vadd.f32 %v4893, %v5297
    %v5550 = vadd.f32 %v4902, %v5194
    %v5551 = vadd.f32 %v4911, %v5298
    %v5552 = vadd.f32 %v4920, %v5299
    %v5553 = vadd.f32 %v4929, %v5300
    %v5554 = vadd.f32 %v4938, %v5301
    %v5555 = vadd.f32 %v4947, %v5302
    %v5556 = vadd.f32 %v4956, %v5303
    %v5557 = vadd.f32 %v4965, %v5304
    %v5558 = vadd.f32 %v4974, %v5195
    %v5559 = vadd.f32 %v4983, %v5305
    %v5560 = vadd.f32 %v4992, %v5306
    %v5561 = vadd.f32 %v5001, %v5307
    %v5562 = vadd.f32 %v5010, %v5308
    %v5563 = vadd.f32 %v5019, %v5309
    %v5564 = vadd.f32 %v5028, %v5310
    %v5565 = vadd.f32 %v5037, %v5311
    %v5566 = vadd.f32 %v5046, %v5196
    %v5567 = vadd.f32 %v5055, %v5312
    %v5568 = vadd.f32 %v5064, %v5313
    %v5569 = vadd.f32 %v5073, %v5314
    %v5570 = vadd.f32 %v5082, %v5315
    %v5571 = vadd.f32 %v5091, %v5316
    %v5572 = vadd.f32 %v5100, %v5317
    %v5573 = vadd.f32 %v5109, %v5318
    %v5574 = vadd.f32 %v5118, %v5197
    %v5575 = vadd.f32 %v5127, %v5319
    %v5576 = vadd.f32 %v5136, %v5320
    %v5577 = vadd.f32 %v5145, %v5321
    %v5578 = vadd.f32 %v5154, %v5322
    %v5579 = vadd.f32 %v5163, %v5323
    %v5580 = vadd.f32 %v5172, %v5324
    %v5581 = vadd.f32 %v5181, %v5325
    %v5710 = vrot.slane %v5455, 7
    %vm5711 = vcmask 1041409
    %v5712 = vsel %vm5711, %v5710, %v5454
    %v5713 = vrot.slane %v5456, 6
    %vm5714 = vcmask 1042434
    %v5715 = vsel %vm5714, %v5713, %v5712
    %v5716 = vrot.slane %v5457, 5
    %vm5717 = vcmask 1043459
    %v5718 = vsel %vm5717, %v5716, %v5715
    %v5719 = vrot.slane %v5458, 4
    %vm5720 = vcmask 1044484
    %v5721 = vsel %vm5720, %v5719, %v5718
    %v5722 = vrot.slane %v5459, 3
    %vm5723 = vcmask 1045509
    %v5724 = vsel %vm5723, %v5722, %v5721
    %v5725 = vrot.slane %v5460, 2
    %vm5726 = vcmask 1046534
    %v5727 = vsel %vm5726, %v5725, %v5724
    %v5728 = vrot.slane %v5461, 1
    %vm5729 = vcmask 1047559
    %v5730 = vsel %vm5729, %v5728, %v5727
    %v5731 = vrot.slane %v5463, 7
    %v5732 = vsel %vm5711, %v5731, %v5462
    %v5733 = vrot.slane %v5464, 6
    %v5734 = vsel %vm5714, %v5733, %v5732
    %v5735 = vrot.slane %v5465, 5
    %v5736 = vsel %vm5717, %v5735, %v5734
    %v5737 = vrot.slane %v5466, 4
    %v5738 = vsel %vm5720, %v5737, %v5736
    %v5739 = vrot.slane %v5467, 3
    %v5740 = vsel %vm5723, %v5739, %v5738
    %v5741 = vrot.slane %v5468, 2
    %v5742 = vsel %vm5726, %v5741, %v5740
    %v5743 = vrot.slane %v5469, 1
    %v5744 = vsel %vm5729, %v5743, %v5742
    %v5745 = vrot.slane %v5471, 7
    %v5746 = vsel %vm5711, %v5745, %v5470
    %v5747 = vrot.slane %v5472, 6
    %v5748 = vsel %vm5714, %v5747, %v5746
    %v5749 = vrot.slane %v5473, 5
    %v5750 = vsel %vm5717, %v5749, %v5748
    %v5751 = vrot.slane %v5474, 4
    %v5752 = vsel %vm5720, %v5751, %v5750
    %v5753 = vrot.slane %v5475, 3
    %v5754 = vsel %vm5723, %v5753, %v5752
    %v5755 = vrot.slane %v5476, 2
    %v5756 = vsel %vm5726, %v5755, %v5754
    %v5757 = vrot.slane %v5477, 1
    %v5758 = vsel %vm5729, %v5757, %v5756
    %v5759 = vrot.slane %v5479, 7
    %v5760 = vsel %vm5711, %v5759, %v5478
    %v5761 = vrot.slane %v5480, 6
    %v5762 = vsel %vm5714, %v5761, %v5760
    %v5763 = vrot.slane %v5481, 5
    %v5764 = vsel %vm5717, %v5763, %v5762
    %v5765 = vrot.slane %v5482, 4
    %v5766 = vsel %vm5720, %v5765, %v5764
    %v5767 = vrot.slane %v5483, 3
    %v5768 = vsel %vm5723, %v5767, %v5766
    %v5769 = vrot.slane %v5484, 2
    %v5770 = vsel %vm5726, %v5769, %v5768
    %v5771 = vrot.slane %v5485, 1
    %v5772 = vsel %vm5729, %v5771, %v5770
    %v5773 = vrot.slane %v5487, 7
    %v5774 = vsel %vm5711, %v5773, %v5486
    %v5775 = vrot.slane %v5488, 6
    %v5776 = vsel %vm5714, %v5775, %v5774
    %v5777 = vrot.slane %v5489, 5
    %v5778 = vsel %vm5717, %v5777, %v5776
    %v5779 = vrot.slane %v5490, 4
    %v5780 = vsel %vm5720, %v5779, %v5778
    %v5781 = vrot.slane %v5491, 3
    %v5782 = vsel %vm5723, %v5781, %v5780
    %v5783 = vrot.slane %v5492, 2
    %v5784 = vsel %vm5726, %v5783, %v5782
    %v5785 = vrot.slane %v5493, 1
    %v5786 = vsel %vm5729, %v5785, %v5784
    %v5787 = vrot.slane %v5495, 7
    %v5788 = vsel %vm5711, %v5787, %v5494
    %v5789 = vrot.slane %v5496, 6
    %v5790 = vsel %vm5714, %v5789, %v5788
    %v5791 = vrot.slane %v5497, 5
    %v5792 = vsel %vm5717, %v5791, %v5790
    %v5793 = vrot.slane %v5498, 4
    %v5794 = vsel %vm5720, %v5793, %v5792
    %v5795 = vrot.slane %v5499, 3
    %v5796 = vsel %vm5723, %v5795, %v5794
    %v5797 = vrot.slane %v5500, 2
    %v5798 = vsel %vm5726, %v5797, %v5796
    %v5799 = vrot.slane %v5501, 1
    %v5800 = vsel %vm5729, %v5799, %v5798
    %v5801 = vrot.slane %v5503, 7
    %v5802 = vsel %vm5711, %v5801, %v5502
    %v5803 = vrot.slane %v5504, 6
    %v5804 = vsel %vm5714, %v5803, %v5802
    %v5805 = vrot.slane %v5505, 5
    %v5806 = vsel %vm5717, %v5805, %v5804
    %v5807 = vrot.slane %v5506, 4
    %v5808 = vsel %vm5720, %v5807, %v5806
    %v5809 = vrot.slane %v5507, 3
    %v5810 = vsel %vm5723, %v5809, %v5808
    %v5811 = vrot.slane %v5508, 2
    %v5812 = vsel %vm5726, %v5811, %v5810
    %v5813 = vrot.slane %v5509, 1
    %v5814 = vsel %vm5729, %v5813, %v5812
    %v5815 = vrot.slane %v5511, 7
    %v5816 = vsel %vm5711, %v5815, %v5510
    %v5817 = vrot.slane %v5512, 6
    %v5818 = vsel %vm5714, %v5817, %v5816
    %v5819 = vrot.slane %v5513, 5
    %v5820 = vsel %vm5717, %v5819, %v5818
    %v5821 = vrot.slane %v5514, 4
    %v5822 = vsel %vm5720, %v5821, %v5820
    %v5823 = vrot.slane %v5515, 3
    %v5824 = vsel %vm5723, %v5823, %v5822
    %v5825 = vrot.slane %v5516, 2
    %v5826 = vsel %vm5726, %v5825, %v5824
    %v5827 = vrot.slane %v5517, 1
    %v5828 = vsel %vm5729, %v5827, %v5826
    %v5829 = vrot.slane %v5519, 7
    %v5830 = vsel %vm5711, %v5829, %v5518
    %v5831 = vrot.slane %v5520, 6
    %v5832 = vsel %vm5714, %v5831, %v5830
    %v5833 = vrot.slane %v5521, 5
    %v5834 = vsel %vm5717, %v5833, %v5832
    %v5835 = vrot.slane %v5522, 4
    %v5836 = vsel %vm5720, %v5835, %v5834
    %v5837 = vrot.slane %v5523, 3
    %v5838 = vsel %vm5723, %v5837, %v5836
    %v5839 = vrot.slane %v5524, 2
    %v5840 = vsel %vm5726, %v5839, %v5838
    %v5841 = vrot.slane %v5525, 1
    %v5842 = vsel %vm5729, %v5841, %v5840
    %v5843 = vrot.slane %v5527, 7
    %v5844 = vsel %vm5711, %v5843, %v5526
    %v5845 = vrot.slane %v5528, 6
    %v5846 = vsel %vm5714, %v5845, %v5844
    %v5847 = vrot.slane %v5529, 5
    %v5848 = vsel %vm5717, %v5847, %v5846
    %v5849 = vrot.slane %v5530, 4
    %v5850 = vsel %vm5720, %v5849, %v5848
    %v5851 = vrot.slane %v5531, 3
    %v5852 = vsel %vm5723, %v5851, %v5850
    %v5853 = vrot.slane %v5532, 2
    %v5854 = vsel %vm5726, %v5853, %v5852
    %v5855 = vrot.slane %v5533, 1
    %v5856 = vsel %vm5729, %v5855, %v5854
    %v5857 = vrot.slane %v5535, 7
    %v5858 = vsel %vm5711, %v5857, %v5534
    %v5859 = vrot.slane %v5536, 6
    %v5860 = vsel %vm5714, %v5859, %v5858
    %v5861 = vrot.slane %v5537, 5
    %v5862 = vsel %vm5717, %v5861, %v5860
    %v5863 = vrot.slane %v5538, 4
    %v5864 = vsel %vm5720, %v5863, %v5862
    %v5865 = vrot.slane %v5539, 3
    %v5866 = vsel %vm5723, %v5865, %v5864
    %v5867 = vrot.slane %v5540, 2
    %v5868 = vsel %vm5726, %v5867, %v5866
    %v5869 = vrot.slane %v5541, 1
    %v5870 = vsel %vm5729, %v5869, %v5868
    %v5871 = vrot.slane %v5543, 7
    %v5872 = vsel %vm5711, %v5871, %v5542
    %v5873 = vrot.slane %v5544, 6
    %v5874 = vsel %vm5714, %v5873, %v5872
    %v5875 = vrot.slane %v5545, 5
    %v5876 = vsel %vm5717, %v5875, %v5874
    %v5877 = vrot.slane %v5546, 4
    %v5878 = vsel %vm5720, %v5877, %v5876
    %v5879 = vrot.slane %v5547, 3
    %v5880 = vsel %vm5723, %v5879, %v5878
    %v5881 = vrot.slane %v5548, 2
    %v5882 = vsel %vm5726, %v5881, %v5880
    %v5883 = vrot.slane %v5549, 1
    %v5884 = vsel %vm5729, %v5883, %v5882
    %v5885 = vrot.slane %v5551, 7
    %v5886 = vsel %vm5711, %v5885, %v5550
    %v5887 = vrot.slane %v5552, 6
    %v5888 = vsel %vm5714, %v5887, %v5886
    %v5889 = vrot.slane %v5553, 5
    %v5890 = vsel %vm5717, %v5889, %v5888
    %v5891 = vrot.slane %v5554, 4
    %v5892 = vsel %vm5720, %v5891, %v5890
    %v5893 = vrot.slane %v5555, 3
    %v5894 = vsel %vm5723, %v5893, %v5892
    %v5895 = vrot.slane %v5556, 2
    %v5896 = vsel %vm5726, %v5895, %v5894
    %v5897 = vrot.slane %v5557, 1
    %v5898 = vsel %vm5729, %v5897, %v5896
    %v5899 = vrot.slane %v5559, 7
    %v5900 = vsel %vm5711, %v5899, %v5558
    %v5901 = vrot.slane %v5560, 6
    %v5902 = vsel %vm5714, %v5901, %v5900
    %v5903 = vrot.slane %v5561, 5
    %v5904 = vsel %vm5717, %v5903, %v5902
    %v5905 = vrot.slane %v5562, 4
    %v5906 = vsel %vm5720, %v5905, %v5904
    %v5907 = vrot.slane %v5563, 3
    %v5908 = vsel %vm5723, %v5907, %v5906
    %v5909 = vrot.slane %v5564, 2
    %v5910 = vsel %vm5726, %v5909, %v5908
    %v5911 = vrot.slane %v5565, 1
    %v5912 = vsel %vm5729, %v5911, %v5910
    %v5913 = vrot.slane %v5567, 7
    %v5914 = vsel %vm5711, %v5913, %v5566
    %v5915 = vrot.slane %v5568, 6
    %v5916 = vsel %vm5714, %v5915, %v5914
    %v5917 = vrot.slane %v5569, 5
    %v5918 = vsel %vm5717, %v5917, %v5916
    %v5919 = vrot.slane %v5570, 4
    %v5920 = vsel %vm5720, %v5919, %v5918
    %v5921 = vrot.slane %v5571, 3
    %v5922 = vsel %vm5723, %v5921, %v5920
    %v5923 = vrot.slane %v5572, 2
    %v5924 = vsel %vm5726, %v5923, %v5922
    %v5925 = vrot.slane %v5573, 1
    %v5926 = vsel %vm5729, %v5925, %v5924
    %v5927 = vrot.slane %v5575, 7
    %v5928 = vsel %vm5711, %v5927, %v5574
    %v5929 = vrot.slane %v5576, 6
    %v5930 = vsel %vm5714, %v5929, %v5928
    %v5931 = vrot.slane %v5577, 5
    %v5932 = vsel %vm5717, %v5931, %v5930
    %v5933 = vrot.slane %v5578, 4
    %v5934 = vsel %vm5720, %v5933, %v5932
    %v5935 = vrot.slane %v5579, 3
    %v5936 = vsel %vm5723, %v5935, %v5934
    %v5937 = vrot.slane %v5580, 2
    %v5938 = vsel %vm5726, %v5937, %v5936
    %v5939 = vrot.slane %v5581, 1
    %v5940 = vsel %vm5729, %v5939, %v5938
    %5957 = vmax.xlane.f32.xlu0 %v5730
    %v5958 = vpop.xlane.xlu0 %5957
    %5959 = vmax.xlane.f32.xlu0 %v5744
    %v5960 = vpop.xlane.xlu0 %5959
    %5961 = vmax.xlane.f32.xlu0 %v5758
    %v5962 = vpop.xlane.xlu0 %5961
    %5963 = vmax.xlane.f32.xlu0 %v5772
    %v5964 = vpop.xlane.xlu0 %5963
    %5965 = vmax.xlane.f32.xlu0 %v5786
    %v5966 = vpop.xlane.xlu0 %5965
    %5967 = vmax.xlane.f32.xlu0 %v5800
    %v5968 = vpop.xlane.xlu0 %5967
    %5969 = vmax.xlane.f32.xlu0 %v5814
    %v5970 = vpop.xlane.xlu0 %5969
    %5971 = vmax.xlane.f32.xlu0 %v5828
    %v5972 = vpop.xlane.xlu0 %5971
    %5973 = vmax.xlane.f32.xlu0 %v5842
    %v5974 = vpop.xlane.xlu0 %5973
    %5975 = vmax.xlane.f32.xlu0 %v5856
    %v5976 = vpop.xlane.xlu0 %5975
    %5977 = vmax.xlane.f32.xlu0 %v5870
    %v5978 = vpop.xlane.xlu0 %5977
    %5979 = vmax.xlane.f32.xlu0 %v5884
    %v5980 = vpop.xlane.xlu0 %5979
    %5981 = vmax.xlane.f32.xlu0 %v5898
    %v5982 = vpop.xlane.xlu0 %5981
    %5983 = vmax.xlane.f32.xlu0 %v5912
    %v5984 = vpop.xlane.xlu0 %5983
    %5985 = vmax.xlane.f32.xlu0 %v5926
    %v5986 = vpop.xlane.xlu0 %5985
    %5987 = vmax.xlane.f32.xlu0 %v5940
    %v5988 = vpop.xlane.xlu0 %5987
    %v6005 = vrot.slane %v5958, 1
    %v6006 = vrot.slane %v5958, 2
    %v6007 = vrot.slane %v5958, 3
    %v6008 = vrot.slane %v5958, 4
    %v6009 = vrot.slane %v5958, 5
    %v6010 = vrot.slane %v5958, 6
    %v6011 = vrot.slane %v5958, 7
    %v6012 = vrot.slane %v5960, 1
    %v6013 = vrot.slane %v5960, 2
    %v6014 = vrot.slane %v5960, 3
    %v6015 = vrot.slane %v5960, 4
    %v6016 = vrot.slane %v5960, 5
    %v6017 = vrot.slane %v5960, 6
    %v6018 = vrot.slane %v5960, 7
    %v6019 = vrot.slane %v5962, 1
    %v6020 = vrot.slane %v5962, 2
    %v6021 = vrot.slane %v5962, 3
    %v6022 = vrot.slane %v5962, 4
    %v6023 = vrot.slane %v5962, 5
    %v6024 = vrot.slane %v5962, 6
    %v6025 = vrot.slane %v5962, 7
    %v6026 = vrot.slane %v5964, 1
    %v6027 = vrot.slane %v5964, 2
    %v6028 = vrot.slane %v5964, 3
    %v6029 = vrot.slane %v5964, 4
    %v6030 = vrot.slane %v5964, 5
    %v6031 = vrot.slane %v5964, 6
    %v6032 = vrot.slane %v5964, 7
    %v6033 = vrot.slane %v5966, 1
    %v6034 = vrot.slane %v5966, 2
    %v6035 = vrot.slane %v5966, 3
    %v6036 = vrot.slane %v5966, 4
    %v6037 = vrot.slane %v5966, 5
    %v6038 = vrot.slane %v5966, 6
    %v6039 = vrot.slane %v5966, 7
    %v6040 = vrot.slane %v5968, 1
    %v6041 = vrot.slane %v5968, 2
    %v6042 = vrot.slane %v5968, 3
    %v6043 = vrot.slane %v5968, 4
    %v6044 = vrot.slane %v5968, 5
    %v6045 = vrot.slane %v5968, 6
    %v6046 = vrot.slane %v5968, 7
    %v6047 = vrot.slane %v5970, 1
    %v6048 = vrot.slane %v5970, 2
    %v6049 = vrot.slane %v5970, 3
    %v6050 = vrot.slane %v5970, 4
    %v6051 = vrot.slane %v5970, 5
    %v6052 = vrot.slane %v5970, 6
    %v6053 = vrot.slane %v5970, 7
    %v6054 = vrot.slane %v5972, 1
    %v6055 = vrot.slane %v5972, 2
    %v6056 = vrot.slane %v5972, 3
    %v6057 = vrot.slane %v5972, 4
    %v6058 = vrot.slane %v5972, 5
    %v6059 = vrot.slane %v5972, 6
    %v6060 = vrot.slane %v5972, 7
    %v6061 = vrot.slane %v5974, 1
    %v6062 = vrot.slane %v5974, 2
    %v6063 = vrot.slane %v5974, 3
    %v6064 = vrot.slane %v5974, 4
    %v6065 = vrot.slane %v5974, 5
    %v6066 = vrot.slane %v5974, 6
    %v6067 = vrot.slane %v5974, 7
    %v6068 = vrot.slane %v5976, 1
    %v6069 = vrot.slane %v5976, 2
    %v6070 = vrot.slane %v5976, 3
    %v6071 = vrot.slane %v5976, 4
    %v6072 = vrot.slane %v5976, 5
    %v6073 = vrot.slane %v5976, 6
    %v6074 = vrot.slane %v5976, 7
    %v6075 = vrot.slane %v5978, 1
    %v6076 = vrot.slane %v5978, 2
    %v6077 = vrot.slane %v5978, 3
    %v6078 = vrot.slane %v5978, 4
    %v6079 = vrot.slane %v5978, 5
    %v6080 = vrot.slane %v5978, 6
    %v6081 = vrot.slane %v5978, 7
    %v6082 = vrot.slane %v5980, 1
    %v6083 = vrot.slane %v5980, 2
    %v6084 = vrot.slane %v5980, 3
    %v6085 = vrot.slane %v5980, 4
    %v6086 = vrot.slane %v5980, 5
    %v6087 = vrot.slane %v5980, 6
    %v6088 = vrot.slane %v5980, 7
    %v6089 = vrot.slane %v5982, 1
    %v6090 = vrot.slane %v5982, 2
    %v6091 = vrot.slane %v5982, 3
    %v6092 = vrot.slane %v5982, 4
    %v6093 = vrot.slane %v5982, 5
    %v6094 = vrot.slane %v5982, 6
    %v6095 = vrot.slane %v5982, 7
    %v6096 = vrot.slane %v5984, 1
    %v6097 = vrot.slane %v5984, 2
    %v6098 = vrot.slane %v5984, 3
    %v6099 = vrot.slane %v5984, 4
    %v6100 = vrot.slane %v5984, 5
    %v6101 = vrot.slane %v5984, 6
    %v6102 = vrot.slane %v5984, 7
    %v6103 = vrot.slane %v5986, 1
    %v6104 = vrot.slane %v5986, 2
    %v6105 = vrot.slane %v5986, 3
    %v6106 = vrot.slane %v5986, 4
    %v6107 = vrot.slane %v5986, 5
    %v6108 = vrot.slane %v5986, 6
    %v6109 = vrot.slane %v5986, 7
    %v6110 = vrot.slane %v5988, 1
    %v6111 = vrot.slane %v5988, 2
    %v6112 = vrot.slane %v5988, 3
    %v6113 = vrot.slane %v5988, 4
    %v6114 = vrot.slane %v5988, 5
    %v6115 = vrot.slane %v5988, 6
    %v6116 = vrot.slane %v5988, 7
    %v6245 = vsub.f32 %v5454, %v5958
    %v6246 = vsub.f32 %v5455, %v6005
    %v6247 = vsub.f32 %v5456, %v6006
    %v6248 = vsub.f32 %v5457, %v6007
    %v6249 = vsub.f32 %v5458, %v6008
    %v6250 = vsub.f32 %v5459, %v6009
    %v6251 = vsub.f32 %v5460, %v6010
    %v6252 = vsub.f32 %v5461, %v6011
    %v6253 = vsub.f32 %v5462, %v5960
    %v6254 = vsub.f32 %v5463, %v6012
    %v6255 = vsub.f32 %v5464, %v6013
    %v6256 = vsub.f32 %v5465, %v6014
    %v6257 = vsub.f32 %v5466, %v6015
    %v6258 = vsub.f32 %v5467, %v6016
    %v6259 = vsub.f32 %v5468, %v6017
    %v6260 = vsub.f32 %v5469, %v6018
    %v6261 = vsub.f32 %v5470, %v5962
    %v6262 = vsub.f32 %v5471, %v6019
    %v6263 = vsub.f32 %v5472, %v6020
    %v6264 = vsub.f32 %v5473, %v6021
    %v6265 = vsub.f32 %v5474, %v6022
    %v6266 = vsub.f32 %v5475, %v6023
    %v6267 = vsub.f32 %v5476, %v6024
    %v6268 = vsub.f32 %v5477, %v6025
    %v6269 = vsub.f32 %v5478, %v5964
    %v6270 = vsub.f32 %v5479, %v6026
    %v6271 = vsub.f32 %v5480, %v6027
    %v6272 = vsub.f32 %v5481, %v6028
    %v6273 = vsub.f32 %v5482, %v6029
    %v6274 = vsub.f32 %v5483, %v6030
    %v6275 = vsub.f32 %v5484, %v6031
    %v6276 = vsub.f32 %v5485, %v6032
    %v6277 = vsub.f32 %v5486, %v5966
    %v6278 = vsub.f32 %v5487, %v6033
    %v6279 = vsub.f32 %v5488, %v6034
    %v6280 = vsub.f32 %v5489, %v6035
    %v6281 = vsub.f32 %v5490, %v6036
    %v6282 = vsub.f32 %v5491, %v6037
    %v6283 = vsub.f32 %v5492, %v6038
    %v6284 = vsub.f32 %v5493, %v6039
    %v6285 = vsub.f32 %v5494, %v5968
    %v6286 = vsub.f32 %v5495, %v6040
    %v6287 = vsub.f32 %v5496, %v6041
    %v6288 = vsub.f32 %v5497, %v6042
    %v6289 = vsub.f32 %v5498, %v6043
    %v6290 = vsub.f32 %v5499, %v6044
    %v6291 = vsub.f32 %v5500, %v6045
    %v6292 = vsub.f32 %v5501, %v6046
    %v6293 = vsub.f32 %v5502, %v5970
    %v6294 = vsub.f32 %v5503, %v6047
    %v6295 = vsub.f32 %v5504, %v6048
    %v6296 = vsub.f32 %v5505, %v6049
    %v6297 = vsub.f32 %v5506, %v6050
    %v6298 = vsub.f32 %v5507, %v6051
    %v6299 = vsub.f32 %v5508, %v6052
    %v6300 = vsub.f32 %v5509, %v6053
    %v6301 = vsub.f32 %v5510, %v5972
    %v6302 = vsub.f32 %v5511, %v6054
    %v6303 = vsub.f32 %v5512, %v6055
    %v6304 = vsub.f32 %v5513, %v6056
    %v6305 = vsub.f32 %v5514, %v6057
    %v6306 = vsub.f32 %v5515, %v6058
    %v6307 = vsub.f32 %v5516, %v6059
    %v6308 = vsub.f32 %v5517, %v6060
    %v6309 = vsub.f32 %v5518, %v5974
    %v6310 = vsub.f32 %v5519, %v6061
    %v6311 = vsub.f32 %v5520, %v6062
    %v6312 = vsub.f32 %v5521, %v6063
    %v6313 = vsub.f32 %v5522, %v6064
    %v6314 = vsub.f32 %v5523, %v6065
    %v6315 = vsub.f32 %v5524, %v6066
    %v6316 = vsub.f32 %v5525, %v6067
    %v6317 = vsub.f32 %v5526, %v5976
    %v6318 = vsub.f32 %v5527, %v6068
    %v6319 = vsub.f32 %v5528, %v6069
    %v6320 = vsub.f32 %v5529, %v6070
    %v6321 = vsub.f32 %v5530, %v6071
    %v6322 = vsub.f32 %v5531, %v6072
    %v6323 = vsub.f32 %v5532, %v6073
    %v6324 = vsub.f32 %v5533, %v6074
    %v6325 = vsub.f32 %v5534, %v5978
    %v6326 = vsub.f32 %v5535, %v6075
    %v6327 = vsub.f32 %v5536, %v6076
    %v6328 = vsub.f32 %v5537, %v6077
    %v6329 = vsub.f32 %v5538, %v6078
    %v6330 = vsub.f32 %v5539, %v6079
    %v6331 = vsub.f32 %v5540, %v6080
    %v6332 = vsub.f32 %v5541, %v6081
    %v6333 = vsub.f32 %v5542, %v5980
    %v6334 = vsub.f32 %v5543, %v6082
    %v6335 = vsub.f32 %v5544, %v6083
    %v6336 = vsub.f32 %v5545, %v6084
    %v6337 = vsub.f32 %v5546, %v6085
    %v6338 = vsub.f32 %v5547, %v6086
    %v6339 = vsub.f32 %v5548, %v6087
    %v6340 = vsub.f32 %v5549, %v6088
    %v6341 = vsub.f32 %v5550, %v5982
    %v6342 = vsub.f32 %v5551, %v6089
    %v6343 = vsub.f32 %v5552, %v6090
    %v6344 = vsub.f32 %v5553, %v6091
    %v6345 = vsub.f32 %v5554, %v6092
    %v6346 = vsub.f32 %v5555, %v6093
    %v6347 = vsub.f32 %v5556, %v6094
    %v6348 = vsub.f32 %v5557, %v6095
    %v6349 = vsub.f32 %v5558, %v5984
    %v6350 = vsub.f32 %v5559, %v6096
    %v6351 = vsub.f32 %v5560, %v6097
    %v6352 = vsub.f32 %v5561, %v6098
    %v6353 = vsub.f32 %v5562, %v6099
    %v6354 = vsub.f32 %v5563, %v6100
    %v6355 = vsub.f32 %v5564, %v6101
    %v6356 = vsub.f32 %v5565, %v6102
    %v6357 = vsub.f32 %v5566, %v5986
    %v6358 = vsub.f32 %v5567, %v6103
    %v6359 = vsub.f32 %v5568, %v6104
    %v6360 = vsub.f32 %v5569, %v6105
    %v6361 = vsub.f32 %v5570, %v6106
    %v6362 = vsub.f32 %v5571, %v6107
    %v6363 = vsub.f32 %v5572, %v6108
    %v6364 = vsub.f32 %v5573, %v6109
    %v6365 = vsub.f32 %v5574, %v5988
    %v6366 = vsub.f32 %v5575, %v6110
    %v6367 = vsub.f32 %v5576, %v6111
    %v6368 = vsub.f32 %v5577, %v6112
    %v6369 = vsub.f32 %v5578, %v6113
    %v6370 = vsub.f32 %v5579, %v6114
    %v6371 = vsub.f32 %v5580, %v6115
    %v6372 = vsub.f32 %v5581, %v6116
    %v6373 = vmul.f32 %v6245, 1.442695
    %v6374 = vpow.pop %v6373
    %v6375 = vmul.f32 %v6246, 1.442695
    %v6376 = vpow.pop %v6375
    %v6377 = vmul.f32 %v6247, 1.442695
    %v6378 = vpow.pop %v6377
    %v6379 = vmul.f32 %v6248, 1.442695
    %v6380 = vpow.pop %v6379
    %v6381 = vmul.f32 %v6249, 1.442695
    %v6382 = vpow.pop %v6381
    %v6383 = vmul.f32 %v6250, 1.442695
    %v6384 = vpow.pop %v6383
    %v6385 = vmul.f32 %v6251, 1.442695
    %v6386 = vpow.pop %v6385
    %v6387 = vmul.f32 %v6252, 1.442695
    %v6388 = vpow.pop %v6387
    %v6389 = vmul.f32 %v6253, 1.442695
    %v6390 = vpow.pop %v6389
    %v6391 = vmul.f32 %v6254, 1.442695
    %v6392 = vpow.pop %v6391
    %v6393 = vmul.f32 %v6255, 1.442695
    %v6394 = vpow.pop %v6393
    %v6395 = vmul.f32 %v6256, 1.442695
    %v6396 = vpow.pop %v6395
    %v6397 = vmul.f32 %v6257, 1.442695
    %v6398 = vpow.pop %v6397
    %v6399 = vmul.f32 %v6258, 1.442695
    %v6400 = vpow.pop %v6399
    %v6401 = vmul.f32 %v6259, 1.442695
    %v6402 = vpow.pop %v6401
    %v6403 = vmul.f32 %v6260, 1.442695
    %v6404 = vpow.pop %v6403
    %v6405 = vmul.f32 %v6261, 1.442695
    %v6406 = vpow.pop %v6405
    %v6407 = vmul.f32 %v6262, 1.442695
    %v6408 = vpow.pop %v6407
    %v6409 = vmul.f32 %v6263, 1.442695
    %v6410 = vpow.pop %v6409
    %v6411 = vmul.f32 %v6264, 1.442695
    %v6412 = vpow.pop %v6411
    %v6413 = vmul.f32 %v6265, 1.442695
    %v6414 = vpow.pop %v6413
    %v6415 = vmul.f32 %v6266, 1.442695
    %v6416 = vpow.pop %v6415
    %v6417 = vmul.f32 %v6267, 1.442695
    %v6418 = vpow.pop %v6417
    %v6419 = vmul.f32 %v6268, 1.442695
    %v6420 = vpow.pop %v6419
    %v6421 = vmul.f32 %v6269, 1.442695
    %v6422 = vpow.pop %v6421
    %v6423 = vmul.f32 %v6270, 1.442695
    %v6424 = vpow.pop %v6423
    %v6425 = vmul.f32 %v6271, 1.442695
    %v6426 = vpow.pop %v6425
    %v6427 = vmul.f32 %v6272, 1.442695
    %v6428 = vpow.pop %v6427
    %v6429 = vmul.f32 %v6273, 1.442695
    %v6430 = vpow.pop %v6429
    %v6431 = vmul.f32 %v6274, 1.442695
    %v6432 = vpow.pop %v6431
    %v6433 = vmul.f32 %v6275, 1.442695
    %v6434 = vpow.pop %v6433
    %v6435 = vmul.f32 %v6276, 1.442695
    %v6436 = vpow.pop %v6435
    %v6437 = vmul.f32 %v6277, 1.442695
    %v6438 = vpow.pop %v6437
    %v6439 = vmul.f32 %v6278, 1.442695
    %v6440 = vpow.pop %v6439
    %v6441 = vmul.f32 %v6279, 1.442695
    %v6442 = vpow.pop %v6441
    %v6443 = vmul.f32 %v6280, 1.442695
    %v6444 = vpow.pop %v6443
    %v6445 = vmul.f32 %v6281, 1.442695
    %v6446 = vpow.pop %v6445
    %v6447 = vmul.f32 %v6282, 1.442695
    %v6448 = vpow.pop %v6447
    %v6449 = vmul.f32 %v6283, 1.442695
    %v6450 = vpow.pop %v6449
    %v6451 = vmul.f32 %v6284, 1.442695
    %v6452 = vpow.pop %v6451
    %v6453 = vmul.f32 %v6285, 1.442695
    %v6454 = vpow.pop %v6453
    %v6455 = vmul.f32 %v6286, 1.442695
    %v6456 = vpow.pop %v6455
    %v6457 = vmul.f32 %v6287, 1.442695
    %v6458 = vpow.pop %v6457
    %v6459 = vmul.f32 %v6288, 1.442695
    %v6460 = vpow.pop %v6459
    %v6461 = vmul.f32 %v6289, 1.442695
    %v6462 = vpow.pop %v6461
    %v6463 = vmul.f32 %v6290, 1.442695
    %v6464 = vpow.pop %v6463
    %v6465 = vmul.f32 %v6291, 1.442695
    %v6466 = vpow.pop %v6465
    %v6467 = vmul.f32 %v6292, 1.442695
    %v6468 = vpow.pop %v6467
    %v6469 = vmul.f32 %v6293, 1.442695
    %v6470 = vpow.pop %v6469
    %v6471 = vmul.f32 %v6294, 1.442695
    %v6472 = vpow.pop %v6471
    %v6473 = vmul.f32 %v6295, 1.442695
    %v6474 = vpow.pop %v6473
    %v6475 = vmul.f32 %v6296, 1.442695
    %v6476 = vpow.pop %v6475
    %v6477 = vmul.f32 %v6297, 1.442695
    %v6478 = vpow.pop %v6477
    %v6479 = vmul.f32 %v6298, 1.442695
    %v6480 = vpow.pop %v6479
    %v6481 = vmul.f32 %v6299, 1.442695
    %v6482 = vpow.pop %v6481
    %v6483 = vmul.f32 %v6300, 1.442695
    %v6484 = vpow.pop %v6483
    %v6485 = vmul.f32 %v6301, 1.442695
    %v6486 = vpow.pop %v6485
    %v6487 = vmul.f32 %v6302, 1.442695
    %v6488 = vpow.pop %v6487
    %v6489 = vmul.f32 %v6303, 1.442695
    %v6490 = vpow.pop %v6489
    %v6491 = vmul.f32 %v6304, 1.442695
    %v6492 = vpow.pop %v6491
    %v6493 = vmul.f32 %v6305, 1.442695
    %v6494 = vpow.pop %v6493
    %v6495 = vmul.f32 %v6306, 1.442695
    %v6496 = vpow.pop %v6495
    %v6497 = vmul.f32 %v6307, 1.442695
    %v6498 = vpow.pop %v6497
    %v6499 = vmul.f32 %v6308, 1.442695
    %v6500 = vpow.pop %v6499
    %v6501 = vmul.f32 %v6309, 1.442695
    %v6502 = vpow.pop %v6501
    %v6503 = vmul.f32 %v6310, 1.442695
    %v6504 = vpow.pop %v6503
    %v6505 = vmul.f32 %v6311, 1.442695
    %v6506 = vpow.pop %v6505
    %v6507 = vmul.f32 %v6312, 1.442695
    %v6508 = vpow.pop %v6507
    %v6509 = vmul.f32 %v6313, 1.442695
    %v6510 = vpow.pop %v6509
    %v6511 = vmul.f32 %v6314, 1.442695
    %v6512 = vpow.pop %v6511
    %v6513 = vmul.f32 %v6315, 1.442695
    %v6514 = vpow.pop %v6513
    %v6515 = vmul.f32 %v6316, 1.442695
    %v6516 = vpow.pop %v6515
    %v6517 = vmul.f32 %v6317, 1.442695
    %v6518 = vpow.pop %v6517
    %v6519 = vmul.f32 %v6318, 1.442695
    %v6520 = vpow.pop %v6519
    %v6521 = vmul.f32 %v6319, 1.442695
    %v6522 = vpow.pop %v6521
    %v6523 = vmul.f32 %v6320, 1.442695
    %v6524 = vpow.pop %v6523
    %v6525 = vmul.f32 %v6321, 1.442695
    %v6526 = vpow.pop %v6525
    %v6527 = vmul.f32 %v6322, 1.442695
    %v6528 = vpow.pop %v6527
    %v6529 = vmul.f32 %v6323, 1.442695
    %v6530 = vpow.pop %v6529
    %v6531 = vmul.f32 %v6324, 1.442695
    %v6532 = vpow.pop %v6531
    %v6533 = vmul.f32 %v6325, 1.442695
    %v6534 = vpow.pop %v6533
    %v6535 = vmul.f32 %v6326, 1.442695
    %v6536 = vpow.pop %v6535
    %v6537 = vmul.f32 %v6327, 1.442695
    %v6538 = vpow.pop %v6537
    %v6539 = vmul.f32 %v6328, 1.442695
    %v6540 = vpow.pop %v6539
    %v6541 = vmul.f32 %v6329, 1.442695
    %v6542 = vpow.pop %v6541
    %v6543 = vmul.f32 %v6330, 1.442695
    %v6544 = vpow.pop %v6543
    %v6545 = vmul.f32 %v6331, 1.442695
    %v6546 = vpow.pop %v6545
    %v6547 = vmul.f32 %v6332, 1.442695
    %v6548 = vpow.pop %v6547
    %v6549 = vmul.f32 %v6333, 1.442695
    %v6550 = vpow.pop %v6549
    %v6551 = vmul.f32 %v6334, 1.442695
    %v6552 = vpow.pop %v6551
    %v6553 = vmul.f32 %v6335, 1.442695
    %v6554 = vpow.pop %v6553
    %v6555 = vmul.f32 %v6336, 1.442695
    %v6556 = vpow.pop %v6555
    %v6557 = vmul.f32 %v6337, 1.442695
    %v6558 = vpow.pop %v6557
    %v6559 = vmul.f32 %v6338, 1.442695
    %v6560 = vpow.pop %v6559
    %v6561 = vmul.f32 %v6339, 1.442695
    %v6562 = vpow.pop %v6561
    %v6563 = vmul.f32 %v6340, 1.442695
    %v6564 = vpow.pop %v6563
    %v6565 = vmul.f32 %v6341, 1.442695
    %v6566 = vpow.pop %v6565
    %v6567 = vmul.f32 %v6342, 1.442695
    %v6568 = vpow.pop %v6567
    %v6569 = vmul.f32 %v6343, 1.442695
    %v6570 = vpow.pop %v6569
    %v6571 = vmul.f32 %v6344, 1.442695
    %v6572 = vpow.pop %v6571
    %v6573 = vmul.f32 %v6345, 1.442695
    %v6574 = vpow.pop %v6573
    %v6575 = vmul.f32 %v6346, 1.442695
    %v6576 = vpow.pop %v6575
    %v6577 = vmul.f32 %v6347, 1.442695
    %v6578 = vpow.pop %v6577
    %v6579 = vmul.f32 %v6348, 1.442695
    %v6580 = vpow.pop %v6579
    %v6581 = vmul.f32 %v6349, 1.442695
    %v6582 = vpow.pop %v6581
    %v6583 = vmul.f32 %v6350, 1.442695
    %v6584 = vpow.pop %v6583
    %v6585 = vmul.f32 %v6351, 1.442695
    %v6586 = vpow.pop %v6585
    %v6587 = vmul.f32 %v6352, 1.442695
    %v6588 = vpow.pop %v6587
    %v6589 = vmul.f32 %v6353, 1.442695
    %v6590 = vpow.pop %v6589
    %v6591 = vmul.f32 %v6354, 1.442695
    %v6592 = vpow.pop %v6591
    %v6593 = vmul.f32 %v6355, 1.442695
    %v6594 = vpow.pop %v6593
    %v6595 = vmul.f32 %v6356, 1.442695
    %v6596 = vpow.pop %v6595
    %v6597 = vmul.f32 %v6357, 1.442695
    %v6598 = vpow.pop %v6597
    %v6599 = vmul.f32 %v6358, 1.442695
    %v6600 = vpow.pop %v6599
    %v6601 = vmul.f32 %v6359, 1.442695
    %v6602 = vpow.pop %v6601
    %v6603 = vmul.f32 %v6360, 1.442695
    %v6604 = vpow.pop %v6603
    %v6605 = vmul.f32 %v6361, 1.442695
    %v6606 = vpow.pop %v6605
    %v6607 = vmul.f32 %v6362, 1.442695
    %v6608 = vpow.pop %v6607
    %v6609 = vmul.f32 %v6363, 1.442695
    %v6610 = vpow.pop %v6609
    %v6611 = vmul.f32 %v6364, 1.442695
    %v6612 = vpow.pop %v6611
    %v6613 = vmul.f32 %v6365, 1.442695
    %v6614 = vpow.pop %v6613
    %v6615 = vmul.f32 %v6366, 1.442695
    %v6616 = vpow.pop %v6615
    %v6617 = vmul.f32 %v6367, 1.442695
    %v6618 = vpow.pop %v6617
    %v6619 = vmul.f32 %v6368, 1.442695
    %v6620 = vpow.pop %v6619
    %v6621 = vmul.f32 %v6369, 1.442695
    %v6622 = vpow.pop %v6621
    %v6623 = vmul.f32 %v6370, 1.442695
    %v6624 = vpow.pop %v6623
    %v6625 = vmul.f32 %v6371, 1.442695
    %v6626 = vpow.pop %v6625
    %v6627 = vmul.f32 %v6372, 1.442695
    %v6628 = vpow.pop %v6627
    %v6757 = vrot.slane %v6376, 7
    %v6758 = vsel %vm5711, %v6757, %v6374
    %v6759 = vrot.slane %v6378, 6
    %v6760 = vsel %vm5714, %v6759, %v6758
    %v6761 = vrot.slane %v6380, 5
    %v6762 = vsel %vm5717, %v6761, %v6760
    %v6763 = vrot.slane %v6382, 4
    %v6764 = vsel %vm5720, %v6763, %v6762
    %v6765 = vrot.slane %v6384, 3
    %v6766 = vsel %vm5723, %v6765, %v6764
    %v6767 = vrot.slane %v6386, 2
    %v6768 = vsel %vm5726, %v6767, %v6766
    %v6769 = vrot.slane %v6388, 1
    %v6770 = vsel %vm5729, %v6769, %v6768
    %v6771 = vrot.slane %v6392, 7
    %v6772 = vsel %vm5711, %v6771, %v6390
    %v6773 = vrot.slane %v6394, 6
    %v6774 = vsel %vm5714, %v6773, %v6772
    %v6775 = vrot.slane %v6396, 5
    %v6776 = vsel %vm5717, %v6775, %v6774
    %v6777 = vrot.slane %v6398, 4
    %v6778 = vsel %vm5720, %v6777, %v6776
    %v6779 = vrot.slane %v6400, 3
    %v6780 = vsel %vm5723, %v6779, %v6778
    %v6781 = vrot.slane %v6402, 2
    %v6782 = vsel %vm5726, %v6781, %v6780
    %v6783 = vrot.slane %v6404, 1
    %v6784 = vsel %vm5729, %v6783, %v6782
    %v6785 = vrot.slane %v6408, 7
    %v6786 = vsel %vm5711, %v6785, %v6406
    %v6787 = vrot.slane %v6410, 6
    %v6788 = vsel %vm5714, %v6787, %v6786
    %v6789 = vrot.slane %v6412, 5
    %v6790 = vsel %vm5717, %v6789, %v6788
    %v6791 = vrot.slane %v6414, 4
    %v6792 = vsel %vm5720, %v6791, %v6790
    %v6793 = vrot.slane %v6416, 3
    %v6794 = vsel %vm5723, %v6793, %v6792
    %v6795 = vrot.slane %v6418, 2
    %v6796 = vsel %vm5726, %v6795, %v6794
    %v6797 = vrot.slane %v6420, 1
    %v6798 = vsel %vm5729, %v6797, %v6796
    %v6799 = vrot.slane %v6424, 7
    %v6800 = vsel %vm5711, %v6799, %v6422
    %v6801 = vrot.slane %v6426, 6
    %v6802 = vsel %vm5714, %v6801, %v6800
    %v6803 = vrot.slane %v6428, 5
    %v6804 = vsel %vm5717, %v6803, %v6802
    %v6805 = vrot.slane %v6430, 4
    %v6806 = vsel %vm5720, %v6805, %v6804
    %v6807 = vrot.slane %v6432, 3
    %v6808 = vsel %vm5723, %v6807, %v6806
    %v6809 = vrot.slane %v6434, 2
    %v6810 = vsel %vm5726, %v6809, %v6808
    %v6811 = vrot.slane %v6436, 1
    %v6812 = vsel %vm5729, %v6811, %v6810
    %v6813 = vrot.slane %v6440, 7
    %v6814 = vsel %vm5711, %v6813, %v6438
    %v6815 = vrot.slane %v6442, 6
    %v6816 = vsel %vm5714, %v6815, %v6814
    %v6817 = vrot.slane %v6444, 5
    %v6818 = vsel %vm5717, %v6817, %v6816
    %v6819 = vrot.slane %v6446, 4
    %v6820 = vsel %vm5720, %v6819, %v6818
    %v6821 = vrot.slane %v6448, 3
    %v6822 = vsel %vm5723, %v6821, %v6820
    %v6823 = vrot.slane %v6450, 2
    %v6824 = vsel %vm5726, %v6823, %v6822
    %v6825 = vrot.slane %v6452, 1
    %v6826 = vsel %vm5729, %v6825, %v6824
    %v6827 = vrot.slane %v6456, 7
    %v6828 = vsel %vm5711, %v6827, %v6454
    %v6829 = vrot.slane %v6458, 6
    %v6830 = vsel %vm5714, %v6829, %v6828
    %v6831 = vrot.slane %v6460, 5
    %v6832 = vsel %vm5717, %v6831, %v6830
    %v6833 = vrot.slane %v6462, 4
    %v6834 = vsel %vm5720, %v6833, %v6832
    %v6835 = vrot.slane %v6464, 3
    %v6836 = vsel %vm5723, %v6835, %v6834
    %v6837 = vrot.slane %v6466, 2
    %v6838 = vsel %vm5726, %v6837, %v6836
    %v6839 = vrot.slane %v6468, 1
    %v6840 = vsel %vm5729, %v6839, %v6838
    %v6841 = vrot.slane %v6472, 7
    %v6842 = vsel %vm5711, %v6841, %v6470
    %v6843 = vrot.slane %v6474, 6
    %v6844 = vsel %vm5714, %v6843, %v6842
    %v6845 = vrot.slane %v6476, 5
    %v6846 = vsel %vm5717, %v6845, %v6844
    %v6847 = vrot.slane %v6478, 4
    %v6848 = vsel %vm5720, %v6847, %v6846
    %v6849 = vrot.slane %v6480, 3
    %v6850 = vsel %vm5723, %v6849, %v6848
    %v6851 = vrot.slane %v6482, 2
    %v6852 = vsel %vm5726, %v6851, %v6850
    %v6853 = vrot.slane %v6484, 1
    %v6854 = vsel %vm5729, %v6853, %v6852
    %v6855 = vrot.slane %v6488, 7
    %v6856 = vsel %vm5711, %v6855, %v6486
    %v6857 = vrot.slane %v6490, 6
    %v6858 = vsel %vm5714, %v6857, %v6856
    %v6859 = vrot.slane %v6492, 5
    %v6860 = vsel %vm5717, %v6859, %v6858
    %v6861 = vrot.slane %v6494, 4
    %v6862 = vsel %vm5720, %v6861, %v6860
    %v6863 = vrot.slane %v6496, 3
    %v6864 = vsel %vm5723, %v6863, %v6862
    %v6865 = vrot.slane %v6498, 2
    %v6866 = vsel %vm5726, %v6865, %v6864
    %v6867 = vrot.slane %v6500, 1
    %v6868 = vsel %vm5729, %v6867, %v6866
    %v6869 = vrot.slane %v6504, 7
    %v6870 = vsel %vm5711, %v6869, %v6502
    %v6871 = vrot.slane %v6506, 6
    %v6872 = vsel %vm5714, %v6871, %v6870
    %v6873 = vrot.slane %v6508, 5
    %v6874 = vsel %vm5717, %v6873, %v6872
    %v6875 = vrot.slane %v6510, 4
    %v6876 = vsel %vm5720, %v6875, %v6874
    %v6877 = vrot.slane %v6512, 3
    %v6878 = vsel %vm5723, %v6877, %v6876
    %v6879 = vrot.slane %v6514, 2
    %v6880 = vsel %vm5726, %v6879, %v6878
    %v6881 = vrot.slane %v6516, 1
    %v6882 = vsel %vm5729, %v6881, %v6880
    %v6883 = vrot.slane %v6520, 7
    %v6884 = vsel %vm5711, %v6883, %v6518
    %v6885 = vrot.slane %v6522, 6
    %v6886 = vsel %vm5714, %v6885, %v6884
    %v6887 = vrot.slane %v6524, 5
    %v6888 = vsel %vm5717, %v6887, %v6886
    %v6889 = vrot.slane %v6526, 4
    %v6890 = vsel %vm5720, %v6889, %v6888
    %v6891 = vrot.slane %v6528, 3
    %v6892 = vsel %vm5723, %v6891, %v6890
    %v6893 = vrot.slane %v6530, 2
    %v6894 = vsel %vm5726, %v6893, %v6892
    %v6895 = vrot.slane %v6532, 1
    %v6896 = vsel %vm5729, %v6895, %v6894
    %v6897 = vrot.slane %v6536, 7
    %v6898 = vsel %vm5711, %v6897, %v6534
    %v6899 = vrot.slane %v6538, 6
    %v6900 = vsel %vm5714, %v6899, %v6898
    %v6901 = vrot.slane %v6540, 5
    %v6902 = vsel %vm5717, %v6901, %v6900
    %v6903 = vrot.slane %v6542, 4
    %v6904 = vsel %vm5720, %v6903, %v6902
    %v6905 = vrot.slane %v6544, 3
    %v6906 = vsel %vm5723, %v6905, %v6904
    %v6907 = vrot.slane %v6546, 2
    %v6908 = vsel %vm5726, %v6907, %v6906
    %v6909 = vrot.slane %v6548, 1
    %v6910 = vsel %vm5729, %v6909, %v6908
    %v6911 = vrot.slane %v6552, 7
    %v6912 = vsel %vm5711, %v6911, %v6550
    %v6913 = vrot.slane %v6554, 6
    %v6914 = vsel %vm5714, %v6913, %v6912
    %v6915 = vrot.slane %v6556, 5
    %v6916 = vsel %vm5717, %v6915, %v6914
    %v6917 = vrot.slane %v6558, 4
    %v6918 = vsel %vm5720, %v6917, %v6916
    %v6919 = vrot.slane %v6560, 3
    %v6920 = vsel %vm5723, %v6919, %v6918
    %v6921 = vrot.slane %v6562, 2
    %v6922 = vsel %vm5726, %v6921, %v6920
    %v6923 = vrot.slane %v6564, 1
    %v6924 = vsel %vm5729, %v6923, %v6922
    %v6925 = vrot.slane %v6568, 7
    %v6926 = vsel %vm5711, %v6925, %v6566
    %v6927 = vrot.slane %v6570, 6
    %v6928 = vsel %vm5714, %v6927, %v6926
    %v6929 = vrot.slane %v6572, 5
    %v6930 = vsel %vm5717, %v6929, %v6928
    %v6931 = vrot.slane %v6574, 4
    %v6932 = vsel %vm5720, %v6931, %v6930
    %v6933 = vrot.slane %v6576, 3
    %v6934 = vsel %vm5723, %v6933, %v6932
    %v6935 = vrot.slane %v6578, 2
    %v6936 = vsel %vm5726, %v6935, %v6934
    %v6937 = vrot.slane %v6580, 1
    %v6938 = vsel %vm5729, %v6937, %v6936
    %v6939 = vrot.slane %v6584, 7
    %v6940 = vsel %vm5711, %v6939, %v6582
    %v6941 = vrot.slane %v6586, 6
    %v6942 = vsel %vm5714, %v6941, %v6940
    %v6943 = vrot.slane %v6588, 5
    %v6944 = vsel %vm5717, %v6943, %v6942
    %v6945 = vrot.slane %v6590, 4
    %v6946 = vsel %vm5720, %v6945, %v6944
    %v6947 = vrot.slane %v6592, 3
    %v6948 = vsel %vm5723, %v6947, %v6946
    %v6949 = vrot.slane %v6594, 2
    %v6950 = vsel %vm5726, %v6949, %v6948
    %v6951 = vrot.slane %v6596, 1
    %v6952 = vsel %vm5729, %v6951, %v6950
    %v6953 = vrot.slane %v6600, 7
    %v6954 = vsel %vm5711, %v6953, %v6598
    %v6955 = vrot.slane %v6602, 6
    %v6956 = vsel %vm5714, %v6955, %v6954
    %v6957 = vrot.slane %v6604, 5
    %v6958 = vsel %vm5717, %v6957, %v6956
    %v6959 = vrot.slane %v6606, 4
    %v6960 = vsel %vm5720, %v6959, %v6958
    %v6961 = vrot.slane %v6608, 3
    %v6962 = vsel %vm5723, %v6961, %v6960
    %v6963 = vrot.slane %v6610, 2
    %v6964 = vsel %vm5726, %v6963, %v6962
    %v6965 = vrot.slane %v6612, 1
    %v6966 = vsel %vm5729, %v6965, %v6964
    %v6967 = vrot.slane %v6616, 7
    %v6968 = vsel %vm5711, %v6967, %v6614
    %v6969 = vrot.slane %v6618, 6
    %v6970 = vsel %vm5714, %v6969, %v6968
    %v6971 = vrot.slane %v6620, 5
    %v6972 = vsel %vm5717, %v6971, %v6970
    %v6973 = vrot.slane %v6622, 4
    %v6974 = vsel %vm5720, %v6973, %v6972
    %v6975 = vrot.slane %v6624, 3
    %v6976 = vsel %vm5723, %v6975, %v6974
    %v6977 = vrot.slane %v6626, 2
    %v6978 = vsel %vm5726, %v6977, %v6976
    %v6979 = vrot.slane %v6628, 1
    %v6980 = vsel %vm5729, %v6979, %v6978
    %6997 = vadd.xlane.f32.xlu0 %v6770
    %v6998 = vpop.xlane.xlu0 %6997
    %6999 = vadd.xlane.f32.xlu0 %v6784
    %v7000 = vpop.xlane.xlu0 %6999
    %7001 = vadd.xlane.f32.xlu0 %v6798
    %v7002 = vpop.xlane.xlu0 %7001
    %7003 = vadd.xlane.f32.xlu0 %v6812
    %v7004 = vpop.xlane.xlu0 %7003
    %7005 = vadd.xlane.f32.xlu0 %v6826
    %v7006 = vpop.xlane.xlu0 %7005
    %7007 = vadd.xlane.f32.xlu0 %v6840
    %v7008 = vpop.xlane.xlu0 %7007
    %7009 = vadd.xlane.f32.xlu0 %v6854
    %v7010 = vpop.xlane.xlu0 %7009
    %7011 = vadd.xlane.f32.xlu0 %v6868
    %v7012 = vpop.xlane.xlu0 %7011
    %7013 = vadd.xlane.f32.xlu0 %v6882
    %v7014 = vpop.xlane.xlu0 %7013
    %7015 = vadd.xlane.f32.xlu0 %v6896
    %v7016 = vpop.xlane.xlu0 %7015
    %7017 = vadd.xlane.f32.xlu0 %v6910
    %v7018 = vpop.xlane.xlu0 %7017
    %7019 = vadd.xlane.f32.xlu0 %v6924
    %v7020 = vpop.xlane.xlu0 %7019
    %7021 = vadd.xlane.f32.xlu0 %v6938
    %v7022 = vpop.xlane.xlu0 %7021
    %7023 = vadd.xlane.f32.xlu0 %v6952
    %v7024 = vpop.xlane.xlu0 %7023
    %7025 = vadd.xlane.f32.xlu0 %v6966
    %v7026 = vpop.xlane.xlu0 %7025
    %7027 = vadd.xlane.f32.xlu0 %v6980
    %v7028 = vpop.xlane.xlu0 %7027
    %v7045 = vrot.slane %v6998, 1
    %v7046 = vrot.slane %v6998, 2
    %v7047 = vrot.slane %v6998, 3
    %v7048 = vrot.slane %v6998, 4
    %v7049 = vrot.slane %v6998, 5
    %v7050 = vrot.slane %v6998, 6
    %v7051 = vrot.slane %v6998, 7
    %v7052 = vrot.slane %v7000, 1
    %v7053 = vrot.slane %v7000, 2
    %v7054 = vrot.slane %v7000, 3
    %v7055 = vrot.slane %v7000, 4
    %v7056 = vrot.slane %v7000, 5
    %v7057 = vrot.slane %v7000, 6
    %v7058 = vrot.slane %v7000, 7
    %v7059 = vrot.slane %v7002, 1
    %v7060 = vrot.slane %v7002, 2
    %v7061 = vrot.slane %v7002, 3
    %v7062 = vrot.slane %v7002, 4
    %v7063 = vrot.slane %v7002, 5
    %v7064 = vrot.slane %v7002, 6
    %v7065 = vrot.slane %v7002, 7
    %v7066 = vrot.slane %v7004, 1
    %v7067 = vrot.slane %v7004, 2
    %v7068 = vrot.slane %v7004, 3
    %v7069 = vrot.slane %v7004, 4
    %v7070 = vrot.slane %v7004, 5
    %v7071 = vrot.slane %v7004, 6
    %v7072 = vrot.slane %v7004, 7
    %v7073 = vrot.slane %v7006, 1
    %v7074 = vrot.slane %v7006, 2
    %v7075 = vrot.slane %v7006, 3
    %v7076 = vrot.slane %v7006, 4
    %v7077 = vrot.slane %v7006, 5
    %v7078 = vrot.slane %v7006, 6
    %v7079 = vrot.slane %v7006, 7
    %v7080 = vrot.slane %v7008, 1
    %v7081 = vrot.slane %v7008, 2
    %v7082 = vrot.slane %v7008, 3
    %v7083 = vrot.slane %v7008, 4
    %v7084 = vrot.slane %v7008, 5
    %v7085 = vrot.slane %v7008, 6
    %v7086 = vrot.slane %v7008, 7
    %v7087 = vrot.slane %v7010, 1
    %v7088 = vrot.slane %v7010, 2
    %v7089 = vrot.slane %v7010, 3
    %v7090 = vrot.slane %v7010, 4
    %v7091 = vrot.slane %v7010, 5
    %v7092 = vrot.slane %v7010, 6
    %v7093 = vrot.slane %v7010, 7
    %v7094 = vrot.slane %v7012, 1
    %v7095 = vrot.slane %v7012, 2
    %v7096 = vrot.slane %v7012, 3
    %v7097 = vrot.slane %v7012, 4
    %v7098 = vrot.slane %v7012, 5
    %v7099 = vrot.slane %v7012, 6
    %v7100 = vrot.slane %v7012, 7
    %v7101 = vrot.slane %v7014, 1
    %v7102 = vrot.slane %v7014, 2
    %v7103 = vrot.slane %v7014, 3
    %v7104 = vrot.slane %v7014, 4
    %v7105 = vrot.slane %v7014, 5
    %v7106 = vrot.slane %v7014, 6
    %v7107 = vrot.slane %v7014, 7
    %v7108 = vrot.slane %v7016, 1
    %v7109 = vrot.slane %v7016, 2
    %v7110 = vrot.slane %v7016, 3
    %v7111 = vrot.slane %v7016, 4
    %v7112 = vrot.slane %v7016, 5
    %v7113 = vrot.slane %v7016, 6
    %v7114 = vrot.slane %v7016, 7
    %v7115 = vrot.slane %v7018, 1
    %v7116 = vrot.slane %v7018, 2
    %v7117 = vrot.slane %v7018, 3
    %v7118 = vrot.slane %v7018, 4
    %v7119 = vrot.slane %v7018, 5
    %v7120 = vrot.slane %v7018, 6
    %v7121 = vrot.slane %v7018, 7
    %v7122 = vrot.slane %v7020, 1
    %v7123 = vrot.slane %v7020, 2
    %v7124 = vrot.slane %v7020, 3
    %v7125 = vrot.slane %v7020, 4
    %v7126 = vrot.slane %v7020, 5
    %v7127 = vrot.slane %v7020, 6
    %v7128 = vrot.slane %v7020, 7
    %v7129 = vrot.slane %v7022, 1
    %v7130 = vrot.slane %v7022, 2
    %v7131 = vrot.slane %v7022, 3
    %v7132 = vrot.slane %v7022, 4
    %v7133 = vrot.slane %v7022, 5
    %v7134 = vrot.slane %v7022, 6
    %v7135 = vrot.slane %v7022, 7
    %v7136 = vrot.slane %v7024, 1
    %v7137 = vrot.slane %v7024, 2
    %v7138 = vrot.slane %v7024, 3
    %v7139 = vrot.slane %v7024, 4
    %v7140 = vrot.slane %v7024, 5
    %v7141 = vrot.slane %v7024, 6
    %v7142 = vrot.slane %v7024, 7
    %v7143 = vrot.slane %v7026, 1
    %v7144 = vrot.slane %v7026, 2
    %v7145 = vrot.slane %v7026, 3
    %v7146 = vrot.slane %v7026, 4
    %v7147 = vrot.slane %v7026, 5
    %v7148 = vrot.slane %v7026, 6
    %v7149 = vrot.slane %v7026, 7
    %v7150 = vrot.slane %v7028, 1
    %v7151 = vrot.slane %v7028, 2
    %v7152 = vrot.slane %v7028, 3
    %v7153 = vrot.slane %v7028, 4
    %v7154 = vrot.slane %v7028, 5
    %v7155 = vrot.slane %v7028, 6
    %v7156 = vrot.slane %v7028, 7
    %v7285 = vrcp.pop %v6998
    %v7286 = vmul.f32 %v6374, %v7285
    %v7287 = vrcp.pop %v7045
    %v7288 = vmul.f32 %v6376, %v7287
    %v7289 = vrcp.pop %v7046
    %v7290 = vmul.f32 %v6378, %v7289
    %v7291 = vrcp.pop %v7047
    %v7292 = vmul.f32 %v6380, %v7291
    %v7293 = vrcp.pop %v7048
    %v7294 = vmul.f32 %v6382, %v7293
    %v7295 = vrcp.pop %v7049
    %v7296 = vmul.f32 %v6384, %v7295
    %v7297 = vrcp.pop %v7050
    %v7298 = vmul.f32 %v6386, %v7297
    %v7299 = vrcp.pop %v7051
    %v7300 = vmul.f32 %v6388, %v7299
    %v7301 = vrcp.pop %v7000
    %v7302 = vmul.f32 %v6390, %v7301
    %v7303 = vrcp.pop %v7052
    %v7304 = vmul.f32 %v6392, %v7303
    %v7305 = vrcp.pop %v7053
    %v7306 = vmul.f32 %v6394, %v7305
    %v7307 = vrcp.pop %v7054
    %v7308 = vmul.f32 %v6396, %v7307
    %v7309 = vrcp.pop %v7055
    %v7310 = vmul.f32 %v6398, %v7309
    %v7311 = vrcp.pop %v7056
    %v7312 = vmul.f32 %v6400, %v7311
    %v7313 = vrcp.pop %v7057
    %v7314 = vmul.f32 %v6402, %v7313
    %v7315 = vrcp.pop %v7058
    %v7316 = vmul.f32 %v6404, %v7315
    %v7317 = vrcp.pop %v7002
    %v7318 = vmul.f32 %v6406, %v7317
    %v7319 = vrcp.pop %v7059
    %v7320 = vmul.f32 %v6408, %v7319
    %v7321 = vrcp.pop %v7060
    %v7322 = vmul.f32 %v6410, %v7321
    %v7323 = vrcp.pop %v7061
    %v7324 = vmul.f32 %v6412, %v7323
    %v7325 = vrcp.pop %v7062
    %v7326 = vmul.f32 %v6414, %v7325
    %v7327 = vrcp.pop %v7063
    %v7328 = vmul.f32 %v6416, %v7327
    %v7329 = vrcp.pop %v7064
    %v7330 = vmul.f32 %v6418, %v7329
    %v7331 = vrcp.pop %v7065
    %v7332 = vmul.f32 %v6420, %v7331
    %v7333 = vrcp.pop %v7004
    %v7334 = vmul.f32 %v6422, %v7333
    %v7335 = vrcp.pop %v7066
    %v7336 = vmul.f32 %v6424, %v7335
    %v7337 = vrcp.pop %v7067
    %v7338 = vmul.f32 %v6426, %v7337
    %v7339 = vrcp.pop %v7068
    %v7340 = vmul.f32 %v6428, %v7339
    %v7341 = vrcp.pop %v7069
    %v7342 = vmul.f32 %v6430, %v7341
    %v7343 = vrcp.pop %v7070
    %v7344 = vmul.f32 %v6432, %v7343
    %v7345 = vrcp.pop %v7071
    %v7346 = vmul.f32 %v6434, %v7345
    %v7347 = vrcp.pop %v7072
    %v7348 = vmul.f32 %v6436, %v7347
    %v7349 = vrcp.pop %v7006
    %v7350 = vmul.f32 %v6438, %v7349
    %v7351 = vrcp.pop %v7073
    %v7352 = vmul.f32 %v6440, %v7351
    %v7353 = vrcp.pop %v7074
    %v7354 = vmul.f32 %v6442, %v7353
    %v7355 = vrcp.pop %v7075
    %v7356 = vmul.f32 %v6444, %v7355
    %v7357 = vrcp.pop %v7076
    %v7358 = vmul.f32 %v6446, %v7357
    %v7359 = vrcp.pop %v7077
    %v7360 = vmul.f32 %v6448, %v7359
    %v7361 = vrcp.pop %v7078
    %v7362 = vmul.f32 %v6450, %v7361
    %v7363 = vrcp.pop %v7079
    %v7364 = vmul.f32 %v6452, %v7363
    %v7365 = vrcp.pop %v7008
    %v7366 = vmul.f32 %v6454, %v7365
    %v7367 = vrcp.pop %v7080
    %v7368 = vmul.f32 %v6456, %v7367
    %v7369 = vrcp.pop %v7081
    %v7370 = vmul.f32 %v6458, %v7369
    %v7371 = vrcp.pop %v7082
    %v7372 = vmul.f32 %v6460, %v7371
    %v7373 = vrcp.pop %v7083
    %v7374 = vmul.f32 %v6462, %v7373
    %v7375 = vrcp.pop %v7084
    %v7376 = vmul.f32 %v6464, %v7375
    %v7377 = vrcp.pop %v7085
    %v7378 = vmul.f32 %v6466, %v7377
    %v7379 = vrcp.pop %v7086
    %v7380 = vmul.f32 %v6468, %v7379
    %v7381 = vrcp.pop %v7010
    %v7382 = vmul.f32 %v6470, %v7381
    %v7383 = vrcp.pop %v7087
    %v7384 = vmul.f32 %v6472, %v7383
    %v7385 = vrcp.pop %v7088
    %v7386 = vmul.f32 %v6474, %v7385
    %v7387 = vrcp.pop %v7089
    %v7388 = vmul.f32 %v6476, %v7387
    %v7389 = vrcp.pop %v7090
    %v7390 = vmul.f32 %v6478, %v7389
    %v7391 = vrcp.pop %v7091
    %v7392 = vmul.f32 %v6480, %v7391
    %v7393 = vrcp.pop %v7092
    %v7394 = vmul.f32 %v6482, %v7393
    %v7395 = vrcp.pop %v7093
    %v7396 = vmul.f32 %v6484, %v7395
    %v7397 = vrcp.pop %v7012
    %v7398 = vmul.f32 %v6486, %v7397
    %v7399 = vrcp.pop %v7094
    %v7400 = vmul.f32 %v6488, %v7399
    %v7401 = vrcp.pop %v7095
    %v7402 = vmul.f32 %v6490, %v7401
    %v7403 = vrcp.pop %v7096
    %v7404 = vmul.f32 %v6492, %v7403
    %v7405 = vrcp.pop %v7097
    %v7406 = vmul.f32 %v6494, %v7405
    %v7407 = vrcp.pop %v7098
    %v7408 = vmul.f32 %v6496, %v7407
    %v7409 = vrcp.pop %v7099
    %v7410 = vmul.f32 %v6498, %v7409
    %v7411 = vrcp.pop %v7100
    %v7412 = vmul.f32 %v6500, %v7411
    %v7413 = vrcp.pop %v7014
    %v7414 = vmul.f32 %v6502, %v7413
    %v7415 = vrcp.pop %v7101
    %v7416 = vmul.f32 %v6504, %v7415
    %v7417 = vrcp.pop %v7102
    %v7418 = vmul.f32 %v6506, %v7417
    %v7419 = vrcp.pop %v7103
    %v7420 = vmul.f32 %v6508, %v7419
    %v7421 = vrcp.pop %v7104
    %v7422 = vmul.f32 %v6510, %v7421
    %v7423 = vrcp.pop %v7105
    %v7424 = vmul.f32 %v6512, %v7423
    %v7425 = vrcp.pop %v7106
    %v7426 = vmul.f32 %v6514, %v7425
    %v7427 = vrcp.pop %v7107
    %v7428 = vmul.f32 %v6516, %v7427
    %v7429 = vrcp.pop %v7016
    %v7430 = vmul.f32 %v6518, %v7429
    %v7431 = vrcp.pop %v7108
    %v7432 = vmul.f32 %v6520, %v7431
    %v7433 = vrcp.pop %v7109
    %v7434 = vmul.f32 %v6522, %v7433
    %v7435 = vrcp.pop %v7110
    %v7436 = vmul.f32 %v6524, %v7435
    %v7437 = vrcp.pop %v7111
    %v7438 = vmul.f32 %v6526, %v7437
    %v7439 = vrcp.pop %v7112
    %v7440 = vmul.f32 %v6528, %v7439
    %v7441 = vrcp.pop %v7113
    %v7442 = vmul.f32 %v6530, %v7441
    %v7443 = vrcp.pop %v7114
    %v7444 = vmul.f32 %v6532, %v7443
    %v7445 = vrcp.pop %v7018
    %v7446 = vmul.f32 %v6534, %v7445
    %v7447 = vrcp.pop %v7115
    %v7448 = vmul.f32 %v6536, %v7447
    %v7449 = vrcp.pop %v7116
    %v7450 = vmul.f32 %v6538, %v7449
    %v7451 = vrcp.pop %v7117
    %v7452 = vmul.f32 %v6540, %v7451
    %v7453 = vrcp.pop %v7118
    %v7454 = vmul.f32 %v6542, %v7453
    %v7455 = vrcp.pop %v7119
    %v7456 = vmul.f32 %v6544, %v7455
    %v7457 = vrcp.pop %v7120
    %v7458 = vmul.f32 %v6546, %v7457
    %v7459 = vrcp.pop %v7121
    %v7460 = vmul.f32 %v6548, %v7459
    %v7461 = vrcp.pop %v7020
    %v7462 = vmul.f32 %v6550, %v7461
    %v7463 = vrcp.pop %v7122
    %v7464 = vmul.f32 %v6552, %v7463
    %v7465 = vrcp.pop %v7123
    %v7466 = vmul.f32 %v6554, %v7465
    %v7467 = vrcp.pop %v7124
    %v7468 = vmul.f32 %v6556, %v7467
    %v7469 = vrcp.pop %v7125
    %v7470 = vmul.f32 %v6558, %v7469
    %v7471 = vrcp.pop %v7126
    %v7472 = vmul.f32 %v6560, %v7471
    %v7473 = vrcp.pop %v7127
    %v7474 = vmul.f32 %v6562, %v7473
    %v7475 = vrcp.pop %v7128
    %v7476 = vmul.f32 %v6564, %v7475
    %v7477 = vrcp.pop %v7022
    %v7478 = vmul.f32 %v6566, %v7477
    %v7479 = vrcp.pop %v7129
    %v7480 = vmul.f32 %v6568, %v7479
    %v7481 = vrcp.pop %v7130
    %v7482 = vmul.f32 %v6570, %v7481
    %v7483 = vrcp.pop %v7131
    %v7484 = vmul.f32 %v6572, %v7483
    %v7485 = vrcp.pop %v7132
    %v7486 = vmul.f32 %v6574, %v7485
    %v7487 = vrcp.pop %v7133
    %v7488 = vmul.f32 %v6576, %v7487
    %v7489 = vrcp.pop %v7134
    %v7490 = vmul.f32 %v6578, %v7489
    %v7491 = vrcp.pop %v7135
    %v7492 = vmul.f32 %v6580, %v7491
    %v7493 = vrcp.pop %v7024
    %v7494 = vmul.f32 %v6582, %v7493
    %v7495 = vrcp.pop %v7136
    %v7496 = vmul.f32 %v6584, %v7495
    %v7497 = vrcp.pop %v7137
    %v7498 = vmul.f32 %v6586, %v7497
    %v7499 = vrcp.pop %v7138
    %v7500 = vmul.f32 %v6588, %v7499
    %v7501 = vrcp.pop %v7139
    %v7502 = vmul.f32 %v6590, %v7501
    %v7503 = vrcp.pop %v7140
    %v7504 = vmul.f32 %v6592, %v7503
    %v7505 = vrcp.pop %v7141
    %v7506 = vmul.f32 %v6594, %v7505
    %v7507 = vrcp.pop %v7142
    %v7508 = vmul.f32 %v6596, %v7507
    %v7509 = vrcp.pop %v7026
    %v7510 = vmul.f32 %v6598, %v7509
    %v7511 = vrcp.pop %v7143
    %v7512 = vmul.f32 %v6600, %v7511
    %v7513 = vrcp.pop %v7144
    %v7514 = vmul.f32 %v6602, %v7513
    %v7515 = vrcp.pop %v7145
    %v7516 = vmul.f32 %v6604, %v7515
    %v7517 = vrcp.pop %v7146
    %v7518 = vmul.f32 %v6606, %v7517
    %v7519 = vrcp.pop %v7147
    %v7520 = vmul.f32 %v6608, %v7519
    %v7521 = vrcp.pop %v7148
    %v7522 = vmul.f32 %v6610, %v7521
    %v7523 = vrcp.pop %v7149
    %v7524 = vmul.f32 %v6612, %v7523
    %v7525 = vrcp.pop %v7028
    %v7526 = vmul.f32 %v6614, %v7525
    %v7527 = vrcp.pop %v7150
    %v7528 = vmul.f32 %v6616, %v7527
    %v7529 = vrcp.pop %v7151
    %v7530 = vmul.f32 %v6618, %v7529
    %v7531 = vrcp.pop %v7152
    %v7532 = vmul.f32 %v6620, %v7531
    %v7533 = vrcp.pop %v7153
    %v7534 = vmul.f32 %v6622, %v7533
    %v7535 = vrcp.pop %v7154
    %v7536 = vmul.f32 %v6624, %v7535
    %v7537 = vrcp.pop %v7155
    %v7538 = vmul.f32 %v6626, %v7537
    %v7539 = vrcp.pop %v7156
    %v7540 = vmul.f32 %v6628, %v7539
    %v7541 = vadd.f32 %v7286, 0.0
    %v7542 = vadd.f32 %v7288, 0.0
    %v7543 = vadd.f32 %v7290, 0.0
    %v7544 = vadd.f32 %v7292, 0.0
    %v7545 = vadd.f32 %v7294, 0.0
    %v7546 = vadd.f32 %v7296, 0.0
    %v7547 = vadd.f32 %v7298, 0.0
    %v7548 = vadd.f32 %v7300, 0.0
    %v7549 = vadd.f32 %v7302, 0.0
    %v7550 = vadd.f32 %v7304, 0.0
    %v7551 = vadd.f32 %v7306, 0.0
    %v7552 = vadd.f32 %v7308, 0.0
    %v7553 = vadd.f32 %v7310, 0.0
    %v7554 = vadd.f32 %v7312, 0.0
    %v7555 = vadd.f32 %v7314, 0.0
    %v7556 = vadd.f32 %v7316, 0.0
    %v7557 = vadd.f32 %v7318, 0.0
    %v7558 = vadd.f32 %v7320, 0.0
    %v7559 = vadd.f32 %v7322, 0.0
    %v7560 = vadd.f32 %v7324, 0.0
    %v7561 = vadd.f32 %v7326, 0.0
    %v7562 = vadd.f32 %v7328, 0.0
    %v7563 = vadd.f32 %v7330, 0.0
    %v7564 = vadd.f32 %v7332, 0.0
    %v7565 = vadd.f32 %v7334, 0.0
    %v7566 = vadd.f32 %v7336, 0.0
    %v7567 = vadd.f32 %v7338, 0.0
    %v7568 = vadd.f32 %v7340, 0.0
    %v7569 = vadd.f32 %v7342, 0.0
    %v7570 = vadd.f32 %v7344, 0.0
    %v7571 = vadd.f32 %v7346, 0.0
    %v7572 = vadd.f32 %v7348, 0.0
    %v7573 = vadd.f32 %v7350, 0.0
    %v7574 = vadd.f32 %v7352, 0.0
    %v7575 = vadd.f32 %v7354, 0.0
    %v7576 = vadd.f32 %v7356, 0.0
    %v7577 = vadd.f32 %v7358, 0.0
    %v7578 = vadd.f32 %v7360, 0.0
    %v7579 = vadd.f32 %v7362, 0.0
    %v7580 = vadd.f32 %v7364, 0.0
    %v7581 = vadd.f32 %v7366, 0.0
    %v7582 = vadd.f32 %v7368, 0.0
    %v7583 = vadd.f32 %v7370, 0.0
    %v7584 = vadd.f32 %v7372, 0.0
    %v7585 = vadd.f32 %v7374, 0.0
    %v7586 = vadd.f32 %v7376, 0.0
    %v7587 = vadd.f32 %v7378, 0.0
    %v7588 = vadd.f32 %v7380, 0.0
    %v7589 = vadd.f32 %v7382, 0.0
    %v7590 = vadd.f32 %v7384, 0.0
    %v7591 = vadd.f32 %v7386, 0.0
    %v7592 = vadd.f32 %v7388, 0.0
    %v7593 = vadd.f32 %v7390, 0.0
    %v7594 = vadd.f32 %v7392, 0.0
    %v7595 = vadd.f32 %v7394, 0.0
    %v7596 = vadd.f32 %v7396, 0.0
    %v7597 = vadd.f32 %v7398, 0.0
    %v7598 = vadd.f32 %v7400, 0.0
    %v7599 = vadd.f32 %v7402, 0.0
    %v7600 = vadd.f32 %v7404, 0.0
    %v7601 = vadd.f32 %v7406, 0.0
    %v7602 = vadd.f32 %v7408, 0.0
    %v7603 = vadd.f32 %v7410, 0.0
    %v7604 = vadd.f32 %v7412, 0.0
    %v7605 = vadd.f32 %v7414, 0.0
    %v7606 = vadd.f32 %v7416, 0.0
    %v7607 = vadd.f32 %v7418, 0.0
    %v7608 = vadd.f32 %v7420, 0.0
    %v7609 = vadd.f32 %v7422, 0.0
    %v7610 = vadd.f32 %v7424, 0.0
    %v7611 = vadd.f32 %v7426, 0.0
    %v7612 = vadd.f32 %v7428, 0.0
    %v7613 = vadd.f32 %v7430, 0.0
    %v7614 = vadd.f32 %v7432, 0.0
    %v7615 = vadd.f32 %v7434, 0.0
    %v7616 = vadd.f32 %v7436, 0.0
    %v7617 = vadd.f32 %v7438, 0.0
    %v7618 = vadd.f32 %v7440, 0.0
    %v7619 = vadd.f32 %v7442, 0.0
    %v7620 = vadd.f32 %v7444, 0.0
    %v7621 = vadd.f32 %v7446, 0.0
    %v7622 = vadd.f32 %v7448, 0.0
    %v7623 = vadd.f32 %v7450, 0.0
    %v7624 = vadd.f32 %v7452, 0.0
    %v7625 = vadd.f32 %v7454, 0.0
    %v7626 = vadd.f32 %v7456, 0.0
    %v7627 = vadd.f32 %v7458, 0.0
    %v7628 = vadd.f32 %v7460, 0.0
    %v7629 = vadd.f32 %v7462, 0.0
    %v7630 = vadd.f32 %v7464, 0.0
    %v7631 = vadd.f32 %v7466, 0.0
    %v7632 = vadd.f32 %v7468, 0.0
    %v7633 = vadd.f32 %v7470, 0.0
    %v7634 = vadd.f32 %v7472, 0.0
    %v7635 = vadd.f32 %v7474, 0.0
    %v7636 = vadd.f32 %v7476, 0.0
    %v7637 = vadd.f32 %v7478, 0.0
    %v7638 = vadd.f32 %v7480, 0.0
    %v7639 = vadd.f32 %v7482, 0.0
    %v7640 = vadd.f32 %v7484, 0.0
    %v7641 = vadd.f32 %v7486, 0.0
    %v7642 = vadd.f32 %v7488, 0.0
    %v7643 = vadd.f32 %v7490, 0.0
    %v7644 = vadd.f32 %v7492, 0.0
    %v7645 = vadd.f32 %v7494, 0.0
    %v7646 = vadd.f32 %v7496, 0.0
    %v7647 = vadd.f32 %v7498, 0.0
    %v7648 = vadd.f32 %v7500, 0.0
    %v7649 = vadd.f32 %v7502, 0.0
    %v7650 = vadd.f32 %v7504, 0.0
    %v7651 = vadd.f32 %v7506, 0.0
    %v7652 = vadd.f32 %v7508, 0.0
    %v7653 = vadd.f32 %v7510, 0.0
    %v7654 = vadd.f32 %v7512, 0.0
    %v7655 = vadd.f32 %v7514, 0.0
    %v7656 = vadd.f32 %v7516, 0.0
    %v7657 = vadd.f32 %v7518, 0.0
    %v7658 = vadd.f32 %v7520, 0.0
    %v7659 = vadd.f32 %v7522, 0.0
    %v7660 = vadd.f32 %v7524, 0.0
    %v7661 = vadd.f32 %v7526, 0.0
    %v7662 = vadd.f32 %v7528, 0.0
    %v7663 = vadd.f32 %v7530, 0.0
    %v7664 = vadd.f32 %v7532, 0.0
    %v7665 = vadd.f32 %v7534, 0.0
    %v7666 = vadd.f32 %v7536, 0.0
    %v7667 = vadd.f32 %v7538, 0.0
    %v7668 = vadd.f32 %v7540, 0.0
    %s7669 = scalar_lea.vmem %s3, 128
    %v7670 = vld [vmem:[%s7669] sm:$0xff]
    %v7671 = vld [vmem:[%s7669 + $0x8] sm:$0xff]
    %v7672 = vld [vmem:[%s7669 + $0x10] sm:$0xff]
    %v7673 = vld [vmem:[%s7669 + $0x18] sm:$0xff]
    %v7674 = vld [vmem:[%s7669 + $0x20] sm:$0xff]
    %v7675 = vld [vmem:[%s7669 + $0x28] sm:$0xff]
    %v7676 = vld [vmem:[%s7669 + $0x30] sm:$0xff]
    %v7677 = vld [vmem:[%s7669 + $0x38] sm:$0xff]
    %v7678 = vld [vmem:[%s7669 + $0x40] sm:$0xff]
    %v7679 = vld [vmem:[%s7669 + $0x48] sm:$0xff]
    %v7680 = vld [vmem:[%s7669 + $0x50] sm:$0xff]
    %v7681 = vld [vmem:[%s7669 + $0x58] sm:$0xff]
    %v7682 = vld [vmem:[%s7669 + $0x60] sm:$0xff]
    %v7683 = vld [vmem:[%s7669 + $0x68] sm:$0xff]
    %v7684 = vld [vmem:[%s7669 + $0x70] sm:$0xff]
    %v7685 = vld [vmem:[%s7669 + $0x78] sm:$0xff]
    %v7702 = vrot.slane %v7670, 1
    %v7703 = vrot.slane %v7670, 2
    %v7704 = vrot.slane %v7670, 3
    %v7705 = vrot.slane %v7670, 4
    %v7706 = vrot.slane %v7670, 5
    %v7707 = vrot.slane %v7670, 6
    %v7708 = vrot.slane %v7670, 7
    %v7709 = vrot.slane %v7671, 1
    %v7710 = vrot.slane %v7671, 2
    %v7711 = vrot.slane %v7671, 3
    %v7712 = vrot.slane %v7671, 4
    %v7713 = vrot.slane %v7671, 5
    %v7714 = vrot.slane %v7671, 6
    %v7715 = vrot.slane %v7671, 7
    %v7716 = vrot.slane %v7672, 1
    %v7717 = vrot.slane %v7672, 2
    %v7718 = vrot.slane %v7672, 3
    %v7719 = vrot.slane %v7672, 4
    %v7720 = vrot.slane %v7672, 5
    %v7721 = vrot.slane %v7672, 6
    %v7722 = vrot.slane %v7672, 7
    %v7723 = vrot.slane %v7673, 1
    %v7724 = vrot.slane %v7673, 2
    %v7725 = vrot.slane %v7673, 3
    %v7726 = vrot.slane %v7673, 4
    %v7727 = vrot.slane %v7673, 5
    %v7728 = vrot.slane %v7673, 6
    %v7729 = vrot.slane %v7673, 7
    %v7730 = vrot.slane %v7674, 1
    %v7731 = vrot.slane %v7674, 2
    %v7732 = vrot.slane %v7674, 3
    %v7733 = vrot.slane %v7674, 4
    %v7734 = vrot.slane %v7674, 5
    %v7735 = vrot.slane %v7674, 6
    %v7736 = vrot.slane %v7674, 7
    %v7737 = vrot.slane %v7675, 1
    %v7738 = vrot.slane %v7675, 2
    %v7739 = vrot.slane %v7675, 3
    %v7740 = vrot.slane %v7675, 4
    %v7741 = vrot.slane %v7675, 5
    %v7742 = vrot.slane %v7675, 6
    %v7743 = vrot.slane %v7675, 7
    %v7744 = vrot.slane %v7676, 1
    %v7745 = vrot.slane %v7676, 2
    %v7746 = vrot.slane %v7676, 3
    %v7747 = vrot.slane %v7676, 4
    %v7748 = vrot.slane %v7676, 5
    %v7749 = vrot.slane %v7676, 6
    %v7750 = vrot.slane %v7676, 7
    %v7751 = vrot.slane %v7677, 1
    %v7752 = vrot.slane %v7677, 2
    %v7753 = vrot.slane %v7677, 3
    %v7754 = vrot.slane %v7677, 4
    %v7755 = vrot.slane %v7677, 5
    %v7756 = vrot.slane %v7677, 6
    %v7757 = vrot.slane %v7677, 7
    %v7758 = vrot.slane %v7678, 1
    %v7759 = vrot.slane %v7678, 2
    %v7760 = vrot.slane %v7678, 3
    %v7761 = vrot.slane %v7678, 4
    %v7762 = vrot.slane %v7678, 5
    %v7763 = vrot.slane %v7678, 6
    %v7764 = vrot.slane %v7678, 7
    %v7765 = vrot.slane %v7679, 1
    %v7766 = vrot.slane %v7679, 2
    %v7767 = vrot.slane %v7679, 3
    %v7768 = vrot.slane %v7679, 4
    %v7769 = vrot.slane %v7679, 5
    %v7770 = vrot.slane %v7679, 6
    %v7771 = vrot.slane %v7679, 7
    %v7772 = vrot.slane %v7680, 1
    %v7773 = vrot.slane %v7680, 2
    %v7774 = vrot.slane %v7680, 3
    %v7775 = vrot.slane %v7680, 4
    %v7776 = vrot.slane %v7680, 5
    %v7777 = vrot.slane %v7680, 6
    %v7778 = vrot.slane %v7680, 7
    %v7779 = vrot.slane %v7681, 1
    %v7780 = vrot.slane %v7681, 2
    %v7781 = vrot.slane %v7681, 3
    %v7782 = vrot.slane %v7681, 4
    %v7783 = vrot.slane %v7681, 5
    %v7784 = vrot.slane %v7681, 6
    %v7785 = vrot.slane %v7681, 7
    %v7786 = vrot.slane %v7682, 1
    %v7787 = vrot.slane %v7682, 2
    %v7788 = vrot.slane %v7682, 3
    %v7789 = vrot.slane %v7682, 4
    %v7790 = vrot.slane %v7682, 5
    %v7791 = vrot.slane %v7682, 6
    %v7792 = vrot.slane %v7682, 7
    %v7793 = vrot.slane %v7683, 1
    %v7794 = vrot.slane %v7683, 2
    %v7795 = vrot.slane %v7683, 3
    %v7796 = vrot.slane %v7683, 4
    %v7797 = vrot.slane %v7683, 5
    %v7798 = vrot.slane %v7683, 6
    %v7799 = vrot.slane %v7683, 7
    %v7800 = vrot.slane %v7684, 1
    %v7801 = vrot.slane %v7684, 2
    %v7802 = vrot.slane %v7684, 3
    %v7803 = vrot.slane %v7684, 4
    %v7804 = vrot.slane %v7684, 5
    %v7805 = vrot.slane %v7684, 6
    %v7806 = vrot.slane %v7684, 7
    %v7807 = vrot.slane %v7685, 1
    %v7808 = vrot.slane %v7685, 2
    %v7809 = vrot.slane %v7685, 3
    %v7810 = vrot.slane %v7685, 4
    %v7811 = vrot.slane %v7685, 5
    %v7812 = vrot.slane %v7685, 6
    %v7813 = vrot.slane %v7685, 7
    %v7942 = vadd.f32 %v4038, %v7670
    %v7943 = vadd.f32 %v4047, %v7702
    %v7944 = vadd.f32 %v4056, %v7703
    %v7945 = vadd.f32 %v4065, %v7704
    %v7946 = vadd.f32 %v4074, %v7705
    %v7947 = vadd.f32 %v4083, %v7706
    %v7948 = vadd.f32 %v4092, %v7707
    %v7949 = vadd.f32 %v4101, %v7708
    %v7950 = vadd.f32 %v4110, %v7671
    %v7951 = vadd.f32 %v4119, %v7709
    %v7952 = vadd.f32 %v4128, %v7710
    %v7953 = vadd.f32 %v4137, %v7711
    %v7954 = vadd.f32 %v4146, %v7712
    %v7955 = vadd.f32 %v4155, %v7713
    %v7956 = vadd.f32 %v4164, %v7714
    %v7957 = vadd.f32 %v4173, %v7715
    %v7958 = vadd.f32 %v4182, %v7672
    %v7959 = vadd.f32 %v4191, %v7716
    %v7960 = vadd.f32 %v4200, %v7717
    %v7961 = vadd.f32 %v4209, %v7718
    %v7962 = vadd.f32 %v4218, %v7719
    %v7963 = vadd.f32 %v4227, %v7720
    %v7964 = vadd.f32 %v4236, %v7721
    %v7965 = vadd.f32 %v4245, %v7722
    %v7966 = vadd.f32 %v4254, %v7673
    %v7967 = vadd.f32 %v4263, %v7723
    %v7968 = vadd.f32 %v4272, %v7724
    %v7969 = vadd.f32 %v4281, %v7725
    %v7970 = vadd.f32 %v4290, %v7726
    %v7971 = vadd.f32 %v4299, %v7727
    %v7972 = vadd.f32 %v4308, %v7728
    %v7973 = vadd.f32 %v4317, %v7729
    %v7974 = vadd.f32 %v4326, %v7674
    %v7975 = vadd.f32 %v4335, %v7730
    %v7976 = vadd.f32 %v4344, %v7731
    %v7977 = vadd.f32 %v4353, %v7732
    %v7978 = vadd.f32 %v4362, %v7733
    %v7979 = vadd.f32 %v4371, %v7734
    %v7980 = vadd.f32 %v4380, %v7735
    %v7981 = vadd.f32 %v4389, %v7736
    %v7982 = vadd.f32 %v4398, %v7675
    %v7983 = vadd.f32 %v4407, %v7737
    %v7984 = vadd.f32 %v4416, %v7738
    %v7985 = vadd.f32 %v4425, %v7739
    %v7986 = vadd.f32 %v4434, %v7740
    %v7987 = vadd.f32 %v4443, %v7741
    %v7988 = vadd.f32 %v4452, %v7742
    %v7989 = vadd.f32 %v4461, %v7743
    %v7990 = vadd.f32 %v4470, %v7676
    %v7991 = vadd.f32 %v4479, %v7744
    %v7992 = vadd.f32 %v4488, %v7745
    %v7993 = vadd.f32 %v4497, %v7746
    %v7994 = vadd.f32 %v4506, %v7747
    %v7995 = vadd.f32 %v4515, %v7748
    %v7996 = vadd.f32 %v4524, %v7749
    %v7997 = vadd.f32 %v4533, %v7750
    %v7998 = vadd.f32 %v4542, %v7677
    %v7999 = vadd.f32 %v4551, %v7751
    %v8000 = vadd.f32 %v4560, %v7752
    %v8001 = vadd.f32 %v4569, %v7753
    %v8002 = vadd.f32 %v4578, %v7754
    %v8003 = vadd.f32 %v4587, %v7755
    %v8004 = vadd.f32 %v4596, %v7756
    %v8005 = vadd.f32 %v4605, %v7757
    %v8006 = vadd.f32 %v4614, %v7678
    %v8007 = vadd.f32 %v4623, %v7758
    %v8008 = vadd.f32 %v4632, %v7759
    %v8009 = vadd.f32 %v4641, %v7760
    %v8010 = vadd.f32 %v4650, %v7761
    %v8011 = vadd.f32 %v4659, %v7762
    %v8012 = vadd.f32 %v4668, %v7763
    %v8013 = vadd.f32 %v4677, %v7764
    %v8014 = vadd.f32 %v4686, %v7679
    %v8015 = vadd.f32 %v4695, %v7765
    %v8016 = vadd.f32 %v4704, %v7766
    %v8017 = vadd.f32 %v4713, %v7767
    %v8018 = vadd.f32 %v4722, %v7768
    %v8019 = vadd.f32 %v4731, %v7769
    %v8020 = vadd.f32 %v4740, %v7770
    %v8021 = vadd.f32 %v4749, %v7771
    %v8022 = vadd.f32 %v4758, %v7680
    %v8023 = vadd.f32 %v4767, %v7772
    %v8024 = vadd.f32 %v4776, %v7773
    %v8025 = vadd.f32 %v4785, %v7774
    %v8026 = vadd.f32 %v4794, %v7775
    %v8027 = vadd.f32 %v4803, %v7776
    %v8028 = vadd.f32 %v4812, %v7777
    %v8029 = vadd.f32 %v4821, %v7778
    %v8030 = vadd.f32 %v4830, %v7681
    %v8031 = vadd.f32 %v4839, %v7779
    %v8032 = vadd.f32 %v4848, %v7780
    %v8033 = vadd.f32 %v4857, %v7781
    %v8034 = vadd.f32 %v4866, %v7782
    %v8035 = vadd.f32 %v4875, %v7783
    %v8036 = vadd.f32 %v4884, %v7784
    %v8037 = vadd.f32 %v4893, %v7785
    %v8038 = vadd.f32 %v4902, %v7682
    %v8039 = vadd.f32 %v4911, %v7786
    %v8040 = vadd.f32 %v4920, %v7787
    %v8041 = vadd.f32 %v4929, %v7788
    %v8042 = vadd.f32 %v4938, %v7789
    %v8043 = vadd.f32 %v4947, %v7790
    %v8044 = vadd.f32 %v4956, %v7791
    %v8045 = vadd.f32 %v4965, %v7792
    %v8046 = vadd.f32 %v4974, %v7683
    %v8047 = vadd.f32 %v4983, %v7793
    %v8048 = vadd.f32 %v4992, %v7794
    %v8049 = vadd.f32 %v5001, %v7795
    %v8050 = vadd.f32 %v5010, %v7796
    %v8051 = vadd.f32 %v5019, %v7797
    %v8052 = vadd.f32 %v5028, %v7798
    %v8053 = vadd.f32 %v5037, %v7799
    %v8054 = vadd.f32 %v5046, %v7684
    %v8055 = vadd.f32 %v5055, %v7800
    %v8056 = vadd.f32 %v5064, %v7801
    %v8057 = vadd.f32 %v5073, %v7802
    %v8058 = vadd.f32 %v5082, %v7803
    %v8059 = vadd.f32 %v5091, %v7804
    %v8060 = vadd.f32 %v5100, %v7805
    %v8061 = vadd.f32 %v5109, %v7806
    %v8062 = vadd.f32 %v5118, %v7685
    %v8063 = vadd.f32 %v5127, %v7807
    %v8064 = vadd.f32 %v5136, %v7808
    %v8065 = vadd.f32 %v5145, %v7809
    %v8066 = vadd.f32 %v5154, %v7810
    %v8067 = vadd.f32 %v5163, %v7811
    %v8068 = vadd.f32 %v5172, %v7812
    %v8069 = vadd.f32 %v5181, %v7813
    %v8198 = vrot.slane %v7943, 7
    %v8199 = vsel %vm5711, %v8198, %v7942
    %v8200 = vrot.slane %v7944, 6
    %v8201 = vsel %vm5714, %v8200, %v8199
    %v8202 = vrot.slane %v7945, 5
    %v8203 = vsel %vm5717, %v8202, %v8201
    %v8204 = vrot.slane %v7946, 4
    %v8205 = vsel %vm5720, %v8204, %v8203
    %v8206 = vrot.slane %v7947, 3
    %v8207 = vsel %vm5723, %v8206, %v8205
    %v8208 = vrot.slane %v7948, 2
    %v8209 = vsel %vm5726, %v8208, %v8207
    %v8210 = vrot.slane %v7949, 1
    %v8211 = vsel %vm5729, %v8210, %v8209
    %v8212 = vrot.slane %v7951, 7
    %v8213 = vsel %vm5711, %v8212, %v7950
    %v8214 = vrot.slane %v7952, 6
    %v8215 = vsel %vm5714, %v8214, %v8213
    %v8216 = vrot.slane %v7953, 5
    %v8217 = vsel %vm5717, %v8216, %v8215
    %v8218 = vrot.slane %v7954, 4
    %v8219 = vsel %vm5720, %v8218, %v8217
    %v8220 = vrot.slane %v7955, 3
    %v8221 = vsel %vm5723, %v8220, %v8219
    %v8222 = vrot.slane %v7956, 2
    %v8223 = vsel %vm5726, %v8222, %v8221
    %v8224 = vrot.slane %v7957, 1
    %v8225 = vsel %vm5729, %v8224, %v8223
    %v8226 = vrot.slane %v7959, 7
    %v8227 = vsel %vm5711, %v8226, %v7958
    %v8228 = vrot.slane %v7960, 6
    %v8229 = vsel %vm5714, %v8228, %v8227
    %v8230 = vrot.slane %v7961, 5
    %v8231 = vsel %vm5717, %v8230, %v8229
    %v8232 = vrot.slane %v7962, 4
    %v8233 = vsel %vm5720, %v8232, %v8231
    %v8234 = vrot.slane %v7963, 3
    %v8235 = vsel %vm5723, %v8234, %v8233
    %v8236 = vrot.slane %v7964, 2
    %v8237 = vsel %vm5726, %v8236, %v8235
    %v8238 = vrot.slane %v7965, 1
    %v8239 = vsel %vm5729, %v8238, %v8237
    %v8240 = vrot.slane %v7967, 7
    %v8241 = vsel %vm5711, %v8240, %v7966
    %v8242 = vrot.slane %v7968, 6
    %v8243 = vsel %vm5714, %v8242, %v8241
    %v8244 = vrot.slane %v7969, 5
    %v8245 = vsel %vm5717, %v8244, %v8243
    %v8246 = vrot.slane %v7970, 4
    %v8247 = vsel %vm5720, %v8246, %v8245
    %v8248 = vrot.slane %v7971, 3
    %v8249 = vsel %vm5723, %v8248, %v8247
    %v8250 = vrot.slane %v7972, 2
    %v8251 = vsel %vm5726, %v8250, %v8249
    %v8252 = vrot.slane %v7973, 1
    %v8253 = vsel %vm5729, %v8252, %v8251
    %v8254 = vrot.slane %v7975, 7
    %v8255 = vsel %vm5711, %v8254, %v7974
    %v8256 = vrot.slane %v7976, 6
    %v8257 = vsel %vm5714, %v8256, %v8255
    %v8258 = vrot.slane %v7977, 5
    %v8259 = vsel %vm5717, %v8258, %v8257
    %v8260 = vrot.slane %v7978, 4
    %v8261 = vsel %vm5720, %v8260, %v8259
    %v8262 = vrot.slane %v7979, 3
    %v8263 = vsel %vm5723, %v8262, %v8261
    %v8264 = vrot.slane %v7980, 2
    %v8265 = vsel %vm5726, %v8264, %v8263
    %v8266 = vrot.slane %v7981, 1
    %v8267 = vsel %vm5729, %v8266, %v8265
    %v8268 = vrot.slane %v7983, 7
    %v8269 = vsel %vm5711, %v8268, %v7982
    %v8270 = vrot.slane %v7984, 6
    %v8271 = vsel %vm5714, %v8270, %v8269
    %v8272 = vrot.slane %v7985, 5
    %v8273 = vsel %vm5717, %v8272, %v8271
    %v8274 = vrot.slane %v7986, 4
    %v8275 = vsel %vm5720, %v8274, %v8273
    %v8276 = vrot.slane %v7987, 3
    %v8277 = vsel %vm5723, %v8276, %v8275
    %v8278 = vrot.slane %v7988, 2
    %v8279 = vsel %vm5726, %v8278, %v8277
    %v8280 = vrot.slane %v7989, 1
    %v8281 = vsel %vm5729, %v8280, %v8279
    %v8282 = vrot.slane %v7991, 7
    %v8283 = vsel %vm5711, %v8282, %v7990
    %v8284 = vrot.slane %v7992, 6
    %v8285 = vsel %vm5714, %v8284, %v8283
    %v8286 = vrot.slane %v7993, 5
    %v8287 = vsel %vm5717, %v8286, %v8285
    %v8288 = vrot.slane %v7994, 4
    %v8289 = vsel %vm5720, %v8288, %v8287
    %v8290 = vrot.slane %v7995, 3
    %v8291 = vsel %vm5723, %v8290, %v8289
    %v8292 = vrot.slane %v7996, 2
    %v8293 = vsel %vm5726, %v8292, %v8291
    %v8294 = vrot.slane %v7997, 1
    %v8295 = vsel %vm5729, %v8294, %v8293
    %v8296 = vrot.slane %v7999, 7
    %v8297 = vsel %vm5711, %v8296, %v7998
    %v8298 = vrot.slane %v8000, 6
    %v8299 = vsel %vm5714, %v8298, %v8297
    %v8300 = vrot.slane %v8001, 5
    %v8301 = vsel %vm5717, %v8300, %v8299
    %v8302 = vrot.slane %v8002, 4
    %v8303 = vsel %vm5720, %v8302, %v8301
    %v8304 = vrot.slane %v8003, 3
    %v8305 = vsel %vm5723, %v8304, %v8303
    %v8306 = vrot.slane %v8004, 2
    %v8307 = vsel %vm5726, %v8306, %v8305
    %v8308 = vrot.slane %v8005, 1
    %v8309 = vsel %vm5729, %v8308, %v8307
    %v8310 = vrot.slane %v8007, 7
    %v8311 = vsel %vm5711, %v8310, %v8006
    %v8312 = vrot.slane %v8008, 6
    %v8313 = vsel %vm5714, %v8312, %v8311
    %v8314 = vrot.slane %v8009, 5
    %v8315 = vsel %vm5717, %v8314, %v8313
    %v8316 = vrot.slane %v8010, 4
    %v8317 = vsel %vm5720, %v8316, %v8315
    %v8318 = vrot.slane %v8011, 3
    %v8319 = vsel %vm5723, %v8318, %v8317
    %v8320 = vrot.slane %v8012, 2
    %v8321 = vsel %vm5726, %v8320, %v8319
    %v8322 = vrot.slane %v8013, 1
    %v8323 = vsel %vm5729, %v8322, %v8321
    %v8324 = vrot.slane %v8015, 7
    %v8325 = vsel %vm5711, %v8324, %v8014
    %v8326 = vrot.slane %v8016, 6
    %v8327 = vsel %vm5714, %v8326, %v8325
    %v8328 = vrot.slane %v8017, 5
    %v8329 = vsel %vm5717, %v8328, %v8327
    %v8330 = vrot.slane %v8018, 4
    %v8331 = vsel %vm5720, %v8330, %v8329
    %v8332 = vrot.slane %v8019, 3
    %v8333 = vsel %vm5723, %v8332, %v8331
    %v8334 = vrot.slane %v8020, 2
    %v8335 = vsel %vm5726, %v8334, %v8333
    %v8336 = vrot.slane %v8021, 1
    %v8337 = vsel %vm5729, %v8336, %v8335
    %v8338 = vrot.slane %v8023, 7
    %v8339 = vsel %vm5711, %v8338, %v8022
    %v8340 = vrot.slane %v8024, 6
    %v8341 = vsel %vm5714, %v8340, %v8339
    %v8342 = vrot.slane %v8025, 5
    %v8343 = vsel %vm5717, %v8342, %v8341
    %v8344 = vrot.slane %v8026, 4
    %v8345 = vsel %vm5720, %v8344, %v8343
    %v8346 = vrot.slane %v8027, 3
    %v8347 = vsel %vm5723, %v8346, %v8345
    %v8348 = vrot.slane %v8028, 2
    %v8349 = vsel %vm5726, %v8348, %v8347
    %v8350 = vrot.slane %v8029, 1
    %v8351 = vsel %vm5729, %v8350, %v8349
    %v8352 = vrot.slane %v8031, 7
    %v8353 = vsel %vm5711, %v8352, %v8030
    %v8354 = vrot.slane %v8032, 6
    %v8355 = vsel %vm5714, %v8354, %v8353
    %v8356 = vrot.slane %v8033, 5
    %v8357 = vsel %vm5717, %v8356, %v8355
    %v8358 = vrot.slane %v8034, 4
    %v8359 = vsel %vm5720, %v8358, %v8357
    %v8360 = vrot.slane %v8035, 3
    %v8361 = vsel %vm5723, %v8360, %v8359
    %v8362 = vrot.slane %v8036, 2
    %v8363 = vsel %vm5726, %v8362, %v8361
    %v8364 = vrot.slane %v8037, 1
    %v8365 = vsel %vm5729, %v8364, %v8363
    %v8366 = vrot.slane %v8039, 7
    %v8367 = vsel %vm5711, %v8366, %v8038
    %v8368 = vrot.slane %v8040, 6
    %v8369 = vsel %vm5714, %v8368, %v8367
    %v8370 = vrot.slane %v8041, 5
    %v8371 = vsel %vm5717, %v8370, %v8369
    %v8372 = vrot.slane %v8042, 4
    %v8373 = vsel %vm5720, %v8372, %v8371
    %v8374 = vrot.slane %v8043, 3
    %v8375 = vsel %vm5723, %v8374, %v8373
    %v8376 = vrot.slane %v8044, 2
    %v8377 = vsel %vm5726, %v8376, %v8375
    %v8378 = vrot.slane %v8045, 1
    %v8379 = vsel %vm5729, %v8378, %v8377
    %v8380 = vrot.slane %v8047, 7
    %v8381 = vsel %vm5711, %v8380, %v8046
    %v8382 = vrot.slane %v8048, 6
    %v8383 = vsel %vm5714, %v8382, %v8381
    %v8384 = vrot.slane %v8049, 5
    %v8385 = vsel %vm5717, %v8384, %v8383
    %v8386 = vrot.slane %v8050, 4
    %v8387 = vsel %vm5720, %v8386, %v8385
    %v8388 = vrot.slane %v8051, 3
    %v8389 = vsel %vm5723, %v8388, %v8387
    %v8390 = vrot.slane %v8052, 2
    %v8391 = vsel %vm5726, %v8390, %v8389
    %v8392 = vrot.slane %v8053, 1
    %v8393 = vsel %vm5729, %v8392, %v8391
    %v8394 = vrot.slane %v8055, 7
    %v8395 = vsel %vm5711, %v8394, %v8054
    %v8396 = vrot.slane %v8056, 6
    %v8397 = vsel %vm5714, %v8396, %v8395
    %v8398 = vrot.slane %v8057, 5
    %v8399 = vsel %vm5717, %v8398, %v8397
    %v8400 = vrot.slane %v8058, 4
    %v8401 = vsel %vm5720, %v8400, %v8399
    %v8402 = vrot.slane %v8059, 3
    %v8403 = vsel %vm5723, %v8402, %v8401
    %v8404 = vrot.slane %v8060, 2
    %v8405 = vsel %vm5726, %v8404, %v8403
    %v8406 = vrot.slane %v8061, 1
    %v8407 = vsel %vm5729, %v8406, %v8405
    %v8408 = vrot.slane %v8063, 7
    %v8409 = vsel %vm5711, %v8408, %v8062
    %v8410 = vrot.slane %v8064, 6
    %v8411 = vsel %vm5714, %v8410, %v8409
    %v8412 = vrot.slane %v8065, 5
    %v8413 = vsel %vm5717, %v8412, %v8411
    %v8414 = vrot.slane %v8066, 4
    %v8415 = vsel %vm5720, %v8414, %v8413
    %v8416 = vrot.slane %v8067, 3
    %v8417 = vsel %vm5723, %v8416, %v8415
    %v8418 = vrot.slane %v8068, 2
    %v8419 = vsel %vm5726, %v8418, %v8417
    %v8420 = vrot.slane %v8069, 1
    %v8421 = vsel %vm5729, %v8420, %v8419
    %8438 = vmax.xlane.f32.xlu0 %v8211
    %v8439 = vpop.xlane.xlu0 %8438
    %8440 = vmax.xlane.f32.xlu0 %v8225
    %v8441 = vpop.xlane.xlu0 %8440
    %8442 = vmax.xlane.f32.xlu0 %v8239
    %v8443 = vpop.xlane.xlu0 %8442
    %8444 = vmax.xlane.f32.xlu0 %v8253
    %v8445 = vpop.xlane.xlu0 %8444
    %8446 = vmax.xlane.f32.xlu0 %v8267
    %v8447 = vpop.xlane.xlu0 %8446
    %8448 = vmax.xlane.f32.xlu0 %v8281
    %v8449 = vpop.xlane.xlu0 %8448
    %8450 = vmax.xlane.f32.xlu0 %v8295
    %v8451 = vpop.xlane.xlu0 %8450
    %8452 = vmax.xlane.f32.xlu0 %v8309
    %v8453 = vpop.xlane.xlu0 %8452
    %8454 = vmax.xlane.f32.xlu0 %v8323
    %v8455 = vpop.xlane.xlu0 %8454
    %8456 = vmax.xlane.f32.xlu0 %v8337
    %v8457 = vpop.xlane.xlu0 %8456
    %8458 = vmax.xlane.f32.xlu0 %v8351
    %v8459 = vpop.xlane.xlu0 %8458
    %8460 = vmax.xlane.f32.xlu0 %v8365
    %v8461 = vpop.xlane.xlu0 %8460
    %8462 = vmax.xlane.f32.xlu0 %v8379
    %v8463 = vpop.xlane.xlu0 %8462
    %8464 = vmax.xlane.f32.xlu0 %v8393
    %v8465 = vpop.xlane.xlu0 %8464
    %8466 = vmax.xlane.f32.xlu0 %v8407
    %v8467 = vpop.xlane.xlu0 %8466
    %8468 = vmax.xlane.f32.xlu0 %v8421
    %v8469 = vpop.xlane.xlu0 %8468
    %v8486 = vrot.slane %v8439, 1
    %v8487 = vrot.slane %v8439, 2
    %v8488 = vrot.slane %v8439, 3
    %v8489 = vrot.slane %v8439, 4
    %v8490 = vrot.slane %v8439, 5
    %v8491 = vrot.slane %v8439, 6
    %v8492 = vrot.slane %v8439, 7
    %v8493 = vrot.slane %v8441, 1
    %v8494 = vrot.slane %v8441, 2
    %v8495 = vrot.slane %v8441, 3
    %v8496 = vrot.slane %v8441, 4
    %v8497 = vrot.slane %v8441, 5
    %v8498 = vrot.slane %v8441, 6
    %v8499 = vrot.slane %v8441, 7
    %v8500 = vrot.slane %v8443, 1
    %v8501 = vrot.slane %v8443, 2
    %v8502 = vrot.slane %v8443, 3
    %v8503 = vrot.slane %v8443, 4
    %v8504 = vrot.slane %v8443, 5
    %v8505 = vrot.slane %v8443, 6
    %v8506 = vrot.slane %v8443, 7
    %v8507 = vrot.slane %v8445, 1
    %v8508 = vrot.slane %v8445, 2
    %v8509 = vrot.slane %v8445, 3
    %v8510 = vrot.slane %v8445, 4
    %v8511 = vrot.slane %v8445, 5
    %v8512 = vrot.slane %v8445, 6
    %v8513 = vrot.slane %v8445, 7
    %v8514 = vrot.slane %v8447, 1
    %v8515 = vrot.slane %v8447, 2
    %v8516 = vrot.slane %v8447, 3
    %v8517 = vrot.slane %v8447, 4
    %v8518 = vrot.slane %v8447, 5
    %v8519 = vrot.slane %v8447, 6
    %v8520 = vrot.slane %v8447, 7
    %v8521 = vrot.slane %v8449, 1
    %v8522 = vrot.slane %v8449, 2
    %v8523 = vrot.slane %v8449, 3
    %v8524 = vrot.slane %v8449, 4
    %v8525 = vrot.slane %v8449, 5
    %v8526 = vrot.slane %v8449, 6
    %v8527 = vrot.slane %v8449, 7
    %v8528 = vrot.slane %v8451, 1
    %v8529 = vrot.slane %v8451, 2
    %v8530 = vrot.slane %v8451, 3
    %v8531 = vrot.slane %v8451, 4
    %v8532 = vrot.slane %v8451, 5
    %v8533 = vrot.slane %v8451, 6
    %v8534 = vrot.slane %v8451, 7
    %v8535 = vrot.slane %v8453, 1
    %v8536 = vrot.slane %v8453, 2
    %v8537 = vrot.slane %v8453, 3
    %v8538 = vrot.slane %v8453, 4
    %v8539 = vrot.slane %v8453, 5
    %v8540 = vrot.slane %v8453, 6
    %v8541 = vrot.slane %v8453, 7
    %v8542 = vrot.slane %v8455, 1
    %v8543 = vrot.slane %v8455, 2
    %v8544 = vrot.slane %v8455, 3
    %v8545 = vrot.slane %v8455, 4
    %v8546 = vrot.slane %v8455, 5
    %v8547 = vrot.slane %v8455, 6
    %v8548 = vrot.slane %v8455, 7
    %v8549 = vrot.slane %v8457, 1
    %v8550 = vrot.slane %v8457, 2
    %v8551 = vrot.slane %v8457, 3
    %v8552 = vrot.slane %v8457, 4
    %v8553 = vrot.slane %v8457, 5
    %v8554 = vrot.slane %v8457, 6
    %v8555 = vrot.slane %v8457, 7
    %v8556 = vrot.slane %v8459, 1
    %v8557 = vrot.slane %v8459, 2
    %v8558 = vrot.slane %v8459, 3
    %v8559 = vrot.slane %v8459, 4
    %v8560 = vrot.slane %v8459, 5
    %v8561 = vrot.slane %v8459, 6
    %v8562 = vrot.slane %v8459, 7
    %v8563 = vrot.slane %v8461, 1
    %v8564 = vrot.slane %v8461, 2
    %v8565 = vrot.slane %v8461, 3
    %v8566 = vrot.slane %v8461, 4
    %v8567 = vrot.slane %v8461, 5
    %v8568 = vrot.slane %v8461, 6
    %v8569 = vrot.slane %v8461, 7
    %v8570 = vrot.slane %v8463, 1
    %v8571 = vrot.slane %v8463, 2
    %v8572 = vrot.slane %v8463, 3
    %v8573 = vrot.slane %v8463, 4
    %v8574 = vrot.slane %v8463, 5
    %v8575 = vrot.slane %v8463, 6
    %v8576 = vrot.slane %v8463, 7
    %v8577 = vrot.slane %v8465, 1
    %v8578 = vrot.slane %v8465, 2
    %v8579 = vrot.slane %v8465, 3
    %v8580 = vrot.slane %v8465, 4
    %v8581 = vrot.slane %v8465, 5
    %v8582 = vrot.slane %v8465, 6
    %v8583 = vrot.slane %v8465, 7
    %v8584 = vrot.slane %v8467, 1
    %v8585 = vrot.slane %v8467, 2
    %v8586 = vrot.slane %v8467, 3
    %v8587 = vrot.slane %v8467, 4
    %v8588 = vrot.slane %v8467, 5
    %v8589 = vrot.slane %v8467, 6
    %v8590 = vrot.slane %v8467, 7
    %v8591 = vrot.slane %v8469, 1
    %v8592 = vrot.slane %v8469, 2
    %v8593 = vrot.slane %v8469, 3
    %v8594 = vrot.slane %v8469, 4
    %v8595 = vrot.slane %v8469, 5
    %v8596 = vrot.slane %v8469, 6
    %v8597 = vrot.slane %v8469, 7
    %v8726 = vsub.f32 %v7942, %v8439
    %v8727 = vsub.f32 %v7943, %v8486
    %v8728 = vsub.f32 %v7944, %v8487
    %v8729 = vsub.f32 %v7945, %v8488
    %v8730 = vsub.f32 %v7946, %v8489
    %v8731 = vsub.f32 %v7947, %v8490
    %v8732 = vsub.f32 %v7948, %v8491
    %v8733 = vsub.f32 %v7949, %v8492
    %v8734 = vsub.f32 %v7950, %v8441
    %v8735 = vsub.f32 %v7951, %v8493
    %v8736 = vsub.f32 %v7952, %v8494
    %v8737 = vsub.f32 %v7953, %v8495
    %v8738 = vsub.f32 %v7954, %v8496
    %v8739 = vsub.f32 %v7955, %v8497
    %v8740 = vsub.f32 %v7956, %v8498
    %v8741 = vsub.f32 %v7957, %v8499
    %v8742 = vsub.f32 %v7958, %v8443
    %v8743 = vsub.f32 %v7959, %v8500
    %v8744 = vsub.f32 %v7960, %v8501
    %v8745 = vsub.f32 %v7961, %v8502
    %v8746 = vsub.f32 %v7962, %v8503
    %v8747 = vsub.f32 %v7963, %v8504
    %v8748 = vsub.f32 %v7964, %v8505
    %v8749 = vsub.f32 %v7965, %v8506
    %v8750 = vsub.f32 %v7966, %v8445
    %v8751 = vsub.f32 %v7967, %v8507
    %v8752 = vsub.f32 %v7968, %v8508
    %v8753 = vsub.f32 %v7969, %v8509
    %v8754 = vsub.f32 %v7970, %v8510
    %v8755 = vsub.f32 %v7971, %v8511
    %v8756 = vsub.f32 %v7972, %v8512
    %v8757 = vsub.f32 %v7973, %v8513
    %v8758 = vsub.f32 %v7974, %v8447
    %v8759 = vsub.f32 %v7975, %v8514
    %v8760 = vsub.f32 %v7976, %v8515
    %v8761 = vsub.f32 %v7977, %v8516
    %v8762 = vsub.f32 %v7978, %v8517
    %v8763 = vsub.f32 %v7979, %v8518
    %v8764 = vsub.f32 %v7980, %v8519
    %v8765 = vsub.f32 %v7981, %v8520
    %v8766 = vsub.f32 %v7982, %v8449
    %v8767 = vsub.f32 %v7983, %v8521
    %v8768 = vsub.f32 %v7984, %v8522
    %v8769 = vsub.f32 %v7985, %v8523
    %v8770 = vsub.f32 %v7986, %v8524
    %v8771 = vsub.f32 %v7987, %v8525
    %v8772 = vsub.f32 %v7988, %v8526
    %v8773 = vsub.f32 %v7989, %v8527
    %v8774 = vsub.f32 %v7990, %v8451
    %v8775 = vsub.f32 %v7991, %v8528
    %v8776 = vsub.f32 %v7992, %v8529
    %v8777 = vsub.f32 %v7993, %v8530
    %v8778 = vsub.f32 %v7994, %v8531
    %v8779 = vsub.f32 %v7995, %v8532
    %v8780 = vsub.f32 %v7996, %v8533
    %v8781 = vsub.f32 %v7997, %v8534
    %v8782 = vsub.f32 %v7998, %v8453
    %v8783 = vsub.f32 %v7999, %v8535
    %v8784 = vsub.f32 %v8000, %v8536
    %v8785 = vsub.f32 %v8001, %v8537
    %v8786 = vsub.f32 %v8002, %v8538
    %v8787 = vsub.f32 %v8003, %v8539
    %v8788 = vsub.f32 %v8004, %v8540
    %v8789 = vsub.f32 %v8005, %v8541
    %v8790 = vsub.f32 %v8006, %v8455
    %v8791 = vsub.f32 %v8007, %v8542
    %v8792 = vsub.f32 %v8008, %v8543
    %v8793 = vsub.f32 %v8009, %v8544
    %v8794 = vsub.f32 %v8010, %v8545
    %v8795 = vsub.f32 %v8011, %v8546
    %v8796 = vsub.f32 %v8012, %v8547
    %v8797 = vsub.f32 %v8013, %v8548
    %v8798 = vsub.f32 %v8014, %v8457
    %v8799 = vsub.f32 %v8015, %v8549
    %v8800 = vsub.f32 %v8016, %v8550
    %v8801 = vsub.f32 %v8017, %v8551
    %v8802 = vsub.f32 %v8018, %v8552
    %v8803 = vsub.f32 %v8019, %v8553
    %v8804 = vsub.f32 %v8020, %v8554
    %v8805 = vsub.f32 %v8021, %v8555
    %v8806 = vsub.f32 %v8022, %v8459
    %v8807 = vsub.f32 %v8023, %v8556
    %v8808 = vsub.f32 %v8024, %v8557
    %v8809 = vsub.f32 %v8025, %v8558
    %v8810 = vsub.f32 %v8026, %v8559
    %v8811 = vsub.f32 %v8027, %v8560
    %v8812 = vsub.f32 %v8028, %v8561
    %v8813 = vsub.f32 %v8029, %v8562
    %v8814 = vsub.f32 %v8030, %v8461
    %v8815 = vsub.f32 %v8031, %v8563
    %v8816 = vsub.f32 %v8032, %v8564
    %v8817 = vsub.f32 %v8033, %v8565
    %v8818 = vsub.f32 %v8034, %v8566
    %v8819 = vsub.f32 %v8035, %v8567
    %v8820 = vsub.f32 %v8036, %v8568
    %v8821 = vsub.f32 %v8037, %v8569
    %v8822 = vsub.f32 %v8038, %v8463
    %v8823 = vsub.f32 %v8039, %v8570
    %v8824 = vsub.f32 %v8040, %v8571
    %v8825 = vsub.f32 %v8041, %v8572
    %v8826 = vsub.f32 %v8042, %v8573
    %v8827 = vsub.f32 %v8043, %v8574
    %v8828 = vsub.f32 %v8044, %v8575
    %v8829 = vsub.f32 %v8045, %v8576
    %v8830 = vsub.f32 %v8046, %v8465
    %v8831 = vsub.f32 %v8047, %v8577
    %v8832 = vsub.f32 %v8048, %v8578
    %v8833 = vsub.f32 %v8049, %v8579
    %v8834 = vsub.f32 %v8050, %v8580
    %v8835 = vsub.f32 %v8051, %v8581
    %v8836 = vsub.f32 %v8052, %v8582
    %v8837 = vsub.f32 %v8053, %v8583
    %v8838 = vsub.f32 %v8054, %v8467
    %v8839 = vsub.f32 %v8055, %v8584
    %v8840 = vsub.f32 %v8056, %v8585
    %v8841 = vsub.f32 %v8057, %v8586
    %v8842 = vsub.f32 %v8058, %v8587
    %v8843 = vsub.f32 %v8059, %v8588
    %v8844 = vsub.f32 %v8060, %v8589
    %v8845 = vsub.f32 %v8061, %v8590
    %v8846 = vsub.f32 %v8062, %v8469
    %v8847 = vsub.f32 %v8063, %v8591
    %v8848 = vsub.f32 %v8064, %v8592
    %v8849 = vsub.f32 %v8065, %v8593
    %v8850 = vsub.f32 %v8066, %v8594
    %v8851 = vsub.f32 %v8067, %v8595
    %v8852 = vsub.f32 %v8068, %v8596
    %v8853 = vsub.f32 %v8069, %v8597
    %v8854 = vmul.f32 %v8726, 1.442695
    %v8855 = vpow.pop %v8854
    %v8856 = vmul.f32 %v8727, 1.442695
    %v8857 = vpow.pop %v8856
    %v8858 = vmul.f32 %v8728, 1.442695
    %v8859 = vpow.pop %v8858
    %v8860 = vmul.f32 %v8729, 1.442695
    %v8861 = vpow.pop %v8860
    %v8862 = vmul.f32 %v8730, 1.442695
    %v8863 = vpow.pop %v8862
    %v8864 = vmul.f32 %v8731, 1.442695
    %v8865 = vpow.pop %v8864
    %v8866 = vmul.f32 %v8732, 1.442695
    %v8867 = vpow.pop %v8866
    %v8868 = vmul.f32 %v8733, 1.442695
    %v8869 = vpow.pop %v8868
    %v8870 = vmul.f32 %v8734, 1.442695
    %v8871 = vpow.pop %v8870
    %v8872 = vmul.f32 %v8735, 1.442695
    %v8873 = vpow.pop %v8872
    %v8874 = vmul.f32 %v8736, 1.442695
    %v8875 = vpow.pop %v8874
    %v8876 = vmul.f32 %v8737, 1.442695
    %v8877 = vpow.pop %v8876
    %v8878 = vmul.f32 %v8738, 1.442695
    %v8879 = vpow.pop %v8878
    %v8880 = vmul.f32 %v8739, 1.442695
    %v8881 = vpow.pop %v8880
    %v8882 = vmul.f32 %v8740, 1.442695
    %v8883 = vpow.pop %v8882
    %v8884 = vmul.f32 %v8741, 1.442695
    %v8885 = vpow.pop %v8884
    %v8886 = vmul.f32 %v8742, 1.442695
    %v8887 = vpow.pop %v8886
    %v8888 = vmul.f32 %v8743, 1.442695
    %v8889 = vpow.pop %v8888
    %v8890 = vmul.f32 %v8744, 1.442695
    %v8891 = vpow.pop %v8890
    %v8892 = vmul.f32 %v8745, 1.442695
    %v8893 = vpow.pop %v8892
    %v8894 = vmul.f32 %v8746, 1.442695
    %v8895 = vpow.pop %v8894
    %v8896 = vmul.f32 %v8747, 1.442695
    %v8897 = vpow.pop %v8896
    %v8898 = vmul.f32 %v8748, 1.442695
    %v8899 = vpow.pop %v8898
    %v8900 = vmul.f32 %v8749, 1.442695
    %v8901 = vpow.pop %v8900
    %v8902 = vmul.f32 %v8750, 1.442695
    %v8903 = vpow.pop %v8902
    %v8904 = vmul.f32 %v8751, 1.442695
    %v8905 = vpow.pop %v8904
    %v8906 = vmul.f32 %v8752, 1.442695
    %v8907 = vpow.pop %v8906
    %v8908 = vmul.f32 %v8753, 1.442695
    %v8909 = vpow.pop %v8908
    %v8910 = vmul.f32 %v8754, 1.442695
    %v8911 = vpow.pop %v8910
    %v8912 = vmul.f32 %v8755, 1.442695
    %v8913 = vpow.pop %v8912
    %v8914 = vmul.f32 %v8756, 1.442695
    %v8915 = vpow.pop %v8914
    %v8916 = vmul.f32 %v8757, 1.442695
    %v8917 = vpow.pop %v8916
    %v8918 = vmul.f32 %v8758, 1.442695
    %v8919 = vpow.pop %v8918
    %v8920 = vmul.f32 %v8759, 1.442695
    %v8921 = vpow.pop %v8920
    %v8922 = vmul.f32 %v8760, 1.442695
    %v8923 = vpow.pop %v8922
    %v8924 = vmul.f32 %v8761, 1.442695
    %v8925 = vpow.pop %v8924
    %v8926 = vmul.f32 %v8762, 1.442695
    %v8927 = vpow.pop %v8926
    %v8928 = vmul.f32 %v8763, 1.442695
    %v8929 = vpow.pop %v8928
    %v8930 = vmul.f32 %v8764, 1.442695
    %v8931 = vpow.pop %v8930
    %v8932 = vmul.f32 %v8765, 1.442695
    %v8933 = vpow.pop %v8932
    %v8934 = vmul.f32 %v8766, 1.442695
    %v8935 = vpow.pop %v8934
    %v8936 = vmul.f32 %v8767, 1.442695
    %v8937 = vpow.pop %v8936
    %v8938 = vmul.f32 %v8768, 1.442695
    %v8939 = vpow.pop %v8938
    %v8940 = vmul.f32 %v8769, 1.442695
    %v8941 = vpow.pop %v8940
    %v8942 = vmul.f32 %v8770, 1.442695
    %v8943 = vpow.pop %v8942
    %v8944 = vmul.f32 %v8771, 1.442695
    %v8945 = vpow.pop %v8944
    %v8946 = vmul.f32 %v8772, 1.442695
    %v8947 = vpow.pop %v8946
    %v8948 = vmul.f32 %v8773, 1.442695
    %v8949 = vpow.pop %v8948
    %v8950 = vmul.f32 %v8774, 1.442695
    %v8951 = vpow.pop %v8950
    %v8952 = vmul.f32 %v8775, 1.442695
    %v8953 = vpow.pop %v8952
    %v8954 = vmul.f32 %v8776, 1.442695
    %v8955 = vpow.pop %v8954
    %v8956 = vmul.f32 %v8777, 1.442695
    %v8957 = vpow.pop %v8956
    %v8958 = vmul.f32 %v8778, 1.442695
    %v8959 = vpow.pop %v8958
    %v8960 = vmul.f32 %v8779, 1.442695
    %v8961 = vpow.pop %v8960
    %v8962 = vmul.f32 %v8780, 1.442695
    %v8963 = vpow.pop %v8962
    %v8964 = vmul.f32 %v8781, 1.442695
    %v8965 = vpow.pop %v8964
    %v8966 = vmul.f32 %v8782, 1.442695
    %v8967 = vpow.pop %v8966
    %v8968 = vmul.f32 %v8783, 1.442695
    %v8969 = vpow.pop %v8968
    %v8970 = vmul.f32 %v8784, 1.442695
    %v8971 = vpow.pop %v8970
    %v8972 = vmul.f32 %v8785, 1.442695
    %v8973 = vpow.pop %v8972
    %v8974 = vmul.f32 %v8786, 1.442695
    %v8975 = vpow.pop %v8974
    %v8976 = vmul.f32 %v8787, 1.442695
    %v8977 = vpow.pop %v8976
    %v8978 = vmul.f32 %v8788, 1.442695
    %v8979 = vpow.pop %v8978
    %v8980 = vmul.f32 %v8789, 1.442695
    %v8981 = vpow.pop %v8980
    %v8982 = vmul.f32 %v8790, 1.442695
    %v8983 = vpow.pop %v8982
    %v8984 = vmul.f32 %v8791, 1.442695
    %v8985 = vpow.pop %v8984
    %v8986 = vmul.f32 %v8792, 1.442695
    %v8987 = vpow.pop %v8986
    %v8988 = vmul.f32 %v8793, 1.442695
    %v8989 = vpow.pop %v8988
    %v8990 = vmul.f32 %v8794, 1.442695
    %v8991 = vpow.pop %v8990
    %v8992 = vmul.f32 %v8795, 1.442695
    %v8993 = vpow.pop %v8992
    %v8994 = vmul.f32 %v8796, 1.442695
    %v8995 = vpow.pop %v8994
    %v8996 = vmul.f32 %v8797, 1.442695
    %v8997 = vpow.pop %v8996
    %v8998 = vmul.f32 %v8798, 1.442695
    %v8999 = vpow.pop %v8998
    %v9000 = vmul.f32 %v8799, 1.442695
    %v9001 = vpow.pop %v9000
    %v9002 = vmul.f32 %v8800, 1.442695
    %v9003 = vpow.pop %v9002
    %v9004 = vmul.f32 %v8801, 1.442695
    %v9005 = vpow.pop %v9004
    %v9006 = vmul.f32 %v8802, 1.442695
    %v9007 = vpow.pop %v9006
    %v9008 = vmul.f32 %v8803, 1.442695
    %v9009 = vpow.pop %v9008
    %v9010 = vmul.f32 %v8804, 1.442695
    %v9011 = vpow.pop %v9010
    %v9012 = vmul.f32 %v8805, 1.442695
    %v9013 = vpow.pop %v9012
    %v9014 = vmul.f32 %v8806, 1.442695
    %v9015 = vpow.pop %v9014
    %v9016 = vmul.f32 %v8807, 1.442695
    %v9017 = vpow.pop %v9016
    %v9018 = vmul.f32 %v8808, 1.442695
    %v9019 = vpow.pop %v9018
    %v9020 = vmul.f32 %v8809, 1.442695
    %v9021 = vpow.pop %v9020
    %v9022 = vmul.f32 %v8810, 1.442695
    %v9023 = vpow.pop %v9022
    %v9024 = vmul.f32 %v8811, 1.442695
    %v9025 = vpow.pop %v9024
    %v9026 = vmul.f32 %v8812, 1.442695
    %v9027 = vpow.pop %v9026
    %v9028 = vmul.f32 %v8813, 1.442695
    %v9029 = vpow.pop %v9028
    %v9030 = vmul.f32 %v8814, 1.442695
    %v9031 = vpow.pop %v9030
    %v9032 = vmul.f32 %v8815, 1.442695
    %v9033 = vpow.pop %v9032
    %v9034 = vmul.f32 %v8816, 1.442695
    %v9035 = vpow.pop %v9034
    %v9036 = vmul.f32 %v8817, 1.442695
    %v9037 = vpow.pop %v9036
    %v9038 = vmul.f32 %v8818, 1.442695
    %v9039 = vpow.pop %v9038
    %v9040 = vmul.f32 %v8819, 1.442695
    %v9041 = vpow.pop %v9040
    %v9042 = vmul.f32 %v8820, 1.442695
    %v9043 = vpow.pop %v9042
    %v9044 = vmul.f32 %v8821, 1.442695
    %v9045 = vpow.pop %v9044
    %v9046 = vmul.f32 %v8822, 1.442695
    %v9047 = vpow.pop %v9046
    %v9048 = vmul.f32 %v8823, 1.442695
    %v9049 = vpow.pop %v9048
    %v9050 = vmul.f32 %v8824, 1.442695
    %v9051 = vpow.pop %v9050
    %v9052 = vmul.f32 %v8825, 1.442695
    %v9053 = vpow.pop %v9052
    %v9054 = vmul.f32 %v8826, 1.442695
    %v9055 = vpow.pop %v9054
    %v9056 = vmul.f32 %v8827, 1.442695
    %v9057 = vpow.pop %v9056
    %v9058 = vmul.f32 %v8828, 1.442695
    %v9059 = vpow.pop %v9058
    %v9060 = vmul.f32 %v8829, 1.442695
    %v9061 = vpow.pop %v9060
    %v9062 = vmul.f32 %v8830, 1.442695
    %v9063 = vpow.pop %v9062
    %v9064 = vmul.f32 %v8831, 1.442695
    %v9065 = vpow.pop %v9064
    %v9066 = vmul.f32 %v8832, 1.442695
    %v9067 = vpow.pop %v9066
    %v9068 = vmul.f32 %v8833, 1.442695
    %v9069 = vpow.pop %v9068
    %v9070 = vmul.f32 %v8834, 1.442695
    %v9071 = vpow.pop %v9070
    %v9072 = vmul.f32 %v8835, 1.442695
    %v9073 = vpow.pop %v9072
    %v9074 = vmul.f32 %v8836, 1.442695
    %v9075 = vpow.pop %v9074
    %v9076 = vmul.f32 %v8837, 1.442695
    %v9077 = vpow.pop %v9076
    %v9078 = vmul.f32 %v8838, 1.442695
    %v9079 = vpow.pop %v9078
    %v9080 = vmul.f32 %v8839, 1.442695
    %v9081 = vpow.pop %v9080
    %v9082 = vmul.f32 %v8840, 1.442695
    %v9083 = vpow.pop %v9082
    %v9084 = vmul.f32 %v8841, 1.442695
    %v9085 = vpow.pop %v9084
    %v9086 = vmul.f32 %v8842, 1.442695
    %v9087 = vpow.pop %v9086
    %v9088 = vmul.f32 %v8843, 1.442695
    %v9089 = vpow.pop %v9088
    %v9090 = vmul.f32 %v8844, 1.442695
    %v9091 = vpow.pop %v9090
    %v9092 = vmul.f32 %v8845, 1.442695
    %v9093 = vpow.pop %v9092
    %v9094 = vmul.f32 %v8846, 1.442695
    %v9095 = vpow.pop %v9094
    %v9096 = vmul.f32 %v8847, 1.442695
    %v9097 = vpow.pop %v9096
    %v9098 = vmul.f32 %v8848, 1.442695
    %v9099 = vpow.pop %v9098
    %v9100 = vmul.f32 %v8849, 1.442695
    %v9101 = vpow.pop %v9100
    %v9102 = vmul.f32 %v8850, 1.442695
    %v9103 = vpow.pop %v9102
    %v9104 = vmul.f32 %v8851, 1.442695
    %v9105 = vpow.pop %v9104
    %v9106 = vmul.f32 %v8852, 1.442695
    %v9107 = vpow.pop %v9106
    %v9108 = vmul.f32 %v8853, 1.442695
    %v9109 = vpow.pop %v9108
    %v9238 = vrot.slane %v8857, 7
    %v9239 = vsel %vm5711, %v9238, %v8855
    %v9240 = vrot.slane %v8859, 6
    %v9241 = vsel %vm5714, %v9240, %v9239
    %v9242 = vrot.slane %v8861, 5
    %v9243 = vsel %vm5717, %v9242, %v9241
    %v9244 = vrot.slane %v8863, 4
    %v9245 = vsel %vm5720, %v9244, %v9243
    %v9246 = vrot.slane %v8865, 3
    %v9247 = vsel %vm5723, %v9246, %v9245
    %v9248 = vrot.slane %v8867, 2
    %v9249 = vsel %vm5726, %v9248, %v9247
    %v9250 = vrot.slane %v8869, 1
    %v9251 = vsel %vm5729, %v9250, %v9249
    %v9252 = vrot.slane %v8873, 7
    %v9253 = vsel %vm5711, %v9252, %v8871
    %v9254 = vrot.slane %v8875, 6
    %v9255 = vsel %vm5714, %v9254, %v9253
    %v9256 = vrot.slane %v8877, 5
    %v9257 = vsel %vm5717, %v9256, %v9255
    %v9258 = vrot.slane %v8879, 4
    %v9259 = vsel %vm5720, %v9258, %v9257
    %v9260 = vrot.slane %v8881, 3
    %v9261 = vsel %vm5723, %v9260, %v9259
    %v9262 = vrot.slane %v8883, 2
    %v9263 = vsel %vm5726, %v9262, %v9261
    %v9264 = vrot.slane %v8885, 1
    %v9265 = vsel %vm5729, %v9264, %v9263
    %v9266 = vrot.slane %v8889, 7
    %v9267 = vsel %vm5711, %v9266, %v8887
    %v9268 = vrot.slane %v8891, 6
    %v9269 = vsel %vm5714, %v9268, %v9267
    %v9270 = vrot.slane %v8893, 5
    %v9271 = vsel %vm5717, %v9270, %v9269
    %v9272 = vrot.slane %v8895, 4
    %v9273 = vsel %vm5720, %v9272, %v9271
    %v9274 = vrot.slane %v8897, 3
    %v9275 = vsel %vm5723, %v9274, %v9273
    %v9276 = vrot.slane %v8899, 2
    %v9277 = vsel %vm5726, %v9276, %v9275
    %v9278 = vrot.slane %v8901, 1
    %v9279 = vsel %vm5729, %v9278, %v9277
    %v9280 = vrot.slane %v8905, 7
    %v9281 = vsel %vm5711, %v9280, %v8903
    %v9282 = vrot.slane %v8907, 6
    %v9283 = vsel %vm5714, %v9282, %v9281
    %v9284 = vrot.slane %v8909, 5
    %v9285 = vsel %vm5717, %v9284, %v9283
    %v9286 = vrot.slane %v8911, 4
    %v9287 = vsel %vm5720, %v9286, %v9285
    %v9288 = vrot.slane %v8913, 3
    %v9289 = vsel %vm5723, %v9288, %v9287
    %v9290 = vrot.slane %v8915, 2
    %v9291 = vsel %vm5726, %v9290, %v9289
    %v9292 = vrot.slane %v8917, 1
    %v9293 = vsel %vm5729, %v9292, %v9291
    %v9294 = vrot.slane %v8921, 7
    %v9295 = vsel %vm5711, %v9294, %v8919
    %v9296 = vrot.slane %v8923, 6
    %v9297 = vsel %vm5714, %v9296, %v9295
    %v9298 = vrot.slane %v8925, 5
    %v9299 = vsel %vm5717, %v9298, %v9297
    %v9300 = vrot.slane %v8927, 4
    %v9301 = vsel %vm5720, %v9300, %v9299
    %v9302 = vrot.slane %v8929, 3
    %v9303 = vsel %vm5723, %v9302, %v9301
    %v9304 = vrot.slane %v8931, 2
    %v9305 = vsel %vm5726, %v9304, %v9303
    %v9306 = vrot.slane %v8933, 1
    %v9307 = vsel %vm5729, %v9306, %v9305
    %v9308 = vrot.slane %v8937, 7
    %v9309 = vsel %vm5711, %v9308, %v8935
    %v9310 = vrot.slane %v8939, 6
    %v9311 = vsel %vm5714, %v9310, %v9309
    %v9312 = vrot.slane %v8941, 5
    %v9313 = vsel %vm5717, %v9312, %v9311
    %v9314 = vrot.slane %v8943, 4
    %v9315 = vsel %vm5720, %v9314, %v9313
    %v9316 = vrot.slane %v8945, 3
    %v9317 = vsel %vm5723, %v9316, %v9315
    %v9318 = vrot.slane %v8947, 2
    %v9319 = vsel %vm5726, %v9318, %v9317
    %v9320 = vrot.slane %v8949, 1
    %v9321 = vsel %vm5729, %v9320, %v9319
    %v9322 = vrot.slane %v8953, 7
    %v9323 = vsel %vm5711, %v9322, %v8951
    %v9324 = vrot.slane %v8955, 6
    %v9325 = vsel %vm5714, %v9324, %v9323
    %v9326 = vrot.slane %v8957, 5
    %v9327 = vsel %vm5717, %v9326, %v9325
    %v9328 = vrot.slane %v8959, 4
    %v9329 = vsel %vm5720, %v9328, %v9327
    %v9330 = vrot.slane %v8961, 3
    %v9331 = vsel %vm5723, %v9330, %v9329
    %v9332 = vrot.slane %v8963, 2
    %v9333 = vsel %vm5726, %v9332, %v9331
    %v9334 = vrot.slane %v8965, 1
    %v9335 = vsel %vm5729, %v9334, %v9333
    %v9336 = vrot.slane %v8969, 7
    %v9337 = vsel %vm5711, %v9336, %v8967
    %v9338 = vrot.slane %v8971, 6
    %v9339 = vsel %vm5714, %v9338, %v9337
    %v9340 = vrot.slane %v8973, 5
    %v9341 = vsel %vm5717, %v9340, %v9339
    %v9342 = vrot.slane %v8975, 4
    %v9343 = vsel %vm5720, %v9342, %v9341
    %v9344 = vrot.slane %v8977, 3
    %v9345 = vsel %vm5723, %v9344, %v9343
    %v9346 = vrot.slane %v8979, 2
    %v9347 = vsel %vm5726, %v9346, %v9345
    %v9348 = vrot.slane %v8981, 1
    %v9349 = vsel %vm5729, %v9348, %v9347
    %v9350 = vrot.slane %v8985, 7
    %v9351 = vsel %vm5711, %v9350, %v8983
    %v9352 = vrot.slane %v8987, 6
    %v9353 = vsel %vm5714, %v9352, %v9351
    %v9354 = vrot.slane %v8989, 5
    %v9355 = vsel %vm5717, %v9354, %v9353
    %v9356 = vrot.slane %v8991, 4
    %v9357 = vsel %vm5720, %v9356, %v9355
    %v9358 = vrot.slane %v8993, 3
    %v9359 = vsel %vm5723, %v9358, %v9357
    %v9360 = vrot.slane %v8995, 2
    %v9361 = vsel %vm5726, %v9360, %v9359
    %v9362 = vrot.slane %v8997, 1
    %v9363 = vsel %vm5729, %v9362, %v9361
    %v9364 = vrot.slane %v9001, 7
    %v9365 = vsel %vm5711, %v9364, %v8999
    %v9366 = vrot.slane %v9003, 6
    %v9367 = vsel %vm5714, %v9366, %v9365
    %v9368 = vrot.slane %v9005, 5
    %v9369 = vsel %vm5717, %v9368, %v9367
    %v9370 = vrot.slane %v9007, 4
    %v9371 = vsel %vm5720, %v9370, %v9369
    %v9372 = vrot.slane %v9009, 3
    %v9373 = vsel %vm5723, %v9372, %v9371
    %v9374 = vrot.slane %v9011, 2
    %v9375 = vsel %vm5726, %v9374, %v9373
    %v9376 = vrot.slane %v9013, 1
    %v9377 = vsel %vm5729, %v9376, %v9375
    %v9378 = vrot.slane %v9017, 7
    %v9379 = vsel %vm5711, %v9378, %v9015
    %v9380 = vrot.slane %v9019, 6
    %v9381 = vsel %vm5714, %v9380, %v9379
    %v9382 = vrot.slane %v9021, 5
    %v9383 = vsel %vm5717, %v9382, %v9381
    %v9384 = vrot.slane %v9023, 4
    %v9385 = vsel %vm5720, %v9384, %v9383
    %v9386 = vrot.slane %v9025, 3
    %v9387 = vsel %vm5723, %v9386, %v9385
    %v9388 = vrot.slane %v9027, 2
    %v9389 = vsel %vm5726, %v9388, %v9387
    %v9390 = vrot.slane %v9029, 1
    %v9391 = vsel %vm5729, %v9390, %v9389
    %v9392 = vrot.slane %v9033, 7
    %v9393 = vsel %vm5711, %v9392, %v9031
    %v9394 = vrot.slane %v9035, 6
    %v9395 = vsel %vm5714, %v9394, %v9393
    %v9396 = vrot.slane %v9037, 5
    %v9397 = vsel %vm5717, %v9396, %v9395
    %v9398 = vrot.slane %v9039, 4
    %v9399 = vsel %vm5720, %v9398, %v9397
    %v9400 = vrot.slane %v9041, 3
    %v9401 = vsel %vm5723, %v9400, %v9399
    %v9402 = vrot.slane %v9043, 2
    %v9403 = vsel %vm5726, %v9402, %v9401
    %v9404 = vrot.slane %v9045, 1
    %v9405 = vsel %vm5729, %v9404, %v9403
    %v9406 = vrot.slane %v9049, 7
    %v9407 = vsel %vm5711, %v9406, %v9047
    %v9408 = vrot.slane %v9051, 6
    %v9409 = vsel %vm5714, %v9408, %v9407
    %v9410 = vrot.slane %v9053, 5
    %v9411 = vsel %vm5717, %v9410, %v9409
    %v9412 = vrot.slane %v9055, 4
    %v9413 = vsel %vm5720, %v9412, %v9411
    %v9414 = vrot.slane %v9057, 3
    %v9415 = vsel %vm5723, %v9414, %v9413
    %v9416 = vrot.slane %v9059, 2
    %v9417 = vsel %vm5726, %v9416, %v9415
    %v9418 = vrot.slane %v9061, 1
    %v9419 = vsel %vm5729, %v9418, %v9417
    %v9420 = vrot.slane %v9065, 7
    %v9421 = vsel %vm5711, %v9420, %v9063
    %v9422 = vrot.slane %v9067, 6
    %v9423 = vsel %vm5714, %v9422, %v9421
    %v9424 = vrot.slane %v9069, 5
    %v9425 = vsel %vm5717, %v9424, %v9423
    %v9426 = vrot.slane %v9071, 4
    %v9427 = vsel %vm5720, %v9426, %v9425
    %v9428 = vrot.slane %v9073, 3
    %v9429 = vsel %vm5723, %v9428, %v9427
    %v9430 = vrot.slane %v9075, 2
    %v9431 = vsel %vm5726, %v9430, %v9429
    %v9432 = vrot.slane %v9077, 1
    %v9433 = vsel %vm5729, %v9432, %v9431
    %v9434 = vrot.slane %v9081, 7
    %v9435 = vsel %vm5711, %v9434, %v9079
    %v9436 = vrot.slane %v9083, 6
    %v9437 = vsel %vm5714, %v9436, %v9435
    %v9438 = vrot.slane %v9085, 5
    %v9439 = vsel %vm5717, %v9438, %v9437
    %v9440 = vrot.slane %v9087, 4
    %v9441 = vsel %vm5720, %v9440, %v9439
    %v9442 = vrot.slane %v9089, 3
    %v9443 = vsel %vm5723, %v9442, %v9441
    %v9444 = vrot.slane %v9091, 2
    %v9445 = vsel %vm5726, %v9444, %v9443
    %v9446 = vrot.slane %v9093, 1
    %v9447 = vsel %vm5729, %v9446, %v9445
    %v9448 = vrot.slane %v9097, 7
    %v9449 = vsel %vm5711, %v9448, %v9095
    %v9450 = vrot.slane %v9099, 6
    %v9451 = vsel %vm5714, %v9450, %v9449
    %v9452 = vrot.slane %v9101, 5
    %v9453 = vsel %vm5717, %v9452, %v9451
    %v9454 = vrot.slane %v9103, 4
    %v9455 = vsel %vm5720, %v9454, %v9453
    %v9456 = vrot.slane %v9105, 3
    %v9457 = vsel %vm5723, %v9456, %v9455
    %v9458 = vrot.slane %v9107, 2
    %v9459 = vsel %vm5726, %v9458, %v9457
    %v9460 = vrot.slane %v9109, 1
    %v9461 = vsel %vm5729, %v9460, %v9459
    %9478 = vadd.xlane.f32.xlu0 %v9251
    %v9479 = vpop.xlane.xlu0 %9478
    %9480 = vadd.xlane.f32.xlu0 %v9265
    %v9481 = vpop.xlane.xlu0 %9480
    %9482 = vadd.xlane.f32.xlu0 %v9279
    %v9483 = vpop.xlane.xlu0 %9482
    %9484 = vadd.xlane.f32.xlu0 %v9293
    %v9485 = vpop.xlane.xlu0 %9484
    %9486 = vadd.xlane.f32.xlu0 %v9307
    %v9487 = vpop.xlane.xlu0 %9486
    %9488 = vadd.xlane.f32.xlu0 %v9321
    %v9489 = vpop.xlane.xlu0 %9488
    %9490 = vadd.xlane.f32.xlu0 %v9335
    %v9491 = vpop.xlane.xlu0 %9490
    %9492 = vadd.xlane.f32.xlu0 %v9349
    %v9493 = vpop.xlane.xlu0 %9492
    %9494 = vadd.xlane.f32.xlu0 %v9363
    %v9495 = vpop.xlane.xlu0 %9494
    %9496 = vadd.xlane.f32.xlu0 %v9377
    %v9497 = vpop.xlane.xlu0 %9496
    %9498 = vadd.xlane.f32.xlu0 %v9391
    %v9499 = vpop.xlane.xlu0 %9498
    %9500 = vadd.xlane.f32.xlu0 %v9405
    %v9501 = vpop.xlane.xlu0 %9500
    %9502 = vadd.xlane.f32.xlu0 %v9419
    %v9503 = vpop.xlane.xlu0 %9502
    %9504 = vadd.xlane.f32.xlu0 %v9433
    %v9505 = vpop.xlane.xlu0 %9504
    %9506 = vadd.xlane.f32.xlu0 %v9447
    %v9507 = vpop.xlane.xlu0 %9506
    %9508 = vadd.xlane.f32.xlu0 %v9461
    %v9509 = vpop.xlane.xlu0 %9508
    %v9526 = vrot.slane %v9479, 1
    %v9527 = vrot.slane %v9479, 2
    %v9528 = vrot.slane %v9479, 3
    %v9529 = vrot.slane %v9479, 4
    %v9530 = vrot.slane %v9479, 5
    %v9531 = vrot.slane %v9479, 6
    %v9532 = vrot.slane %v9479, 7
    %v9533 = vrot.slane %v9481, 1
    %v9534 = vrot.slane %v9481, 2
    %v9535 = vrot.slane %v9481, 3
    %v9536 = vrot.slane %v9481, 4
    %v9537 = vrot.slane %v9481, 5
    %v9538 = vrot.slane %v9481, 6
    %v9539 = vrot.slane %v9481, 7
    %v9540 = vrot.slane %v9483, 1
    %v9541 = vrot.slane %v9483, 2
    %v9542 = vrot.slane %v9483, 3
    %v9543 = vrot.slane %v9483, 4
    %v9544 = vrot.slane %v9483, 5
    %v9545 = vrot.slane %v9483, 6
    %v9546 = vrot.slane %v9483, 7
    %v9547 = vrot.slane %v9485, 1
    %v9548 = vrot.slane %v9485, 2
    %v9549 = vrot.slane %v9485, 3
    %v9550 = vrot.slane %v9485, 4
    %v9551 = vrot.slane %v9485, 5
    %v9552 = vrot.slane %v9485, 6
    %v9553 = vrot.slane %v9485, 7
    %v9554 = vrot.slane %v9487, 1
    %v9555 = vrot.slane %v9487, 2
    %v9556 = vrot.slane %v9487, 3
    %v9557 = vrot.slane %v9487, 4
    %v9558 = vrot.slane %v9487, 5
    %v9559 = vrot.slane %v9487, 6
    %v9560 = vrot.slane %v9487, 7
    %v9561 = vrot.slane %v9489, 1
    %v9562 = vrot.slane %v9489, 2
    %v9563 = vrot.slane %v9489, 3
    %v9564 = vrot.slane %v9489, 4
    %v9565 = vrot.slane %v9489, 5
    %v9566 = vrot.slane %v9489, 6
    %v9567 = vrot.slane %v9489, 7
    %v9568 = vrot.slane %v9491, 1
    %v9569 = vrot.slane %v9491, 2
    %v9570 = vrot.slane %v9491, 3
    %v9571 = vrot.slane %v9491, 4
    %v9572 = vrot.slane %v9491, 5
    %v9573 = vrot.slane %v9491, 6
    %v9574 = vrot.slane %v9491, 7
    %v9575 = vrot.slane %v9493, 1
    %v9576 = vrot.slane %v9493, 2
    %v9577 = vrot.slane %v9493, 3
    %v9578 = vrot.slane %v9493, 4
    %v9579 = vrot.slane %v9493, 5
    %v9580 = vrot.slane %v9493, 6
    %v9581 = vrot.slane %v9493, 7
    %v9582 = vrot.slane %v9495, 1
    %v9583 = vrot.slane %v9495, 2
    %v9584 = vrot.slane %v9495, 3
    %v9585 = vrot.slane %v9495, 4
    %v9586 = vrot.slane %v9495, 5
    %v9587 = vrot.slane %v9495, 6
    %v9588 = vrot.slane %v9495, 7
    %v9589 = vrot.slane %v9497, 1
    %v9590 = vrot.slane %v9497, 2
    %v9591 = vrot.slane %v9497, 3
    %v9592 = vrot.slane %v9497, 4
    %v9593 = vrot.slane %v9497, 5
    %v9594 = vrot.slane %v9497, 6
    %v9595 = vrot.slane %v9497, 7
    %v9596 = vrot.slane %v9499, 1
    %v9597 = vrot.slane %v9499, 2
    %v9598 = vrot.slane %v9499, 3
    %v9599 = vrot.slane %v9499, 4
    %v9600 = vrot.slane %v9499, 5
    %v9601 = vrot.slane %v9499, 6
    %v9602 = vrot.slane %v9499, 7
    %v9603 = vrot.slane %v9501, 1
    %v9604 = vrot.slane %v9501, 2
    %v9605 = vrot.slane %v9501, 3
    %v9606 = vrot.slane %v9501, 4
    %v9607 = vrot.slane %v9501, 5
    %v9608 = vrot.slane %v9501, 6
    %v9609 = vrot.slane %v9501, 7
    %v9610 = vrot.slane %v9503, 1
    %v9611 = vrot.slane %v9503, 2
    %v9612 = vrot.slane %v9503, 3
    %v9613 = vrot.slane %v9503, 4
    %v9614 = vrot.slane %v9503, 5
    %v9615 = vrot.slane %v9503, 6
    %v9616 = vrot.slane %v9503, 7
    %v9617 = vrot.slane %v9505, 1
    %v9618 = vrot.slane %v9505, 2
    %v9619 = vrot.slane %v9505, 3
    %v9620 = vrot.slane %v9505, 4
    %v9621 = vrot.slane %v9505, 5
    %v9622 = vrot.slane %v9505, 6
    %v9623 = vrot.slane %v9505, 7
    %v9624 = vrot.slane %v9507, 1
    %v9625 = vrot.slane %v9507, 2
    %v9626 = vrot.slane %v9507, 3
    %v9627 = vrot.slane %v9507, 4
    %v9628 = vrot.slane %v9507, 5
    %v9629 = vrot.slane %v9507, 6
    %v9630 = vrot.slane %v9507, 7
    %v9631 = vrot.slane %v9509, 1
    %v9632 = vrot.slane %v9509, 2
    %v9633 = vrot.slane %v9509, 3
    %v9634 = vrot.slane %v9509, 4
    %v9635 = vrot.slane %v9509, 5
    %v9636 = vrot.slane %v9509, 6
    %v9637 = vrot.slane %v9509, 7
    %v9766 = vrcp.pop %v9479
    %v9767 = vmul.f32 %v8855, %v9766
    %v9768 = vrcp.pop %v9526
    %v9769 = vmul.f32 %v8857, %v9768
    %v9770 = vrcp.pop %v9527
    %v9771 = vmul.f32 %v8859, %v9770
    %v9772 = vrcp.pop %v9528
    %v9773 = vmul.f32 %v8861, %v9772
    %v9774 = vrcp.pop %v9529
    %v9775 = vmul.f32 %v8863, %v9774
    %v9776 = vrcp.pop %v9530
    %v9777 = vmul.f32 %v8865, %v9776
    %v9778 = vrcp.pop %v9531
    %v9779 = vmul.f32 %v8867, %v9778
    %v9780 = vrcp.pop %v9532
    %v9781 = vmul.f32 %v8869, %v9780
    %v9782 = vrcp.pop %v9481
    %v9783 = vmul.f32 %v8871, %v9782
    %v9784 = vrcp.pop %v9533
    %v9785 = vmul.f32 %v8873, %v9784
    %v9786 = vrcp.pop %v9534
    %v9787 = vmul.f32 %v8875, %v9786
    %v9788 = vrcp.pop %v9535
    %v9789 = vmul.f32 %v8877, %v9788
    %v9790 = vrcp.pop %v9536
    %v9791 = vmul.f32 %v8879, %v9790
    %v9792 = vrcp.pop %v9537
    %v9793 = vmul.f32 %v8881, %v9792
    %v9794 = vrcp.pop %v9538
    %v9795 = vmul.f32 %v8883, %v9794
    %v9796 = vrcp.pop %v9539
    %v9797 = vmul.f32 %v8885, %v9796
    %v9798 = vrcp.pop %v9483
    %v9799 = vmul.f32 %v8887, %v9798
    %v9800 = vrcp.pop %v9540
    %v9801 = vmul.f32 %v8889, %v9800
    %v9802 = vrcp.pop %v9541
    %v9803 = vmul.f32 %v8891, %v9802
    %v9804 = vrcp.pop %v9542
    %v9805 = vmul.f32 %v8893, %v9804
    %v9806 = vrcp.pop %v9543
    %v9807 = vmul.f32 %v8895, %v9806
    %v9808 = vrcp.pop %v9544
    %v9809 = vmul.f32 %v8897, %v9808
    %v9810 = vrcp.pop %v9545
    %v9811 = vmul.f32 %v8899, %v9810
    %v9812 = vrcp.pop %v9546
    %v9813 = vmul.f32 %v8901, %v9812
    %v9814 = vrcp.pop %v9485
    %v9815 = vmul.f32 %v8903, %v9814
    %v9816 = vrcp.pop %v9547
    %v9817 = vmul.f32 %v8905, %v9816
    %v9818 = vrcp.pop %v9548
    %v9819 = vmul.f32 %v8907, %v9818
    %v9820 = vrcp.pop %v9549
    %v9821 = vmul.f32 %v8909, %v9820
    %v9822 = vrcp.pop %v9550
    %v9823 = vmul.f32 %v8911, %v9822
    %v9824 = vrcp.pop %v9551
    %v9825 = vmul.f32 %v8913, %v9824
    %v9826 = vrcp.pop %v9552
    %v9827 = vmul.f32 %v8915, %v9826
    %v9828 = vrcp.pop %v9553
    %v9829 = vmul.f32 %v8917, %v9828
    %v9830 = vrcp.pop %v9487
    %v9831 = vmul.f32 %v8919, %v9830
    %v9832 = vrcp.pop %v9554
    %v9833 = vmul.f32 %v8921, %v9832
    %v9834 = vrcp.pop %v9555
    %v9835 = vmul.f32 %v8923, %v9834
    %v9836 = vrcp.pop %v9556
    %v9837 = vmul.f32 %v8925, %v9836
    %v9838 = vrcp.pop %v9557
    %v9839 = vmul.f32 %v8927, %v9838
    %v9840 = vrcp.pop %v9558
    %v9841 = vmul.f32 %v8929, %v9840
    %v9842 = vrcp.pop %v9559
    %v9843 = vmul.f32 %v8931, %v9842
    %v9844 = vrcp.pop %v9560
    %v9845 = vmul.f32 %v8933, %v9844
    %v9846 = vrcp.pop %v9489
    %v9847 = vmul.f32 %v8935, %v9846
    %v9848 = vrcp.pop %v9561
    %v9849 = vmul.f32 %v8937, %v9848
    %v9850 = vrcp.pop %v9562
    %v9851 = vmul.f32 %v8939, %v9850
    %v9852 = vrcp.pop %v9563
    %v9853 = vmul.f32 %v8941, %v9852
    %v9854 = vrcp.pop %v9564
    %v9855 = vmul.f32 %v8943, %v9854
    %v9856 = vrcp.pop %v9565
    %v9857 = vmul.f32 %v8945, %v9856
    %v9858 = vrcp.pop %v9566
    %v9859 = vmul.f32 %v8947, %v9858
    %v9860 = vrcp.pop %v9567
    %v9861 = vmul.f32 %v8949, %v9860
    %v9862 = vrcp.pop %v9491
    %v9863 = vmul.f32 %v8951, %v9862
    %v9864 = vrcp.pop %v9568
    %v9865 = vmul.f32 %v8953, %v9864
    %v9866 = vrcp.pop %v9569
    %v9867 = vmul.f32 %v8955, %v9866
    %v9868 = vrcp.pop %v9570
    %v9869 = vmul.f32 %v8957, %v9868
    %v9870 = vrcp.pop %v9571
    %v9871 = vmul.f32 %v8959, %v9870
    %v9872 = vrcp.pop %v9572
    %v9873 = vmul.f32 %v8961, %v9872
    %v9874 = vrcp.pop %v9573
    %v9875 = vmul.f32 %v8963, %v9874
    %v9876 = vrcp.pop %v9574
    %v9877 = vmul.f32 %v8965, %v9876
    %v9878 = vrcp.pop %v9493
    %v9879 = vmul.f32 %v8967, %v9878
    %v9880 = vrcp.pop %v9575
    %v9881 = vmul.f32 %v8969, %v9880
    %v9882 = vrcp.pop %v9576
    %v9883 = vmul.f32 %v8971, %v9882
    %v9884 = vrcp.pop %v9577
    %v9885 = vmul.f32 %v8973, %v9884
    %v9886 = vrcp.pop %v9578
    %v9887 = vmul.f32 %v8975, %v9886
    %v9888 = vrcp.pop %v9579
    %v9889 = vmul.f32 %v8977, %v9888
    %v9890 = vrcp.pop %v9580
    %v9891 = vmul.f32 %v8979, %v9890
    %v9892 = vrcp.pop %v9581
    %v9893 = vmul.f32 %v8981, %v9892
    %v9894 = vrcp.pop %v9495
    %v9895 = vmul.f32 %v8983, %v9894
    %v9896 = vrcp.pop %v9582
    %v9897 = vmul.f32 %v8985, %v9896
    %v9898 = vrcp.pop %v9583
    %v9899 = vmul.f32 %v8987, %v9898
    %v9900 = vrcp.pop %v9584
    %v9901 = vmul.f32 %v8989, %v9900
    %v9902 = vrcp.pop %v9585
    %v9903 = vmul.f32 %v8991, %v9902
    %v9904 = vrcp.pop %v9586
    %v9905 = vmul.f32 %v8993, %v9904
    %v9906 = vrcp.pop %v9587
    %v9907 = vmul.f32 %v8995, %v9906
    %v9908 = vrcp.pop %v9588
    %v9909 = vmul.f32 %v8997, %v9908
    %v9910 = vrcp.pop %v9497
    %v9911 = vmul.f32 %v8999, %v9910
    %v9912 = vrcp.pop %v9589
    %v9913 = vmul.f32 %v9001, %v9912
    %v9914 = vrcp.pop %v9590
    %v9915 = vmul.f32 %v9003, %v9914
    %v9916 = vrcp.pop %v9591
    %v9917 = vmul.f32 %v9005, %v9916
    %v9918 = vrcp.pop %v9592
    %v9919 = vmul.f32 %v9007, %v9918
    %v9920 = vrcp.pop %v9593
    %v9921 = vmul.f32 %v9009, %v9920
    %v9922 = vrcp.pop %v9594
    %v9923 = vmul.f32 %v9011, %v9922
    %v9924 = vrcp.pop %v9595
    %v9925 = vmul.f32 %v9013, %v9924
    %v9926 = vrcp.pop %v9499
    %v9927 = vmul.f32 %v9015, %v9926
    %v9928 = vrcp.pop %v9596
    %v9929 = vmul.f32 %v9017, %v9928
    %v9930 = vrcp.pop %v9597
    %v9931 = vmul.f32 %v9019, %v9930
    %v9932 = vrcp.pop %v9598
    %v9933 = vmul.f32 %v9021, %v9932
    %v9934 = vrcp.pop %v9599
    %v9935 = vmul.f32 %v9023, %v9934
    %v9936 = vrcp.pop %v9600
    %v9937 = vmul.f32 %v9025, %v9936
    %v9938 = vrcp.pop %v9601
    %v9939 = vmul.f32 %v9027, %v9938
    %v9940 = vrcp.pop %v9602
    %v9941 = vmul.f32 %v9029, %v9940
    %v9942 = vrcp.pop %v9501
    %v9943 = vmul.f32 %v9031, %v9942
    %v9944 = vrcp.pop %v9603
    %v9945 = vmul.f32 %v9033, %v9944
    %v9946 = vrcp.pop %v9604
    %v9947 = vmul.f32 %v9035, %v9946
    %v9948 = vrcp.pop %v9605
    %v9949 = vmul.f32 %v9037, %v9948
    %v9950 = vrcp.pop %v9606
    %v9951 = vmul.f32 %v9039, %v9950
    %v9952 = vrcp.pop %v9607
    %v9953 = vmul.f32 %v9041, %v9952
    %v9954 = vrcp.pop %v9608
    %v9955 = vmul.f32 %v9043, %v9954
    %v9956 = vrcp.pop %v9609
    %v9957 = vmul.f32 %v9045, %v9956
    %v9958 = vrcp.pop %v9503
    %v9959 = vmul.f32 %v9047, %v9958
    %v9960 = vrcp.pop %v9610
    %v9961 = vmul.f32 %v9049, %v9960
    %v9962 = vrcp.pop %v9611
    %v9963 = vmul.f32 %v9051, %v9962
    %v9964 = vrcp.pop %v9612
    %v9965 = vmul.f32 %v9053, %v9964
    %v9966 = vrcp.pop %v9613
    %v9967 = vmul.f32 %v9055, %v9966
    %v9968 = vrcp.pop %v9614
    %v9969 = vmul.f32 %v9057, %v9968
    %v9970 = vrcp.pop %v9615
    %v9971 = vmul.f32 %v9059, %v9970
    %v9972 = vrcp.pop %v9616
    %v9973 = vmul.f32 %v9061, %v9972
    %v9974 = vrcp.pop %v9505
    %v9975 = vmul.f32 %v9063, %v9974
    %v9976 = vrcp.pop %v9617
    %v9977 = vmul.f32 %v9065, %v9976
    %v9978 = vrcp.pop %v9618
    %v9979 = vmul.f32 %v9067, %v9978
    %v9980 = vrcp.pop %v9619
    %v9981 = vmul.f32 %v9069, %v9980
    %v9982 = vrcp.pop %v9620
    %v9983 = vmul.f32 %v9071, %v9982
    %v9984 = vrcp.pop %v9621
    %v9985 = vmul.f32 %v9073, %v9984
    %v9986 = vrcp.pop %v9622
    %v9987 = vmul.f32 %v9075, %v9986
    %v9988 = vrcp.pop %v9623
    %v9989 = vmul.f32 %v9077, %v9988
    %v9990 = vrcp.pop %v9507
    %v9991 = vmul.f32 %v9079, %v9990
    %v9992 = vrcp.pop %v9624
    %v9993 = vmul.f32 %v9081, %v9992
    %v9994 = vrcp.pop %v9625
    %v9995 = vmul.f32 %v9083, %v9994
    %v9996 = vrcp.pop %v9626
    %v9997 = vmul.f32 %v9085, %v9996
    %v9998 = vrcp.pop %v9627
    %v9999 = vmul.f32 %v9087, %v9998
    %v10000 = vrcp.pop %v9628
    %v10001 = vmul.f32 %v9089, %v10000
    %v10002 = vrcp.pop %v9629
    %v10003 = vmul.f32 %v9091, %v10002
    %v10004 = vrcp.pop %v9630
    %v10005 = vmul.f32 %v9093, %v10004
    %v10006 = vrcp.pop %v9509
    %v10007 = vmul.f32 %v9095, %v10006
    %v10008 = vrcp.pop %v9631
    %v10009 = vmul.f32 %v9097, %v10008
    %v10010 = vrcp.pop %v9632
    %v10011 = vmul.f32 %v9099, %v10010
    %v10012 = vrcp.pop %v9633
    %v10013 = vmul.f32 %v9101, %v10012
    %v10014 = vrcp.pop %v9634
    %v10015 = vmul.f32 %v9103, %v10014
    %v10016 = vrcp.pop %v9635
    %v10017 = vmul.f32 %v9105, %v10016
    %v10018 = vrcp.pop %v9636
    %v10019 = vmul.f32 %v9107, %v10018
    %v10020 = vrcp.pop %v9637
    %v10021 = vmul.f32 %v9109, %v10020
    %v10022 = vadd.f32 %v7541, %v9767
    %v10023 = vadd.f32 %v7542, %v9769
    %v10024 = vadd.f32 %v7543, %v9771
    %v10025 = vadd.f32 %v7544, %v9773
    %v10026 = vadd.f32 %v7545, %v9775
    %v10027 = vadd.f32 %v7546, %v9777
    %v10028 = vadd.f32 %v7547, %v9779
    %v10029 = vadd.f32 %v7548, %v9781
    %v10030 = vadd.f32 %v7549, %v9783
    %v10031 = vadd.f32 %v7550, %v9785
    %v10032 = vadd.f32 %v7551, %v9787
    %v10033 = vadd.f32 %v7552, %v9789
    %v10034 = vadd.f32 %v7553, %v9791
    %v10035 = vadd.f32 %v7554, %v9793
    %v10036 = vadd.f32 %v7555, %v9795
    %v10037 = vadd.f32 %v7556, %v9797
    %v10038 = vadd.f32 %v7557, %v9799
    %v10039 = vadd.f32 %v7558, %v9801
    %v10040 = vadd.f32 %v7559, %v9803
    %v10041 = vadd.f32 %v7560, %v9805
    %v10042 = vadd.f32 %v7561, %v9807
    %v10043 = vadd.f32 %v7562, %v9809
    %v10044 = vadd.f32 %v7563, %v9811
    %v10045 = vadd.f32 %v7564, %v9813
    %v10046 = vadd.f32 %v7565, %v9815
    %v10047 = vadd.f32 %v7566, %v9817
    %v10048 = vadd.f32 %v7567, %v9819
    %v10049 = vadd.f32 %v7568, %v9821
    %v10050 = vadd.f32 %v7569, %v9823
    %v10051 = vadd.f32 %v7570, %v9825
    %v10052 = vadd.f32 %v7571, %v9827
    %v10053 = vadd.f32 %v7572, %v9829
    %v10054 = vadd.f32 %v7573, %v9831
    %v10055 = vadd.f32 %v7574, %v9833
    %v10056 = vadd.f32 %v7575, %v9835
    %v10057 = vadd.f32 %v7576, %v9837
    %v10058 = vadd.f32 %v7577, %v9839
    %v10059 = vadd.f32 %v7578, %v9841
    %v10060 = vadd.f32 %v7579, %v9843
    %v10061 = vadd.f32 %v7580, %v9845
    %v10062 = vadd.f32 %v7581, %v9847
    %v10063 = vadd.f32 %v7582, %v9849
    %v10064 = vadd.f32 %v7583, %v9851
    %v10065 = vadd.f32 %v7584, %v9853
    %v10066 = vadd.f32 %v7585, %v9855
    %v10067 = vadd.f32 %v7586, %v9857
    %v10068 = vadd.f32 %v7587, %v9859
    %v10069 = vadd.f32 %v7588, %v9861
    %v10070 = vadd.f32 %v7589, %v9863
    %v10071 = vadd.f32 %v7590, %v9865
    %v10072 = vadd.f32 %v7591, %v9867
    %v10073 = vadd.f32 %v7592, %v9869
    %v10074 = vadd.f32 %v7593, %v9871
    %v10075 = vadd.f32 %v7594, %v9873
    %v10076 = vadd.f32 %v7595, %v9875
    %v10077 = vadd.f32 %v7596, %v9877
    %v10078 = vadd.f32 %v7597, %v9879
    %v10079 = vadd.f32 %v7598, %v9881
    %v10080 = vadd.f32 %v7599, %v9883
    %v10081 = vadd.f32 %v7600, %v9885
    %v10082 = vadd.f32 %v7601, %v9887
    %v10083 = vadd.f32 %v7602, %v9889
    %v10084 = vadd.f32 %v7603, %v9891
    %v10085 = vadd.f32 %v7604, %v9893
    %v10086 = vadd.f32 %v7605, %v9895
    %v10087 = vadd.f32 %v7606, %v9897
    %v10088 = vadd.f32 %v7607, %v9899
    %v10089 = vadd.f32 %v7608, %v9901
    %v10090 = vadd.f32 %v7609, %v9903
    %v10091 = vadd.f32 %v7610, %v9905
    %v10092 = vadd.f32 %v7611, %v9907
    %v10093 = vadd.f32 %v7612, %v9909
    %v10094 = vadd.f32 %v7613, %v9911
    %v10095 = vadd.f32 %v7614, %v9913
    %v10096 = vadd.f32 %v7615, %v9915
    %v10097 = vadd.f32 %v7616, %v9917
    %v10098 = vadd.f32 %v7617, %v9919
    %v10099 = vadd.f32 %v7618, %v9921
    %v10100 = vadd.f32 %v7619, %v9923
    %v10101 = vadd.f32 %v7620, %v9925
    %v10102 = vadd.f32 %v7621, %v9927
    %v10103 = vadd.f32 %v7622, %v9929
    %v10104 = vadd.f32 %v7623, %v9931
    %v10105 = vadd.f32 %v7624, %v9933
    %v10106 = vadd.f32 %v7625, %v9935
    %v10107 = vadd.f32 %v7626, %v9937
    %v10108 = vadd.f32 %v7627, %v9939
    %v10109 = vadd.f32 %v7628, %v9941
    %v10110 = vadd.f32 %v7629, %v9943
    %v10111 = vadd.f32 %v7630, %v9945
    %v10112 = vadd.f32 %v7631, %v9947
    %v10113 = vadd.f32 %v7632, %v9949
    %v10114 = vadd.f32 %v7633, %v9951
    %v10115 = vadd.f32 %v7634, %v9953
    %v10116 = vadd.f32 %v7635, %v9955
    %v10117 = vadd.f32 %v7636, %v9957
    %v10118 = vadd.f32 %v7637, %v9959
    %v10119 = vadd.f32 %v7638, %v9961
    %v10120 = vadd.f32 %v7639, %v9963
    %v10121 = vadd.f32 %v7640, %v9965
    %v10122 = vadd.f32 %v7641, %v9967
    %v10123 = vadd.f32 %v7642, %v9969
    %v10124 = vadd.f32 %v7643, %v9971
    %v10125 = vadd.f32 %v7644, %v9973
    %v10126 = vadd.f32 %v7645, %v9975
    %v10127 = vadd.f32 %v7646, %v9977
    %v10128 = vadd.f32 %v7647, %v9979
    %v10129 = vadd.f32 %v7648, %v9981
    %v10130 = vadd.f32 %v7649, %v9983
    %v10131 = vadd.f32 %v7650, %v9985
    %v10132 = vadd.f32 %v7651, %v9987
    %v10133 = vadd.f32 %v7652, %v9989
    %v10134 = vadd.f32 %v7653, %v9991
    %v10135 = vadd.f32 %v7654, %v9993
    %v10136 = vadd.f32 %v7655, %v9995
    %v10137 = vadd.f32 %v7656, %v9997
    %v10138 = vadd.f32 %v7657, %v9999
    %v10139 = vadd.f32 %v7658, %v10001
    %v10140 = vadd.f32 %v7659, %v10003
    %v10141 = vadd.f32 %v7660, %v10005
    %v10142 = vadd.f32 %v7661, %v10007
    %v10143 = vadd.f32 %v7662, %v10009
    %v10144 = vadd.f32 %v7663, %v10011
    %v10145 = vadd.f32 %v7664, %v10013
    %v10146 = vadd.f32 %v7665, %v10015
    %v10147 = vadd.f32 %v7666, %v10017
    %v10148 = vadd.f32 %v7667, %v10019
    %v10149 = vadd.f32 %v7668, %v10021
    %s10150 = scalar_lea.vmem %s3, 256
    %v10151 = vld [vmem:[%s10150] sm:$0xff]
    %v10152 = vld [vmem:[%s10150 + $0x8] sm:$0xff]
    %v10153 = vld [vmem:[%s10150 + $0x10] sm:$0xff]
    %v10154 = vld [vmem:[%s10150 + $0x18] sm:$0xff]
    %v10155 = vld [vmem:[%s10150 + $0x20] sm:$0xff]
    %v10156 = vld [vmem:[%s10150 + $0x28] sm:$0xff]
    %v10157 = vld [vmem:[%s10150 + $0x30] sm:$0xff]
    %v10158 = vld [vmem:[%s10150 + $0x38] sm:$0xff]
    %v10159 = vld [vmem:[%s10150 + $0x40] sm:$0xff]
    %v10160 = vld [vmem:[%s10150 + $0x48] sm:$0xff]
    %v10161 = vld [vmem:[%s10150 + $0x50] sm:$0xff]
    %v10162 = vld [vmem:[%s10150 + $0x58] sm:$0xff]
    %v10163 = vld [vmem:[%s10150 + $0x60] sm:$0xff]
    %v10164 = vld [vmem:[%s10150 + $0x68] sm:$0xff]
    %v10165 = vld [vmem:[%s10150 + $0x70] sm:$0xff]
    %v10166 = vld [vmem:[%s10150 + $0x78] sm:$0xff]
    %v10183 = vrot.slane %v10151, 1
    %v10184 = vrot.slane %v10151, 2
    %v10185 = vrot.slane %v10151, 3
    %v10186 = vrot.slane %v10151, 4
    %v10187 = vrot.slane %v10151, 5
    %v10188 = vrot.slane %v10151, 6
    %v10189 = vrot.slane %v10151, 7
    %v10190 = vrot.slane %v10152, 1
    %v10191 = vrot.slane %v10152, 2
    %v10192 = vrot.slane %v10152, 3
    %v10193 = vrot.slane %v10152, 4
    %v10194 = vrot.slane %v10152, 5
    %v10195 = vrot.slane %v10152, 6
    %v10196 = vrot.slane %v10152, 7
    %v10197 = vrot.slane %v10153, 1
    %v10198 = vrot.slane %v10153, 2
    %v10199 = vrot.slane %v10153, 3
    %v10200 = vrot.slane %v10153, 4
    %v10201 = vrot.slane %v10153, 5
    %v10202 = vrot.slane %v10153, 6
    %v10203 = vrot.slane %v10153, 7
    %v10204 = vrot.slane %v10154, 1
    %v10205 = vrot.slane %v10154, 2
    %v10206 = vrot.slane %v10154, 3
    %v10207 = vrot.slane %v10154, 4
    %v10208 = vrot.slane %v10154, 5
    %v10209 = vrot.slane %v10154, 6
    %v10210 = vrot.slane %v10154, 7
    %v10211 = vrot.slane %v10155, 1
    %v10212 = vrot.slane %v10155, 2
    %v10213 = vrot.slane %v10155, 3
    %v10214 = vrot.slane %v10155, 4
    %v10215 = vrot.slane %v10155, 5
    %v10216 = vrot.slane %v10155, 6
    %v10217 = vrot.slane %v10155, 7
    %v10218 = vrot.slane %v10156, 1
    %v10219 = vrot.slane %v10156, 2
    %v10220 = vrot.slane %v10156, 3
    %v10221 = vrot.slane %v10156, 4
    %v10222 = vrot.slane %v10156, 5
    %v10223 = vrot.slane %v10156, 6
    %v10224 = vrot.slane %v10156, 7
    %v10225 = vrot.slane %v10157, 1
    %v10226 = vrot.slane %v10157, 2
    %v10227 = vrot.slane %v10157, 3
    %v10228 = vrot.slane %v10157, 4
    %v10229 = vrot.slane %v10157, 5
    %v10230 = vrot.slane %v10157, 6
    %v10231 = vrot.slane %v10157, 7
    %v10232 = vrot.slane %v10158, 1
    %v10233 = vrot.slane %v10158, 2
    %v10234 = vrot.slane %v10158, 3
    %v10235 = vrot.slane %v10158, 4
    %v10236 = vrot.slane %v10158, 5
    %v10237 = vrot.slane %v10158, 6
    %v10238 = vrot.slane %v10158, 7
    %v10239 = vrot.slane %v10159, 1
    %v10240 = vrot.slane %v10159, 2
    %v10241 = vrot.slane %v10159, 3
    %v10242 = vrot.slane %v10159, 4
    %v10243 = vrot.slane %v10159, 5
    %v10244 = vrot.slane %v10159, 6
    %v10245 = vrot.slane %v10159, 7
    %v10246 = vrot.slane %v10160, 1
    %v10247 = vrot.slane %v10160, 2
    %v10248 = vrot.slane %v10160, 3
    %v10249 = vrot.slane %v10160, 4
    %v10250 = vrot.slane %v10160, 5
    %v10251 = vrot.slane %v10160, 6
    %v10252 = vrot.slane %v10160, 7
    %v10253 = vrot.slane %v10161, 1
    %v10254 = vrot.slane %v10161, 2
    %v10255 = vrot.slane %v10161, 3
    %v10256 = vrot.slane %v10161, 4
    %v10257 = vrot.slane %v10161, 5
    %v10258 = vrot.slane %v10161, 6
    %v10259 = vrot.slane %v10161, 7
    %v10260 = vrot.slane %v10162, 1
    %v10261 = vrot.slane %v10162, 2
    %v10262 = vrot.slane %v10162, 3
    %v10263 = vrot.slane %v10162, 4
    %v10264 = vrot.slane %v10162, 5
    %v10265 = vrot.slane %v10162, 6
    %v10266 = vrot.slane %v10162, 7
    %v10267 = vrot.slane %v10163, 1
    %v10268 = vrot.slane %v10163, 2
    %v10269 = vrot.slane %v10163, 3
    %v10270 = vrot.slane %v10163, 4
    %v10271 = vrot.slane %v10163, 5
    %v10272 = vrot.slane %v10163, 6
    %v10273 = vrot.slane %v10163, 7
    %v10274 = vrot.slane %v10164, 1
    %v10275 = vrot.slane %v10164, 2
    %v10276 = vrot.slane %v10164, 3
    %v10277 = vrot.slane %v10164, 4
    %v10278 = vrot.slane %v10164, 5
    %v10279 = vrot.slane %v10164, 6
    %v10280 = vrot.slane %v10164, 7
    %v10281 = vrot.slane %v10165, 1
    %v10282 = vrot.slane %v10165, 2
    %v10283 = vrot.slane %v10165, 3
    %v10284 = vrot.slane %v10165, 4
    %v10285 = vrot.slane %v10165, 5
    %v10286 = vrot.slane %v10165, 6
    %v10287 = vrot.slane %v10165, 7
    %v10288 = vrot.slane %v10166, 1
    %v10289 = vrot.slane %v10166, 2
    %v10290 = vrot.slane %v10166, 3
    %v10291 = vrot.slane %v10166, 4
    %v10292 = vrot.slane %v10166, 5
    %v10293 = vrot.slane %v10166, 6
    %v10294 = vrot.slane %v10166, 7
    %v10423 = vadd.f32 %v4038, %v10151
    %v10424 = vadd.f32 %v4047, %v10183
    %v10425 = vadd.f32 %v4056, %v10184
    %v10426 = vadd.f32 %v4065, %v10185
    %v10427 = vadd.f32 %v4074, %v10186
    %v10428 = vadd.f32 %v4083, %v10187
    %v10429 = vadd.f32 %v4092, %v10188
    %v10430 = vadd.f32 %v4101, %v10189
    %v10431 = vadd.f32 %v4110, %v10152
    %v10432 = vadd.f32 %v4119, %v10190
    %v10433 = vadd.f32 %v4128, %v10191
    %v10434 = vadd.f32 %v4137, %v10192
    %v10435 = vadd.f32 %v4146, %v10193
    %v10436 = vadd.f32 %v4155, %v10194
    %v10437 = vadd.f32 %v4164, %v10195
    %v10438 = vadd.f32 %v4173, %v10196
    %v10439 = vadd.f32 %v4182, %v10153
    %v10440 = vadd.f32 %v4191, %v10197
    %v10441 = vadd.f32 %v4200, %v10198
    %v10442 = vadd.f32 %v4209, %v10199
    %v10443 = vadd.f32 %v4218, %v10200
    %v10444 = vadd.f32 %v4227, %v10201
    %v10445 = vadd.f32 %v4236, %v10202
    %v10446 = vadd.f32 %v4245, %v10203
    %v10447 = vadd.f32 %v4254, %v10154
    %v10448 = vadd.f32 %v4263, %v10204
    %v10449 = vadd.f32 %v4272, %v10205
    %v10450 = vadd.f32 %v4281, %v10206
    %v10451 = vadd.f32 %v4290, %v10207
    %v10452 = vadd.f32 %v4299, %v10208
    %v10453 = vadd.f32 %v4308, %v10209
    %v10454 = vadd.f32 %v4317, %v10210
    %v10455 = vadd.f32 %v4326, %v10155
    %v10456 = vadd.f32 %v4335, %v10211
    %v10457 = vadd.f32 %v4344, %v10212
    %v10458 = vadd.f32 %v4353, %v10213
    %v10459 = vadd.f32 %v4362, %v10214
    %v10460 = vadd.f32 %v4371, %v10215
    %v10461 = vadd.f32 %v4380, %v10216
    %v10462 = vadd.f32 %v4389, %v10217
    %v10463 = vadd.f32 %v4398, %v10156
    %v10464 = vadd.f32 %v4407, %v10218
    %v10465 = vadd.f32 %v4416, %v10219
    %v10466 = vadd.f32 %v4425, %v10220
    %v10467 = vadd.f32 %v4434, %v10221
    %v10468 = vadd.f32 %v4443, %v10222
    %v10469 = vadd.f32 %v4452, %v10223
    %v10470 = vadd.f32 %v4461, %v10224
    %v10471 = vadd.f32 %v4470, %v10157
    %v10472 = vadd.f32 %v4479, %v10225
    %v10473 = vadd.f32 %v4488, %v10226
    %v10474 = vadd.f32 %v4497, %v10227
    %v10475 = vadd.f32 %v4506, %v10228
    %v10476 = vadd.f32 %v4515, %v10229
    %v10477 = vadd.f32 %v4524, %v10230
    %v10478 = vadd.f32 %v4533, %v10231
    %v10479 = vadd.f32 %v4542, %v10158
    %v10480 = vadd.f32 %v4551, %v10232
    %v10481 = vadd.f32 %v4560, %v10233
    %v10482 = vadd.f32 %v4569, %v10234
    %v10483 = vadd.f32 %v4578, %v10235
    %v10484 = vadd.f32 %v4587, %v10236
    %v10485 = vadd.f32 %v4596, %v10237
    %v10486 = vadd.f32 %v4605, %v10238
    %v10487 = vadd.f32 %v4614, %v10159
    %v10488 = vadd.f32 %v4623, %v10239
    %v10489 = vadd.f32 %v4632, %v10240
    %v10490 = vadd.f32 %v4641, %v10241
    %v10491 = vadd.f32 %v4650, %v10242
    %v10492 = vadd.f32 %v4659, %v10243
    %v10493 = vadd.f32 %v4668, %v10244
    %v10494 = vadd.f32 %v4677, %v10245
    %v10495 = vadd.f32 %v4686, %v10160
    %v10496 = vadd.f32 %v4695, %v10246
    %v10497 = vadd.f32 %v4704, %v10247
    %v10498 = vadd.f32 %v4713, %v10248
    %v10499 = vadd.f32 %v4722, %v10249
    %v10500 = vadd.f32 %v4731, %v10250
    %v10501 = vadd.f32 %v4740, %v10251
    %v10502 = vadd.f32 %v4749, %v10252
    %v10503 = vadd.f32 %v4758, %v10161
    %v10504 = vadd.f32 %v4767, %v10253
    %v10505 = vadd.f32 %v4776, %v10254
    %v10506 = vadd.f32 %v4785, %v10255
    %v10507 = vadd.f32 %v4794, %v10256
    %v10508 = vadd.f32 %v4803, %v10257
    %v10509 = vadd.f32 %v4812, %v10258
    %v10510 = vadd.f32 %v4821, %v10259
    %v10511 = vadd.f32 %v4830, %v10162
    %v10512 = vadd.f32 %v4839, %v10260
    %v10513 = vadd.f32 %v4848, %v10261
    %v10514 = vadd.f32 %v4857, %v10262
    %v10515 = vadd.f32 %v4866, %v10263
    %v10516 = vadd.f32 %v4875, %v10264
    %v10517 = vadd.f32 %v4884, %v10265
    %v10518 = vadd.f32 %v4893, %v10266
    %v10519 = vadd.f32 %v4902, %v10163
    %v10520 = vadd.f32 %v4911, %v10267
    %v10521 = vadd.f32 %v4920, %v10268
    %v10522 = vadd.f32 %v4929, %v10269
    %v10523 = vadd.f32 %v4938, %v10270
    %v10524 = vadd.f32 %v4947, %v10271
    %v10525 = vadd.f32 %v4956, %v10272
    %v10526 = vadd.f32 %v4965, %v10273
    %v10527 = vadd.f32 %v4974, %v10164
    %v10528 = vadd.f32 %v4983, %v10274
    %v10529 = vadd.f32 %v4992, %v10275
    %v10530 = vadd.f32 %v5001, %v10276
    %v10531 = vadd.f32 %v5010, %v10277
    %v10532 = vadd.f32 %v5019, %v10278
    %v10533 = vadd.f32 %v5028, %v10279
    %v10534 = vadd.f32 %v5037, %v10280
    %v10535 = vadd.f32 %v5046, %v10165
    %v10536 = vadd.f32 %v5055, %v10281
    %v10537 = vadd.f32 %v5064, %v10282
    %v10538 = vadd.f32 %v5073, %v10283
    %v10539 = vadd.f32 %v5082, %v10284
    %v10540 = vadd.f32 %v5091, %v10285
    %v10541 = vadd.f32 %v5100, %v10286
    %v10542 = vadd.f32 %v5109, %v10287
    %v10543 = vadd.f32 %v5118, %v10166
    %v10544 = vadd.f32 %v5127, %v10288
    %v10545 = vadd.f32 %v5136, %v10289
    %v10546 = vadd.f32 %v5145, %v10290
    %v10547 = vadd.f32 %v5154, %v10291
    %v10548 = vadd.f32 %v5163, %v10292
    %v10549 = vadd.f32 %v5172, %v10293
    %v10550 = vadd.f32 %v5181, %v10294
    %v10679 = vrot.slane %v10424, 7
    %v10680 = vsel %vm5711, %v10679, %v10423
    %v10681 = vrot.slane %v10425, 6
    %v10682 = vsel %vm5714, %v10681, %v10680
    %v10683 = vrot.slane %v10426, 5
    %v10684 = vsel %vm5717, %v10683, %v10682
    %v10685 = vrot.slane %v10427, 4
    %v10686 = vsel %vm5720, %v10685, %v10684
    %v10687 = vrot.slane %v10428, 3
    %v10688 = vsel %vm5723, %v10687, %v10686
    %v10689 = vrot.slane %v10429, 2
    %v10690 = vsel %vm5726, %v10689, %v10688
    %v10691 = vrot.slane %v10430, 1
    %v10692 = vsel %vm5729, %v10691, %v10690
    %v10693 = vrot.slane %v10432, 7
    %v10694 = vsel %vm5711, %v10693, %v10431
    %v10695 = vrot.slane %v10433, 6
    %v10696 = vsel %vm5714, %v10695, %v10694
    %v10697 = vrot.slane %v10434, 5
    %v10698 = vsel %vm5717, %v10697, %v10696
    %v10699 = vrot.slane %v10435, 4
    %v10700 = vsel %vm5720, %v10699, %v10698
    %v10701 = vrot.slane %v10436, 3
    %v10702 = vsel %vm5723, %v10701, %v10700
    %v10703 = vrot.slane %v10437, 2
    %v10704 = vsel %vm5726, %v10703, %v10702
    %v10705 = vrot.slane %v10438, 1
    %v10706 = vsel %vm5729, %v10705, %v10704
    %v10707 = vrot.slane %v10440, 7
    %v10708 = vsel %vm5711, %v10707, %v10439
    %v10709 = vrot.slane %v10441, 6
    %v10710 = vsel %vm5714, %v10709, %v10708
    %v10711 = vrot.slane %v10442, 5
    %v10712 = vsel %vm5717, %v10711, %v10710
    %v10713 = vrot.slane %v10443, 4
    %v10714 = vsel %vm5720, %v10713, %v10712
    %v10715 = vrot.slane %v10444, 3
    %v10716 = vsel %vm5723, %v10715, %v10714
    %v10717 = vrot.slane %v10445, 2
    %v10718 = vsel %vm5726, %v10717, %v10716
    %v10719 = vrot.slane %v10446, 1
    %v10720 = vsel %vm5729, %v10719, %v10718
    %v10721 = vrot.slane %v10448, 7
    %v10722 = vsel %vm5711, %v10721, %v10447
    %v10723 = vrot.slane %v10449, 6
    %v10724 = vsel %vm5714, %v10723, %v10722
    %v10725 = vrot.slane %v10450, 5
    %v10726 = vsel %vm5717, %v10725, %v10724
    %v10727 = vrot.slane %v10451, 4
    %v10728 = vsel %vm5720, %v10727, %v10726
    %v10729 = vrot.slane %v10452, 3
    %v10730 = vsel %vm5723, %v10729, %v10728
    %v10731 = vrot.slane %v10453, 2
    %v10732 = vsel %vm5726, %v10731, %v10730
    %v10733 = vrot.slane %v10454, 1
    %v10734 = vsel %vm5729, %v10733, %v10732
    %v10735 = vrot.slane %v10456, 7
    %v10736 = vsel %vm5711, %v10735, %v10455
    %v10737 = vrot.slane %v10457, 6
    %v10738 = vsel %vm5714, %v10737, %v10736
    %v10739 = vrot.slane %v10458, 5
    %v10740 = vsel %vm5717, %v10739, %v10738
    %v10741 = vrot.slane %v10459, 4
    %v10742 = vsel %vm5720, %v10741, %v10740
    %v10743 = vrot.slane %v10460, 3
    %v10744 = vsel %vm5723, %v10743, %v10742
    %v10745 = vrot.slane %v10461, 2
    %v10746 = vsel %vm5726, %v10745, %v10744
    %v10747 = vrot.slane %v10462, 1
    %v10748 = vsel %vm5729, %v10747, %v10746
    %v10749 = vrot.slane %v10464, 7
    %v10750 = vsel %vm5711, %v10749, %v10463
    %v10751 = vrot.slane %v10465, 6
    %v10752 = vsel %vm5714, %v10751, %v10750
    %v10753 = vrot.slane %v10466, 5
    %v10754 = vsel %vm5717, %v10753, %v10752
    %v10755 = vrot.slane %v10467, 4
    %v10756 = vsel %vm5720, %v10755, %v10754
    %v10757 = vrot.slane %v10468, 3
    %v10758 = vsel %vm5723, %v10757, %v10756
    %v10759 = vrot.slane %v10469, 2
    %v10760 = vsel %vm5726, %v10759, %v10758
    %v10761 = vrot.slane %v10470, 1
    %v10762 = vsel %vm5729, %v10761, %v10760
    %v10763 = vrot.slane %v10472, 7
    %v10764 = vsel %vm5711, %v10763, %v10471
    %v10765 = vrot.slane %v10473, 6
    %v10766 = vsel %vm5714, %v10765, %v10764
    %v10767 = vrot.slane %v10474, 5
    %v10768 = vsel %vm5717, %v10767, %v10766
    %v10769 = vrot.slane %v10475, 4
    %v10770 = vsel %vm5720, %v10769, %v10768
    %v10771 = vrot.slane %v10476, 3
    %v10772 = vsel %vm5723, %v10771, %v10770
    %v10773 = vrot.slane %v10477, 2
    %v10774 = vsel %vm5726, %v10773, %v10772
    %v10775 = vrot.slane %v10478, 1
    %v10776 = vsel %vm5729, %v10775, %v10774
    %v10777 = vrot.slane %v10480, 7
    %v10778 = vsel %vm5711, %v10777, %v10479
    %v10779 = vrot.slane %v10481, 6
    %v10780 = vsel %vm5714, %v10779, %v10778
    %v10781 = vrot.slane %v10482, 5
    %v10782 = vsel %vm5717, %v10781, %v10780
    %v10783 = vrot.slane %v10483, 4
    %v10784 = vsel %vm5720, %v10783, %v10782
    %v10785 = vrot.slane %v10484, 3
    %v10786 = vsel %vm5723, %v10785, %v10784
    %v10787 = vrot.slane %v10485, 2
    %v10788 = vsel %vm5726, %v10787, %v10786
    %v10789 = vrot.slane %v10486, 1
    %v10790 = vsel %vm5729, %v10789, %v10788
    %v10791 = vrot.slane %v10488, 7
    %v10792 = vsel %vm5711, %v10791, %v10487
    %v10793 = vrot.slane %v10489, 6
    %v10794 = vsel %vm5714, %v10793, %v10792
    %v10795 = vrot.slane %v10490, 5
    %v10796 = vsel %vm5717, %v10795, %v10794
    %v10797 = vrot.slane %v10491, 4
    %v10798 = vsel %vm5720, %v10797, %v10796
    %v10799 = vrot.slane %v10492, 3
    %v10800 = vsel %vm5723, %v10799, %v10798
    %v10801 = vrot.slane %v10493, 2
    %v10802 = vsel %vm5726, %v10801, %v10800
    %v10803 = vrot.slane %v10494, 1
    %v10804 = vsel %vm5729, %v10803, %v10802
    %v10805 = vrot.slane %v10496, 7
    %v10806 = vsel %vm5711, %v10805, %v10495
    %v10807 = vrot.slane %v10497, 6
    %v10808 = vsel %vm5714, %v10807, %v10806
    %v10809 = vrot.slane %v10498, 5
    %v10810 = vsel %vm5717, %v10809, %v10808
    %v10811 = vrot.slane %v10499, 4
    %v10812 = vsel %vm5720, %v10811, %v10810
    %v10813 = vrot.slane %v10500, 3
    %v10814 = vsel %vm5723, %v10813, %v10812
    %v10815 = vrot.slane %v10501, 2
    %v10816 = vsel %vm5726, %v10815, %v10814
    %v10817 = vrot.slane %v10502, 1
    %v10818 = vsel %vm5729, %v10817, %v10816
    %v10819 = vrot.slane %v10504, 7
    %v10820 = vsel %vm5711, %v10819, %v10503
    %v10821 = vrot.slane %v10505, 6
    %v10822 = vsel %vm5714, %v10821, %v10820
    %v10823 = vrot.slane %v10506, 5
    %v10824 = vsel %vm5717, %v10823, %v10822
    %v10825 = vrot.slane %v10507, 4
    %v10826 = vsel %vm5720, %v10825, %v10824
    %v10827 = vrot.slane %v10508, 3
    %v10828 = vsel %vm5723, %v10827, %v10826
    %v10829 = vrot.slane %v10509, 2
    %v10830 = vsel %vm5726, %v10829, %v10828
    %v10831 = vrot.slane %v10510, 1
    %v10832 = vsel %vm5729, %v10831, %v10830
    %v10833 = vrot.slane %v10512, 7
    %v10834 = vsel %vm5711, %v10833, %v10511
    %v10835 = vrot.slane %v10513, 6
    %v10836 = vsel %vm5714, %v10835, %v10834
    %v10837 = vrot.slane %v10514, 5
    %v10838 = vsel %vm5717, %v10837, %v10836
    %v10839 = vrot.slane %v10515, 4
    %v10840 = vsel %vm5720, %v10839, %v10838
    %v10841 = vrot.slane %v10516, 3
    %v10842 = vsel %vm5723, %v10841, %v10840
    %v10843 = vrot.slane %v10517, 2
    %v10844 = vsel %vm5726, %v10843, %v10842
    %v10845 = vrot.slane %v10518, 1
    %v10846 = vsel %vm5729, %v10845, %v10844
    %v10847 = vrot.slane %v10520, 7
    %v10848 = vsel %vm5711, %v10847, %v10519
    %v10849 = vrot.slane %v10521, 6
    %v10850 = vsel %vm5714, %v10849, %v10848
    %v10851 = vrot.slane %v10522, 5
    %v10852 = vsel %vm5717, %v10851, %v10850
    %v10853 = vrot.slane %v10523, 4
    %v10854 = vsel %vm5720, %v10853, %v10852
    %v10855 = vrot.slane %v10524, 3
    %v10856 = vsel %vm5723, %v10855, %v10854
    %v10857 = vrot.slane %v10525, 2
    %v10858 = vsel %vm5726, %v10857, %v10856
    %v10859 = vrot.slane %v10526, 1
    %v10860 = vsel %vm5729, %v10859, %v10858
    %v10861 = vrot.slane %v10528, 7
    %v10862 = vsel %vm5711, %v10861, %v10527
    %v10863 = vrot.slane %v10529, 6
    %v10864 = vsel %vm5714, %v10863, %v10862
    %v10865 = vrot.slane %v10530, 5
    %v10866 = vsel %vm5717, %v10865, %v10864
    %v10867 = vrot.slane %v10531, 4
    %v10868 = vsel %vm5720, %v10867, %v10866
    %v10869 = vrot.slane %v10532, 3
    %v10870 = vsel %vm5723, %v10869, %v10868
    %v10871 = vrot.slane %v10533, 2
    %v10872 = vsel %vm5726, %v10871, %v10870
    %v10873 = vrot.slane %v10534, 1
    %v10874 = vsel %vm5729, %v10873, %v10872
    %v10875 = vrot.slane %v10536, 7
    %v10876 = vsel %vm5711, %v10875, %v10535
    %v10877 = vrot.slane %v10537, 6
    %v10878 = vsel %vm5714, %v10877, %v10876
    %v10879 = vrot.slane %v10538, 5
    %v10880 = vsel %vm5717, %v10879, %v10878
    %v10881 = vrot.slane %v10539, 4
    %v10882 = vsel %vm5720, %v10881, %v10880
    %v10883 = vrot.slane %v10540, 3
    %v10884 = vsel %vm5723, %v10883, %v10882
    %v10885 = vrot.slane %v10541, 2
    %v10886 = vsel %vm5726, %v10885, %v10884
    %v10887 = vrot.slane %v10542, 1
    %v10888 = vsel %vm5729, %v10887, %v10886
    %v10889 = vrot.slane %v10544, 7
    %v10890 = vsel %vm5711, %v10889, %v10543
    %v10891 = vrot.slane %v10545, 6
    %v10892 = vsel %vm5714, %v10891, %v10890
    %v10893 = vrot.slane %v10546, 5
    %v10894 = vsel %vm5717, %v10893, %v10892
    %v10895 = vrot.slane %v10547, 4
    %v10896 = vsel %vm5720, %v10895, %v10894
    %v10897 = vrot.slane %v10548, 3
    %v10898 = vsel %vm5723, %v10897, %v10896
    %v10899 = vrot.slane %v10549, 2
    %v10900 = vsel %vm5726, %v10899, %v10898
    %v10901 = vrot.slane %v10550, 1
    %v10902 = vsel %vm5729, %v10901, %v10900
    %10919 = vmax.xlane.f32.xlu0 %v10692
    %v10920 = vpop.xlane.xlu0 %10919
    %10921 = vmax.xlane.f32.xlu0 %v10706
    %v10922 = vpop.xlane.xlu0 %10921
    %10923 = vmax.xlane.f32.xlu0 %v10720
    %v10924 = vpop.xlane.xlu0 %10923
    %10925 = vmax.xlane.f32.xlu0 %v10734
    %v10926 = vpop.xlane.xlu0 %10925
    %10927 = vmax.xlane.f32.xlu0 %v10748
    %v10928 = vpop.xlane.xlu0 %10927
    %10929 = vmax.xlane.f32.xlu0 %v10762
    %v10930 = vpop.xlane.xlu0 %10929
    %10931 = vmax.xlane.f32.xlu0 %v10776
    %v10932 = vpop.xlane.xlu0 %10931
    %10933 = vmax.xlane.f32.xlu0 %v10790
    %v10934 = vpop.xlane.xlu0 %10933
    %10935 = vmax.xlane.f32.xlu0 %v10804
    %v10936 = vpop.xlane.xlu0 %10935
    %10937 = vmax.xlane.f32.xlu0 %v10818
    %v10938 = vpop.xlane.xlu0 %10937
    %10939 = vmax.xlane.f32.xlu0 %v10832
    %v10940 = vpop.xlane.xlu0 %10939
    %10941 = vmax.xlane.f32.xlu0 %v10846
    %v10942 = vpop.xlane.xlu0 %10941
    %10943 = vmax.xlane.f32.xlu0 %v10860
    %v10944 = vpop.xlane.xlu0 %10943
    %10945 = vmax.xlane.f32.xlu0 %v10874
    %v10946 = vpop.xlane.xlu0 %10945
    %10947 = vmax.xlane.f32.xlu0 %v10888
    %v10948 = vpop.xlane.xlu0 %10947
    %10949 = vmax.xlane.f32.xlu0 %v10902
    %v10950 = vpop.xlane.xlu0 %10949
    %v10967 = vrot.slane %v10920, 1
    %v10968 = vrot.slane %v10920, 2
    %v10969 = vrot.slane %v10920, 3
    %v10970 = vrot.slane %v10920, 4
    %v10971 = vrot.slane %v10920, 5
    %v10972 = vrot.slane %v10920, 6
    %v10973 = vrot.slane %v10920, 7
    %v10974 = vrot.slane %v10922, 1
    %v10975 = vrot.slane %v10922, 2
    %v10976 = vrot.slane %v10922, 3
    %v10977 = vrot.slane %v10922, 4
    %v10978 = vrot.slane %v10922, 5
    %v10979 = vrot.slane %v10922, 6
    %v10980 = vrot.slane %v10922, 7
    %v10981 = vrot.slane %v10924, 1
    %v10982 = vrot.slane %v10924, 2
    %v10983 = vrot.slane %v10924, 3
    %v10984 = vrot.slane %v10924, 4
    %v10985 = vrot.slane %v10924, 5
    %v10986 = vrot.slane %v10924, 6
    %v10987 = vrot.slane %v10924, 7
    %v10988 = vrot.slane %v10926, 1
    %v10989 = vrot.slane %v10926, 2
    %v10990 = vrot.slane %v10926, 3
    %v10991 = vrot.slane %v10926, 4
    %v10992 = vrot.slane %v10926, 5
    %v10993 = vrot.slane %v10926, 6
    %v10994 = vrot.slane %v10926, 7
    %v10995 = vrot.slane %v10928, 1
    %v10996 = vrot.slane %v10928, 2
    %v10997 = vrot.slane %v10928, 3
    %v10998 = vrot.slane %v10928, 4
    %v10999 = vrot.slane %v10928, 5
    %v11000 = vrot.slane %v10928, 6
    %v11001 = vrot.slane %v10928, 7
    %v11002 = vrot.slane %v10930, 1
    %v11003 = vrot.slane %v10930, 2
    %v11004 = vrot.slane %v10930, 3
    %v11005 = vrot.slane %v10930, 4
    %v11006 = vrot.slane %v10930, 5
    %v11007 = vrot.slane %v10930, 6
    %v11008 = vrot.slane %v10930, 7
    %v11009 = vrot.slane %v10932, 1
    %v11010 = vrot.slane %v10932, 2
    %v11011 = vrot.slane %v10932, 3
    %v11012 = vrot.slane %v10932, 4
    %v11013 = vrot.slane %v10932, 5
    %v11014 = vrot.slane %v10932, 6
    %v11015 = vrot.slane %v10932, 7
    %v11016 = vrot.slane %v10934, 1
    %v11017 = vrot.slane %v10934, 2
    %v11018 = vrot.slane %v10934, 3
    %v11019 = vrot.slane %v10934, 4
    %v11020 = vrot.slane %v10934, 5
    %v11021 = vrot.slane %v10934, 6
    %v11022 = vrot.slane %v10934, 7
    %v11023 = vrot.slane %v10936, 1
    %v11024 = vrot.slane %v10936, 2
    %v11025 = vrot.slane %v10936, 3
    %v11026 = vrot.slane %v10936, 4
    %v11027 = vrot.slane %v10936, 5
    %v11028 = vrot.slane %v10936, 6
    %v11029 = vrot.slane %v10936, 7
    %v11030 = vrot.slane %v10938, 1
    %v11031 = vrot.slane %v10938, 2
    %v11032 = vrot.slane %v10938, 3
    %v11033 = vrot.slane %v10938, 4
    %v11034 = vrot.slane %v10938, 5
    %v11035 = vrot.slane %v10938, 6
    %v11036 = vrot.slane %v10938, 7
    %v11037 = vrot.slane %v10940, 1
    %v11038 = vrot.slane %v10940, 2
    %v11039 = vrot.slane %v10940, 3
    %v11040 = vrot.slane %v10940, 4
    %v11041 = vrot.slane %v10940, 5
    %v11042 = vrot.slane %v10940, 6
    %v11043 = vrot.slane %v10940, 7
    %v11044 = vrot.slane %v10942, 1
    %v11045 = vrot.slane %v10942, 2
    %v11046 = vrot.slane %v10942, 3
    %v11047 = vrot.slane %v10942, 4
    %v11048 = vrot.slane %v10942, 5
    %v11049 = vrot.slane %v10942, 6
    %v11050 = vrot.slane %v10942, 7
    %v11051 = vrot.slane %v10944, 1
    %v11052 = vrot.slane %v10944, 2
    %v11053 = vrot.slane %v10944, 3
    %v11054 = vrot.slane %v10944, 4
    %v11055 = vrot.slane %v10944, 5
    %v11056 = vrot.slane %v10944, 6
    %v11057 = vrot.slane %v10944, 7
    %v11058 = vrot.slane %v10946, 1
    %v11059 = vrot.slane %v10946, 2
    %v11060 = vrot.slane %v10946, 3
    %v11061 = vrot.slane %v10946, 4
    %v11062 = vrot.slane %v10946, 5
    %v11063 = vrot.slane %v10946, 6
    %v11064 = vrot.slane %v10946, 7
    %v11065 = vrot.slane %v10948, 1
    %v11066 = vrot.slane %v10948, 2
    %v11067 = vrot.slane %v10948, 3
    %v11068 = vrot.slane %v10948, 4
    %v11069 = vrot.slane %v10948, 5
    %v11070 = vrot.slane %v10948, 6
    %v11071 = vrot.slane %v10948, 7
    %v11072 = vrot.slane %v10950, 1
    %v11073 = vrot.slane %v10950, 2
    %v11074 = vrot.slane %v10950, 3
    %v11075 = vrot.slane %v10950, 4
    %v11076 = vrot.slane %v10950, 5
    %v11077 = vrot.slane %v10950, 6
    %v11078 = vrot.slane %v10950, 7
    %v11207 = vsub.f32 %v10423, %v10920
    %v11208 = vsub.f32 %v10424, %v10967
    %v11209 = vsub.f32 %v10425, %v10968
    %v11210 = vsub.f32 %v10426, %v10969
    %v11211 = vsub.f32 %v10427, %v10970
    %v11212 = vsub.f32 %v10428, %v10971
    %v11213 = vsub.f32 %v10429, %v10972
    %v11214 = vsub.f32 %v10430, %v10973
    %v11215 = vsub.f32 %v10431, %v10922
    %v11216 = vsub.f32 %v10432, %v10974
    %v11217 = vsub.f32 %v10433, %v10975
    %v11218 = vsub.f32 %v10434, %v10976
    %v11219 = vsub.f32 %v10435, %v10977
    %v11220 = vsub.f32 %v10436, %v10978
    %v11221 = vsub.f32 %v10437, %v10979
    %v11222 = vsub.f32 %v10438, %v10980
    %v11223 = vsub.f32 %v10439, %v10924
    %v11224 = vsub.f32 %v10440, %v10981
    %v11225 = vsub.f32 %v10441, %v10982
    %v11226 = vsub.f32 %v10442, %v10983
    %v11227 = vsub.f32 %v10443, %v10984
    %v11228 = vsub.f32 %v10444, %v10985
    %v11229 = vsub.f32 %v10445, %v10986
    %v11230 = vsub.f32 %v10446, %v10987
    %v11231 = vsub.f32 %v10447, %v10926
    %v11232 = vsub.f32 %v10448, %v10988
    %v11233 = vsub.f32 %v10449, %v10989
    %v11234 = vsub.f32 %v10450, %v10990
    %v11235 = vsub.f32 %v10451, %v10991
    %v11236 = vsub.f32 %v10452, %v10992
    %v11237 = vsub.f32 %v10453, %v10993
    %v11238 = vsub.f32 %v10454, %v10994
    %v11239 = vsub.f32 %v10455, %v10928
    %v11240 = vsub.f32 %v10456, %v10995
    %v11241 = vsub.f32 %v10457, %v10996
    %v11242 = vsub.f32 %v10458, %v10997
    %v11243 = vsub.f32 %v10459, %v10998
    %v11244 = vsub.f32 %v10460, %v10999
    %v11245 = vsub.f32 %v10461, %v11000
    %v11246 = vsub.f32 %v10462, %v11001
    %v11247 = vsub.f32 %v10463, %v10930
    %v11248 = vsub.f32 %v10464, %v11002
    %v11249 = vsub.f32 %v10465, %v11003
    %v11250 = vsub.f32 %v10466, %v11004
    %v11251 = vsub.f32 %v10467, %v11005
    %v11252 = vsub.f32 %v10468, %v11006
    %v11253 = vsub.f32 %v10469, %v11007
    %v11254 = vsub.f32 %v10470, %v11008
    %v11255 = vsub.f32 %v10471, %v10932
    %v11256 = vsub.f32 %v10472, %v11009
    %v11257 = vsub.f32 %v10473, %v11010
    %v11258 = vsub.f32 %v10474, %v11011
    %v11259 = vsub.f32 %v10475, %v11012
    %v11260 = vsub.f32 %v10476, %v11013
    %v11261 = vsub.f32 %v10477, %v11014
    %v11262 = vsub.f32 %v10478, %v11015
    %v11263 = vsub.f32 %v10479, %v10934
    %v11264 = vsub.f32 %v10480, %v11016
    %v11265 = vsub.f32 %v10481, %v11017
    %v11266 = vsub.f32 %v10482, %v11018
    %v11267 = vsub.f32 %v10483, %v11019
    %v11268 = vsub.f32 %v10484, %v11020
    %v11269 = vsub.f32 %v10485, %v11021
    %v11270 = vsub.f32 %v10486, %v11022
    %v11271 = vsub.f32 %v10487, %v10936
    %v11272 = vsub.f32 %v10488, %v11023
    %v11273 = vsub.f32 %v10489, %v11024
    %v11274 = vsub.f32 %v10490, %v11025
    %v11275 = vsub.f32 %v10491, %v11026
    %v11276 = vsub.f32 %v10492, %v11027
    %v11277 = vsub.f32 %v10493, %v11028
    %v11278 = vsub.f32 %v10494, %v11029
    %v11279 = vsub.f32 %v10495, %v10938
    %v11280 = vsub.f32 %v10496, %v11030
    %v11281 = vsub.f32 %v10497, %v11031
    %v11282 = vsub.f32 %v10498, %v11032
    %v11283 = vsub.f32 %v10499, %v11033
    %v11284 = vsub.f32 %v10500, %v11034
    %v11285 = vsub.f32 %v10501, %v11035
    %v11286 = vsub.f32 %v10502, %v11036
    %v11287 = vsub.f32 %v10503, %v10940
    %v11288 = vsub.f32 %v10504, %v11037
    %v11289 = vsub.f32 %v10505, %v11038
    %v11290 = vsub.f32 %v10506, %v11039
    %v11291 = vsub.f32 %v10507, %v11040
    %v11292 = vsub.f32 %v10508, %v11041
    %v11293 = vsub.f32 %v10509, %v11042
    %v11294 = vsub.f32 %v10510, %v11043
    %v11295 = vsub.f32 %v10511, %v10942
    %v11296 = vsub.f32 %v10512, %v11044
    %v11297 = vsub.f32 %v10513, %v11045
    %v11298 = vsub.f32 %v10514, %v11046
    %v11299 = vsub.f32 %v10515, %v11047
    %v11300 = vsub.f32 %v10516, %v11048
    %v11301 = vsub.f32 %v10517, %v11049
    %v11302 = vsub.f32 %v10518, %v11050
    %v11303 = vsub.f32 %v10519, %v10944
    %v11304 = vsub.f32 %v10520, %v11051
    %v11305 = vsub.f32 %v10521, %v11052
    %v11306 = vsub.f32 %v10522, %v11053
    %v11307 = vsub.f32 %v10523, %v11054
    %v11308 = vsub.f32 %v10524, %v11055
    %v11309 = vsub.f32 %v10525, %v11056
    %v11310 = vsub.f32 %v10526, %v11057
    %v11311 = vsub.f32 %v10527, %v10946
    %v11312 = vsub.f32 %v10528, %v11058
    %v11313 = vsub.f32 %v10529, %v11059
    %v11314 = vsub.f32 %v10530, %v11060
    %v11315 = vsub.f32 %v10531, %v11061
    %v11316 = vsub.f32 %v10532, %v11062
    %v11317 = vsub.f32 %v10533, %v11063
    %v11318 = vsub.f32 %v10534, %v11064
    %v11319 = vsub.f32 %v10535, %v10948
    %v11320 = vsub.f32 %v10536, %v11065
    %v11321 = vsub.f32 %v10537, %v11066
    %v11322 = vsub.f32 %v10538, %v11067
    %v11323 = vsub.f32 %v10539, %v11068
    %v11324 = vsub.f32 %v10540, %v11069
    %v11325 = vsub.f32 %v10541, %v11070
    %v11326 = vsub.f32 %v10542, %v11071
    %v11327 = vsub.f32 %v10543, %v10950
    %v11328 = vsub.f32 %v10544, %v11072
    %v11329 = vsub.f32 %v10545, %v11073
    %v11330 = vsub.f32 %v10546, %v11074
    %v11331 = vsub.f32 %v10547, %v11075
    %v11332 = vsub.f32 %v10548, %v11076
    %v11333 = vsub.f32 %v10549, %v11077
    %v11334 = vsub.f32 %v10550, %v11078
    %v11335 = vmul.f32 %v11207, 1.442695
    %v11336 = vpow.pop %v11335
    %v11337 = vmul.f32 %v11208, 1.442695
    %v11338 = vpow.pop %v11337
    %v11339 = vmul.f32 %v11209, 1.442695
    %v11340 = vpow.pop %v11339
    %v11341 = vmul.f32 %v11210, 1.442695
    %v11342 = vpow.pop %v11341
    %v11343 = vmul.f32 %v11211, 1.442695
    %v11344 = vpow.pop %v11343
    %v11345 = vmul.f32 %v11212, 1.442695
    %v11346 = vpow.pop %v11345
    %v11347 = vmul.f32 %v11213, 1.442695
    %v11348 = vpow.pop %v11347
    %v11349 = vmul.f32 %v11214, 1.442695
    %v11350 = vpow.pop %v11349
    %v11351 = vmul.f32 %v11215, 1.442695
    %v11352 = vpow.pop %v11351
    %v11353 = vmul.f32 %v11216, 1.442695
    %v11354 = vpow.pop %v11353
    %v11355 = vmul.f32 %v11217, 1.442695
    %v11356 = vpow.pop %v11355
    %v11357 = vmul.f32 %v11218, 1.442695
    %v11358 = vpow.pop %v11357
    %v11359 = vmul.f32 %v11219, 1.442695
    %v11360 = vpow.pop %v11359
    %v11361 = vmul.f32 %v11220, 1.442695
    %v11362 = vpow.pop %v11361
    %v11363 = vmul.f32 %v11221, 1.442695
    %v11364 = vpow.pop %v11363
    %v11365 = vmul.f32 %v11222, 1.442695
    %v11366 = vpow.pop %v11365
    %v11367 = vmul.f32 %v11223, 1.442695
    %v11368 = vpow.pop %v11367
    %v11369 = vmul.f32 %v11224, 1.442695
    %v11370 = vpow.pop %v11369
    %v11371 = vmul.f32 %v11225, 1.442695
    %v11372 = vpow.pop %v11371
    %v11373 = vmul.f32 %v11226, 1.442695
    %v11374 = vpow.pop %v11373
    %v11375 = vmul.f32 %v11227, 1.442695
    %v11376 = vpow.pop %v11375
    %v11377 = vmul.f32 %v11228, 1.442695
    %v11378 = vpow.pop %v11377
    %v11379 = vmul.f32 %v11229, 1.442695
    %v11380 = vpow.pop %v11379
    %v11381 = vmul.f32 %v11230, 1.442695
    %v11382 = vpow.pop %v11381
    %v11383 = vmul.f32 %v11231, 1.442695
    %v11384 = vpow.pop %v11383
    %v11385 = vmul.f32 %v11232, 1.442695
    %v11386 = vpow.pop %v11385
    %v11387 = vmul.f32 %v11233, 1.442695
    %v11388 = vpow.pop %v11387
    %v11389 = vmul.f32 %v11234, 1.442695
    %v11390 = vpow.pop %v11389
    %v11391 = vmul.f32 %v11235, 1.442695
    %v11392 = vpow.pop %v11391
    %v11393 = vmul.f32 %v11236, 1.442695
    %v11394 = vpow.pop %v11393
    %v11395 = vmul.f32 %v11237, 1.442695
    %v11396 = vpow.pop %v11395
    %v11397 = vmul.f32 %v11238, 1.442695
    %v11398 = vpow.pop %v11397
    %v11399 = vmul.f32 %v11239, 1.442695
    %v11400 = vpow.pop %v11399
    %v11401 = vmul.f32 %v11240, 1.442695
    %v11402 = vpow.pop %v11401
    %v11403 = vmul.f32 %v11241, 1.442695
    %v11404 = vpow.pop %v11403
    %v11405 = vmul.f32 %v11242, 1.442695
    %v11406 = vpow.pop %v11405
    %v11407 = vmul.f32 %v11243, 1.442695
    %v11408 = vpow.pop %v11407
    %v11409 = vmul.f32 %v11244, 1.442695
    %v11410 = vpow.pop %v11409
    %v11411 = vmul.f32 %v11245, 1.442695
    %v11412 = vpow.pop %v11411
    %v11413 = vmul.f32 %v11246, 1.442695
    %v11414 = vpow.pop %v11413
    %v11415 = vmul.f32 %v11247, 1.442695
    %v11416 = vpow.pop %v11415
    %v11417 = vmul.f32 %v11248, 1.442695
    %v11418 = vpow.pop %v11417
    %v11419 = vmul.f32 %v11249, 1.442695
    %v11420 = vpow.pop %v11419
    %v11421 = vmul.f32 %v11250, 1.442695
    %v11422 = vpow.pop %v11421
    %v11423 = vmul.f32 %v11251, 1.442695
    %v11424 = vpow.pop %v11423
    %v11425 = vmul.f32 %v11252, 1.442695
    %v11426 = vpow.pop %v11425
    %v11427 = vmul.f32 %v11253, 1.442695
    %v11428 = vpow.pop %v11427
    %v11429 = vmul.f32 %v11254, 1.442695
    %v11430 = vpow.pop %v11429
    %v11431 = vmul.f32 %v11255, 1.442695
    %v11432 = vpow.pop %v11431
    %v11433 = vmul.f32 %v11256, 1.442695
    %v11434 = vpow.pop %v11433
    %v11435 = vmul.f32 %v11257, 1.442695
    %v11436 = vpow.pop %v11435
    %v11437 = vmul.f32 %v11258, 1.442695
    %v11438 = vpow.pop %v11437
    %v11439 = vmul.f32 %v11259, 1.442695
    %v11440 = vpow.pop %v11439
    %v11441 = vmul.f32 %v11260, 1.442695
    %v11442 = vpow.pop %v11441
    %v11443 = vmul.f32 %v11261, 1.442695
    %v11444 = vpow.pop %v11443
    %v11445 = vmul.f32 %v11262, 1.442695
    %v11446 = vpow.pop %v11445
    %v11447 = vmul.f32 %v11263, 1.442695
    %v11448 = vpow.pop %v11447
    %v11449 = vmul.f32 %v11264, 1.442695
    %v11450 = vpow.pop %v11449
    %v11451 = vmul.f32 %v11265, 1.442695
    %v11452 = vpow.pop %v11451
    %v11453 = vmul.f32 %v11266, 1.442695
    %v11454 = vpow.pop %v11453
    %v11455 = vmul.f32 %v11267, 1.442695
    %v11456 = vpow.pop %v11455
    %v11457 = vmul.f32 %v11268, 1.442695
    %v11458 = vpow.pop %v11457
    %v11459 = vmul.f32 %v11269, 1.442695
    %v11460 = vpow.pop %v11459
    %v11461 = vmul.f32 %v11270, 1.442695
    %v11462 = vpow.pop %v11461
    %v11463 = vmul.f32 %v11271, 1.442695
    %v11464 = vpow.pop %v11463
    %v11465 = vmul.f32 %v11272, 1.442695
    %v11466 = vpow.pop %v11465
    %v11467 = vmul.f32 %v11273, 1.442695
    %v11468 = vpow.pop %v11467
    %v11469 = vmul.f32 %v11274, 1.442695
    %v11470 = vpow.pop %v11469
    %v11471 = vmul.f32 %v11275, 1.442695
    %v11472 = vpow.pop %v11471
    %v11473 = vmul.f32 %v11276, 1.442695
    %v11474 = vpow.pop %v11473
    %v11475 = vmul.f32 %v11277, 1.442695
    %v11476 = vpow.pop %v11475
    %v11477 = vmul.f32 %v11278, 1.442695
    %v11478 = vpow.pop %v11477
    %v11479 = vmul.f32 %v11279, 1.442695
    %v11480 = vpow.pop %v11479
    %v11481 = vmul.f32 %v11280, 1.442695
    %v11482 = vpow.pop %v11481
    %v11483 = vmul.f32 %v11281, 1.442695
    %v11484 = vpow.pop %v11483
    %v11485 = vmul.f32 %v11282, 1.442695
    %v11486 = vpow.pop %v11485
    %v11487 = vmul.f32 %v11283, 1.442695
    %v11488 = vpow.pop %v11487
    %v11489 = vmul.f32 %v11284, 1.442695
    %v11490 = vpow.pop %v11489
    %v11491 = vmul.f32 %v11285, 1.442695
    %v11492 = vpow.pop %v11491
    %v11493 = vmul.f32 %v11286, 1.442695
    %v11494 = vpow.pop %v11493
    %v11495 = vmul.f32 %v11287, 1.442695
    %v11496 = vpow.pop %v11495
    %v11497 = vmul.f32 %v11288, 1.442695
    %v11498 = vpow.pop %v11497
    %v11499 = vmul.f32 %v11289, 1.442695
    %v11500 = vpow.pop %v11499
    %v11501 = vmul.f32 %v11290, 1.442695
    %v11502 = vpow.pop %v11501
    %v11503 = vmul.f32 %v11291, 1.442695
    %v11504 = vpow.pop %v11503
    %v11505 = vmul.f32 %v11292, 1.442695
    %v11506 = vpow.pop %v11505
    %v11507 = vmul.f32 %v11293, 1.442695
    %v11508 = vpow.pop %v11507
    %v11509 = vmul.f32 %v11294, 1.442695
    %v11510 = vpow.pop %v11509
    %v11511 = vmul.f32 %v11295, 1.442695
    %v11512 = vpow.pop %v11511
    %v11513 = vmul.f32 %v11296, 1.442695
    %v11514 = vpow.pop %v11513
    %v11515 = vmul.f32 %v11297, 1.442695
    %v11516 = vpow.pop %v11515
    %v11517 = vmul.f32 %v11298, 1.442695
    %v11518 = vpow.pop %v11517
    %v11519 = vmul.f32 %v11299, 1.442695
    %v11520 = vpow.pop %v11519
    %v11521 = vmul.f32 %v11300, 1.442695
    %v11522 = vpow.pop %v11521
    %v11523 = vmul.f32 %v11301, 1.442695
    %v11524 = vpow.pop %v11523
    %v11525 = vmul.f32 %v11302, 1.442695
    %v11526 = vpow.pop %v11525
    %v11527 = vmul.f32 %v11303, 1.442695
    %v11528 = vpow.pop %v11527
    %v11529 = vmul.f32 %v11304, 1.442695
    %v11530 = vpow.pop %v11529
    %v11531 = vmul.f32 %v11305, 1.442695
    %v11532 = vpow.pop %v11531
    %v11533 = vmul.f32 %v11306, 1.442695
    %v11534 = vpow.pop %v11533
    %v11535 = vmul.f32 %v11307, 1.442695
    %v11536 = vpow.pop %v11535
    %v11537 = vmul.f32 %v11308, 1.442695
    %v11538 = vpow.pop %v11537
    %v11539 = vmul.f32 %v11309, 1.442695
    %v11540 = vpow.pop %v11539
    %v11541 = vmul.f32 %v11310, 1.442695
    %v11542 = vpow.pop %v11541
    %v11543 = vmul.f32 %v11311, 1.442695
    %v11544 = vpow.pop %v11543
    %v11545 = vmul.f32 %v11312, 1.442695
    %v11546 = vpow.pop %v11545
    %v11547 = vmul.f32 %v11313, 1.442695
    %v11548 = vpow.pop %v11547
    %v11549 = vmul.f32 %v11314, 1.442695
    %v11550 = vpow.pop %v11549
    %v11551 = vmul.f32 %v11315, 1.442695
    %v11552 = vpow.pop %v11551
    %v11553 = vmul.f32 %v11316, 1.442695
    %v11554 = vpow.pop %v11553
    %v11555 = vmul.f32 %v11317, 1.442695
    %v11556 = vpow.pop %v11555
    %v11557 = vmul.f32 %v11318, 1.442695
    %v11558 = vpow.pop %v11557
    %v11559 = vmul.f32 %v11319, 1.442695
    %v11560 = vpow.pop %v11559
    %v11561 = vmul.f32 %v11320, 1.442695
    %v11562 = vpow.pop %v11561
    %v11563 = vmul.f32 %v11321, 1.442695
    %v11564 = vpow.pop %v11563
    %v11565 = vmul.f32 %v11322, 1.442695
    %v11566 = vpow.pop %v11565
    %v11567 = vmul.f32 %v11323, 1.442695
    %v11568 = vpow.pop %v11567
    %v11569 = vmul.f32 %v11324, 1.442695
    %v11570 = vpow.pop %v11569
    %v11571 = vmul.f32 %v11325, 1.442695
    %v11572 = vpow.pop %v11571
    %v11573 = vmul.f32 %v11326, 1.442695
    %v11574 = vpow.pop %v11573
    %v11575 = vmul.f32 %v11327, 1.442695
    %v11576 = vpow.pop %v11575
    %v11577 = vmul.f32 %v11328, 1.442695
    %v11578 = vpow.pop %v11577
    %v11579 = vmul.f32 %v11329, 1.442695
    %v11580 = vpow.pop %v11579
    %v11581 = vmul.f32 %v11330, 1.442695
    %v11582 = vpow.pop %v11581
    %v11583 = vmul.f32 %v11331, 1.442695
    %v11584 = vpow.pop %v11583
    %v11585 = vmul.f32 %v11332, 1.442695
    %v11586 = vpow.pop %v11585
    %v11587 = vmul.f32 %v11333, 1.442695
    %v11588 = vpow.pop %v11587
    %v11589 = vmul.f32 %v11334, 1.442695
    %v11590 = vpow.pop %v11589
    %v11719 = vrot.slane %v11338, 7
    %v11720 = vsel %vm5711, %v11719, %v11336
    %v11721 = vrot.slane %v11340, 6
    %v11722 = vsel %vm5714, %v11721, %v11720
    %v11723 = vrot.slane %v11342, 5
    %v11724 = vsel %vm5717, %v11723, %v11722
    %v11725 = vrot.slane %v11344, 4
    %v11726 = vsel %vm5720, %v11725, %v11724
    %v11727 = vrot.slane %v11346, 3
    %v11728 = vsel %vm5723, %v11727, %v11726
    %v11729 = vrot.slane %v11348, 2
    %v11730 = vsel %vm5726, %v11729, %v11728
    %v11731 = vrot.slane %v11350, 1
    %v11732 = vsel %vm5729, %v11731, %v11730
    %v11733 = vrot.slane %v11354, 7
    %v11734 = vsel %vm5711, %v11733, %v11352
    %v11735 = vrot.slane %v11356, 6
    %v11736 = vsel %vm5714, %v11735, %v11734
    %v11737 = vrot.slane %v11358, 5
    %v11738 = vsel %vm5717, %v11737, %v11736
    %v11739 = vrot.slane %v11360, 4
    %v11740 = vsel %vm5720, %v11739, %v11738
    %v11741 = vrot.slane %v11362, 3
    %v11742 = vsel %vm5723, %v11741, %v11740
    %v11743 = vrot.slane %v11364, 2
    %v11744 = vsel %vm5726, %v11743, %v11742
    %v11745 = vrot.slane %v11366, 1
    %v11746 = vsel %vm5729, %v11745, %v11744
    %v11747 = vrot.slane %v11370, 7
    %v11748 = vsel %vm5711, %v11747, %v11368
    %v11749 = vrot.slane %v11372, 6
    %v11750 = vsel %vm5714, %v11749, %v11748
    %v11751 = vrot.slane %v11374, 5
    %v11752 = vsel %vm5717, %v11751, %v11750
    %v11753 = vrot.slane %v11376, 4
    %v11754 = vsel %vm5720, %v11753, %v11752
    %v11755 = vrot.slane %v11378, 3
    %v11756 = vsel %vm5723, %v11755, %v11754
    %v11757 = vrot.slane %v11380, 2
    %v11758 = vsel %vm5726, %v11757, %v11756
    %v11759 = vrot.slane %v11382, 1
    %v11760 = vsel %vm5729, %v11759, %v11758
    %v11761 = vrot.slane %v11386, 7
    %v11762 = vsel %vm5711, %v11761, %v11384
    %v11763 = vrot.slane %v11388, 6
    %v11764 = vsel %vm5714, %v11763, %v11762
    %v11765 = vrot.slane %v11390, 5
    %v11766 = vsel %vm5717, %v11765, %v11764
    %v11767 = vrot.slane %v11392, 4
    %v11768 = vsel %vm5720, %v11767, %v11766
    %v11769 = vrot.slane %v11394, 3
    %v11770 = vsel %vm5723, %v11769, %v11768
    %v11771 = vrot.slane %v11396, 2
    %v11772 = vsel %vm5726, %v11771, %v11770
    %v11773 = vrot.slane %v11398, 1
    %v11774 = vsel %vm5729, %v11773, %v11772
    %v11775 = vrot.slane %v11402, 7
    %v11776 = vsel %vm5711, %v11775, %v11400
    %v11777 = vrot.slane %v11404, 6
    %v11778 = vsel %vm5714, %v11777, %v11776
    %v11779 = vrot.slane %v11406, 5
    %v11780 = vsel %vm5717, %v11779, %v11778
    %v11781 = vrot.slane %v11408, 4
    %v11782 = vsel %vm5720, %v11781, %v11780
    %v11783 = vrot.slane %v11410, 3
    %v11784 = vsel %vm5723, %v11783, %v11782
    %v11785 = vrot.slane %v11412, 2
    %v11786 = vsel %vm5726, %v11785, %v11784
    %v11787 = vrot.slane %v11414, 1
    %v11788 = vsel %vm5729, %v11787, %v11786
    %v11789 = vrot.slane %v11418, 7
    %v11790 = vsel %vm5711, %v11789, %v11416
    %v11791 = vrot.slane %v11420, 6
    %v11792 = vsel %vm5714, %v11791, %v11790
    %v11793 = vrot.slane %v11422, 5
    %v11794 = vsel %vm5717, %v11793, %v11792
    %v11795 = vrot.slane %v11424, 4
    %v11796 = vsel %vm5720, %v11795, %v11794
    %v11797 = vrot.slane %v11426, 3
    %v11798 = vsel %vm5723, %v11797, %v11796
    %v11799 = vrot.slane %v11428, 2
    %v11800 = vsel %vm5726, %v11799, %v11798
    %v11801 = vrot.slane %v11430, 1
    %v11802 = vsel %vm5729, %v11801, %v11800
    %v11803 = vrot.slane %v11434, 7
    %v11804 = vsel %vm5711, %v11803, %v11432
    %v11805 = vrot.slane %v11436, 6
    %v11806 = vsel %vm5714, %v11805, %v11804
    %v11807 = vrot.slane %v11438, 5
    %v11808 = vsel %vm5717, %v11807, %v11806
    %v11809 = vrot.slane %v11440, 4
    %v11810 = vsel %vm5720, %v11809, %v11808
    %v11811 = vrot.slane %v11442, 3
    %v11812 = vsel %vm5723, %v11811, %v11810
    %v11813 = vrot.slane %v11444, 2
    %v11814 = vsel %vm5726, %v11813, %v11812
    %v11815 = vrot.slane %v11446, 1
    %v11816 = vsel %vm5729, %v11815, %v11814
    %v11817 = vrot.slane %v11450, 7
    %v11818 = vsel %vm5711, %v11817, %v11448
    %v11819 = vrot.slane %v11452, 6
    %v11820 = vsel %vm5714, %v11819, %v11818
    %v11821 = vrot.slane %v11454, 5
    %v11822 = vsel %vm5717, %v11821, %v11820
    %v11823 = vrot.slane %v11456, 4
    %v11824 = vsel %vm5720, %v11823, %v11822
    %v11825 = vrot.slane %v11458, 3
    %v11826 = vsel %vm5723, %v11825, %v11824
    %v11827 = vrot.slane %v11460, 2
    %v11828 = vsel %vm5726, %v11827, %v11826
    %v11829 = vrot.slane %v11462, 1
    %v11830 = vsel %vm5729, %v11829, %v11828
    %v11831 = vrot.slane %v11466, 7
    %v11832 = vsel %vm5711, %v11831, %v11464
    %v11833 = vrot.slane %v11468, 6
    %v11834 = vsel %vm5714, %v11833, %v11832
    %v11835 = vrot.slane %v11470, 5
    %v11836 = vsel %vm5717, %v11835, %v11834
    %v11837 = vrot.slane %v11472, 4
    %v11838 = vsel %vm5720, %v11837, %v11836
    %v11839 = vrot.slane %v11474, 3
    %v11840 = vsel %vm5723, %v11839, %v11838
    %v11841 = vrot.slane %v11476, 2
    %v11842 = vsel %vm5726, %v11841, %v11840
    %v11843 = vrot.slane %v11478, 1
    %v11844 = vsel %vm5729, %v11843, %v11842
    %v11845 = vrot.slane %v11482, 7
    %v11846 = vsel %vm5711, %v11845, %v11480
    %v11847 = vrot.slane %v11484, 6
    %v11848 = vsel %vm5714, %v11847, %v11846
    %v11849 = vrot.slane %v11486, 5
    %v11850 = vsel %vm5717, %v11849, %v11848
    %v11851 = vrot.slane %v11488, 4
    %v11852 = vsel %vm5720, %v11851, %v11850
    %v11853 = vrot.slane %v11490, 3
    %v11854 = vsel %vm5723, %v11853, %v11852
    %v11855 = vrot.slane %v11492, 2
    %v11856 = vsel %vm5726, %v11855, %v11854
    %v11857 = vrot.slane %v11494, 1
    %v11858 = vsel %vm5729, %v11857, %v11856
    %v11859 = vrot.slane %v11498, 7
    %v11860 = vsel %vm5711, %v11859, %v11496
    %v11861 = vrot.slane %v11500, 6
    %v11862 = vsel %vm5714, %v11861, %v11860
    %v11863 = vrot.slane %v11502, 5
    %v11864 = vsel %vm5717, %v11863, %v11862
    %v11865 = vrot.slane %v11504, 4
    %v11866 = vsel %vm5720, %v11865, %v11864
    %v11867 = vrot.slane %v11506, 3
    %v11868 = vsel %vm5723, %v11867, %v11866
    %v11869 = vrot.slane %v11508, 2
    %v11870 = vsel %vm5726, %v11869, %v11868
    %v11871 = vrot.slane %v11510, 1
    %v11872 = vsel %vm5729, %v11871, %v11870
    %v11873 = vrot.slane %v11514, 7
    %v11874 = vsel %vm5711, %v11873, %v11512
    %v11875 = vrot.slane %v11516, 6
    %v11876 = vsel %vm5714, %v11875, %v11874
    %v11877 = vrot.slane %v11518, 5
    %v11878 = vsel %vm5717, %v11877, %v11876
    %v11879 = vrot.slane %v11520, 4
    %v11880 = vsel %vm5720, %v11879, %v11878
    %v11881 = vrot.slane %v11522, 3
    %v11882 = vsel %vm5723, %v11881, %v11880
    %v11883 = vrot.slane %v11524, 2
    %v11884 = vsel %vm5726, %v11883, %v11882
    %v11885 = vrot.slane %v11526, 1
    %v11886 = vsel %vm5729, %v11885, %v11884
    %v11887 = vrot.slane %v11530, 7
    %v11888 = vsel %vm5711, %v11887, %v11528
    %v11889 = vrot.slane %v11532, 6
    %v11890 = vsel %vm5714, %v11889, %v11888
    %v11891 = vrot.slane %v11534, 5
    %v11892 = vsel %vm5717, %v11891, %v11890
    %v11893 = vrot.slane %v11536, 4
    %v11894 = vsel %vm5720, %v11893, %v11892
    %v11895 = vrot.slane %v11538, 3
    %v11896 = vsel %vm5723, %v11895, %v11894
    %v11897 = vrot.slane %v11540, 2
    %v11898 = vsel %vm5726, %v11897, %v11896
    %v11899 = vrot.slane %v11542, 1
    %v11900 = vsel %vm5729, %v11899, %v11898
    %v11901 = vrot.slane %v11546, 7
    %v11902 = vsel %vm5711, %v11901, %v11544
    %v11903 = vrot.slane %v11548, 6
    %v11904 = vsel %vm5714, %v11903, %v11902
    %v11905 = vrot.slane %v11550, 5
    %v11906 = vsel %vm5717, %v11905, %v11904
    %v11907 = vrot.slane %v11552, 4
    %v11908 = vsel %vm5720, %v11907, %v11906
    %v11909 = vrot.slane %v11554, 3
    %v11910 = vsel %vm5723, %v11909, %v11908
    %v11911 = vrot.slane %v11556, 2
    %v11912 = vsel %vm5726, %v11911, %v11910
    %v11913 = vrot.slane %v11558, 1
    %v11914 = vsel %vm5729, %v11913, %v11912
    %v11915 = vrot.slane %v11562, 7
    %v11916 = vsel %vm5711, %v11915, %v11560
    %v11917 = vrot.slane %v11564, 6
    %v11918 = vsel %vm5714, %v11917, %v11916
    %v11919 = vrot.slane %v11566, 5
    %v11920 = vsel %vm5717, %v11919, %v11918
    %v11921 = vrot.slane %v11568, 4
    %v11922 = vsel %vm5720, %v11921, %v11920
    %v11923 = vrot.slane %v11570, 3
    %v11924 = vsel %vm5723, %v11923, %v11922
    %v11925 = vrot.slane %v11572, 2
    %v11926 = vsel %vm5726, %v11925, %v11924
    %v11927 = vrot.slane %v11574, 1
    %v11928 = vsel %vm5729, %v11927, %v11926
    %v11929 = vrot.slane %v11578, 7
    %v11930 = vsel %vm5711, %v11929, %v11576
    %v11931 = vrot.slane %v11580, 6
    %v11932 = vsel %vm5714, %v11931, %v11930
    %v11933 = vrot.slane %v11582, 5
    %v11934 = vsel %vm5717, %v11933, %v11932
    %v11935 = vrot.slane %v11584, 4
    %v11936 = vsel %vm5720, %v11935, %v11934
    %v11937 = vrot.slane %v11586, 3
    %v11938 = vsel %vm5723, %v11937, %v11936
    %v11939 = vrot.slane %v11588, 2
    %v11940 = vsel %vm5726, %v11939, %v11938
    %v11941 = vrot.slane %v11590, 1
    %v11942 = vsel %vm5729, %v11941, %v11940
    %11959 = vadd.xlane.f32.xlu0 %v11732
    %v11960 = vpop.xlane.xlu0 %11959
    %11961 = vadd.xlane.f32.xlu0 %v11746
    %v11962 = vpop.xlane.xlu0 %11961
    %11963 = vadd.xlane.f32.xlu0 %v11760
    %v11964 = vpop.xlane.xlu0 %11963
    %11965 = vadd.xlane.f32.xlu0 %v11774
    %v11966 = vpop.xlane.xlu0 %11965
    %11967 = vadd.xlane.f32.xlu0 %v11788
    %v11968 = vpop.xlane.xlu0 %11967
    %11969 = vadd.xlane.f32.xlu0 %v11802
    %v11970 = vpop.xlane.xlu0 %11969
    %11971 = vadd.xlane.f32.xlu0 %v11816
    %v11972 = vpop.xlane.xlu0 %11971
    %11973 = vadd.xlane.f32.xlu0 %v11830
    %v11974 = vpop.xlane.xlu0 %11973
    %11975 = vadd.xlane.f32.xlu0 %v11844
    %v11976 = vpop.xlane.xlu0 %11975
    %11977 = vadd.xlane.f32.xlu0 %v11858
    %v11978 = vpop.xlane.xlu0 %11977
    %11979 = vadd.xlane.f32.xlu0 %v11872
    %v11980 = vpop.xlane.xlu0 %11979
    %11981 = vadd.xlane.f32.xlu0 %v11886
    %v11982 = vpop.xlane.xlu0 %11981
    %11983 = vadd.xlane.f32.xlu0 %v11900
    %v11984 = vpop.xlane.xlu0 %11983
    %11985 = vadd.xlane.f32.xlu0 %v11914
    %v11986 = vpop.xlane.xlu0 %11985
    %11987 = vadd.xlane.f32.xlu0 %v11928
    %v11988 = vpop.xlane.xlu0 %11987
    %11989 = vadd.xlane.f32.xlu0 %v11942
    %v11990 = vpop.xlane.xlu0 %11989
    %v12007 = vrot.slane %v11960, 1
    %v12008 = vrot.slane %v11960, 2
    %v12009 = vrot.slane %v11960, 3
    %v12010 = vrot.slane %v11960, 4
    %v12011 = vrot.slane %v11960, 5
    %v12012 = vrot.slane %v11960, 6
    %v12013 = vrot.slane %v11960, 7
    %v12014 = vrot.slane %v11962, 1
    %v12015 = vrot.slane %v11962, 2
    %v12016 = vrot.slane %v11962, 3
    %v12017 = vrot.slane %v11962, 4
    %v12018 = vrot.slane %v11962, 5
    %v12019 = vrot.slane %v11962, 6
    %v12020 = vrot.slane %v11962, 7
    %v12021 = vrot.slane %v11964, 1
    %v12022 = vrot.slane %v11964, 2
    %v12023 = vrot.slane %v11964, 3
    %v12024 = vrot.slane %v11964, 4
    %v12025 = vrot.slane %v11964, 5
    %v12026 = vrot.slane %v11964, 6
    %v12027 = vrot.slane %v11964, 7
    %v12028 = vrot.slane %v11966, 1
    %v12029 = vrot.slane %v11966, 2
    %v12030 = vrot.slane %v11966, 3
    %v12031 = vrot.slane %v11966, 4
    %v12032 = vrot.slane %v11966, 5
    %v12033 = vrot.slane %v11966, 6
    %v12034 = vrot.slane %v11966, 7
    %v12035 = vrot.slane %v11968, 1
    %v12036 = vrot.slane %v11968, 2
    %v12037 = vrot.slane %v11968, 3
    %v12038 = vrot.slane %v11968, 4
    %v12039 = vrot.slane %v11968, 5
    %v12040 = vrot.slane %v11968, 6
    %v12041 = vrot.slane %v11968, 7
    %v12042 = vrot.slane %v11970, 1
    %v12043 = vrot.slane %v11970, 2
    %v12044 = vrot.slane %v11970, 3
    %v12045 = vrot.slane %v11970, 4
    %v12046 = vrot.slane %v11970, 5
    %v12047 = vrot.slane %v11970, 6
    %v12048 = vrot.slane %v11970, 7
    %v12049 = vrot.slane %v11972, 1
    %v12050 = vrot.slane %v11972, 2
    %v12051 = vrot.slane %v11972, 3
    %v12052 = vrot.slane %v11972, 4
    %v12053 = vrot.slane %v11972, 5
    %v12054 = vrot.slane %v11972, 6
    %v12055 = vrot.slane %v11972, 7
    %v12056 = vrot.slane %v11974, 1
    %v12057 = vrot.slane %v11974, 2
    %v12058 = vrot.slane %v11974, 3
    %v12059 = vrot.slane %v11974, 4
    %v12060 = vrot.slane %v11974, 5
    %v12061 = vrot.slane %v11974, 6
    %v12062 = vrot.slane %v11974, 7
    %v12063 = vrot.slane %v11976, 1
    %v12064 = vrot.slane %v11976, 2
    %v12065 = vrot.slane %v11976, 3
    %v12066 = vrot.slane %v11976, 4
    %v12067 = vrot.slane %v11976, 5
    %v12068 = vrot.slane %v11976, 6
    %v12069 = vrot.slane %v11976, 7
    %v12070 = vrot.slane %v11978, 1
    %v12071 = vrot.slane %v11978, 2
    %v12072 = vrot.slane %v11978, 3
    %v12073 = vrot.slane %v11978, 4
    %v12074 = vrot.slane %v11978, 5
    %v12075 = vrot.slane %v11978, 6
    %v12076 = vrot.slane %v11978, 7
    %v12077 = vrot.slane %v11980, 1
    %v12078 = vrot.slane %v11980, 2
    %v12079 = vrot.slane %v11980, 3
    %v12080 = vrot.slane %v11980, 4
    %v12081 = vrot.slane %v11980, 5
    %v12082 = vrot.slane %v11980, 6
    %v12083 = vrot.slane %v11980, 7
    %v12084 = vrot.slane %v11982, 1
    %v12085 = vrot.slane %v11982, 2
    %v12086 = vrot.slane %v11982, 3
    %v12087 = vrot.slane %v11982, 4
    %v12088 = vrot.slane %v11982, 5
    %v12089 = vrot.slane %v11982, 6
    %v12090 = vrot.slane %v11982, 7
    %v12091 = vrot.slane %v11984, 1
    %v12092 = vrot.slane %v11984, 2
    %v12093 = vrot.slane %v11984, 3
    %v12094 = vrot.slane %v11984, 4
    %v12095 = vrot.slane %v11984, 5
    %v12096 = vrot.slane %v11984, 6
    %v12097 = vrot.slane %v11984, 7
    %v12098 = vrot.slane %v11986, 1
    %v12099 = vrot.slane %v11986, 2
    %v12100 = vrot.slane %v11986, 3
    %v12101 = vrot.slane %v11986, 4
    %v12102 = vrot.slane %v11986, 5
    %v12103 = vrot.slane %v11986, 6
    %v12104 = vrot.slane %v11986, 7
    %v12105 = vrot.slane %v11988, 1
    %v12106 = vrot.slane %v11988, 2
    %v12107 = vrot.slane %v11988, 3
    %v12108 = vrot.slane %v11988, 4
    %v12109 = vrot.slane %v11988, 5
    %v12110 = vrot.slane %v11988, 6
    %v12111 = vrot.slane %v11988, 7
    %v12112 = vrot.slane %v11990, 1
    %v12113 = vrot.slane %v11990, 2
    %v12114 = vrot.slane %v11990, 3
    %v12115 = vrot.slane %v11990, 4
    %v12116 = vrot.slane %v11990, 5
    %v12117 = vrot.slane %v11990, 6
    %v12118 = vrot.slane %v11990, 7
    %v12247 = vrcp.pop %v11960
    %v12248 = vmul.f32 %v11336, %v12247
    %v12249 = vrcp.pop %v12007
    %v12250 = vmul.f32 %v11338, %v12249
    %v12251 = vrcp.pop %v12008
    %v12252 = vmul.f32 %v11340, %v12251
    %v12253 = vrcp.pop %v12009
    %v12254 = vmul.f32 %v11342, %v12253
    %v12255 = vrcp.pop %v12010
    %v12256 = vmul.f32 %v11344, %v12255
    %v12257 = vrcp.pop %v12011
    %v12258 = vmul.f32 %v11346, %v12257
    %v12259 = vrcp.pop %v12012
    %v12260 = vmul.f32 %v11348, %v12259
    %v12261 = vrcp.pop %v12013
    %v12262 = vmul.f32 %v11350, %v12261
    %v12263 = vrcp.pop %v11962
    %v12264 = vmul.f32 %v11352, %v12263
    %v12265 = vrcp.pop %v12014
    %v12266 = vmul.f32 %v11354, %v12265
    %v12267 = vrcp.pop %v12015
    %v12268 = vmul.f32 %v11356, %v12267
    %v12269 = vrcp.pop %v12016
    %v12270 = vmul.f32 %v11358, %v12269
    %v12271 = vrcp.pop %v12017
    %v12272 = vmul.f32 %v11360, %v12271
    %v12273 = vrcp.pop %v12018
    %v12274 = vmul.f32 %v11362, %v12273
    %v12275 = vrcp.pop %v12019
    %v12276 = vmul.f32 %v11364, %v12275
    %v12277 = vrcp.pop %v12020
    %v12278 = vmul.f32 %v11366, %v12277
    %v12279 = vrcp.pop %v11964
    %v12280 = vmul.f32 %v11368, %v12279
    %v12281 = vrcp.pop %v12021
    %v12282 = vmul.f32 %v11370, %v12281
    %v12283 = vrcp.pop %v12022
    %v12284 = vmul.f32 %v11372, %v12283
    %v12285 = vrcp.pop %v12023
    %v12286 = vmul.f32 %v11374, %v12285
    %v12287 = vrcp.pop %v12024
    %v12288 = vmul.f32 %v11376, %v12287
    %v12289 = vrcp.pop %v12025
    %v12290 = vmul.f32 %v11378, %v12289
    %v12291 = vrcp.pop %v12026
    %v12292 = vmul.f32 %v11380, %v12291
    %v12293 = vrcp.pop %v12027
    %v12294 = vmul.f32 %v11382, %v12293
    %v12295 = vrcp.pop %v11966
    %v12296 = vmul.f32 %v11384, %v12295
    %v12297 = vrcp.pop %v12028
    %v12298 = vmul.f32 %v11386, %v12297
    %v12299 = vrcp.pop %v12029
    %v12300 = vmul.f32 %v11388, %v12299
    %v12301 = vrcp.pop %v12030
    %v12302 = vmul.f32 %v11390, %v12301
    %v12303 = vrcp.pop %v12031
    %v12304 = vmul.f32 %v11392, %v12303
    %v12305 = vrcp.pop %v12032
    %v12306 = vmul.f32 %v11394, %v12305
    %v12307 = vrcp.pop %v12033
    %v12308 = vmul.f32 %v11396, %v12307
    %v12309 = vrcp.pop %v12034
    %v12310 = vmul.f32 %v11398, %v12309
    %v12311 = vrcp.pop %v11968
    %v12312 = vmul.f32 %v11400, %v12311
    %v12313 = vrcp.pop %v12035
    %v12314 = vmul.f32 %v11402, %v12313
    %v12315 = vrcp.pop %v12036
    %v12316 = vmul.f32 %v11404, %v12315
    %v12317 = vrcp.pop %v12037
    %v12318 = vmul.f32 %v11406, %v12317
    %v12319 = vrcp.pop %v12038
    %v12320 = vmul.f32 %v11408, %v12319
    %v12321 = vrcp.pop %v12039
    %v12322 = vmul.f32 %v11410, %v12321
    %v12323 = vrcp.pop %v12040
    %v12324 = vmul.f32 %v11412, %v12323
    %v12325 = vrcp.pop %v12041
    %v12326 = vmul.f32 %v11414, %v12325
    %v12327 = vrcp.pop %v11970
    %v12328 = vmul.f32 %v11416, %v12327
    %v12329 = vrcp.pop %v12042
    %v12330 = vmul.f32 %v11418, %v12329
    %v12331 = vrcp.pop %v12043
    %v12332 = vmul.f32 %v11420, %v12331
    %v12333 = vrcp.pop %v12044
    %v12334 = vmul.f32 %v11422, %v12333
    %v12335 = vrcp.pop %v12045
    %v12336 = vmul.f32 %v11424, %v12335
    %v12337 = vrcp.pop %v12046
    %v12338 = vmul.f32 %v11426, %v12337
    %v12339 = vrcp.pop %v12047
    %v12340 = vmul.f32 %v11428, %v12339
    %v12341 = vrcp.pop %v12048
    %v12342 = vmul.f32 %v11430, %v12341
    %v12343 = vrcp.pop %v11972
    %v12344 = vmul.f32 %v11432, %v12343
    %v12345 = vrcp.pop %v12049
    %v12346 = vmul.f32 %v11434, %v12345
    %v12347 = vrcp.pop %v12050
    %v12348 = vmul.f32 %v11436, %v12347
    %v12349 = vrcp.pop %v12051
    %v12350 = vmul.f32 %v11438, %v12349
    %v12351 = vrcp.pop %v12052
    %v12352 = vmul.f32 %v11440, %v12351
    %v12353 = vrcp.pop %v12053
    %v12354 = vmul.f32 %v11442, %v12353
    %v12355 = vrcp.pop %v12054
    %v12356 = vmul.f32 %v11444, %v12355
    %v12357 = vrcp.pop %v12055
    %v12358 = vmul.f32 %v11446, %v12357
    %v12359 = vrcp.pop %v11974
    %v12360 = vmul.f32 %v11448, %v12359
    %v12361 = vrcp.pop %v12056
    %v12362 = vmul.f32 %v11450, %v12361
    %v12363 = vrcp.pop %v12057
    %v12364 = vmul.f32 %v11452, %v12363
    %v12365 = vrcp.pop %v12058
    %v12366 = vmul.f32 %v11454, %v12365
    %v12367 = vrcp.pop %v12059
    %v12368 = vmul.f32 %v11456, %v12367
    %v12369 = vrcp.pop %v12060
    %v12370 = vmul.f32 %v11458, %v12369
    %v12371 = vrcp.pop %v12061
    %v12372 = vmul.f32 %v11460, %v12371
    %v12373 = vrcp.pop %v12062
    %v12374 = vmul.f32 %v11462, %v12373
    %v12375 = vrcp.pop %v11976
    %v12376 = vmul.f32 %v11464, %v12375
    %v12377 = vrcp.pop %v12063
    %v12378 = vmul.f32 %v11466, %v12377
    %v12379 = vrcp.pop %v12064
    %v12380 = vmul.f32 %v11468, %v12379
    %v12381 = vrcp.pop %v12065
    %v12382 = vmul.f32 %v11470, %v12381
    %v12383 = vrcp.pop %v12066
    %v12384 = vmul.f32 %v11472, %v12383
    %v12385 = vrcp.pop %v12067
    %v12386 = vmul.f32 %v11474, %v12385
    %v12387 = vrcp.pop %v12068
    %v12388 = vmul.f32 %v11476, %v12387
    %v12389 = vrcp.pop %v12069
    %v12390 = vmul.f32 %v11478, %v12389
    %v12391 = vrcp.pop %v11978
    %v12392 = vmul.f32 %v11480, %v12391
    %v12393 = vrcp.pop %v12070
    %v12394 = vmul.f32 %v11482, %v12393
    %v12395 = vrcp.pop %v12071
    %v12396 = vmul.f32 %v11484, %v12395
    %v12397 = vrcp.pop %v12072
    %v12398 = vmul.f32 %v11486, %v12397
    %v12399 = vrcp.pop %v12073
    %v12400 = vmul.f32 %v11488, %v12399
    %v12401 = vrcp.pop %v12074
    %v12402 = vmul.f32 %v11490, %v12401
    %v12403 = vrcp.pop %v12075
    %v12404 = vmul.f32 %v11492, %v12403
    %v12405 = vrcp.pop %v12076
    %v12406 = vmul.f32 %v11494, %v12405
    %v12407 = vrcp.pop %v11980
    %v12408 = vmul.f32 %v11496, %v12407
    %v12409 = vrcp.pop %v12077
    %v12410 = vmul.f32 %v11498, %v12409
    %v12411 = vrcp.pop %v12078
    %v12412 = vmul.f32 %v11500, %v12411
    %v12413 = vrcp.pop %v12079
    %v12414 = vmul.f32 %v11502, %v12413
    %v12415 = vrcp.pop %v12080
    %v12416 = vmul.f32 %v11504, %v12415
    %v12417 = vrcp.pop %v12081
    %v12418 = vmul.f32 %v11506, %v12417
    %v12419 = vrcp.pop %v12082
    %v12420 = vmul.f32 %v11508, %v12419
    %v12421 = vrcp.pop %v12083
    %v12422 = vmul.f32 %v11510, %v12421
    %v12423 = vrcp.pop %v11982
    %v12424 = vmul.f32 %v11512, %v12423
    %v12425 = vrcp.pop %v12084
    %v12426 = vmul.f32 %v11514, %v12425
    %v12427 = vrcp.pop %v12085
    %v12428 = vmul.f32 %v11516, %v12427
    %v12429 = vrcp.pop %v12086
    %v12430 = vmul.f32 %v11518, %v12429
    %v12431 = vrcp.pop %v12087
    %v12432 = vmul.f32 %v11520, %v12431
    %v12433 = vrcp.pop %v12088
    %v12434 = vmul.f32 %v11522, %v12433
    %v12435 = vrcp.pop %v12089
    %v12436 = vmul.f32 %v11524, %v12435
    %v12437 = vrcp.pop %v12090
    %v12438 = vmul.f32 %v11526, %v12437
    %v12439 = vrcp.pop %v11984
    %v12440 = vmul.f32 %v11528, %v12439
    %v12441 = vrcp.pop %v12091
    %v12442 = vmul.f32 %v11530, %v12441
    %v12443 = vrcp.pop %v12092
    %v12444 = vmul.f32 %v11532, %v12443
    %v12445 = vrcp.pop %v12093
    %v12446 = vmul.f32 %v11534, %v12445
    %v12447 = vrcp.pop %v12094
    %v12448 = vmul.f32 %v11536, %v12447
    %v12449 = vrcp.pop %v12095
    %v12450 = vmul.f32 %v11538, %v12449
    %v12451 = vrcp.pop %v12096
    %v12452 = vmul.f32 %v11540, %v12451
    %v12453 = vrcp.pop %v12097
    %v12454 = vmul.f32 %v11542, %v12453
    %v12455 = vrcp.pop %v11986
    %v12456 = vmul.f32 %v11544, %v12455
    %v12457 = vrcp.pop %v12098
    %v12458 = vmul.f32 %v11546, %v12457
    %v12459 = vrcp.pop %v12099
    %v12460 = vmul.f32 %v11548, %v12459
    %v12461 = vrcp.pop %v12100
    %v12462 = vmul.f32 %v11550, %v12461
    %v12463 = vrcp.pop %v12101
    %v12464 = vmul.f32 %v11552, %v12463
    %v12465 = vrcp.pop %v12102
    %v12466 = vmul.f32 %v11554, %v12465
    %v12467 = vrcp.pop %v12103
    %v12468 = vmul.f32 %v11556, %v12467
    %v12469 = vrcp.pop %v12104
    %v12470 = vmul.f32 %v11558, %v12469
    %v12471 = vrcp.pop %v11988
    %v12472 = vmul.f32 %v11560, %v12471
    %v12473 = vrcp.pop %v12105
    %v12474 = vmul.f32 %v11562, %v12473
    %v12475 = vrcp.pop %v12106
    %v12476 = vmul.f32 %v11564, %v12475
    %v12477 = vrcp.pop %v12107
    %v12478 = vmul.f32 %v11566, %v12477
    %v12479 = vrcp.pop %v12108
    %v12480 = vmul.f32 %v11568, %v12479
    %v12481 = vrcp.pop %v12109
    %v12482 = vmul.f32 %v11570, %v12481
    %v12483 = vrcp.pop %v12110
    %v12484 = vmul.f32 %v11572, %v12483
    %v12485 = vrcp.pop %v12111
    %v12486 = vmul.f32 %v11574, %v12485
    %v12487 = vrcp.pop %v11990
    %v12488 = vmul.f32 %v11576, %v12487
    %v12489 = vrcp.pop %v12112
    %v12490 = vmul.f32 %v11578, %v12489
    %v12491 = vrcp.pop %v12113
    %v12492 = vmul.f32 %v11580, %v12491
    %v12493 = vrcp.pop %v12114
    %v12494 = vmul.f32 %v11582, %v12493
    %v12495 = vrcp.pop %v12115
    %v12496 = vmul.f32 %v11584, %v12495
    %v12497 = vrcp.pop %v12116
    %v12498 = vmul.f32 %v11586, %v12497
    %v12499 = vrcp.pop %v12117
    %v12500 = vmul.f32 %v11588, %v12499
    %v12501 = vrcp.pop %v12118
    %v12502 = vmul.f32 %v11590, %v12501
    %v12503 = vadd.f32 %v10022, %v12248
    %v12504 = vadd.f32 %v10023, %v12250
    %v12505 = vadd.f32 %v10024, %v12252
    %v12506 = vadd.f32 %v10025, %v12254
    %v12507 = vadd.f32 %v10026, %v12256
    %v12508 = vadd.f32 %v10027, %v12258
    %v12509 = vadd.f32 %v10028, %v12260
    %v12510 = vadd.f32 %v10029, %v12262
    %v12511 = vadd.f32 %v10030, %v12264
    %v12512 = vadd.f32 %v10031, %v12266
    %v12513 = vadd.f32 %v10032, %v12268
    %v12514 = vadd.f32 %v10033, %v12270
    %v12515 = vadd.f32 %v10034, %v12272
    %v12516 = vadd.f32 %v10035, %v12274
    %v12517 = vadd.f32 %v10036, %v12276
    %v12518 = vadd.f32 %v10037, %v12278
    %v12519 = vadd.f32 %v10038, %v12280
    %v12520 = vadd.f32 %v10039, %v12282
    %v12521 = vadd.f32 %v10040, %v12284
    %v12522 = vadd.f32 %v10041, %v12286
    %v12523 = vadd.f32 %v10042, %v12288
    %v12524 = vadd.f32 %v10043, %v12290
    %v12525 = vadd.f32 %v10044, %v12292
    %v12526 = vadd.f32 %v10045, %v12294
    %v12527 = vadd.f32 %v10046, %v12296
    %v12528 = vadd.f32 %v10047, %v12298
    %v12529 = vadd.f32 %v10048, %v12300
    %v12530 = vadd.f32 %v10049, %v12302
    %v12531 = vadd.f32 %v10050, %v12304
    %v12532 = vadd.f32 %v10051, %v12306
    %v12533 = vadd.f32 %v10052, %v12308
    %v12534 = vadd.f32 %v10053, %v12310
    %v12535 = vadd.f32 %v10054, %v12312
    %v12536 = vadd.f32 %v10055, %v12314
    %v12537 = vadd.f32 %v10056, %v12316
    %v12538 = vadd.f32 %v10057, %v12318
    %v12539 = vadd.f32 %v10058, %v12320
    %v12540 = vadd.f32 %v10059, %v12322
    %v12541 = vadd.f32 %v10060, %v12324
    %v12542 = vadd.f32 %v10061, %v12326
    %v12543 = vadd.f32 %v10062, %v12328
    %v12544 = vadd.f32 %v10063, %v12330
    %v12545 = vadd.f32 %v10064, %v12332
    %v12546 = vadd.f32 %v10065, %v12334
    %v12547 = vadd.f32 %v10066, %v12336
    %v12548 = vadd.f32 %v10067, %v12338
    %v12549 = vadd.f32 %v10068, %v12340
    %v12550 = vadd.f32 %v10069, %v12342
    %v12551 = vadd.f32 %v10070, %v12344
    %v12552 = vadd.f32 %v10071, %v12346
    %v12553 = vadd.f32 %v10072, %v12348
    %v12554 = vadd.f32 %v10073, %v12350
    %v12555 = vadd.f32 %v10074, %v12352
    %v12556 = vadd.f32 %v10075, %v12354
    %v12557 = vadd.f32 %v10076, %v12356
    %v12558 = vadd.f32 %v10077, %v12358
    %v12559 = vadd.f32 %v10078, %v12360
    %v12560 = vadd.f32 %v10079, %v12362
    %v12561 = vadd.f32 %v10080, %v12364
    %v12562 = vadd.f32 %v10081, %v12366
    %v12563 = vadd.f32 %v10082, %v12368
    %v12564 = vadd.f32 %v10083, %v12370
    %v12565 = vadd.f32 %v10084, %v12372
    %v12566 = vadd.f32 %v10085, %v12374
    %v12567 = vadd.f32 %v10086, %v12376
    %v12568 = vadd.f32 %v10087, %v12378
    %v12569 = vadd.f32 %v10088, %v12380
    %v12570 = vadd.f32 %v10089, %v12382
    %v12571 = vadd.f32 %v10090, %v12384
    %v12572 = vadd.f32 %v10091, %v12386
    %v12573 = vadd.f32 %v10092, %v12388
    %v12574 = vadd.f32 %v10093, %v12390
    %v12575 = vadd.f32 %v10094, %v12392
    %v12576 = vadd.f32 %v10095, %v12394
    %v12577 = vadd.f32 %v10096, %v12396
    %v12578 = vadd.f32 %v10097, %v12398
    %v12579 = vadd.f32 %v10098, %v12400
    %v12580 = vadd.f32 %v10099, %v12402
    %v12581 = vadd.f32 %v10100, %v12404
    %v12582 = vadd.f32 %v10101, %v12406
    %v12583 = vadd.f32 %v10102, %v12408
    %v12584 = vadd.f32 %v10103, %v12410
    %v12585 = vadd.f32 %v10104, %v12412
    %v12586 = vadd.f32 %v10105, %v12414
    %v12587 = vadd.f32 %v10106, %v12416
    %v12588 = vadd.f32 %v10107, %v12418
    %v12589 = vadd.f32 %v10108, %v12420
    %v12590 = vadd.f32 %v10109, %v12422
    %v12591 = vadd.f32 %v10110, %v12424
    %v12592 = vadd.f32 %v10111, %v12426
    %v12593 = vadd.f32 %v10112, %v12428
    %v12594 = vadd.f32 %v10113, %v12430
    %v12595 = vadd.f32 %v10114, %v12432
    %v12596 = vadd.f32 %v10115, %v12434
    %v12597 = vadd.f32 %v10116, %v12436
    %v12598 = vadd.f32 %v10117, %v12438
    %v12599 = vadd.f32 %v10118, %v12440
    %v12600 = vadd.f32 %v10119, %v12442
    %v12601 = vadd.f32 %v10120, %v12444
    %v12602 = vadd.f32 %v10121, %v12446
    %v12603 = vadd.f32 %v10122, %v12448
    %v12604 = vadd.f32 %v10123, %v12450
    %v12605 = vadd.f32 %v10124, %v12452
    %v12606 = vadd.f32 %v10125, %v12454
    %v12607 = vadd.f32 %v10126, %v12456
    %v12608 = vadd.f32 %v10127, %v12458
    %v12609 = vadd.f32 %v10128, %v12460
    %v12610 = vadd.f32 %v10129, %v12462
    %v12611 = vadd.f32 %v10130, %v12464
    %v12612 = vadd.f32 %v10131, %v12466
    %v12613 = vadd.f32 %v10132, %v12468
    %v12614 = vadd.f32 %v10133, %v12470
    %v12615 = vadd.f32 %v10134, %v12472
    %v12616 = vadd.f32 %v10135, %v12474
    %v12617 = vadd.f32 %v10136, %v12476
    %v12618 = vadd.f32 %v10137, %v12478
    %v12619 = vadd.f32 %v10138, %v12480
    %v12620 = vadd.f32 %v10139, %v12482
    %v12621 = vadd.f32 %v10140, %v12484
    %v12622 = vadd.f32 %v10141, %v12486
    %v12623 = vadd.f32 %v10142, %v12488
    %v12624 = vadd.f32 %v10143, %v12490
    %v12625 = vadd.f32 %v10144, %v12492
    %v12626 = vadd.f32 %v10145, %v12494
    %v12627 = vadd.f32 %v10146, %v12496
    %v12628 = vadd.f32 %v10147, %v12498
    %v12629 = vadd.f32 %v10148, %v12500
    %v12630 = vadd.f32 %v10149, %v12502
    %s12631 = scalar_lea.vmem %s3, 384
    %v12632 = vld [vmem:[%s12631] sm:$0xff]
    %v12633 = vld [vmem:[%s12631 + $0x8] sm:$0xff]
    %v12634 = vld [vmem:[%s12631 + $0x10] sm:$0xff]
    %v12635 = vld [vmem:[%s12631 + $0x18] sm:$0xff]
    %v12636 = vld [vmem:[%s12631 + $0x20] sm:$0xff]
    %v12637 = vld [vmem:[%s12631 + $0x28] sm:$0xff]
    %v12638 = vld [vmem:[%s12631 + $0x30] sm:$0xff]
    %v12639 = vld [vmem:[%s12631 + $0x38] sm:$0xff]
    %v12640 = vld [vmem:[%s12631 + $0x40] sm:$0xff]
    %v12641 = vld [vmem:[%s12631 + $0x48] sm:$0xff]
    %v12642 = vld [vmem:[%s12631 + $0x50] sm:$0xff]
    %v12643 = vld [vmem:[%s12631 + $0x58] sm:$0xff]
    %v12644 = vld [vmem:[%s12631 + $0x60] sm:$0xff]
    %v12645 = vld [vmem:[%s12631 + $0x68] sm:$0xff]
    %v12646 = vld [vmem:[%s12631 + $0x70] sm:$0xff]
    %v12647 = vld [vmem:[%s12631 + $0x78] sm:$0xff]
    %v12664 = vrot.slane %v12632, 1
    %v12665 = vrot.slane %v12632, 2
    %v12666 = vrot.slane %v12632, 3
    %v12667 = vrot.slane %v12632, 4
    %v12668 = vrot.slane %v12632, 5
    %v12669 = vrot.slane %v12632, 6
    %v12670 = vrot.slane %v12632, 7
    %v12671 = vrot.slane %v12633, 1
    %v12672 = vrot.slane %v12633, 2
    %v12673 = vrot.slane %v12633, 3
    %v12674 = vrot.slane %v12633, 4
    %v12675 = vrot.slane %v12633, 5
    %v12676 = vrot.slane %v12633, 6
    %v12677 = vrot.slane %v12633, 7
    %v12678 = vrot.slane %v12634, 1
    %v12679 = vrot.slane %v12634, 2
    %v12680 = vrot.slane %v12634, 3
    %v12681 = vrot.slane %v12634, 4
    %v12682 = vrot.slane %v12634, 5
    %v12683 = vrot.slane %v12634, 6
    %v12684 = vrot.slane %v12634, 7
    %v12685 = vrot.slane %v12635, 1
    %v12686 = vrot.slane %v12635, 2
    %v12687 = vrot.slane %v12635, 3
    %v12688 = vrot.slane %v12635, 4
    %v12689 = vrot.slane %v12635, 5
    %v12690 = vrot.slane %v12635, 6
    %v12691 = vrot.slane %v12635, 7
    %v12692 = vrot.slane %v12636, 1
    %v12693 = vrot.slane %v12636, 2
    %v12694 = vrot.slane %v12636, 3
    %v12695 = vrot.slane %v12636, 4
    %v12696 = vrot.slane %v12636, 5
    %v12697 = vrot.slane %v12636, 6
    %v12698 = vrot.slane %v12636, 7
    %v12699 = vrot.slane %v12637, 1
    %v12700 = vrot.slane %v12637, 2
    %v12701 = vrot.slane %v12637, 3
    %v12702 = vrot.slane %v12637, 4
    %v12703 = vrot.slane %v12637, 5
    %v12704 = vrot.slane %v12637, 6
    %v12705 = vrot.slane %v12637, 7
    %v12706 = vrot.slane %v12638, 1
    %v12707 = vrot.slane %v12638, 2
    %v12708 = vrot.slane %v12638, 3
    %v12709 = vrot.slane %v12638, 4
    %v12710 = vrot.slane %v12638, 5
    %v12711 = vrot.slane %v12638, 6
    %v12712 = vrot.slane %v12638, 7
    %v12713 = vrot.slane %v12639, 1
    %v12714 = vrot.slane %v12639, 2
    %v12715 = vrot.slane %v12639, 3
    %v12716 = vrot.slane %v12639, 4
    %v12717 = vrot.slane %v12639, 5
    %v12718 = vrot.slane %v12639, 6
    %v12719 = vrot.slane %v12639, 7
    %v12720 = vrot.slane %v12640, 1
    %v12721 = vrot.slane %v12640, 2
    %v12722 = vrot.slane %v12640, 3
    %v12723 = vrot.slane %v12640, 4
    %v12724 = vrot.slane %v12640, 5
    %v12725 = vrot.slane %v12640, 6
    %v12726 = vrot.slane %v12640, 7
    %v12727 = vrot.slane %v12641, 1
    %v12728 = vrot.slane %v12641, 2
    %v12729 = vrot.slane %v12641, 3
    %v12730 = vrot.slane %v12641, 4
    %v12731 = vrot.slane %v12641, 5
    %v12732 = vrot.slane %v12641, 6
    %v12733 = vrot.slane %v12641, 7
    %v12734 = vrot.slane %v12642, 1
    %v12735 = vrot.slane %v12642, 2
    %v12736 = vrot.slane %v12642, 3
    %v12737 = vrot.slane %v12642, 4
    %v12738 = vrot.slane %v12642, 5
    %v12739 = vrot.slane %v12642, 6
    %v12740 = vrot.slane %v12642, 7
    %v12741 = vrot.slane %v12643, 1
    %v12742 = vrot.slane %v12643, 2
    %v12743 = vrot.slane %v12643, 3
    %v12744 = vrot.slane %v12643, 4
    %v12745 = vrot.slane %v12643, 5
    %v12746 = vrot.slane %v12643, 6
    %v12747 = vrot.slane %v12643, 7
    %v12748 = vrot.slane %v12644, 1
    %v12749 = vrot.slane %v12644, 2
    %v12750 = vrot.slane %v12644, 3
    %v12751 = vrot.slane %v12644, 4
    %v12752 = vrot.slane %v12644, 5
    %v12753 = vrot.slane %v12644, 6
    %v12754 = vrot.slane %v12644, 7
    %v12755 = vrot.slane %v12645, 1
    %v12756 = vrot.slane %v12645, 2
    %v12757 = vrot.slane %v12645, 3
    %v12758 = vrot.slane %v12645, 4
    %v12759 = vrot.slane %v12645, 5
    %v12760 = vrot.slane %v12645, 6
    %v12761 = vrot.slane %v12645, 7
    %v12762 = vrot.slane %v12646, 1
    %v12763 = vrot.slane %v12646, 2
    %v12764 = vrot.slane %v12646, 3
    %v12765 = vrot.slane %v12646, 4
    %v12766 = vrot.slane %v12646, 5
    %v12767 = vrot.slane %v12646, 6
    %v12768 = vrot.slane %v12646, 7
    %v12769 = vrot.slane %v12647, 1
    %v12770 = vrot.slane %v12647, 2
    %v12771 = vrot.slane %v12647, 3
    %v12772 = vrot.slane %v12647, 4
    %v12773 = vrot.slane %v12647, 5
    %v12774 = vrot.slane %v12647, 6
    %v12775 = vrot.slane %v12647, 7
    %v12904 = vadd.f32 %v4038, %v12632
    %v12905 = vadd.f32 %v4047, %v12664
    %v12906 = vadd.f32 %v4056, %v12665
    %v12907 = vadd.f32 %v4065, %v12666
    %v12908 = vadd.f32 %v4074, %v12667
    %v12909 = vadd.f32 %v4083, %v12668
    %v12910 = vadd.f32 %v4092, %v12669
    %v12911 = vadd.f32 %v4101, %v12670
    %v12912 = vadd.f32 %v4110, %v12633
    %v12913 = vadd.f32 %v4119, %v12671
    %v12914 = vadd.f32 %v4128, %v12672
    %v12915 = vadd.f32 %v4137, %v12673
    %v12916 = vadd.f32 %v4146, %v12674
    %v12917 = vadd.f32 %v4155, %v12675
    %v12918 = vadd.f32 %v4164, %v12676
    %v12919 = vadd.f32 %v4173, %v12677
    %v12920 = vadd.f32 %v4182, %v12634
    %v12921 = vadd.f32 %v4191, %v12678
    %v12922 = vadd.f32 %v4200, %v12679
    %v12923 = vadd.f32 %v4209, %v12680
    %v12924 = vadd.f32 %v4218, %v12681
    %v12925 = vadd.f32 %v4227, %v12682
    %v12926 = vadd.f32 %v4236, %v12683
    %v12927 = vadd.f32 %v4245, %v12684
    %v12928 = vadd.f32 %v4254, %v12635
    %v12929 = vadd.f32 %v4263, %v12685
    %v12930 = vadd.f32 %v4272, %v12686
    %v12931 = vadd.f32 %v4281, %v12687
    %v12932 = vadd.f32 %v4290, %v12688
    %v12933 = vadd.f32 %v4299, %v12689
    %v12934 = vadd.f32 %v4308, %v12690
    %v12935 = vadd.f32 %v4317, %v12691
    %v12936 = vadd.f32 %v4326, %v12636
    %v12937 = vadd.f32 %v4335, %v12692
    %v12938 = vadd.f32 %v4344, %v12693
    %v12939 = vadd.f32 %v4353, %v12694
    %v12940 = vadd.f32 %v4362, %v12695
    %v12941 = vadd.f32 %v4371, %v12696
    %v12942 = vadd.f32 %v4380, %v12697
    %v12943 = vadd.f32 %v4389, %v12698
    %v12944 = vadd.f32 %v4398, %v12637
    %v12945 = vadd.f32 %v4407, %v12699
    %v12946 = vadd.f32 %v4416, %v12700
    %v12947 = vadd.f32 %v4425, %v12701
    %v12948 = vadd.f32 %v4434, %v12702
    %v12949 = vadd.f32 %v4443, %v12703
    %v12950 = vadd.f32 %v4452, %v12704
    %v12951 = vadd.f32 %v4461, %v12705
    %v12952 = vadd.f32 %v4470, %v12638
    %v12953 = vadd.f32 %v4479, %v12706
    %v12954 = vadd.f32 %v4488, %v12707
    %v12955 = vadd.f32 %v4497, %v12708
    %v12956 = vadd.f32 %v4506, %v12709
    %v12957 = vadd.f32 %v4515, %v12710
    %v12958 = vadd.f32 %v4524, %v12711
    %v12959 = vadd.f32 %v4533, %v12712
    %v12960 = vadd.f32 %v4542, %v12639
    %v12961 = vadd.f32 %v4551, %v12713
    %v12962 = vadd.f32 %v4560, %v12714
    %v12963 = vadd.f32 %v4569, %v12715
    %v12964 = vadd.f32 %v4578, %v12716
    %v12965 = vadd.f32 %v4587, %v12717
    %v12966 = vadd.f32 %v4596, %v12718
    %v12967 = vadd.f32 %v4605, %v12719
    %v12968 = vadd.f32 %v4614, %v12640
    %v12969 = vadd.f32 %v4623, %v12720
    %v12970 = vadd.f32 %v4632, %v12721
    %v12971 = vadd.f32 %v4641, %v12722
    %v12972 = vadd.f32 %v4650, %v12723
    %v12973 = vadd.f32 %v4659, %v12724
    %v12974 = vadd.f32 %v4668, %v12725
    %v12975 = vadd.f32 %v4677, %v12726
    %v12976 = vadd.f32 %v4686, %v12641
    %v12977 = vadd.f32 %v4695, %v12727
    %v12978 = vadd.f32 %v4704, %v12728
    %v12979 = vadd.f32 %v4713, %v12729
    %v12980 = vadd.f32 %v4722, %v12730
    %v12981 = vadd.f32 %v4731, %v12731
    %v12982 = vadd.f32 %v4740, %v12732
    %v12983 = vadd.f32 %v4749, %v12733
    %v12984 = vadd.f32 %v4758, %v12642
    %v12985 = vadd.f32 %v4767, %v12734
    %v12986 = vadd.f32 %v4776, %v12735
    %v12987 = vadd.f32 %v4785, %v12736
    %v12988 = vadd.f32 %v4794, %v12737
    %v12989 = vadd.f32 %v4803, %v12738
    %v12990 = vadd.f32 %v4812, %v12739
    %v12991 = vadd.f32 %v4821, %v12740
    %v12992 = vadd.f32 %v4830, %v12643
    %v12993 = vadd.f32 %v4839, %v12741
    %v12994 = vadd.f32 %v4848, %v12742
    %v12995 = vadd.f32 %v4857, %v12743
    %v12996 = vadd.f32 %v4866, %v12744
    %v12997 = vadd.f32 %v4875, %v12745
    %v12998 = vadd.f32 %v4884, %v12746
    %v12999 = vadd.f32 %v4893, %v12747
    %v13000 = vadd.f32 %v4902, %v12644
    %v13001 = vadd.f32 %v4911, %v12748
    %v13002 = vadd.f32 %v4920, %v12749
    %v13003 = vadd.f32 %v4929, %v12750
    %v13004 = vadd.f32 %v4938, %v12751
    %v13005 = vadd.f32 %v4947, %v12752
    %v13006 = vadd.f32 %v4956, %v12753
    %v13007 = vadd.f32 %v4965, %v12754
    %v13008 = vadd.f32 %v4974, %v12645
    %v13009 = vadd.f32 %v4983, %v12755
    %v13010 = vadd.f32 %v4992, %v12756
    %v13011 = vadd.f32 %v5001, %v12757
    %v13012 = vadd.f32 %v5010, %v12758
    %v13013 = vadd.f32 %v5019, %v12759
    %v13014 = vadd.f32 %v5028, %v12760
    %v13015 = vadd.f32 %v5037, %v12761
    %v13016 = vadd.f32 %v5046, %v12646
    %v13017 = vadd.f32 %v5055, %v12762
    %v13018 = vadd.f32 %v5064, %v12763
    %v13019 = vadd.f32 %v5073, %v12764
    %v13020 = vadd.f32 %v5082, %v12765
    %v13021 = vadd.f32 %v5091, %v12766
    %v13022 = vadd.f32 %v5100, %v12767
    %v13023 = vadd.f32 %v5109, %v12768
    %v13024 = vadd.f32 %v5118, %v12647
    %v13025 = vadd.f32 %v5127, %v12769
    %v13026 = vadd.f32 %v5136, %v12770
    %v13027 = vadd.f32 %v5145, %v12771
    %v13028 = vadd.f32 %v5154, %v12772
    %v13029 = vadd.f32 %v5163, %v12773
    %v13030 = vadd.f32 %v5172, %v12774
    %v13031 = vadd.f32 %v5181, %v12775
    %v13160 = vrot.slane %v12905, 7
    %v13161 = vsel %vm5711, %v13160, %v12904
    %v13162 = vrot.slane %v12906, 6
    %v13163 = vsel %vm5714, %v13162, %v13161
    %v13164 = vrot.slane %v12907, 5
    %v13165 = vsel %vm5717, %v13164, %v13163
    %v13166 = vrot.slane %v12908, 4
    %v13167 = vsel %vm5720, %v13166, %v13165
    %v13168 = vrot.slane %v12909, 3
    %v13169 = vsel %vm5723, %v13168, %v13167
    %v13170 = vrot.slane %v12910, 2
    %v13171 = vsel %vm5726, %v13170, %v13169
    %v13172 = vrot.slane %v12911, 1
    %v13173 = vsel %vm5729, %v13172, %v13171
    %v13174 = vrot.slane %v12913, 7
    %v13175 = vsel %vm5711, %v13174, %v12912
    %v13176 = vrot.slane %v12914, 6
    %v13177 = vsel %vm5714, %v13176, %v13175
    %v13178 = vrot.slane %v12915, 5
    %v13179 = vsel %vm5717, %v13178, %v13177
    %v13180 = vrot.slane %v12916, 4
    %v13181 = vsel %vm5720, %v13180, %v13179
    %v13182 = vrot.slane %v12917, 3
    %v13183 = vsel %vm5723, %v13182, %v13181
    %v13184 = vrot.slane %v12918, 2
    %v13185 = vsel %vm5726, %v13184, %v13183
    %v13186 = vrot.slane %v12919, 1
    %v13187 = vsel %vm5729, %v13186, %v13185
    %v13188 = vrot.slane %v12921, 7
    %v13189 = vsel %vm5711, %v13188, %v12920
    %v13190 = vrot.slane %v12922, 6
    %v13191 = vsel %vm5714, %v13190, %v13189
    %v13192 = vrot.slane %v12923, 5
    %v13193 = vsel %vm5717, %v13192, %v13191
    %v13194 = vrot.slane %v12924, 4
    %v13195 = vsel %vm5720, %v13194, %v13193
    %v13196 = vrot.slane %v12925, 3
    %v13197 = vsel %vm5723, %v13196, %v13195
    %v13198 = vrot.slane %v12926, 2
    %v13199 = vsel %vm5726, %v13198, %v13197
    %v13200 = vrot.slane %v12927, 1
    %v13201 = vsel %vm5729, %v13200, %v13199
    %v13202 = vrot.slane %v12929, 7
    %v13203 = vsel %vm5711, %v13202, %v12928
    %v13204 = vrot.slane %v12930, 6
    %v13205 = vsel %vm5714, %v13204, %v13203
    %v13206 = vrot.slane %v12931, 5
    %v13207 = vsel %vm5717, %v13206, %v13205
    %v13208 = vrot.slane %v12932, 4
    %v13209 = vsel %vm5720, %v13208, %v13207
    %v13210 = vrot.slane %v12933, 3
    %v13211 = vsel %vm5723, %v13210, %v13209
    %v13212 = vrot.slane %v12934, 2
    %v13213 = vsel %vm5726, %v13212, %v13211
    %v13214 = vrot.slane %v12935, 1
    %v13215 = vsel %vm5729, %v13214, %v13213
    %v13216 = vrot.slane %v12937, 7
    %v13217 = vsel %vm5711, %v13216, %v12936
    %v13218 = vrot.slane %v12938, 6
    %v13219 = vsel %vm5714, %v13218, %v13217
    %v13220 = vrot.slane %v12939, 5
    %v13221 = vsel %vm5717, %v13220, %v13219
    %v13222 = vrot.slane %v12940, 4
    %v13223 = vsel %vm5720, %v13222, %v13221
    %v13224 = vrot.slane %v12941, 3
    %v13225 = vsel %vm5723, %v13224, %v13223
    %v13226 = vrot.slane %v12942, 2
    %v13227 = vsel %vm5726, %v13226, %v13225
    %v13228 = vrot.slane %v12943, 1
    %v13229 = vsel %vm5729, %v13228, %v13227
    %v13230 = vrot.slane %v12945, 7
    %v13231 = vsel %vm5711, %v13230, %v12944
    %v13232 = vrot.slane %v12946, 6
    %v13233 = vsel %vm5714, %v13232, %v13231
    %v13234 = vrot.slane %v12947, 5
    %v13235 = vsel %vm5717, %v13234, %v13233
    %v13236 = vrot.slane %v12948, 4
    %v13237 = vsel %vm5720, %v13236, %v13235
    %v13238 = vrot.slane %v12949, 3
    %v13239 = vsel %vm5723, %v13238, %v13237
    %v13240 = vrot.slane %v12950, 2
    %v13241 = vsel %vm5726, %v13240, %v13239
    %v13242 = vrot.slane %v12951, 1
    %v13243 = vsel %vm5729, %v13242, %v13241
    %v13244 = vrot.slane %v12953, 7
    %v13245 = vsel %vm5711, %v13244, %v12952
    %v13246 = vrot.slane %v12954, 6
    %v13247 = vsel %vm5714, %v13246, %v13245
    %v13248 = vrot.slane %v12955, 5
    %v13249 = vsel %vm5717, %v13248, %v13247
    %v13250 = vrot.slane %v12956, 4
    %v13251 = vsel %vm5720, %v13250, %v13249
    %v13252 = vrot.slane %v12957, 3
    %v13253 = vsel %vm5723, %v13252, %v13251
    %v13254 = vrot.slane %v12958, 2
    %v13255 = vsel %vm5726, %v13254, %v13253
    %v13256 = vrot.slane %v12959, 1
    %v13257 = vsel %vm5729, %v13256, %v13255
    %v13258 = vrot.slane %v12961, 7
    %v13259 = vsel %vm5711, %v13258, %v12960
    %v13260 = vrot.slane %v12962, 6
    %v13261 = vsel %vm5714, %v13260, %v13259
    %v13262 = vrot.slane %v12963, 5
    %v13263 = vsel %vm5717, %v13262, %v13261
    %v13264 = vrot.slane %v12964, 4
    %v13265 = vsel %vm5720, %v13264, %v13263
    %v13266 = vrot.slane %v12965, 3
    %v13267 = vsel %vm5723, %v13266, %v13265
    %v13268 = vrot.slane %v12966, 2
    %v13269 = vsel %vm5726, %v13268, %v13267
    %v13270 = vrot.slane %v12967, 1
    %v13271 = vsel %vm5729, %v13270, %v13269
    %v13272 = vrot.slane %v12969, 7
    %v13273 = vsel %vm5711, %v13272, %v12968
    %v13274 = vrot.slane %v12970, 6
    %v13275 = vsel %vm5714, %v13274, %v13273
    %v13276 = vrot.slane %v12971, 5
    %v13277 = vsel %vm5717, %v13276, %v13275
    %v13278 = vrot.slane %v12972, 4
    %v13279 = vsel %vm5720, %v13278, %v13277
    %v13280 = vrot.slane %v12973, 3
    %v13281 = vsel %vm5723, %v13280, %v13279
    %v13282 = vrot.slane %v12974, 2
    %v13283 = vsel %vm5726, %v13282, %v13281
    %v13284 = vrot.slane %v12975, 1
    %v13285 = vsel %vm5729, %v13284, %v13283
    %v13286 = vrot.slane %v12977, 7
    %v13287 = vsel %vm5711, %v13286, %v12976
    %v13288 = vrot.slane %v12978, 6
    %v13289 = vsel %vm5714, %v13288, %v13287
    %v13290 = vrot.slane %v12979, 5
    %v13291 = vsel %vm5717, %v13290, %v13289
    %v13292 = vrot.slane %v12980, 4
    %v13293 = vsel %vm5720, %v13292, %v13291
    %v13294 = vrot.slane %v12981, 3
    %v13295 = vsel %vm5723, %v13294, %v13293
    %v13296 = vrot.slane %v12982, 2
    %v13297 = vsel %vm5726, %v13296, %v13295
    %v13298 = vrot.slane %v12983, 1
    %v13299 = vsel %vm5729, %v13298, %v13297
    %v13300 = vrot.slane %v12985, 7
    %v13301 = vsel %vm5711, %v13300, %v12984
    %v13302 = vrot.slane %v12986, 6
    %v13303 = vsel %vm5714, %v13302, %v13301
    %v13304 = vrot.slane %v12987, 5
    %v13305 = vsel %vm5717, %v13304, %v13303
    %v13306 = vrot.slane %v12988, 4
    %v13307 = vsel %vm5720, %v13306, %v13305
    %v13308 = vrot.slane %v12989, 3
    %v13309 = vsel %vm5723, %v13308, %v13307
    %v13310 = vrot.slane %v12990, 2
    %v13311 = vsel %vm5726, %v13310, %v13309
    %v13312 = vrot.slane %v12991, 1
    %v13313 = vsel %vm5729, %v13312, %v13311
    %v13314 = vrot.slane %v12993, 7
    %v13315 = vsel %vm5711, %v13314, %v12992
    %v13316 = vrot.slane %v12994, 6
    %v13317 = vsel %vm5714, %v13316, %v13315
    %v13318 = vrot.slane %v12995, 5
    %v13319 = vsel %vm5717, %v13318, %v13317
    %v13320 = vrot.slane %v12996, 4
    %v13321 = vsel %vm5720, %v13320, %v13319
    %v13322 = vrot.slane %v12997, 3
    %v13323 = vsel %vm5723, %v13322, %v13321
    %v13324 = vrot.slane %v12998, 2
    %v13325 = vsel %vm5726, %v13324, %v13323
    %v13326 = vrot.slane %v12999, 1
    %v13327 = vsel %vm5729, %v13326, %v13325
    %v13328 = vrot.slane %v13001, 7
    %v13329 = vsel %vm5711, %v13328, %v13000
    %v13330 = vrot.slane %v13002, 6
    %v13331 = vsel %vm5714, %v13330, %v13329
    %v13332 = vrot.slane %v13003, 5
    %v13333 = vsel %vm5717, %v13332, %v13331
    %v13334 = vrot.slane %v13004, 4
    %v13335 = vsel %vm5720, %v13334, %v13333
    %v13336 = vrot.slane %v13005, 3
    %v13337 = vsel %vm5723, %v13336, %v13335
    %v13338 = vrot.slane %v13006, 2
    %v13339 = vsel %vm5726, %v13338, %v13337
    %v13340 = vrot.slane %v13007, 1
    %v13341 = vsel %vm5729, %v13340, %v13339
    %v13342 = vrot.slane %v13009, 7
    %v13343 = vsel %vm5711, %v13342, %v13008
    %v13344 = vrot.slane %v13010, 6
    %v13345 = vsel %vm5714, %v13344, %v13343
    %v13346 = vrot.slane %v13011, 5
    %v13347 = vsel %vm5717, %v13346, %v13345
    %v13348 = vrot.slane %v13012, 4
    %v13349 = vsel %vm5720, %v13348, %v13347
    %v13350 = vrot.slane %v13013, 3
    %v13351 = vsel %vm5723, %v13350, %v13349
    %v13352 = vrot.slane %v13014, 2
    %v13353 = vsel %vm5726, %v13352, %v13351
    %v13354 = vrot.slane %v13015, 1
    %v13355 = vsel %vm5729, %v13354, %v13353
    %v13356 = vrot.slane %v13017, 7
    %v13357 = vsel %vm5711, %v13356, %v13016
    %v13358 = vrot.slane %v13018, 6
    %v13359 = vsel %vm5714, %v13358, %v13357
    %v13360 = vrot.slane %v13019, 5
    %v13361 = vsel %vm5717, %v13360, %v13359
    %v13362 = vrot.slane %v13020, 4
    %v13363 = vsel %vm5720, %v13362, %v13361
    %v13364 = vrot.slane %v13021, 3
    %v13365 = vsel %vm5723, %v13364, %v13363
    %v13366 = vrot.slane %v13022, 2
    %v13367 = vsel %vm5726, %v13366, %v13365
    %v13368 = vrot.slane %v13023, 1
    %v13369 = vsel %vm5729, %v13368, %v13367
    %v13370 = vrot.slane %v13025, 7
    %v13371 = vsel %vm5711, %v13370, %v13024
    %v13372 = vrot.slane %v13026, 6
    %v13373 = vsel %vm5714, %v13372, %v13371
    %v13374 = vrot.slane %v13027, 5
    %v13375 = vsel %vm5717, %v13374, %v13373
    %v13376 = vrot.slane %v13028, 4
    %v13377 = vsel %vm5720, %v13376, %v13375
    %v13378 = vrot.slane %v13029, 3
    %v13379 = vsel %vm5723, %v13378, %v13377
    %v13380 = vrot.slane %v13030, 2
    %v13381 = vsel %vm5726, %v13380, %v13379
    %v13382 = vrot.slane %v13031, 1
    %v13383 = vsel %vm5729, %v13382, %v13381
    %13400 = vmax.xlane.f32.xlu0 %v13173
    %v13401 = vpop.xlane.xlu0 %13400
    %13402 = vmax.xlane.f32.xlu0 %v13187
    %v13403 = vpop.xlane.xlu0 %13402
    %13404 = vmax.xlane.f32.xlu0 %v13201
    %v13405 = vpop.xlane.xlu0 %13404
    %13406 = vmax.xlane.f32.xlu0 %v13215
    %v13407 = vpop.xlane.xlu0 %13406
    %13408 = vmax.xlane.f32.xlu0 %v13229
    %v13409 = vpop.xlane.xlu0 %13408
    %13410 = vmax.xlane.f32.xlu0 %v13243
    %v13411 = vpop.xlane.xlu0 %13410
    %13412 = vmax.xlane.f32.xlu0 %v13257
    %v13413 = vpop.xlane.xlu0 %13412
    %13414 = vmax.xlane.f32.xlu0 %v13271
    %v13415 = vpop.xlane.xlu0 %13414
    %13416 = vmax.xlane.f32.xlu0 %v13285
    %v13417 = vpop.xlane.xlu0 %13416
    %13418 = vmax.xlane.f32.xlu0 %v13299
    %v13419 = vpop.xlane.xlu0 %13418
    %13420 = vmax.xlane.f32.xlu0 %v13313
    %v13421 = vpop.xlane.xlu0 %13420
    %13422 = vmax.xlane.f32.xlu0 %v13327
    %v13423 = vpop.xlane.xlu0 %13422
    %13424 = vmax.xlane.f32.xlu0 %v13341
    %v13425 = vpop.xlane.xlu0 %13424
    %13426 = vmax.xlane.f32.xlu0 %v13355
    %v13427 = vpop.xlane.xlu0 %13426
    %13428 = vmax.xlane.f32.xlu0 %v13369
    %v13429 = vpop.xlane.xlu0 %13428
    %13430 = vmax.xlane.f32.xlu0 %v13383
    %v13431 = vpop.xlane.xlu0 %13430
    %v13448 = vrot.slane %v13401, 1
    %v13449 = vrot.slane %v13401, 2
    %v13450 = vrot.slane %v13401, 3
    %v13451 = vrot.slane %v13401, 4
    %v13452 = vrot.slane %v13401, 5
    %v13453 = vrot.slane %v13401, 6
    %v13454 = vrot.slane %v13401, 7
    %v13455 = vrot.slane %v13403, 1
    %v13456 = vrot.slane %v13403, 2
    %v13457 = vrot.slane %v13403, 3
    %v13458 = vrot.slane %v13403, 4
    %v13459 = vrot.slane %v13403, 5
    %v13460 = vrot.slane %v13403, 6
    %v13461 = vrot.slane %v13403, 7
    %v13462 = vrot.slane %v13405, 1
    %v13463 = vrot.slane %v13405, 2
    %v13464 = vrot.slane %v13405, 3
    %v13465 = vrot.slane %v13405, 4
    %v13466 = vrot.slane %v13405, 5
    %v13467 = vrot.slane %v13405, 6
    %v13468 = vrot.slane %v13405, 7
    %v13469 = vrot.slane %v13407, 1
    %v13470 = vrot.slane %v13407, 2
    %v13471 = vrot.slane %v13407, 3
    %v13472 = vrot.slane %v13407, 4
    %v13473 = vrot.slane %v13407, 5
    %v13474 = vrot.slane %v13407, 6
    %v13475 = vrot.slane %v13407, 7
    %v13476 = vrot.slane %v13409, 1
    %v13477 = vrot.slane %v13409, 2
    %v13478 = vrot.slane %v13409, 3
    %v13479 = vrot.slane %v13409, 4
    %v13480 = vrot.slane %v13409, 5
    %v13481 = vrot.slane %v13409, 6
    %v13482 = vrot.slane %v13409, 7
    %v13483 = vrot.slane %v13411, 1
    %v13484 = vrot.slane %v13411, 2
    %v13485 = vrot.slane %v13411, 3
    %v13486 = vrot.slane %v13411, 4
    %v13487 = vrot.slane %v13411, 5
    %v13488 = vrot.slane %v13411, 6
    %v13489 = vrot.slane %v13411, 7
    %v13490 = vrot.slane %v13413, 1
    %v13491 = vrot.slane %v13413, 2
    %v13492 = vrot.slane %v13413, 3
    %v13493 = vrot.slane %v13413, 4
    %v13494 = vrot.slane %v13413, 5
    %v13495 = vrot.slane %v13413, 6
    %v13496 = vrot.slane %v13413, 7
    %v13497 = vrot.slane %v13415, 1
    %v13498 = vrot.slane %v13415, 2
    %v13499 = vrot.slane %v13415, 3
    %v13500 = vrot.slane %v13415, 4
    %v13501 = vrot.slane %v13415, 5
    %v13502 = vrot.slane %v13415, 6
    %v13503 = vrot.slane %v13415, 7
    %v13504 = vrot.slane %v13417, 1
    %v13505 = vrot.slane %v13417, 2
    %v13506 = vrot.slane %v13417, 3
    %v13507 = vrot.slane %v13417, 4
    %v13508 = vrot.slane %v13417, 5
    %v13509 = vrot.slane %v13417, 6
    %v13510 = vrot.slane %v13417, 7
    %v13511 = vrot.slane %v13419, 1
    %v13512 = vrot.slane %v13419, 2
    %v13513 = vrot.slane %v13419, 3
    %v13514 = vrot.slane %v13419, 4
    %v13515 = vrot.slane %v13419, 5
    %v13516 = vrot.slane %v13419, 6
    %v13517 = vrot.slane %v13419, 7
    %v13518 = vrot.slane %v13421, 1
    %v13519 = vrot.slane %v13421, 2
    %v13520 = vrot.slane %v13421, 3
    %v13521 = vrot.slane %v13421, 4
    %v13522 = vrot.slane %v13421, 5
    %v13523 = vrot.slane %v13421, 6
    %v13524 = vrot.slane %v13421, 7
    %v13525 = vrot.slane %v13423, 1
    %v13526 = vrot.slane %v13423, 2
    %v13527 = vrot.slane %v13423, 3
    %v13528 = vrot.slane %v13423, 4
    %v13529 = vrot.slane %v13423, 5
    %v13530 = vrot.slane %v13423, 6
    %v13531 = vrot.slane %v13423, 7
    %v13532 = vrot.slane %v13425, 1
    %v13533 = vrot.slane %v13425, 2
    %v13534 = vrot.slane %v13425, 3
    %v13535 = vrot.slane %v13425, 4
    %v13536 = vrot.slane %v13425, 5
    %v13537 = vrot.slane %v13425, 6
    %v13538 = vrot.slane %v13425, 7
    %v13539 = vrot.slane %v13427, 1
    %v13540 = vrot.slane %v13427, 2
    %v13541 = vrot.slane %v13427, 3
    %v13542 = vrot.slane %v13427, 4
    %v13543 = vrot.slane %v13427, 5
    %v13544 = vrot.slane %v13427, 6
    %v13545 = vrot.slane %v13427, 7
    %v13546 = vrot.slane %v13429, 1
    %v13547 = vrot.slane %v13429, 2
    %v13548 = vrot.slane %v13429, 3
    %v13549 = vrot.slane %v13429, 4
    %v13550 = vrot.slane %v13429, 5
    %v13551 = vrot.slane %v13429, 6
    %v13552 = vrot.slane %v13429, 7
    %v13553 = vrot.slane %v13431, 1
    %v13554 = vrot.slane %v13431, 2
    %v13555 = vrot.slane %v13431, 3
    %v13556 = vrot.slane %v13431, 4
    %v13557 = vrot.slane %v13431, 5
    %v13558 = vrot.slane %v13431, 6
    %v13559 = vrot.slane %v13431, 7
    %v13688 = vsub.f32 %v12904, %v13401
    %v13689 = vsub.f32 %v12905, %v13448
    %v13690 = vsub.f32 %v12906, %v13449
    %v13691 = vsub.f32 %v12907, %v13450
    %v13692 = vsub.f32 %v12908, %v13451
    %v13693 = vsub.f32 %v12909, %v13452
    %v13694 = vsub.f32 %v12910, %v13453
    %v13695 = vsub.f32 %v12911, %v13454
    %v13696 = vsub.f32 %v12912, %v13403
    %v13697 = vsub.f32 %v12913, %v13455
    %v13698 = vsub.f32 %v12914, %v13456
    %v13699 = vsub.f32 %v12915, %v13457
    %v13700 = vsub.f32 %v12916, %v13458
    %v13701 = vsub.f32 %v12917, %v13459
    %v13702 = vsub.f32 %v12918, %v13460
    %v13703 = vsub.f32 %v12919, %v13461
    %v13704 = vsub.f32 %v12920, %v13405
    %v13705 = vsub.f32 %v12921, %v13462
    %v13706 = vsub.f32 %v12922, %v13463
    %v13707 = vsub.f32 %v12923, %v13464
    %v13708 = vsub.f32 %v12924, %v13465
    %v13709 = vsub.f32 %v12925, %v13466
    %v13710 = vsub.f32 %v12926, %v13467
    %v13711 = vsub.f32 %v12927, %v13468
    %v13712 = vsub.f32 %v12928, %v13407
    %v13713 = vsub.f32 %v12929, %v13469
    %v13714 = vsub.f32 %v12930, %v13470
    %v13715 = vsub.f32 %v12931, %v13471
    %v13716 = vsub.f32 %v12932, %v13472
    %v13717 = vsub.f32 %v12933, %v13473
    %v13718 = vsub.f32 %v12934, %v13474
    %v13719 = vsub.f32 %v12935, %v13475
    %v13720 = vsub.f32 %v12936, %v13409
    %v13721 = vsub.f32 %v12937, %v13476
    %v13722 = vsub.f32 %v12938, %v13477
    %v13723 = vsub.f32 %v12939, %v13478
    %v13724 = vsub.f32 %v12940, %v13479
    %v13725 = vsub.f32 %v12941, %v13480
    %v13726 = vsub.f32 %v12942, %v13481
    %v13727 = vsub.f32 %v12943, %v13482
    %v13728 = vsub.f32 %v12944, %v13411
    %v13729 = vsub.f32 %v12945, %v13483
    %v13730 = vsub.f32 %v12946, %v13484
    %v13731 = vsub.f32 %v12947, %v13485
    %v13732 = vsub.f32 %v12948, %v13486
    %v13733 = vsub.f32 %v12949, %v13487
    %v13734 = vsub.f32 %v12950, %v13488
    %v13735 = vsub.f32 %v12951, %v13489
    %v13736 = vsub.f32 %v12952, %v13413
    %v13737 = vsub.f32 %v12953, %v13490
    %v13738 = vsub.f32 %v12954, %v13491
    %v13739 = vsub.f32 %v12955, %v13492
    %v13740 = vsub.f32 %v12956, %v13493
    %v13741 = vsub.f32 %v12957, %v13494
    %v13742 = vsub.f32 %v12958, %v13495
    %v13743 = vsub.f32 %v12959, %v13496
    %v13744 = vsub.f32 %v12960, %v13415
    %v13745 = vsub.f32 %v12961, %v13497
    %v13746 = vsub.f32 %v12962, %v13498
    %v13747 = vsub.f32 %v12963, %v13499
    %v13748 = vsub.f32 %v12964, %v13500
    %v13749 = vsub.f32 %v12965, %v13501
    %v13750 = vsub.f32 %v12966, %v13502
    %v13751 = vsub.f32 %v12967, %v13503
    %v13752 = vsub.f32 %v12968, %v13417
    %v13753 = vsub.f32 %v12969, %v13504
    %v13754 = vsub.f32 %v12970, %v13505
    %v13755 = vsub.f32 %v12971, %v13506
    %v13756 = vsub.f32 %v12972, %v13507
    %v13757 = vsub.f32 %v12973, %v13508
    %v13758 = vsub.f32 %v12974, %v13509
    %v13759 = vsub.f32 %v12975, %v13510
    %v13760 = vsub.f32 %v12976, %v13419
    %v13761 = vsub.f32 %v12977, %v13511
    %v13762 = vsub.f32 %v12978, %v13512
    %v13763 = vsub.f32 %v12979, %v13513
    %v13764 = vsub.f32 %v12980, %v13514
    %v13765 = vsub.f32 %v12981, %v13515
    %v13766 = vsub.f32 %v12982, %v13516
    %v13767 = vsub.f32 %v12983, %v13517
    %v13768 = vsub.f32 %v12984, %v13421
    %v13769 = vsub.f32 %v12985, %v13518
    %v13770 = vsub.f32 %v12986, %v13519
    %v13771 = vsub.f32 %v12987, %v13520
    %v13772 = vsub.f32 %v12988, %v13521
    %v13773 = vsub.f32 %v12989, %v13522
    %v13774 = vsub.f32 %v12990, %v13523
    %v13775 = vsub.f32 %v12991, %v13524
    %v13776 = vsub.f32 %v12992, %v13423
    %v13777 = vsub.f32 %v12993, %v13525
    %v13778 = vsub.f32 %v12994, %v13526
    %v13779 = vsub.f32 %v12995, %v13527
    %v13780 = vsub.f32 %v12996, %v13528
    %v13781 = vsub.f32 %v12997, %v13529
    %v13782 = vsub.f32 %v12998, %v13530
    %v13783 = vsub.f32 %v12999, %v13531
    %v13784 = vsub.f32 %v13000, %v13425
    %v13785 = vsub.f32 %v13001, %v13532
    %v13786 = vsub.f32 %v13002, %v13533
    %v13787 = vsub.f32 %v13003, %v13534
    %v13788 = vsub.f32 %v13004, %v13535
    %v13789 = vsub.f32 %v13005, %v13536
    %v13790 = vsub.f32 %v13006, %v13537
    %v13791 = vsub.f32 %v13007, %v13538
    %v13792 = vsub.f32 %v13008, %v13427
    %v13793 = vsub.f32 %v13009, %v13539
    %v13794 = vsub.f32 %v13010, %v13540
    %v13795 = vsub.f32 %v13011, %v13541
    %v13796 = vsub.f32 %v13012, %v13542
    %v13797 = vsub.f32 %v13013, %v13543
    %v13798 = vsub.f32 %v13014, %v13544
    %v13799 = vsub.f32 %v13015, %v13545
    %v13800 = vsub.f32 %v13016, %v13429
    %v13801 = vsub.f32 %v13017, %v13546
    %v13802 = vsub.f32 %v13018, %v13547
    %v13803 = vsub.f32 %v13019, %v13548
    %v13804 = vsub.f32 %v13020, %v13549
    %v13805 = vsub.f32 %v13021, %v13550
    %v13806 = vsub.f32 %v13022, %v13551
    %v13807 = vsub.f32 %v13023, %v13552
    %v13808 = vsub.f32 %v13024, %v13431
    %v13809 = vsub.f32 %v13025, %v13553
    %v13810 = vsub.f32 %v13026, %v13554
    %v13811 = vsub.f32 %v13027, %v13555
    %v13812 = vsub.f32 %v13028, %v13556
    %v13813 = vsub.f32 %v13029, %v13557
    %v13814 = vsub.f32 %v13030, %v13558
    %v13815 = vsub.f32 %v13031, %v13559
    %v13816 = vmul.f32 %v13688, 1.442695
    %v13817 = vpow.pop %v13816
    %v13818 = vmul.f32 %v13689, 1.442695
    %v13819 = vpow.pop %v13818
    %v13820 = vmul.f32 %v13690, 1.442695
    %v13821 = vpow.pop %v13820
    %v13822 = vmul.f32 %v13691, 1.442695
    %v13823 = vpow.pop %v13822
    %v13824 = vmul.f32 %v13692, 1.442695
    %v13825 = vpow.pop %v13824
    %v13826 = vmul.f32 %v13693, 1.442695
    %v13827 = vpow.pop %v13826
    %v13828 = vmul.f32 %v13694, 1.442695
    %v13829 = vpow.pop %v13828
    %v13830 = vmul.f32 %v13695, 1.442695
    %v13831 = vpow.pop %v13830
    %v13832 = vmul.f32 %v13696, 1.442695
    %v13833 = vpow.pop %v13832
    %v13834 = vmul.f32 %v13697, 1.442695
    %v13835 = vpow.pop %v13834
    %v13836 = vmul.f32 %v13698, 1.442695
    %v13837 = vpow.pop %v13836
    %v13838 = vmul.f32 %v13699, 1.442695
    %v13839 = vpow.pop %v13838
    %v13840 = vmul.f32 %v13700, 1.442695
    %v13841 = vpow.pop %v13840
    %v13842 = vmul.f32 %v13701, 1.442695
    %v13843 = vpow.pop %v13842
    %v13844 = vmul.f32 %v13702, 1.442695
    %v13845 = vpow.pop %v13844
    %v13846 = vmul.f32 %v13703, 1.442695
    %v13847 = vpow.pop %v13846
    %v13848 = vmul.f32 %v13704, 1.442695
    %v13849 = vpow.pop %v13848
    %v13850 = vmul.f32 %v13705, 1.442695
    %v13851 = vpow.pop %v13850
    %v13852 = vmul.f32 %v13706, 1.442695
    %v13853 = vpow.pop %v13852
    %v13854 = vmul.f32 %v13707, 1.442695
    %v13855 = vpow.pop %v13854
    %v13856 = vmul.f32 %v13708, 1.442695
    %v13857 = vpow.pop %v13856
    %v13858 = vmul.f32 %v13709, 1.442695
    %v13859 = vpow.pop %v13858
    %v13860 = vmul.f32 %v13710, 1.442695
    %v13861 = vpow.pop %v13860
    %v13862 = vmul.f32 %v13711, 1.442695
    %v13863 = vpow.pop %v13862
    %v13864 = vmul.f32 %v13712, 1.442695
    %v13865 = vpow.pop %v13864
    %v13866 = vmul.f32 %v13713, 1.442695
    %v13867 = vpow.pop %v13866
    %v13868 = vmul.f32 %v13714, 1.442695
    %v13869 = vpow.pop %v13868
    %v13870 = vmul.f32 %v13715, 1.442695
    %v13871 = vpow.pop %v13870
    %v13872 = vmul.f32 %v13716, 1.442695
    %v13873 = vpow.pop %v13872
    %v13874 = vmul.f32 %v13717, 1.442695
    %v13875 = vpow.pop %v13874
    %v13876 = vmul.f32 %v13718, 1.442695
    %v13877 = vpow.pop %v13876
    %v13878 = vmul.f32 %v13719, 1.442695
    %v13879 = vpow.pop %v13878
    %v13880 = vmul.f32 %v13720, 1.442695
    %v13881 = vpow.pop %v13880
    %v13882 = vmul.f32 %v13721, 1.442695
    %v13883 = vpow.pop %v13882
    %v13884 = vmul.f32 %v13722, 1.442695
    %v13885 = vpow.pop %v13884
    %v13886 = vmul.f32 %v13723, 1.442695
    %v13887 = vpow.pop %v13886
    %v13888 = vmul.f32 %v13724, 1.442695
    %v13889 = vpow.pop %v13888
    %v13890 = vmul.f32 %v13725, 1.442695
    %v13891 = vpow.pop %v13890
    %v13892 = vmul.f32 %v13726, 1.442695
    %v13893 = vpow.pop %v13892
    %v13894 = vmul.f32 %v13727, 1.442695
    %v13895 = vpow.pop %v13894
    %v13896 = vmul.f32 %v13728, 1.442695
    %v13897 = vpow.pop %v13896
    %v13898 = vmul.f32 %v13729, 1.442695
    %v13899 = vpow.pop %v13898
    %v13900 = vmul.f32 %v13730, 1.442695
    %v13901 = vpow.pop %v13900
    %v13902 = vmul.f32 %v13731, 1.442695
    %v13903 = vpow.pop %v13902
    %v13904 = vmul.f32 %v13732, 1.442695
    %v13905 = vpow.pop %v13904
    %v13906 = vmul.f32 %v13733, 1.442695
    %v13907 = vpow.pop %v13906
    %v13908 = vmul.f32 %v13734, 1.442695
    %v13909 = vpow.pop %v13908
    %v13910 = vmul.f32 %v13735, 1.442695
    %v13911 = vpow.pop %v13910
    %v13912 = vmul.f32 %v13736, 1.442695
    %v13913 = vpow.pop %v13912
    %v13914 = vmul.f32 %v13737, 1.442695
    %v13915 = vpow.pop %v13914
    %v13916 = vmul.f32 %v13738, 1.442695
    %v13917 = vpow.pop %v13916
    %v13918 = vmul.f32 %v13739, 1.442695
    %v13919 = vpow.pop %v13918
    %v13920 = vmul.f32 %v13740, 1.442695
    %v13921 = vpow.pop %v13920
    %v13922 = vmul.f32 %v13741, 1.442695
    %v13923 = vpow.pop %v13922
    %v13924 = vmul.f32 %v13742, 1.442695
    %v13925 = vpow.pop %v13924
    %v13926 = vmul.f32 %v13743, 1.442695
    %v13927 = vpow.pop %v13926
    %v13928 = vmul.f32 %v13744, 1.442695
    %v13929 = vpow.pop %v13928
    %v13930 = vmul.f32 %v13745, 1.442695
    %v13931 = vpow.pop %v13930
    %v13932 = vmul.f32 %v13746, 1.442695
    %v13933 = vpow.pop %v13932
    %v13934 = vmul.f32 %v13747, 1.442695
    %v13935 = vpow.pop %v13934
    %v13936 = vmul.f32 %v13748, 1.442695
    %v13937 = vpow.pop %v13936
    %v13938 = vmul.f32 %v13749, 1.442695
    %v13939 = vpow.pop %v13938
    %v13940 = vmul.f32 %v13750, 1.442695
    %v13941 = vpow.pop %v13940
    %v13942 = vmul.f32 %v13751, 1.442695
    %v13943 = vpow.pop %v13942
    %v13944 = vmul.f32 %v13752, 1.442695
    %v13945 = vpow.pop %v13944
    %v13946 = vmul.f32 %v13753, 1.442695
    %v13947 = vpow.pop %v13946
    %v13948 = vmul.f32 %v13754, 1.442695
    %v13949 = vpow.pop %v13948
    %v13950 = vmul.f32 %v13755, 1.442695
    %v13951 = vpow.pop %v13950
    %v13952 = vmul.f32 %v13756, 1.442695
    %v13953 = vpow.pop %v13952
    %v13954 = vmul.f32 %v13757, 1.442695
    %v13955 = vpow.pop %v13954
    %v13956 = vmul.f32 %v13758, 1.442695
    %v13957 = vpow.pop %v13956
    %v13958 = vmul.f32 %v13759, 1.442695
    %v13959 = vpow.pop %v13958
    %v13960 = vmul.f32 %v13760, 1.442695
    %v13961 = vpow.pop %v13960
    %v13962 = vmul.f32 %v13761, 1.442695
    %v13963 = vpow.pop %v13962
    %v13964 = vmul.f32 %v13762, 1.442695
    %v13965 = vpow.pop %v13964
    %v13966 = vmul.f32 %v13763, 1.442695
    %v13967 = vpow.pop %v13966
    %v13968 = vmul.f32 %v13764, 1.442695
    %v13969 = vpow.pop %v13968
    %v13970 = vmul.f32 %v13765, 1.442695
    %v13971 = vpow.pop %v13970
    %v13972 = vmul.f32 %v13766, 1.442695
    %v13973 = vpow.pop %v13972
    %v13974 = vmul.f32 %v13767, 1.442695
    %v13975 = vpow.pop %v13974
    %v13976 = vmul.f32 %v13768, 1.442695
    %v13977 = vpow.pop %v13976
    %v13978 = vmul.f32 %v13769, 1.442695
    %v13979 = vpow.pop %v13978
    %v13980 = vmul.f32 %v13770, 1.442695
    %v13981 = vpow.pop %v13980
    %v13982 = vmul.f32 %v13771, 1.442695
    %v13983 = vpow.pop %v13982
    %v13984 = vmul.f32 %v13772, 1.442695
    %v13985 = vpow.pop %v13984
    %v13986 = vmul.f32 %v13773, 1.442695
    %v13987 = vpow.pop %v13986
    %v13988 = vmul.f32 %v13774, 1.442695
    %v13989 = vpow.pop %v13988
    %v13990 = vmul.f32 %v13775, 1.442695
    %v13991 = vpow.pop %v13990
    %v13992 = vmul.f32 %v13776, 1.442695
    %v13993 = vpow.pop %v13992
    %v13994 = vmul.f32 %v13777, 1.442695
    %v13995 = vpow.pop %v13994
    %v13996 = vmul.f32 %v13778, 1.442695
    %v13997 = vpow.pop %v13996
    %v13998 = vmul.f32 %v13779, 1.442695
    %v13999 = vpow.pop %v13998
    %v14000 = vmul.f32 %v13780, 1.442695
    %v14001 = vpow.pop %v14000
    %v14002 = vmul.f32 %v13781, 1.442695
    %v14003 = vpow.pop %v14002
    %v14004 = vmul.f32 %v13782, 1.442695
    %v14005 = vpow.pop %v14004
    %v14006 = vmul.f32 %v13783, 1.442695
    %v14007 = vpow.pop %v14006
    %v14008 = vmul.f32 %v13784, 1.442695
    %v14009 = vpow.pop %v14008
    %v14010 = vmul.f32 %v13785, 1.442695
    %v14011 = vpow.pop %v14010
    %v14012 = vmul.f32 %v13786, 1.442695
    %v14013 = vpow.pop %v14012
    %v14014 = vmul.f32 %v13787, 1.442695
    %v14015 = vpow.pop %v14014
    %v14016 = vmul.f32 %v13788, 1.442695
    %v14017 = vpow.pop %v14016
    %v14018 = vmul.f32 %v13789, 1.442695
    %v14019 = vpow.pop %v14018
    %v14020 = vmul.f32 %v13790, 1.442695
    %v14021 = vpow.pop %v14020
    %v14022 = vmul.f32 %v13791, 1.442695
    %v14023 = vpow.pop %v14022
    %v14024 = vmul.f32 %v13792, 1.442695
    %v14025 = vpow.pop %v14024
    %v14026 = vmul.f32 %v13793, 1.442695
    %v14027 = vpow.pop %v14026
    %v14028 = vmul.f32 %v13794, 1.442695
    %v14029 = vpow.pop %v14028
    %v14030 = vmul.f32 %v13795, 1.442695
    %v14031 = vpow.pop %v14030
    %v14032 = vmul.f32 %v13796, 1.442695
    %v14033 = vpow.pop %v14032
    %v14034 = vmul.f32 %v13797, 1.442695
    %v14035 = vpow.pop %v14034
    %v14036 = vmul.f32 %v13798, 1.442695
    %v14037 = vpow.pop %v14036
    %v14038 = vmul.f32 %v13799, 1.442695
    %v14039 = vpow.pop %v14038
    %v14040 = vmul.f32 %v13800, 1.442695
    %v14041 = vpow.pop %v14040
    %v14042 = vmul.f32 %v13801, 1.442695
    %v14043 = vpow.pop %v14042
    %v14044 = vmul.f32 %v13802, 1.442695
    %v14045 = vpow.pop %v14044
    %v14046 = vmul.f32 %v13803, 1.442695
    %v14047 = vpow.pop %v14046
    %v14048 = vmul.f32 %v13804, 1.442695
    %v14049 = vpow.pop %v14048
    %v14050 = vmul.f32 %v13805, 1.442695
    %v14051 = vpow.pop %v14050
    %v14052 = vmul.f32 %v13806, 1.442695
    %v14053 = vpow.pop %v14052
    %v14054 = vmul.f32 %v13807, 1.442695
    %v14055 = vpow.pop %v14054
    %v14056 = vmul.f32 %v13808, 1.442695
    %v14057 = vpow.pop %v14056
    %v14058 = vmul.f32 %v13809, 1.442695
    %v14059 = vpow.pop %v14058
    %v14060 = vmul.f32 %v13810, 1.442695
    %v14061 = vpow.pop %v14060
    %v14062 = vmul.f32 %v13811, 1.442695
    %v14063 = vpow.pop %v14062
    %v14064 = vmul.f32 %v13812, 1.442695
    %v14065 = vpow.pop %v14064
    %v14066 = vmul.f32 %v13813, 1.442695
    %v14067 = vpow.pop %v14066
    %v14068 = vmul.f32 %v13814, 1.442695
    %v14069 = vpow.pop %v14068
    %v14070 = vmul.f32 %v13815, 1.442695
    %v14071 = vpow.pop %v14070
    %v14200 = vrot.slane %v13819, 7
    %v14201 = vsel %vm5711, %v14200, %v13817
    %v14202 = vrot.slane %v13821, 6
    %v14203 = vsel %vm5714, %v14202, %v14201
    %v14204 = vrot.slane %v13823, 5
    %v14205 = vsel %vm5717, %v14204, %v14203
    %v14206 = vrot.slane %v13825, 4
    %v14207 = vsel %vm5720, %v14206, %v14205
    %v14208 = vrot.slane %v13827, 3
    %v14209 = vsel %vm5723, %v14208, %v14207
    %v14210 = vrot.slane %v13829, 2
    %v14211 = vsel %vm5726, %v14210, %v14209
    %v14212 = vrot.slane %v13831, 1
    %v14213 = vsel %vm5729, %v14212, %v14211
    %v14214 = vrot.slane %v13835, 7
    %v14215 = vsel %vm5711, %v14214, %v13833
    %v14216 = vrot.slane %v13837, 6
    %v14217 = vsel %vm5714, %v14216, %v14215
    %v14218 = vrot.slane %v13839, 5
    %v14219 = vsel %vm5717, %v14218, %v14217
    %v14220 = vrot.slane %v13841, 4
    %v14221 = vsel %vm5720, %v14220, %v14219
    %v14222 = vrot.slane %v13843, 3
    %v14223 = vsel %vm5723, %v14222, %v14221
    %v14224 = vrot.slane %v13845, 2
    %v14225 = vsel %vm5726, %v14224, %v14223
    %v14226 = vrot.slane %v13847, 1
    %v14227 = vsel %vm5729, %v14226, %v14225
    %v14228 = vrot.slane %v13851, 7
    %v14229 = vsel %vm5711, %v14228, %v13849
    %v14230 = vrot.slane %v13853, 6
    %v14231 = vsel %vm5714, %v14230, %v14229
    %v14232 = vrot.slane %v13855, 5
    %v14233 = vsel %vm5717, %v14232, %v14231
    %v14234 = vrot.slane %v13857, 4
    %v14235 = vsel %vm5720, %v14234, %v14233
    %v14236 = vrot.slane %v13859, 3
    %v14237 = vsel %vm5723, %v14236, %v14235
    %v14238 = vrot.slane %v13861, 2
    %v14239 = vsel %vm5726, %v14238, %v14237
    %v14240 = vrot.slane %v13863, 1
    %v14241 = vsel %vm5729, %v14240, %v14239
    %v14242 = vrot.slane %v13867, 7
    %v14243 = vsel %vm5711, %v14242, %v13865
    %v14244 = vrot.slane %v13869, 6
    %v14245 = vsel %vm5714, %v14244, %v14243
    %v14246 = vrot.slane %v13871, 5
    %v14247 = vsel %vm5717, %v14246, %v14245
    %v14248 = vrot.slane %v13873, 4
    %v14249 = vsel %vm5720, %v14248, %v14247
    %v14250 = vrot.slane %v13875, 3
    %v14251 = vsel %vm5723, %v14250, %v14249
    %v14252 = vrot.slane %v13877, 2
    %v14253 = vsel %vm5726, %v14252, %v14251
    %v14254 = vrot.slane %v13879, 1
    %v14255 = vsel %vm5729, %v14254, %v14253
    %v14256 = vrot.slane %v13883, 7
    %v14257 = vsel %vm5711, %v14256, %v13881
    %v14258 = vrot.slane %v13885, 6
    %v14259 = vsel %vm5714, %v14258, %v14257
    %v14260 = vrot.slane %v13887, 5
    %v14261 = vsel %vm5717, %v14260, %v14259
    %v14262 = vrot.slane %v13889, 4
    %v14263 = vsel %vm5720, %v14262, %v14261
    %v14264 = vrot.slane %v13891, 3
    %v14265 = vsel %vm5723, %v14264, %v14263
    %v14266 = vrot.slane %v13893, 2
    %v14267 = vsel %vm5726, %v14266, %v14265
    %v14268 = vrot.slane %v13895, 1
    %v14269 = vsel %vm5729, %v14268, %v14267
    %v14270 = vrot.slane %v13899, 7
    %v14271 = vsel %vm5711, %v14270, %v13897
    %v14272 = vrot.slane %v13901, 6
    %v14273 = vsel %vm5714, %v14272, %v14271
    %v14274 = vrot.slane %v13903, 5
    %v14275 = vsel %vm5717, %v14274, %v14273
    %v14276 = vrot.slane %v13905, 4
    %v14277 = vsel %vm5720, %v14276, %v14275
    %v14278 = vrot.slane %v13907, 3
    %v14279 = vsel %vm5723, %v14278, %v14277
    %v14280 = vrot.slane %v13909, 2
    %v14281 = vsel %vm5726, %v14280, %v14279
    %v14282 = vrot.slane %v13911, 1
    %v14283 = vsel %vm5729, %v14282, %v14281
    %v14284 = vrot.slane %v13915, 7
    %v14285 = vsel %vm5711, %v14284, %v13913
    %v14286 = vrot.slane %v13917, 6
    %v14287 = vsel %vm5714, %v14286, %v14285
    %v14288 = vrot.slane %v13919, 5
    %v14289 = vsel %vm5717, %v14288, %v14287
    %v14290 = vrot.slane %v13921, 4
    %v14291 = vsel %vm5720, %v14290, %v14289
    %v14292 = vrot.slane %v13923, 3
    %v14293 = vsel %vm5723, %v14292, %v14291
    %v14294 = vrot.slane %v13925, 2
    %v14295 = vsel %vm5726, %v14294, %v14293
    %v14296 = vrot.slane %v13927, 1
    %v14297 = vsel %vm5729, %v14296, %v14295
    %v14298 = vrot.slane %v13931, 7
    %v14299 = vsel %vm5711, %v14298, %v13929
    %v14300 = vrot.slane %v13933, 6
    %v14301 = vsel %vm5714, %v14300, %v14299
    %v14302 = vrot.slane %v13935, 5
    %v14303 = vsel %vm5717, %v14302, %v14301
    %v14304 = vrot.slane %v13937, 4
    %v14305 = vsel %vm5720, %v14304, %v14303
    %v14306 = vrot.slane %v13939, 3
    %v14307 = vsel %vm5723, %v14306, %v14305
    %v14308 = vrot.slane %v13941, 2
    %v14309 = vsel %vm5726, %v14308, %v14307
    %v14310 = vrot.slane %v13943, 1
    %v14311 = vsel %vm5729, %v14310, %v14309
    %v14312 = vrot.slane %v13947, 7
    %v14313 = vsel %vm5711, %v14312, %v13945
    %v14314 = vrot.slane %v13949, 6
    %v14315 = vsel %vm5714, %v14314, %v14313
    %v14316 = vrot.slane %v13951, 5
    %v14317 = vsel %vm5717, %v14316, %v14315
    %v14318 = vrot.slane %v13953, 4
    %v14319 = vsel %vm5720, %v14318, %v14317
    %v14320 = vrot.slane %v13955, 3
    %v14321 = vsel %vm5723, %v14320, %v14319
    %v14322 = vrot.slane %v13957, 2
    %v14323 = vsel %vm5726, %v14322, %v14321
    %v14324 = vrot.slane %v13959, 1
    %v14325 = vsel %vm5729, %v14324, %v14323
    %v14326 = vrot.slane %v13963, 7
    %v14327 = vsel %vm5711, %v14326, %v13961
    %v14328 = vrot.slane %v13965, 6
    %v14329 = vsel %vm5714, %v14328, %v14327
    %v14330 = vrot.slane %v13967, 5
    %v14331 = vsel %vm5717, %v14330, %v14329
    %v14332 = vrot.slane %v13969, 4
    %v14333 = vsel %vm5720, %v14332, %v14331
    %v14334 = vrot.slane %v13971, 3
    %v14335 = vsel %vm5723, %v14334, %v14333
    %v14336 = vrot.slane %v13973, 2
    %v14337 = vsel %vm5726, %v14336, %v14335
    %v14338 = vrot.slane %v13975, 1
    %v14339 = vsel %vm5729, %v14338, %v14337
    %v14340 = vrot.slane %v13979, 7
    %v14341 = vsel %vm5711, %v14340, %v13977
    %v14342 = vrot.slane %v13981, 6
    %v14343 = vsel %vm5714, %v14342, %v14341
    %v14344 = vrot.slane %v13983, 5
    %v14345 = vsel %vm5717, %v14344, %v14343
    %v14346 = vrot.slane %v13985, 4
    %v14347 = vsel %vm5720, %v14346, %v14345
    %v14348 = vrot.slane %v13987, 3
    %v14349 = vsel %vm5723, %v14348, %v14347
    %v14350 = vrot.slane %v13989, 2
    %v14351 = vsel %vm5726, %v14350, %v14349
    %v14352 = vrot.slane %v13991, 1
    %v14353 = vsel %vm5729, %v14352, %v14351
    %v14354 = vrot.slane %v13995, 7
    %v14355 = vsel %vm5711, %v14354, %v13993
    %v14356 = vrot.slane %v13997, 6
    %v14357 = vsel %vm5714, %v14356, %v14355
    %v14358 = vrot.slane %v13999, 5
    %v14359 = vsel %vm5717, %v14358, %v14357
    %v14360 = vrot.slane %v14001, 4
    %v14361 = vsel %vm5720, %v14360, %v14359
    %v14362 = vrot.slane %v14003, 3
    %v14363 = vsel %vm5723, %v14362, %v14361
    %v14364 = vrot.slane %v14005, 2
    %v14365 = vsel %vm5726, %v14364, %v14363
    %v14366 = vrot.slane %v14007, 1
    %v14367 = vsel %vm5729, %v14366, %v14365
    %v14368 = vrot.slane %v14011, 7
    %v14369 = vsel %vm5711, %v14368, %v14009
    %v14370 = vrot.slane %v14013, 6
    %v14371 = vsel %vm5714, %v14370, %v14369
    %v14372 = vrot.slane %v14015, 5
    %v14373 = vsel %vm5717, %v14372, %v14371
    %v14374 = vrot.slane %v14017, 4
    %v14375 = vsel %vm5720, %v14374, %v14373
    %v14376 = vrot.slane %v14019, 3
    %v14377 = vsel %vm5723, %v14376, %v14375
    %v14378 = vrot.slane %v14021, 2
    %v14379 = vsel %vm5726, %v14378, %v14377
    %v14380 = vrot.slane %v14023, 1
    %v14381 = vsel %vm5729, %v14380, %v14379
    %v14382 = vrot.slane %v14027, 7
    %v14383 = vsel %vm5711, %v14382, %v14025
    %v14384 = vrot.slane %v14029, 6
    %v14385 = vsel %vm5714, %v14384, %v14383
    %v14386 = vrot.slane %v14031, 5
    %v14387 = vsel %vm5717, %v14386, %v14385
    %v14388 = vrot.slane %v14033, 4
    %v14389 = vsel %vm5720, %v14388, %v14387
    %v14390 = vrot.slane %v14035, 3
    %v14391 = vsel %vm5723, %v14390, %v14389
    %v14392 = vrot.slane %v14037, 2
    %v14393 = vsel %vm5726, %v14392, %v14391
    %v14394 = vrot.slane %v14039, 1
    %v14395 = vsel %vm5729, %v14394, %v14393
    %v14396 = vrot.slane %v14043, 7
    %v14397 = vsel %vm5711, %v14396, %v14041
    %v14398 = vrot.slane %v14045, 6
    %v14399 = vsel %vm5714, %v14398, %v14397
    %v14400 = vrot.slane %v14047, 5
    %v14401 = vsel %vm5717, %v14400, %v14399
    %v14402 = vrot.slane %v14049, 4
    %v14403 = vsel %vm5720, %v14402, %v14401
    %v14404 = vrot.slane %v14051, 3
    %v14405 = vsel %vm5723, %v14404, %v14403
    %v14406 = vrot.slane %v14053, 2
    %v14407 = vsel %vm5726, %v14406, %v14405
    %v14408 = vrot.slane %v14055, 1
    %v14409 = vsel %vm5729, %v14408, %v14407
    %v14410 = vrot.slane %v14059, 7
    %v14411 = vsel %vm5711, %v14410, %v14057
    %v14412 = vrot.slane %v14061, 6
    %v14413 = vsel %vm5714, %v14412, %v14411
    %v14414 = vrot.slane %v14063, 5
    %v14415 = vsel %vm5717, %v14414, %v14413
    %v14416 = vrot.slane %v14065, 4
    %v14417 = vsel %vm5720, %v14416, %v14415
    %v14418 = vrot.slane %v14067, 3
    %v14419 = vsel %vm5723, %v14418, %v14417
    %v14420 = vrot.slane %v14069, 2
    %v14421 = vsel %vm5726, %v14420, %v14419
    %v14422 = vrot.slane %v14071, 1
    %v14423 = vsel %vm5729, %v14422, %v14421
    %14440 = vadd.xlane.f32.xlu0 %v14213
    %v14441 = vpop.xlane.xlu0 %14440
    %14442 = vadd.xlane.f32.xlu0 %v14227
    %v14443 = vpop.xlane.xlu0 %14442
    %14444 = vadd.xlane.f32.xlu0 %v14241
    %v14445 = vpop.xlane.xlu0 %14444
    %14446 = vadd.xlane.f32.xlu0 %v14255
    %v14447 = vpop.xlane.xlu0 %14446
    %14448 = vadd.xlane.f32.xlu0 %v14269
    %v14449 = vpop.xlane.xlu0 %14448
    %14450 = vadd.xlane.f32.xlu0 %v14283
    %v14451 = vpop.xlane.xlu0 %14450
    %14452 = vadd.xlane.f32.xlu0 %v14297
    %v14453 = vpop.xlane.xlu0 %14452
    %14454 = vadd.xlane.f32.xlu0 %v14311
    %v14455 = vpop.xlane.xlu0 %14454
    %14456 = vadd.xlane.f32.xlu0 %v14325
    %v14457 = vpop.xlane.xlu0 %14456
    %14458 = vadd.xlane.f32.xlu0 %v14339
    %v14459 = vpop.xlane.xlu0 %14458
    %14460 = vadd.xlane.f32.xlu0 %v14353
    %v14461 = vpop.xlane.xlu0 %14460
    %14462 = vadd.xlane.f32.xlu0 %v14367
    %v14463 = vpop.xlane.xlu0 %14462
    %14464 = vadd.xlane.f32.xlu0 %v14381
    %v14465 = vpop.xlane.xlu0 %14464
    %14466 = vadd.xlane.f32.xlu0 %v14395
    %v14467 = vpop.xlane.xlu0 %14466
    %14468 = vadd.xlane.f32.xlu0 %v14409
    %v14469 = vpop.xlane.xlu0 %14468
    %14470 = vadd.xlane.f32.xlu0 %v14423
    %v14471 = vpop.xlane.xlu0 %14470
    %v14488 = vrot.slane %v14441, 1
    %v14489 = vrot.slane %v14441, 2
    %v14490 = vrot.slane %v14441, 3
    %v14491 = vrot.slane %v14441, 4
    %v14492 = vrot.slane %v14441, 5
    %v14493 = vrot.slane %v14441, 6
    %v14494 = vrot.slane %v14441, 7
    %v14495 = vrot.slane %v14443, 1
    %v14496 = vrot.slane %v14443, 2
    %v14497 = vrot.slane %v14443, 3
    %v14498 = vrot.slane %v14443, 4
    %v14499 = vrot.slane %v14443, 5
    %v14500 = vrot.slane %v14443, 6
    %v14501 = vrot.slane %v14443, 7
    %v14502 = vrot.slane %v14445, 1
    %v14503 = vrot.slane %v14445, 2
    %v14504 = vrot.slane %v14445, 3
    %v14505 = vrot.slane %v14445, 4
    %v14506 = vrot.slane %v14445, 5
    %v14507 = vrot.slane %v14445, 6
    %v14508 = vrot.slane %v14445, 7
    %v14509 = vrot.slane %v14447, 1
    %v14510 = vrot.slane %v14447, 2
    %v14511 = vrot.slane %v14447, 3
    %v14512 = vrot.slane %v14447, 4
    %v14513 = vrot.slane %v14447, 5
    %v14514 = vrot.slane %v14447, 6
    %v14515 = vrot.slane %v14447, 7
    %v14516 = vrot.slane %v14449, 1
    %v14517 = vrot.slane %v14449, 2
    %v14518 = vrot.slane %v14449, 3
    %v14519 = vrot.slane %v14449, 4
    %v14520 = vrot.slane %v14449, 5
    %v14521 = vrot.slane %v14449, 6
    %v14522 = vrot.slane %v14449, 7
    %v14523 = vrot.slane %v14451, 1
    %v14524 = vrot.slane %v14451, 2
    %v14525 = vrot.slane %v14451, 3
    %v14526 = vrot.slane %v14451, 4
    %v14527 = vrot.slane %v14451, 5
    %v14528 = vrot.slane %v14451, 6
    %v14529 = vrot.slane %v14451, 7
    %v14530 = vrot.slane %v14453, 1
    %v14531 = vrot.slane %v14453, 2
    %v14532 = vrot.slane %v14453, 3
    %v14533 = vrot.slane %v14453, 4
    %v14534 = vrot.slane %v14453, 5
    %v14535 = vrot.slane %v14453, 6
    %v14536 = vrot.slane %v14453, 7
    %v14537 = vrot.slane %v14455, 1
    %v14538 = vrot.slane %v14455, 2
    %v14539 = vrot.slane %v14455, 3
    %v14540 = vrot.slane %v14455, 4
    %v14541 = vrot.slane %v14455, 5
    %v14542 = vrot.slane %v14455, 6
    %v14543 = vrot.slane %v14455, 7
    %v14544 = vrot.slane %v14457, 1
    %v14545 = vrot.slane %v14457, 2
    %v14546 = vrot.slane %v14457, 3
    %v14547 = vrot.slane %v14457, 4
    %v14548 = vrot.slane %v14457, 5
    %v14549 = vrot.slane %v14457, 6
    %v14550 = vrot.slane %v14457, 7
    %v14551 = vrot.slane %v14459, 1
    %v14552 = vrot.slane %v14459, 2
    %v14553 = vrot.slane %v14459, 3
    %v14554 = vrot.slane %v14459, 4
    %v14555 = vrot.slane %v14459, 5
    %v14556 = vrot.slane %v14459, 6
    %v14557 = vrot.slane %v14459, 7
    %v14558 = vrot.slane %v14461, 1
    %v14559 = vrot.slane %v14461, 2
    %v14560 = vrot.slane %v14461, 3
    %v14561 = vrot.slane %v14461, 4
    %v14562 = vrot.slane %v14461, 5
    %v14563 = vrot.slane %v14461, 6
    %v14564 = vrot.slane %v14461, 7
    %v14565 = vrot.slane %v14463, 1
    %v14566 = vrot.slane %v14463, 2
    %v14567 = vrot.slane %v14463, 3
    %v14568 = vrot.slane %v14463, 4
    %v14569 = vrot.slane %v14463, 5
    %v14570 = vrot.slane %v14463, 6
    %v14571 = vrot.slane %v14463, 7
    %v14572 = vrot.slane %v14465, 1
    %v14573 = vrot.slane %v14465, 2
    %v14574 = vrot.slane %v14465, 3
    %v14575 = vrot.slane %v14465, 4
    %v14576 = vrot.slane %v14465, 5
    %v14577 = vrot.slane %v14465, 6
    %v14578 = vrot.slane %v14465, 7
    %v14579 = vrot.slane %v14467, 1
    %v14580 = vrot.slane %v14467, 2
    %v14581 = vrot.slane %v14467, 3
    %v14582 = vrot.slane %v14467, 4
    %v14583 = vrot.slane %v14467, 5
    %v14584 = vrot.slane %v14467, 6
    %v14585 = vrot.slane %v14467, 7
    %v14586 = vrot.slane %v14469, 1
    %v14587 = vrot.slane %v14469, 2
    %v14588 = vrot.slane %v14469, 3
    %v14589 = vrot.slane %v14469, 4
    %v14590 = vrot.slane %v14469, 5
    %v14591 = vrot.slane %v14469, 6
    %v14592 = vrot.slane %v14469, 7
    %v14593 = vrot.slane %v14471, 1
    %v14594 = vrot.slane %v14471, 2
    %v14595 = vrot.slane %v14471, 3
    %v14596 = vrot.slane %v14471, 4
    %v14597 = vrot.slane %v14471, 5
    %v14598 = vrot.slane %v14471, 6
    %v14599 = vrot.slane %v14471, 7
    %v14728 = vrcp.pop %v14441
    %v14729 = vmul.f32 %v13817, %v14728
    %v14730 = vrcp.pop %v14488
    %v14731 = vmul.f32 %v13819, %v14730
    %v14732 = vrcp.pop %v14489
    %v14733 = vmul.f32 %v13821, %v14732
    %v14734 = vrcp.pop %v14490
    %v14735 = vmul.f32 %v13823, %v14734
    %v14736 = vrcp.pop %v14491
    %v14737 = vmul.f32 %v13825, %v14736
    %v14738 = vrcp.pop %v14492
    %v14739 = vmul.f32 %v13827, %v14738
    %v14740 = vrcp.pop %v14493
    %v14741 = vmul.f32 %v13829, %v14740
    %v14742 = vrcp.pop %v14494
    %v14743 = vmul.f32 %v13831, %v14742
    %v14744 = vrcp.pop %v14443
    %v14745 = vmul.f32 %v13833, %v14744
    %v14746 = vrcp.pop %v14495
    %v14747 = vmul.f32 %v13835, %v14746
    %v14748 = vrcp.pop %v14496
    %v14749 = vmul.f32 %v13837, %v14748
    %v14750 = vrcp.pop %v14497
    %v14751 = vmul.f32 %v13839, %v14750
    %v14752 = vrcp.pop %v14498
    %v14753 = vmul.f32 %v13841, %v14752
    %v14754 = vrcp.pop %v14499
    %v14755 = vmul.f32 %v13843, %v14754
    %v14756 = vrcp.pop %v14500
    %v14757 = vmul.f32 %v13845, %v14756
    %v14758 = vrcp.pop %v14501
    %v14759 = vmul.f32 %v13847, %v14758
    %v14760 = vrcp.pop %v14445
    %v14761 = vmul.f32 %v13849, %v14760
    %v14762 = vrcp.pop %v14502
    %v14763 = vmul.f32 %v13851, %v14762
    %v14764 = vrcp.pop %v14503
    %v14765 = vmul.f32 %v13853, %v14764
    %v14766 = vrcp.pop %v14504
    %v14767 = vmul.f32 %v13855, %v14766
    %v14768 = vrcp.pop %v14505
    %v14769 = vmul.f32 %v13857, %v14768
    %v14770 = vrcp.pop %v14506
    %v14771 = vmul.f32 %v13859, %v14770
    %v14772 = vrcp.pop %v14507
    %v14773 = vmul.f32 %v13861, %v14772
    %v14774 = vrcp.pop %v14508
    %v14775 = vmul.f32 %v13863, %v14774
    %v14776 = vrcp.pop %v14447
    %v14777 = vmul.f32 %v13865, %v14776
    %v14778 = vrcp.pop %v14509
    %v14779 = vmul.f32 %v13867, %v14778
    %v14780 = vrcp.pop %v14510
    %v14781 = vmul.f32 %v13869, %v14780
    %v14782 = vrcp.pop %v14511
    %v14783 = vmul.f32 %v13871, %v14782
    %v14784 = vrcp.pop %v14512
    %v14785 = vmul.f32 %v13873, %v14784
    %v14786 = vrcp.pop %v14513
    %v14787 = vmul.f32 %v13875, %v14786
    %v14788 = vrcp.pop %v14514
    %v14789 = vmul.f32 %v13877, %v14788
    %v14790 = vrcp.pop %v14515
    %v14791 = vmul.f32 %v13879, %v14790
    %v14792 = vrcp.pop %v14449
    %v14793 = vmul.f32 %v13881, %v14792
    %v14794 = vrcp.pop %v14516
    %v14795 = vmul.f32 %v13883, %v14794
    %v14796 = vrcp.pop %v14517
    %v14797 = vmul.f32 %v13885, %v14796
    %v14798 = vrcp.pop %v14518
    %v14799 = vmul.f32 %v13887, %v14798
    %v14800 = vrcp.pop %v14519
    %v14801 = vmul.f32 %v13889, %v14800
    %v14802 = vrcp.pop %v14520
    %v14803 = vmul.f32 %v13891, %v14802
    %v14804 = vrcp.pop %v14521
    %v14805 = vmul.f32 %v13893, %v14804
    %v14806 = vrcp.pop %v14522
    %v14807 = vmul.f32 %v13895, %v14806
    %v14808 = vrcp.pop %v14451
    %v14809 = vmul.f32 %v13897, %v14808
    %v14810 = vrcp.pop %v14523
    %v14811 = vmul.f32 %v13899, %v14810
    %v14812 = vrcp.pop %v14524
    %v14813 = vmul.f32 %v13901, %v14812
    %v14814 = vrcp.pop %v14525
    %v14815 = vmul.f32 %v13903, %v14814
    %v14816 = vrcp.pop %v14526
    %v14817 = vmul.f32 %v13905, %v14816
    %v14818 = vrcp.pop %v14527
    %v14819 = vmul.f32 %v13907, %v14818
    %v14820 = vrcp.pop %v14528
    %v14821 = vmul.f32 %v13909, %v14820
    %v14822 = vrcp.pop %v14529
    %v14823 = vmul.f32 %v13911, %v14822
    %v14824 = vrcp.pop %v14453
    %v14825 = vmul.f32 %v13913, %v14824
    %v14826 = vrcp.pop %v14530
    %v14827 = vmul.f32 %v13915, %v14826
    %v14828 = vrcp.pop %v14531
    %v14829 = vmul.f32 %v13917, %v14828
    %v14830 = vrcp.pop %v14532
    %v14831 = vmul.f32 %v13919, %v14830
    %v14832 = vrcp.pop %v14533
    %v14833 = vmul.f32 %v13921, %v14832
    %v14834 = vrcp.pop %v14534
    %v14835 = vmul.f32 %v13923, %v14834
    %v14836 = vrcp.pop %v14535
    %v14837 = vmul.f32 %v13925, %v14836
    %v14838 = vrcp.pop %v14536
    %v14839 = vmul.f32 %v13927, %v14838
    %v14840 = vrcp.pop %v14455
    %v14841 = vmul.f32 %v13929, %v14840
    %v14842 = vrcp.pop %v14537
    %v14843 = vmul.f32 %v13931, %v14842
    %v14844 = vrcp.pop %v14538
    %v14845 = vmul.f32 %v13933, %v14844
    %v14846 = vrcp.pop %v14539
    %v14847 = vmul.f32 %v13935, %v14846
    %v14848 = vrcp.pop %v14540
    %v14849 = vmul.f32 %v13937, %v14848
    %v14850 = vrcp.pop %v14541
    %v14851 = vmul.f32 %v13939, %v14850
    %v14852 = vrcp.pop %v14542
    %v14853 = vmul.f32 %v13941, %v14852
    %v14854 = vrcp.pop %v14543
    %v14855 = vmul.f32 %v13943, %v14854
    %v14856 = vrcp.pop %v14457
    %v14857 = vmul.f32 %v13945, %v14856
    %v14858 = vrcp.pop %v14544
    %v14859 = vmul.f32 %v13947, %v14858
    %v14860 = vrcp.pop %v14545
    %v14861 = vmul.f32 %v13949, %v14860
    %v14862 = vrcp.pop %v14546
    %v14863 = vmul.f32 %v13951, %v14862
    %v14864 = vrcp.pop %v14547
    %v14865 = vmul.f32 %v13953, %v14864
    %v14866 = vrcp.pop %v14548
    %v14867 = vmul.f32 %v13955, %v14866
    %v14868 = vrcp.pop %v14549
    %v14869 = vmul.f32 %v13957, %v14868
    %v14870 = vrcp.pop %v14550
    %v14871 = vmul.f32 %v13959, %v14870
    %v14872 = vrcp.pop %v14459
    %v14873 = vmul.f32 %v13961, %v14872
    %v14874 = vrcp.pop %v14551
    %v14875 = vmul.f32 %v13963, %v14874
    %v14876 = vrcp.pop %v14552
    %v14877 = vmul.f32 %v13965, %v14876
    %v14878 = vrcp.pop %v14553
    %v14879 = vmul.f32 %v13967, %v14878
    %v14880 = vrcp.pop %v14554
    %v14881 = vmul.f32 %v13969, %v14880
    %v14882 = vrcp.pop %v14555
    %v14883 = vmul.f32 %v13971, %v14882
    %v14884 = vrcp.pop %v14556
    %v14885 = vmul.f32 %v13973, %v14884
    %v14886 = vrcp.pop %v14557
    %v14887 = vmul.f32 %v13975, %v14886
    %v14888 = vrcp.pop %v14461
    %v14889 = vmul.f32 %v13977, %v14888
    %v14890 = vrcp.pop %v14558
    %v14891 = vmul.f32 %v13979, %v14890
    %v14892 = vrcp.pop %v14559
    %v14893 = vmul.f32 %v13981, %v14892
    %v14894 = vrcp.pop %v14560
    %v14895 = vmul.f32 %v13983, %v14894
    %v14896 = vrcp.pop %v14561
    %v14897 = vmul.f32 %v13985, %v14896
    %v14898 = vrcp.pop %v14562
    %v14899 = vmul.f32 %v13987, %v14898
    %v14900 = vrcp.pop %v14563
    %v14901 = vmul.f32 %v13989, %v14900
    %v14902 = vrcp.pop %v14564
    %v14903 = vmul.f32 %v13991, %v14902
    %v14904 = vrcp.pop %v14463
    %v14905 = vmul.f32 %v13993, %v14904
    %v14906 = vrcp.pop %v14565
    %v14907 = vmul.f32 %v13995, %v14906
    %v14908 = vrcp.pop %v14566
    %v14909 = vmul.f32 %v13997, %v14908
    %v14910 = vrcp.pop %v14567
    %v14911 = vmul.f32 %v13999, %v14910
    %v14912 = vrcp.pop %v14568
    %v14913 = vmul.f32 %v14001, %v14912
    %v14914 = vrcp.pop %v14569
    %v14915 = vmul.f32 %v14003, %v14914
    %v14916 = vrcp.pop %v14570
    %v14917 = vmul.f32 %v14005, %v14916
    %v14918 = vrcp.pop %v14571
    %v14919 = vmul.f32 %v14007, %v14918
    %v14920 = vrcp.pop %v14465
    %v14921 = vmul.f32 %v14009, %v14920
    %v14922 = vrcp.pop %v14572
    %v14923 = vmul.f32 %v14011, %v14922
    %v14924 = vrcp.pop %v14573
    %v14925 = vmul.f32 %v14013, %v14924
    %v14926 = vrcp.pop %v14574
    %v14927 = vmul.f32 %v14015, %v14926
    %v14928 = vrcp.pop %v14575
    %v14929 = vmul.f32 %v14017, %v14928
    %v14930 = vrcp.pop %v14576
    %v14931 = vmul.f32 %v14019, %v14930
    %v14932 = vrcp.pop %v14577
    %v14933 = vmul.f32 %v14021, %v14932
    %v14934 = vrcp.pop %v14578
    %v14935 = vmul.f32 %v14023, %v14934
    %v14936 = vrcp.pop %v14467
    %v14937 = vmul.f32 %v14025, %v14936
    %v14938 = vrcp.pop %v14579
    %v14939 = vmul.f32 %v14027, %v14938
    %v14940 = vrcp.pop %v14580
    %v14941 = vmul.f32 %v14029, %v14940
    %v14942 = vrcp.pop %v14581
    %v14943 = vmul.f32 %v14031, %v14942
    %v14944 = vrcp.pop %v14582
    %v14945 = vmul.f32 %v14033, %v14944
    %v14946 = vrcp.pop %v14583
    %v14947 = vmul.f32 %v14035, %v14946
    %v14948 = vrcp.pop %v14584
    %v14949 = vmul.f32 %v14037, %v14948
    %v14950 = vrcp.pop %v14585
    %v14951 = vmul.f32 %v14039, %v14950
    %v14952 = vrcp.pop %v14469
    %v14953 = vmul.f32 %v14041, %v14952
    %v14954 = vrcp.pop %v14586
    %v14955 = vmul.f32 %v14043, %v14954
    %v14956 = vrcp.pop %v14587
    %v14957 = vmul.f32 %v14045, %v14956
    %v14958 = vrcp.pop %v14588
    %v14959 = vmul.f32 %v14047, %v14958
    %v14960 = vrcp.pop %v14589
    %v14961 = vmul.f32 %v14049, %v14960
    %v14962 = vrcp.pop %v14590
    %v14963 = vmul.f32 %v14051, %v14962
    %v14964 = vrcp.pop %v14591
    %v14965 = vmul.f32 %v14053, %v14964
    %v14966 = vrcp.pop %v14592
    %v14967 = vmul.f32 %v14055, %v14966
    %v14968 = vrcp.pop %v14471
    %v14969 = vmul.f32 %v14057, %v14968
    %v14970 = vrcp.pop %v14593
    %v14971 = vmul.f32 %v14059, %v14970
    %v14972 = vrcp.pop %v14594
    %v14973 = vmul.f32 %v14061, %v14972
    %v14974 = vrcp.pop %v14595
    %v14975 = vmul.f32 %v14063, %v14974
    %v14976 = vrcp.pop %v14596
    %v14977 = vmul.f32 %v14065, %v14976
    %v14978 = vrcp.pop %v14597
    %v14979 = vmul.f32 %v14067, %v14978
    %v14980 = vrcp.pop %v14598
    %v14981 = vmul.f32 %v14069, %v14980
    %v14982 = vrcp.pop %v14599
    %v14983 = vmul.f32 %v14071, %v14982
    %v14984 = vadd.f32 %v12503, %v14729
    %v14985 = vadd.f32 %v12504, %v14731
    %v14986 = vadd.f32 %v12505, %v14733
    %v14987 = vadd.f32 %v12506, %v14735
    %v14988 = vadd.f32 %v12507, %v14737
    %v14989 = vadd.f32 %v12508, %v14739
    %v14990 = vadd.f32 %v12509, %v14741
    %v14991 = vadd.f32 %v12510, %v14743
    %v14992 = vadd.f32 %v12511, %v14745
    %v14993 = vadd.f32 %v12512, %v14747
    %v14994 = vadd.f32 %v12513, %v14749
    %v14995 = vadd.f32 %v12514, %v14751
    %v14996 = vadd.f32 %v12515, %v14753
    %v14997 = vadd.f32 %v12516, %v14755
    %v14998 = vadd.f32 %v12517, %v14757
    %v14999 = vadd.f32 %v12518, %v14759
    %v15000 = vadd.f32 %v12519, %v14761
    %v15001 = vadd.f32 %v12520, %v14763
    %v15002 = vadd.f32 %v12521, %v14765
    %v15003 = vadd.f32 %v12522, %v14767
    %v15004 = vadd.f32 %v12523, %v14769
    %v15005 = vadd.f32 %v12524, %v14771
    %v15006 = vadd.f32 %v12525, %v14773
    %v15007 = vadd.f32 %v12526, %v14775
    %v15008 = vadd.f32 %v12527, %v14777
    %v15009 = vadd.f32 %v12528, %v14779
    %v15010 = vadd.f32 %v12529, %v14781
    %v15011 = vadd.f32 %v12530, %v14783
    %v15012 = vadd.f32 %v12531, %v14785
    %v15013 = vadd.f32 %v12532, %v14787
    %v15014 = vadd.f32 %v12533, %v14789
    %v15015 = vadd.f32 %v12534, %v14791
    %v15016 = vadd.f32 %v12535, %v14793
    %v15017 = vadd.f32 %v12536, %v14795
    %v15018 = vadd.f32 %v12537, %v14797
    %v15019 = vadd.f32 %v12538, %v14799
    %v15020 = vadd.f32 %v12539, %v14801
    %v15021 = vadd.f32 %v12540, %v14803
    %v15022 = vadd.f32 %v12541, %v14805
    %v15023 = vadd.f32 %v12542, %v14807
    %v15024 = vadd.f32 %v12543, %v14809
    %v15025 = vadd.f32 %v12544, %v14811
    %v15026 = vadd.f32 %v12545, %v14813
    %v15027 = vadd.f32 %v12546, %v14815
    %v15028 = vadd.f32 %v12547, %v14817
    %v15029 = vadd.f32 %v12548, %v14819
    %v15030 = vadd.f32 %v12549, %v14821
    %v15031 = vadd.f32 %v12550, %v14823
    %v15032 = vadd.f32 %v12551, %v14825
    %v15033 = vadd.f32 %v12552, %v14827
    %v15034 = vadd.f32 %v12553, %v14829
    %v15035 = vadd.f32 %v12554, %v14831
    %v15036 = vadd.f32 %v12555, %v14833
    %v15037 = vadd.f32 %v12556, %v14835
    %v15038 = vadd.f32 %v12557, %v14837
    %v15039 = vadd.f32 %v12558, %v14839
    %v15040 = vadd.f32 %v12559, %v14841
    %v15041 = vadd.f32 %v12560, %v14843
    %v15042 = vadd.f32 %v12561, %v14845
    %v15043 = vadd.f32 %v12562, %v14847
    %v15044 = vadd.f32 %v12563, %v14849
    %v15045 = vadd.f32 %v12564, %v14851
    %v15046 = vadd.f32 %v12565, %v14853
    %v15047 = vadd.f32 %v12566, %v14855
    %v15048 = vadd.f32 %v12567, %v14857
    %v15049 = vadd.f32 %v12568, %v14859
    %v15050 = vadd.f32 %v12569, %v14861
    %v15051 = vadd.f32 %v12570, %v14863
    %v15052 = vadd.f32 %v12571, %v14865
    %v15053 = vadd.f32 %v12572, %v14867
    %v15054 = vadd.f32 %v12573, %v14869
    %v15055 = vadd.f32 %v12574, %v14871
    %v15056 = vadd.f32 %v12575, %v14873
    %v15057 = vadd.f32 %v12576, %v14875
    %v15058 = vadd.f32 %v12577, %v14877
    %v15059 = vadd.f32 %v12578, %v14879
    %v15060 = vadd.f32 %v12579, %v14881
    %v15061 = vadd.f32 %v12580, %v14883
    %v15062 = vadd.f32 %v12581, %v14885
    %v15063 = vadd.f32 %v12582, %v14887
    %v15064 = vadd.f32 %v12583, %v14889
    %v15065 = vadd.f32 %v12584, %v14891
    %v15066 = vadd.f32 %v12585, %v14893
    %v15067 = vadd.f32 %v12586, %v14895
    %v15068 = vadd.f32 %v12587, %v14897
    %v15069 = vadd.f32 %v12588, %v14899
    %v15070 = vadd.f32 %v12589, %v14901
    %v15071 = vadd.f32 %v12590, %v14903
    %v15072 = vadd.f32 %v12591, %v14905
    %v15073 = vadd.f32 %v12592, %v14907
    %v15074 = vadd.f32 %v12593, %v14909
    %v15075 = vadd.f32 %v12594, %v14911
    %v15076 = vadd.f32 %v12595, %v14913
    %v15077 = vadd.f32 %v12596, %v14915
    %v15078 = vadd.f32 %v12597, %v14917
    %v15079 = vadd.f32 %v12598, %v14919
    %v15080 = vadd.f32 %v12599, %v14921
    %v15081 = vadd.f32 %v12600, %v14923
    %v15082 = vadd.f32 %v12601, %v14925
    %v15083 = vadd.f32 %v12602, %v14927
    %v15084 = vadd.f32 %v12603, %v14929
    %v15085 = vadd.f32 %v12604, %v14931
    %v15086 = vadd.f32 %v12605, %v14933
    %v15087 = vadd.f32 %v12606, %v14935
    %v15088 = vadd.f32 %v12607, %v14937
    %v15089 = vadd.f32 %v12608, %v14939
    %v15090 = vadd.f32 %v12609, %v14941
    %v15091 = vadd.f32 %v12610, %v14943
    %v15092 = vadd.f32 %v12611, %v14945
    %v15093 = vadd.f32 %v12612, %v14947
    %v15094 = vadd.f32 %v12613, %v14949
    %v15095 = vadd.f32 %v12614, %v14951
    %v15096 = vadd.f32 %v12615, %v14953
    %v15097 = vadd.f32 %v12616, %v14955
    %v15098 = vadd.f32 %v12617, %v14957
    %v15099 = vadd.f32 %v12618, %v14959
    %v15100 = vadd.f32 %v12619, %v14961
    %v15101 = vadd.f32 %v12620, %v14963
    %v15102 = vadd.f32 %v12621, %v14965
    %v15103 = vadd.f32 %v12622, %v14967
    %v15104 = vadd.f32 %v12623, %v14969
    %v15105 = vadd.f32 %v12624, %v14971
    %v15106 = vadd.f32 %v12625, %v14973
    %v15107 = vadd.f32 %v12626, %v14975
    %v15108 = vadd.f32 %v12627, %v14977
    %v15109 = vadd.f32 %v12628, %v14979
    %v15110 = vadd.f32 %v12629, %v14981
    %v15111 = vadd.f32 %v12630, %v14983
    %v15240 = vrot.slane %v14985, 7
    %v15241 = vsel %vm5711, %v15240, %v14984
    %v15242 = vrot.slane %v14986, 6
    %v15243 = vsel %vm5714, %v15242, %v15241
    %v15244 = vrot.slane %v14987, 5
    %v15245 = vsel %vm5717, %v15244, %v15243
    %v15246 = vrot.slane %v14988, 4
    %v15247 = vsel %vm5720, %v15246, %v15245
    %v15248 = vrot.slane %v14989, 3
    %v15249 = vsel %vm5723, %v15248, %v15247
    %v15250 = vrot.slane %v14990, 2
    %v15251 = vsel %vm5726, %v15250, %v15249
    %v15252 = vrot.slane %v14991, 1
    %v15253 = vsel %vm5729, %v15252, %v15251
    %v15254 = vrot.slane %v14993, 7
    %v15255 = vsel %vm5711, %v15254, %v14992
    %v15256 = vrot.slane %v14994, 6
    %v15257 = vsel %vm5714, %v15256, %v15255
    %v15258 = vrot.slane %v14995, 5
    %v15259 = vsel %vm5717, %v15258, %v15257
    %v15260 = vrot.slane %v14996, 4
    %v15261 = vsel %vm5720, %v15260, %v15259
    %v15262 = vrot.slane %v14997, 3
    %v15263 = vsel %vm5723, %v15262, %v15261
    %v15264 = vrot.slane %v14998, 2
    %v15265 = vsel %vm5726, %v15264, %v15263
    %v15266 = vrot.slane %v14999, 1
    %v15267 = vsel %vm5729, %v15266, %v15265
    %v15268 = vrot.slane %v15001, 7
    %v15269 = vsel %vm5711, %v15268, %v15000
    %v15270 = vrot.slane %v15002, 6
    %v15271 = vsel %vm5714, %v15270, %v15269
    %v15272 = vrot.slane %v15003, 5
    %v15273 = vsel %vm5717, %v15272, %v15271
    %v15274 = vrot.slane %v15004, 4
    %v15275 = vsel %vm5720, %v15274, %v15273
    %v15276 = vrot.slane %v15005, 3
    %v15277 = vsel %vm5723, %v15276, %v15275
    %v15278 = vrot.slane %v15006, 2
    %v15279 = vsel %vm5726, %v15278, %v15277
    %v15280 = vrot.slane %v15007, 1
    %v15281 = vsel %vm5729, %v15280, %v15279
    %v15282 = vrot.slane %v15009, 7
    %v15283 = vsel %vm5711, %v15282, %v15008
    %v15284 = vrot.slane %v15010, 6
    %v15285 = vsel %vm5714, %v15284, %v15283
    %v15286 = vrot.slane %v15011, 5
    %v15287 = vsel %vm5717, %v15286, %v15285
    %v15288 = vrot.slane %v15012, 4
    %v15289 = vsel %vm5720, %v15288, %v15287
    %v15290 = vrot.slane %v15013, 3
    %v15291 = vsel %vm5723, %v15290, %v15289
    %v15292 = vrot.slane %v15014, 2
    %v15293 = vsel %vm5726, %v15292, %v15291
    %v15294 = vrot.slane %v15015, 1
    %v15295 = vsel %vm5729, %v15294, %v15293
    %v15296 = vrot.slane %v15017, 7
    %v15297 = vsel %vm5711, %v15296, %v15016
    %v15298 = vrot.slane %v15018, 6
    %v15299 = vsel %vm5714, %v15298, %v15297
    %v15300 = vrot.slane %v15019, 5
    %v15301 = vsel %vm5717, %v15300, %v15299
    %v15302 = vrot.slane %v15020, 4
    %v15303 = vsel %vm5720, %v15302, %v15301
    %v15304 = vrot.slane %v15021, 3
    %v15305 = vsel %vm5723, %v15304, %v15303
    %v15306 = vrot.slane %v15022, 2
    %v15307 = vsel %vm5726, %v15306, %v15305
    %v15308 = vrot.slane %v15023, 1
    %v15309 = vsel %vm5729, %v15308, %v15307
    %v15310 = vrot.slane %v15025, 7
    %v15311 = vsel %vm5711, %v15310, %v15024
    %v15312 = vrot.slane %v15026, 6
    %v15313 = vsel %vm5714, %v15312, %v15311
    %v15314 = vrot.slane %v15027, 5
    %v15315 = vsel %vm5717, %v15314, %v15313
    %v15316 = vrot.slane %v15028, 4
    %v15317 = vsel %vm5720, %v15316, %v15315
    %v15318 = vrot.slane %v15029, 3
    %v15319 = vsel %vm5723, %v15318, %v15317
    %v15320 = vrot.slane %v15030, 2
    %v15321 = vsel %vm5726, %v15320, %v15319
    %v15322 = vrot.slane %v15031, 1
    %v15323 = vsel %vm5729, %v15322, %v15321
    %v15324 = vrot.slane %v15033, 7
    %v15325 = vsel %vm5711, %v15324, %v15032
    %v15326 = vrot.slane %v15034, 6
    %v15327 = vsel %vm5714, %v15326, %v15325
    %v15328 = vrot.slane %v15035, 5
    %v15329 = vsel %vm5717, %v15328, %v15327
    %v15330 = vrot.slane %v15036, 4
    %v15331 = vsel %vm5720, %v15330, %v15329
    %v15332 = vrot.slane %v15037, 3
    %v15333 = vsel %vm5723, %v15332, %v15331
    %v15334 = vrot.slane %v15038, 2
    %v15335 = vsel %vm5726, %v15334, %v15333
    %v15336 = vrot.slane %v15039, 1
    %v15337 = vsel %vm5729, %v15336, %v15335
    %v15338 = vrot.slane %v15041, 7
    %v15339 = vsel %vm5711, %v15338, %v15040
    %v15340 = vrot.slane %v15042, 6
    %v15341 = vsel %vm5714, %v15340, %v15339
    %v15342 = vrot.slane %v15043, 5
    %v15343 = vsel %vm5717, %v15342, %v15341
    %v15344 = vrot.slane %v15044, 4
    %v15345 = vsel %vm5720, %v15344, %v15343
    %v15346 = vrot.slane %v15045, 3
    %v15347 = vsel %vm5723, %v15346, %v15345
    %v15348 = vrot.slane %v15046, 2
    %v15349 = vsel %vm5726, %v15348, %v15347
    %v15350 = vrot.slane %v15047, 1
    %v15351 = vsel %vm5729, %v15350, %v15349
    %v15352 = vrot.slane %v15049, 7
    %v15353 = vsel %vm5711, %v15352, %v15048
    %v15354 = vrot.slane %v15050, 6
    %v15355 = vsel %vm5714, %v15354, %v15353
    %v15356 = vrot.slane %v15051, 5
    %v15357 = vsel %vm5717, %v15356, %v15355
    %v15358 = vrot.slane %v15052, 4
    %v15359 = vsel %vm5720, %v15358, %v15357
    %v15360 = vrot.slane %v15053, 3
    %v15361 = vsel %vm5723, %v15360, %v15359
    %v15362 = vrot.slane %v15054, 2
    %v15363 = vsel %vm5726, %v15362, %v15361
    %v15364 = vrot.slane %v15055, 1
    %v15365 = vsel %vm5729, %v15364, %v15363
    %v15366 = vrot.slane %v15057, 7
    %v15367 = vsel %vm5711, %v15366, %v15056
    %v15368 = vrot.slane %v15058, 6
    %v15369 = vsel %vm5714, %v15368, %v15367
    %v15370 = vrot.slane %v15059, 5
    %v15371 = vsel %vm5717, %v15370, %v15369
    %v15372 = vrot.slane %v15060, 4
    %v15373 = vsel %vm5720, %v15372, %v15371
    %v15374 = vrot.slane %v15061, 3
    %v15375 = vsel %vm5723, %v15374, %v15373
    %v15376 = vrot.slane %v15062, 2
    %v15377 = vsel %vm5726, %v15376, %v15375
    %v15378 = vrot.slane %v15063, 1
    %v15379 = vsel %vm5729, %v15378, %v15377
    %v15380 = vrot.slane %v15065, 7
    %v15381 = vsel %vm5711, %v15380, %v15064
    %v15382 = vrot.slane %v15066, 6
    %v15383 = vsel %vm5714, %v15382, %v15381
    %v15384 = vrot.slane %v15067, 5
    %v15385 = vsel %vm5717, %v15384, %v15383
    %v15386 = vrot.slane %v15068, 4
    %v15387 = vsel %vm5720, %v15386, %v15385
    %v15388 = vrot.slane %v15069, 3
    %v15389 = vsel %vm5723, %v15388, %v15387
    %v15390 = vrot.slane %v15070, 2
    %v15391 = vsel %vm5726, %v15390, %v15389
    %v15392 = vrot.slane %v15071, 1
    %v15393 = vsel %vm5729, %v15392, %v15391
    %v15394 = vrot.slane %v15073, 7
    %v15395 = vsel %vm5711, %v15394, %v15072
    %v15396 = vrot.slane %v15074, 6
    %v15397 = vsel %vm5714, %v15396, %v15395
    %v15398 = vrot.slane %v15075, 5
    %v15399 = vsel %vm5717, %v15398, %v15397
    %v15400 = vrot.slane %v15076, 4
    %v15401 = vsel %vm5720, %v15400, %v15399
    %v15402 = vrot.slane %v15077, 3
    %v15403 = vsel %vm5723, %v15402, %v15401
    %v15404 = vrot.slane %v15078, 2
    %v15405 = vsel %vm5726, %v15404, %v15403
    %v15406 = vrot.slane %v15079, 1
    %v15407 = vsel %vm5729, %v15406, %v15405
    %v15408 = vrot.slane %v15081, 7
    %v15409 = vsel %vm5711, %v15408, %v15080
    %v15410 = vrot.slane %v15082, 6
    %v15411 = vsel %vm5714, %v15410, %v15409
    %v15412 = vrot.slane %v15083, 5
    %v15413 = vsel %vm5717, %v15412, %v15411
    %v15414 = vrot.slane %v15084, 4
    %v15415 = vsel %vm5720, %v15414, %v15413
    %v15416 = vrot.slane %v15085, 3
    %v15417 = vsel %vm5723, %v15416, %v15415
    %v15418 = vrot.slane %v15086, 2
    %v15419 = vsel %vm5726, %v15418, %v15417
    %v15420 = vrot.slane %v15087, 1
    %v15421 = vsel %vm5729, %v15420, %v15419
    %v15422 = vrot.slane %v15089, 7
    %v15423 = vsel %vm5711, %v15422, %v15088
    %v15424 = vrot.slane %v15090, 6
    %v15425 = vsel %vm5714, %v15424, %v15423
    %v15426 = vrot.slane %v15091, 5
    %v15427 = vsel %vm5717, %v15426, %v15425
    %v15428 = vrot.slane %v15092, 4
    %v15429 = vsel %vm5720, %v15428, %v15427
    %v15430 = vrot.slane %v15093, 3
    %v15431 = vsel %vm5723, %v15430, %v15429
    %v15432 = vrot.slane %v15094, 2
    %v15433 = vsel %vm5726, %v15432, %v15431
    %v15434 = vrot.slane %v15095, 1
    %v15435 = vsel %vm5729, %v15434, %v15433
    %v15436 = vrot.slane %v15097, 7
    %v15437 = vsel %vm5711, %v15436, %v15096
    %v15438 = vrot.slane %v15098, 6
    %v15439 = vsel %vm5714, %v15438, %v15437
    %v15440 = vrot.slane %v15099, 5
    %v15441 = vsel %vm5717, %v15440, %v15439
    %v15442 = vrot.slane %v15100, 4
    %v15443 = vsel %vm5720, %v15442, %v15441
    %v15444 = vrot.slane %v15101, 3
    %v15445 = vsel %vm5723, %v15444, %v15443
    %v15446 = vrot.slane %v15102, 2
    %v15447 = vsel %vm5726, %v15446, %v15445
    %v15448 = vrot.slane %v15103, 1
    %v15449 = vsel %vm5729, %v15448, %v15447
    %v15450 = vrot.slane %v15105, 7
    %v15451 = vsel %vm5711, %v15450, %v15104
    %v15452 = vrot.slane %v15106, 6
    %v15453 = vsel %vm5714, %v15452, %v15451
    %v15454 = vrot.slane %v15107, 5
    %v15455 = vsel %vm5717, %v15454, %v15453
    %v15456 = vrot.slane %v15108, 4
    %v15457 = vsel %vm5720, %v15456, %v15455
    %v15458 = vrot.slane %v15109, 3
    %v15459 = vsel %vm5723, %v15458, %v15457
    %v15460 = vrot.slane %v15110, 2
    %v15461 = vsel %vm5726, %v15460, %v15459
    %v15462 = vrot.slane %v15111, 1
    %v15463 = vsel %vm5729, %v15462, %v15461
    %15480 = vadd.xlane.f32.xlu0 %v15253
    %v15481 = vpop.xlane.xlu0 %15480
    %15482 = vadd.xlane.f32.xlu0 %v15267
    %v15483 = vpop.xlane.xlu0 %15482
    %15484 = vadd.xlane.f32.xlu0 %v15281
    %v15485 = vpop.xlane.xlu0 %15484
    %15486 = vadd.xlane.f32.xlu0 %v15295
    %v15487 = vpop.xlane.xlu0 %15486
    %15488 = vadd.xlane.f32.xlu0 %v15309
    %v15489 = vpop.xlane.xlu0 %15488
    %15490 = vadd.xlane.f32.xlu0 %v15323
    %v15491 = vpop.xlane.xlu0 %15490
    %15492 = vadd.xlane.f32.xlu0 %v15337
    %v15493 = vpop.xlane.xlu0 %15492
    %15494 = vadd.xlane.f32.xlu0 %v15351
    %v15495 = vpop.xlane.xlu0 %15494
    %15496 = vadd.xlane.f32.xlu0 %v15365
    %v15497 = vpop.xlane.xlu0 %15496
    %15498 = vadd.xlane.f32.xlu0 %v15379
    %v15499 = vpop.xlane.xlu0 %15498
    %15500 = vadd.xlane.f32.xlu0 %v15393
    %v15501 = vpop.xlane.xlu0 %15500
    %15502 = vadd.xlane.f32.xlu0 %v15407
    %v15503 = vpop.xlane.xlu0 %15502
    %15504 = vadd.xlane.f32.xlu0 %v15421
    %v15505 = vpop.xlane.xlu0 %15504
    %15506 = vadd.xlane.f32.xlu0 %v15435
    %v15507 = vpop.xlane.xlu0 %15506
    %15508 = vadd.xlane.f32.xlu0 %v15449
    %v15509 = vpop.xlane.xlu0 %15508
    %15510 = vadd.xlane.f32.xlu0 %v15463
    %v15511 = vpop.xlane.xlu0 %15510
    %v15528 = vrot.slane %v15481, 1
    %v15529 = vrot.slane %v15481, 2
    %v15530 = vrot.slane %v15481, 3
    %v15531 = vrot.slane %v15481, 4
    %v15532 = vrot.slane %v15481, 5
    %v15533 = vrot.slane %v15481, 6
    %v15534 = vrot.slane %v15481, 7
    %v15535 = vrot.slane %v15483, 1
    %v15536 = vrot.slane %v15483, 2
    %v15537 = vrot.slane %v15483, 3
    %v15538 = vrot.slane %v15483, 4
    %v15539 = vrot.slane %v15483, 5
    %v15540 = vrot.slane %v15483, 6
    %v15541 = vrot.slane %v15483, 7
    %v15542 = vrot.slane %v15485, 1
    %v15543 = vrot.slane %v15485, 2
    %v15544 = vrot.slane %v15485, 3
    %v15545 = vrot.slane %v15485, 4
    %v15546 = vrot.slane %v15485, 5
    %v15547 = vrot.slane %v15485, 6
    %v15548 = vrot.slane %v15485, 7
    %v15549 = vrot.slane %v15487, 1
    %v15550 = vrot.slane %v15487, 2
    %v15551 = vrot.slane %v15487, 3
    %v15552 = vrot.slane %v15487, 4
    %v15553 = vrot.slane %v15487, 5
    %v15554 = vrot.slane %v15487, 6
    %v15555 = vrot.slane %v15487, 7
    %v15556 = vrot.slane %v15489, 1
    %v15557 = vrot.slane %v15489, 2
    %v15558 = vrot.slane %v15489, 3
    %v15559 = vrot.slane %v15489, 4
    %v15560 = vrot.slane %v15489, 5
    %v15561 = vrot.slane %v15489, 6
    %v15562 = vrot.slane %v15489, 7
    %v15563 = vrot.slane %v15491, 1
    %v15564 = vrot.slane %v15491, 2
    %v15565 = vrot.slane %v15491, 3
    %v15566 = vrot.slane %v15491, 4
    %v15567 = vrot.slane %v15491, 5
    %v15568 = vrot.slane %v15491, 6
    %v15569 = vrot.slane %v15491, 7
    %v15570 = vrot.slane %v15493, 1
    %v15571 = vrot.slane %v15493, 2
    %v15572 = vrot.slane %v15493, 3
    %v15573 = vrot.slane %v15493, 4
    %v15574 = vrot.slane %v15493, 5
    %v15575 = vrot.slane %v15493, 6
    %v15576 = vrot.slane %v15493, 7
    %v15577 = vrot.slane %v15495, 1
    %v15578 = vrot.slane %v15495, 2
    %v15579 = vrot.slane %v15495, 3
    %v15580 = vrot.slane %v15495, 4
    %v15581 = vrot.slane %v15495, 5
    %v15582 = vrot.slane %v15495, 6
    %v15583 = vrot.slane %v15495, 7
    %v15584 = vrot.slane %v15497, 1
    %v15585 = vrot.slane %v15497, 2
    %v15586 = vrot.slane %v15497, 3
    %v15587 = vrot.slane %v15497, 4
    %v15588 = vrot.slane %v15497, 5
    %v15589 = vrot.slane %v15497, 6
    %v15590 = vrot.slane %v15497, 7
    %v15591 = vrot.slane %v15499, 1
    %v15592 = vrot.slane %v15499, 2
    %v15593 = vrot.slane %v15499, 3
    %v15594 = vrot.slane %v15499, 4
    %v15595 = vrot.slane %v15499, 5
    %v15596 = vrot.slane %v15499, 6
    %v15597 = vrot.slane %v15499, 7
    %v15598 = vrot.slane %v15501, 1
    %v15599 = vrot.slane %v15501, 2
    %v15600 = vrot.slane %v15501, 3
    %v15601 = vrot.slane %v15501, 4
    %v15602 = vrot.slane %v15501, 5
    %v15603 = vrot.slane %v15501, 6
    %v15604 = vrot.slane %v15501, 7
    %v15605 = vrot.slane %v15503, 1
    %v15606 = vrot.slane %v15503, 2
    %v15607 = vrot.slane %v15503, 3
    %v15608 = vrot.slane %v15503, 4
    %v15609 = vrot.slane %v15503, 5
    %v15610 = vrot.slane %v15503, 6
    %v15611 = vrot.slane %v15503, 7
    %v15612 = vrot.slane %v15505, 1
    %v15613 = vrot.slane %v15505, 2
    %v15614 = vrot.slane %v15505, 3
    %v15615 = vrot.slane %v15505, 4
    %v15616 = vrot.slane %v15505, 5
    %v15617 = vrot.slane %v15505, 6
    %v15618 = vrot.slane %v15505, 7
    %v15619 = vrot.slane %v15507, 1
    %v15620 = vrot.slane %v15507, 2
    %v15621 = vrot.slane %v15507, 3
    %v15622 = vrot.slane %v15507, 4
    %v15623 = vrot.slane %v15507, 5
    %v15624 = vrot.slane %v15507, 6
    %v15625 = vrot.slane %v15507, 7
    %v15626 = vrot.slane %v15509, 1
    %v15627 = vrot.slane %v15509, 2
    %v15628 = vrot.slane %v15509, 3
    %v15629 = vrot.slane %v15509, 4
    %v15630 = vrot.slane %v15509, 5
    %v15631 = vrot.slane %v15509, 6
    %v15632 = vrot.slane %v15509, 7
    %v15633 = vrot.slane %v15511, 1
    %v15634 = vrot.slane %v15511, 2
    %v15635 = vrot.slane %v15511, 3
    %v15636 = vrot.slane %v15511, 4
    %v15637 = vrot.slane %v15511, 5
    %v15638 = vrot.slane %v15511, 6
    %v15639 = vrot.slane %v15511, 7
    %v15768 = vrcp.pop %v15481
    %v15769 = vmul.f32 %v14984, %v15768
    %v15770 = vrcp.pop %v15528
    %v15771 = vmul.f32 %v14985, %v15770
    %v15772 = vrcp.pop %v15529
    %v15773 = vmul.f32 %v14986, %v15772
    %v15774 = vrcp.pop %v15530
    %v15775 = vmul.f32 %v14987, %v15774
    %v15776 = vrcp.pop %v15531
    %v15777 = vmul.f32 %v14988, %v15776
    %v15778 = vrcp.pop %v15532
    %v15779 = vmul.f32 %v14989, %v15778
    %v15780 = vrcp.pop %v15533
    %v15781 = vmul.f32 %v14990, %v15780
    %v15782 = vrcp.pop %v15534
    %v15783 = vmul.f32 %v14991, %v15782
    %v15784 = vrcp.pop %v15483
    %v15785 = vmul.f32 %v14992, %v15784
    %v15786 = vrcp.pop %v15535
    %v15787 = vmul.f32 %v14993, %v15786
    %v15788 = vrcp.pop %v15536
    %v15789 = vmul.f32 %v14994, %v15788
    %v15790 = vrcp.pop %v15537
    %v15791 = vmul.f32 %v14995, %v15790
    %v15792 = vrcp.pop %v15538
    %v15793 = vmul.f32 %v14996, %v15792
    %v15794 = vrcp.pop %v15539
    %v15795 = vmul.f32 %v14997, %v15794
    %v15796 = vrcp.pop %v15540
    %v15797 = vmul.f32 %v14998, %v15796
    %v15798 = vrcp.pop %v15541
    %v15799 = vmul.f32 %v14999, %v15798
    %v15800 = vrcp.pop %v15485
    %v15801 = vmul.f32 %v15000, %v15800
    %v15802 = vrcp.pop %v15542
    %v15803 = vmul.f32 %v15001, %v15802
    %v15804 = vrcp.pop %v15543
    %v15805 = vmul.f32 %v15002, %v15804
    %v15806 = vrcp.pop %v15544
    %v15807 = vmul.f32 %v15003, %v15806
    %v15808 = vrcp.pop %v15545
    %v15809 = vmul.f32 %v15004, %v15808
    %v15810 = vrcp.pop %v15546
    %v15811 = vmul.f32 %v15005, %v15810
    %v15812 = vrcp.pop %v15547
    %v15813 = vmul.f32 %v15006, %v15812
    %v15814 = vrcp.pop %v15548
    %v15815 = vmul.f32 %v15007, %v15814
    %v15816 = vrcp.pop %v15487
    %v15817 = vmul.f32 %v15008, %v15816
    %v15818 = vrcp.pop %v15549
    %v15819 = vmul.f32 %v15009, %v15818
    %v15820 = vrcp.pop %v15550
    %v15821 = vmul.f32 %v15010, %v15820
    %v15822 = vrcp.pop %v15551
    %v15823 = vmul.f32 %v15011, %v15822
    %v15824 = vrcp.pop %v15552
    %v15825 = vmul.f32 %v15012, %v15824
    %v15826 = vrcp.pop %v15553
    %v15827 = vmul.f32 %v15013, %v15826
    %v15828 = vrcp.pop %v15554
    %v15829 = vmul.f32 %v15014, %v15828
    %v15830 = vrcp.pop %v15555
    %v15831 = vmul.f32 %v15015, %v15830
    %v15832 = vrcp.pop %v15489
    %v15833 = vmul.f32 %v15016, %v15832
    %v15834 = vrcp.pop %v15556
    %v15835 = vmul.f32 %v15017, %v15834
    %v15836 = vrcp.pop %v15557
    %v15837 = vmul.f32 %v15018, %v15836
    %v15838 = vrcp.pop %v15558
    %v15839 = vmul.f32 %v15019, %v15838
    %v15840 = vrcp.pop %v15559
    %v15841 = vmul.f32 %v15020, %v15840
    %v15842 = vrcp.pop %v15560
    %v15843 = vmul.f32 %v15021, %v15842
    %v15844 = vrcp.pop %v15561
    %v15845 = vmul.f32 %v15022, %v15844
    %v15846 = vrcp.pop %v15562
    %v15847 = vmul.f32 %v15023, %v15846
    %v15848 = vrcp.pop %v15491
    %v15849 = vmul.f32 %v15024, %v15848
    %v15850 = vrcp.pop %v15563
    %v15851 = vmul.f32 %v15025, %v15850
    %v15852 = vrcp.pop %v15564
    %v15853 = vmul.f32 %v15026, %v15852
    %v15854 = vrcp.pop %v15565
    %v15855 = vmul.f32 %v15027, %v15854
    %v15856 = vrcp.pop %v15566
    %v15857 = vmul.f32 %v15028, %v15856
    %v15858 = vrcp.pop %v15567
    %v15859 = vmul.f32 %v15029, %v15858
    %v15860 = vrcp.pop %v15568
    %v15861 = vmul.f32 %v15030, %v15860
    %v15862 = vrcp.pop %v15569
    %v15863 = vmul.f32 %v15031, %v15862
    %v15864 = vrcp.pop %v15493
    %v15865 = vmul.f32 %v15032, %v15864
    %v15866 = vrcp.pop %v15570
    %v15867 = vmul.f32 %v15033, %v15866
    %v15868 = vrcp.pop %v15571
    %v15869 = vmul.f32 %v15034, %v15868
    %v15870 = vrcp.pop %v15572
    %v15871 = vmul.f32 %v15035, %v15870
    %v15872 = vrcp.pop %v15573
    %v15873 = vmul.f32 %v15036, %v15872
    %v15874 = vrcp.pop %v15574
    %v15875 = vmul.f32 %v15037, %v15874
    %v15876 = vrcp.pop %v15575
    %v15877 = vmul.f32 %v15038, %v15876
    %v15878 = vrcp.pop %v15576
    %v15879 = vmul.f32 %v15039, %v15878
    %v15880 = vrcp.pop %v15495
    %v15881 = vmul.f32 %v15040, %v15880
    %v15882 = vrcp.pop %v15577
    %v15883 = vmul.f32 %v15041, %v15882
    %v15884 = vrcp.pop %v15578
    %v15885 = vmul.f32 %v15042, %v15884
    %v15886 = vrcp.pop %v15579
    %v15887 = vmul.f32 %v15043, %v15886
    %v15888 = vrcp.pop %v15580
    %v15889 = vmul.f32 %v15044, %v15888
    %v15890 = vrcp.pop %v15581
    %v15891 = vmul.f32 %v15045, %v15890
    %v15892 = vrcp.pop %v15582
    %v15893 = vmul.f32 %v15046, %v15892
    %v15894 = vrcp.pop %v15583
    %v15895 = vmul.f32 %v15047, %v15894
    %v15896 = vrcp.pop %v15497
    %v15897 = vmul.f32 %v15048, %v15896
    %v15898 = vrcp.pop %v15584
    %v15899 = vmul.f32 %v15049, %v15898
    %v15900 = vrcp.pop %v15585
    %v15901 = vmul.f32 %v15050, %v15900
    %v15902 = vrcp.pop %v15586
    %v15903 = vmul.f32 %v15051, %v15902
    %v15904 = vrcp.pop %v15587
    %v15905 = vmul.f32 %v15052, %v15904
    %v15906 = vrcp.pop %v15588
    %v15907 = vmul.f32 %v15053, %v15906
    %v15908 = vrcp.pop %v15589
    %v15909 = vmul.f32 %v15054, %v15908
    %v15910 = vrcp.pop %v15590
    %v15911 = vmul.f32 %v15055, %v15910
    %v15912 = vrcp.pop %v15499
    %v15913 = vmul.f32 %v15056, %v15912
    %v15914 = vrcp.pop %v15591
    %v15915 = vmul.f32 %v15057, %v15914
    %v15916 = vrcp.pop %v15592
    %v15917 = vmul.f32 %v15058, %v15916
    %v15918 = vrcp.pop %v15593
    %v15919 = vmul.f32 %v15059, %v15918
    %v15920 = vrcp.pop %v15594
    %v15921 = vmul.f32 %v15060, %v15920
    %v15922 = vrcp.pop %v15595
    %v15923 = vmul.f32 %v15061, %v15922
    %v15924 = vrcp.pop %v15596
    %v15925 = vmul.f32 %v15062, %v15924
    %v15926 = vrcp.pop %v15597
    %v15927 = vmul.f32 %v15063, %v15926
    %v15928 = vrcp.pop %v15501
    %v15929 = vmul.f32 %v15064, %v15928
    %v15930 = vrcp.pop %v15598
    %v15931 = vmul.f32 %v15065, %v15930
    %v15932 = vrcp.pop %v15599
    %v15933 = vmul.f32 %v15066, %v15932
    %v15934 = vrcp.pop %v15600
    %v15935 = vmul.f32 %v15067, %v15934
    %v15936 = vrcp.pop %v15601
    %v15937 = vmul.f32 %v15068, %v15936
    %v15938 = vrcp.pop %v15602
    %v15939 = vmul.f32 %v15069, %v15938
    %v15940 = vrcp.pop %v15603
    %v15941 = vmul.f32 %v15070, %v15940
    %v15942 = vrcp.pop %v15604
    %v15943 = vmul.f32 %v15071, %v15942
    %v15944 = vrcp.pop %v15503
    %v15945 = vmul.f32 %v15072, %v15944
    %v15946 = vrcp.pop %v15605
    %v15947 = vmul.f32 %v15073, %v15946
    %v15948 = vrcp.pop %v15606
    %v15949 = vmul.f32 %v15074, %v15948
    %v15950 = vrcp.pop %v15607
    %v15951 = vmul.f32 %v15075, %v15950
    %v15952 = vrcp.pop %v15608
    %v15953 = vmul.f32 %v15076, %v15952
    %v15954 = vrcp.pop %v15609
    %v15955 = vmul.f32 %v15077, %v15954
    %v15956 = vrcp.pop %v15610
    %v15957 = vmul.f32 %v15078, %v15956
    %v15958 = vrcp.pop %v15611
    %v15959 = vmul.f32 %v15079, %v15958
    %v15960 = vrcp.pop %v15505
    %v15961 = vmul.f32 %v15080, %v15960
    %v15962 = vrcp.pop %v15612
    %v15963 = vmul.f32 %v15081, %v15962
    %v15964 = vrcp.pop %v15613
    %v15965 = vmul.f32 %v15082, %v15964
    %v15966 = vrcp.pop %v15614
    %v15967 = vmul.f32 %v15083, %v15966
    %v15968 = vrcp.pop %v15615
    %v15969 = vmul.f32 %v15084, %v15968
    %v15970 = vrcp.pop %v15616
    %v15971 = vmul.f32 %v15085, %v15970
    %v15972 = vrcp.pop %v15617
    %v15973 = vmul.f32 %v15086, %v15972
    %v15974 = vrcp.pop %v15618
    %v15975 = vmul.f32 %v15087, %v15974
    %v15976 = vrcp.pop %v15507
    %v15977 = vmul.f32 %v15088, %v15976
    %v15978 = vrcp.pop %v15619
    %v15979 = vmul.f32 %v15089, %v15978
    %v15980 = vrcp.pop %v15620
    %v15981 = vmul.f32 %v15090, %v15980
    %v15982 = vrcp.pop %v15621
    %v15983 = vmul.f32 %v15091, %v15982
    %v15984 = vrcp.pop %v15622
    %v15985 = vmul.f32 %v15092, %v15984
    %v15986 = vrcp.pop %v15623
    %v15987 = vmul.f32 %v15093, %v15986
    %v15988 = vrcp.pop %v15624
    %v15989 = vmul.f32 %v15094, %v15988
    %v15990 = vrcp.pop %v15625
    %v15991 = vmul.f32 %v15095, %v15990
    %v15992 = vrcp.pop %v15509
    %v15993 = vmul.f32 %v15096, %v15992
    %v15994 = vrcp.pop %v15626
    %v15995 = vmul.f32 %v15097, %v15994
    %v15996 = vrcp.pop %v15627
    %v15997 = vmul.f32 %v15098, %v15996
    %v15998 = vrcp.pop %v15628
    %v15999 = vmul.f32 %v15099, %v15998
    %v16000 = vrcp.pop %v15629
    %v16001 = vmul.f32 %v15100, %v16000
    %v16002 = vrcp.pop %v15630
    %v16003 = vmul.f32 %v15101, %v16002
    %v16004 = vrcp.pop %v15631
    %v16005 = vmul.f32 %v15102, %v16004
    %v16006 = vrcp.pop %v15632
    %v16007 = vmul.f32 %v15103, %v16006
    %v16008 = vrcp.pop %v15511
    %v16009 = vmul.f32 %v15104, %v16008
    %v16010 = vrcp.pop %v15633
    %v16011 = vmul.f32 %v15105, %v16010
    %v16012 = vrcp.pop %v15634
    %v16013 = vmul.f32 %v15106, %v16012
    %v16014 = vrcp.pop %v15635
    %v16015 = vmul.f32 %v15107, %v16014
    %v16016 = vrcp.pop %v15636
    %v16017 = vmul.f32 %v15108, %v16016
    %v16018 = vrcp.pop %v15637
    %v16019 = vmul.f32 %v15109, %v16018
    %v16020 = vrcp.pop %v15638
    %v16021 = vmul.f32 %v15110, %v16020
    %v16022 = vrcp.pop %v15639
    %v16023 = vmul.f32 %v15111, %v16022
    %v16152 = vrot.slane %v15771, 7
    %v16153 = vsel %vm5711, %v16152, %v15769
    %v16154 = vrot.slane %v15773, 6
    %v16155 = vsel %vm5714, %v16154, %v16153
    %v16156 = vrot.slane %v15775, 5
    %v16157 = vsel %vm5717, %v16156, %v16155
    %v16158 = vrot.slane %v15777, 4
    %v16159 = vsel %vm5720, %v16158, %v16157
    %v16160 = vrot.slane %v15779, 3
    %v16161 = vsel %vm5723, %v16160, %v16159
    %v16162 = vrot.slane %v15781, 2
    %v16163 = vsel %vm5726, %v16162, %v16161
    %v16164 = vrot.slane %v15783, 1
    %v16165 = vsel %vm5729, %v16164, %v16163
    %v16166 = vrot.slane %v15787, 7
    %v16167 = vsel %vm5711, %v16166, %v15785
    %v16168 = vrot.slane %v15789, 6
    %v16169 = vsel %vm5714, %v16168, %v16167
    %v16170 = vrot.slane %v15791, 5
    %v16171 = vsel %vm5717, %v16170, %v16169
    %v16172 = vrot.slane %v15793, 4
    %v16173 = vsel %vm5720, %v16172, %v16171
    %v16174 = vrot.slane %v15795, 3
    %v16175 = vsel %vm5723, %v16174, %v16173
    %v16176 = vrot.slane %v15797, 2
    %v16177 = vsel %vm5726, %v16176, %v16175
    %v16178 = vrot.slane %v15799, 1
    %v16179 = vsel %vm5729, %v16178, %v16177
    %v16180 = vrot.slane %v15803, 7
    %v16181 = vsel %vm5711, %v16180, %v15801
    %v16182 = vrot.slane %v15805, 6
    %v16183 = vsel %vm5714, %v16182, %v16181
    %v16184 = vrot.slane %v15807, 5
    %v16185 = vsel %vm5717, %v16184, %v16183
    %v16186 = vrot.slane %v15809, 4
    %v16187 = vsel %vm5720, %v16186, %v16185
    %v16188 = vrot.slane %v15811, 3
    %v16189 = vsel %vm5723, %v16188, %v16187
    %v16190 = vrot.slane %v15813, 2
    %v16191 = vsel %vm5726, %v16190, %v16189
    %v16192 = vrot.slane %v15815, 1
    %v16193 = vsel %vm5729, %v16192, %v16191
    %v16194 = vrot.slane %v15819, 7
    %v16195 = vsel %vm5711, %v16194, %v15817
    %v16196 = vrot.slane %v15821, 6
    %v16197 = vsel %vm5714, %v16196, %v16195
    %v16198 = vrot.slane %v15823, 5
    %v16199 = vsel %vm5717, %v16198, %v16197
    %v16200 = vrot.slane %v15825, 4
    %v16201 = vsel %vm5720, %v16200, %v16199
    %v16202 = vrot.slane %v15827, 3
    %v16203 = vsel %vm5723, %v16202, %v16201
    %v16204 = vrot.slane %v15829, 2
    %v16205 = vsel %vm5726, %v16204, %v16203
    %v16206 = vrot.slane %v15831, 1
    %v16207 = vsel %vm5729, %v16206, %v16205
    %v16208 = vrot.slane %v15835, 7
    %v16209 = vsel %vm5711, %v16208, %v15833
    %v16210 = vrot.slane %v15837, 6
    %v16211 = vsel %vm5714, %v16210, %v16209
    %v16212 = vrot.slane %v15839, 5
    %v16213 = vsel %vm5717, %v16212, %v16211
    %v16214 = vrot.slane %v15841, 4
    %v16215 = vsel %vm5720, %v16214, %v16213
    %v16216 = vrot.slane %v15843, 3
    %v16217 = vsel %vm5723, %v16216, %v16215
    %v16218 = vrot.slane %v15845, 2
    %v16219 = vsel %vm5726, %v16218, %v16217
    %v16220 = vrot.slane %v15847, 1
    %v16221 = vsel %vm5729, %v16220, %v16219
    %v16222 = vrot.slane %v15851, 7
    %v16223 = vsel %vm5711, %v16222, %v15849
    %v16224 = vrot.slane %v15853, 6
    %v16225 = vsel %vm5714, %v16224, %v16223
    %v16226 = vrot.slane %v15855, 5
    %v16227 = vsel %vm5717, %v16226, %v16225
    %v16228 = vrot.slane %v15857, 4
    %v16229 = vsel %vm5720, %v16228, %v16227
    %v16230 = vrot.slane %v15859, 3
    %v16231 = vsel %vm5723, %v16230, %v16229
    %v16232 = vrot.slane %v15861, 2
    %v16233 = vsel %vm5726, %v16232, %v16231
    %v16234 = vrot.slane %v15863, 1
    %v16235 = vsel %vm5729, %v16234, %v16233
    %v16236 = vrot.slane %v15867, 7
    %v16237 = vsel %vm5711, %v16236, %v15865
    %v16238 = vrot.slane %v15869, 6
    %v16239 = vsel %vm5714, %v16238, %v16237
    %v16240 = vrot.slane %v15871, 5
    %v16241 = vsel %vm5717, %v16240, %v16239
    %v16242 = vrot.slane %v15873, 4
    %v16243 = vsel %vm5720, %v16242, %v16241
    %v16244 = vrot.slane %v15875, 3
    %v16245 = vsel %vm5723, %v16244, %v16243
    %v16246 = vrot.slane %v15877, 2
    %v16247 = vsel %vm5726, %v16246, %v16245
    %v16248 = vrot.slane %v15879, 1
    %v16249 = vsel %vm5729, %v16248, %v16247
    %v16250 = vrot.slane %v15883, 7
    %v16251 = vsel %vm5711, %v16250, %v15881
    %v16252 = vrot.slane %v15885, 6
    %v16253 = vsel %vm5714, %v16252, %v16251
    %v16254 = vrot.slane %v15887, 5
    %v16255 = vsel %vm5717, %v16254, %v16253
    %v16256 = vrot.slane %v15889, 4
    %v16257 = vsel %vm5720, %v16256, %v16255
    %v16258 = vrot.slane %v15891, 3
    %v16259 = vsel %vm5723, %v16258, %v16257
    %v16260 = vrot.slane %v15893, 2
    %v16261 = vsel %vm5726, %v16260, %v16259
    %v16262 = vrot.slane %v15895, 1
    %v16263 = vsel %vm5729, %v16262, %v16261
    %v16264 = vrot.slane %v15899, 7
    %v16265 = vsel %vm5711, %v16264, %v15897
    %v16266 = vrot.slane %v15901, 6
    %v16267 = vsel %vm5714, %v16266, %v16265
    %v16268 = vrot.slane %v15903, 5
    %v16269 = vsel %vm5717, %v16268, %v16267
    %v16270 = vrot.slane %v15905, 4
    %v16271 = vsel %vm5720, %v16270, %v16269
    %v16272 = vrot.slane %v15907, 3
    %v16273 = vsel %vm5723, %v16272, %v16271
    %v16274 = vrot.slane %v15909, 2
    %v16275 = vsel %vm5726, %v16274, %v16273
    %v16276 = vrot.slane %v15911, 1
    %v16277 = vsel %vm5729, %v16276, %v16275
    %v16278 = vrot.slane %v15915, 7
    %v16279 = vsel %vm5711, %v16278, %v15913
    %v16280 = vrot.slane %v15917, 6
    %v16281 = vsel %vm5714, %v16280, %v16279
    %v16282 = vrot.slane %v15919, 5
    %v16283 = vsel %vm5717, %v16282, %v16281
    %v16284 = vrot.slane %v15921, 4
    %v16285 = vsel %vm5720, %v16284, %v16283
    %v16286 = vrot.slane %v15923, 3
    %v16287 = vsel %vm5723, %v16286, %v16285
    %v16288 = vrot.slane %v15925, 2
    %v16289 = vsel %vm5726, %v16288, %v16287
    %v16290 = vrot.slane %v15927, 1
    %v16291 = vsel %vm5729, %v16290, %v16289
    %v16292 = vrot.slane %v15931, 7
    %v16293 = vsel %vm5711, %v16292, %v15929
    %v16294 = vrot.slane %v15933, 6
    %v16295 = vsel %vm5714, %v16294, %v16293
    %v16296 = vrot.slane %v15935, 5
    %v16297 = vsel %vm5717, %v16296, %v16295
    %v16298 = vrot.slane %v15937, 4
    %v16299 = vsel %vm5720, %v16298, %v16297
    %v16300 = vrot.slane %v15939, 3
    %v16301 = vsel %vm5723, %v16300, %v16299
    %v16302 = vrot.slane %v15941, 2
    %v16303 = vsel %vm5726, %v16302, %v16301
    %v16304 = vrot.slane %v15943, 1
    %v16305 = vsel %vm5729, %v16304, %v16303
    %v16306 = vrot.slane %v15947, 7
    %v16307 = vsel %vm5711, %v16306, %v15945
    %v16308 = vrot.slane %v15949, 6
    %v16309 = vsel %vm5714, %v16308, %v16307
    %v16310 = vrot.slane %v15951, 5
    %v16311 = vsel %vm5717, %v16310, %v16309
    %v16312 = vrot.slane %v15953, 4
    %v16313 = vsel %vm5720, %v16312, %v16311
    %v16314 = vrot.slane %v15955, 3
    %v16315 = vsel %vm5723, %v16314, %v16313
    %v16316 = vrot.slane %v15957, 2
    %v16317 = vsel %vm5726, %v16316, %v16315
    %v16318 = vrot.slane %v15959, 1
    %v16319 = vsel %vm5729, %v16318, %v16317
    %v16320 = vrot.slane %v15963, 7
    %v16321 = vsel %vm5711, %v16320, %v15961
    %v16322 = vrot.slane %v15965, 6
    %v16323 = vsel %vm5714, %v16322, %v16321
    %v16324 = vrot.slane %v15967, 5
    %v16325 = vsel %vm5717, %v16324, %v16323
    %v16326 = vrot.slane %v15969, 4
    %v16327 = vsel %vm5720, %v16326, %v16325
    %v16328 = vrot.slane %v15971, 3
    %v16329 = vsel %vm5723, %v16328, %v16327
    %v16330 = vrot.slane %v15973, 2
    %v16331 = vsel %vm5726, %v16330, %v16329
    %v16332 = vrot.slane %v15975, 1
    %v16333 = vsel %vm5729, %v16332, %v16331
    %v16334 = vrot.slane %v15979, 7
    %v16335 = vsel %vm5711, %v16334, %v15977
    %v16336 = vrot.slane %v15981, 6
    %v16337 = vsel %vm5714, %v16336, %v16335
    %v16338 = vrot.slane %v15983, 5
    %v16339 = vsel %vm5717, %v16338, %v16337
    %v16340 = vrot.slane %v15985, 4
    %v16341 = vsel %vm5720, %v16340, %v16339
    %v16342 = vrot.slane %v15987, 3
    %v16343 = vsel %vm5723, %v16342, %v16341
    %v16344 = vrot.slane %v15989, 2
    %v16345 = vsel %vm5726, %v16344, %v16343
    %v16346 = vrot.slane %v15991, 1
    %v16347 = vsel %vm5729, %v16346, %v16345
    %v16348 = vrot.slane %v15995, 7
    %v16349 = vsel %vm5711, %v16348, %v15993
    %v16350 = vrot.slane %v15997, 6
    %v16351 = vsel %vm5714, %v16350, %v16349
    %v16352 = vrot.slane %v15999, 5
    %v16353 = vsel %vm5717, %v16352, %v16351
    %v16354 = vrot.slane %v16001, 4
    %v16355 = vsel %vm5720, %v16354, %v16353
    %v16356 = vrot.slane %v16003, 3
    %v16357 = vsel %vm5723, %v16356, %v16355
    %v16358 = vrot.slane %v16005, 2
    %v16359 = vsel %vm5726, %v16358, %v16357
    %v16360 = vrot.slane %v16007, 1
    %v16361 = vsel %vm5729, %v16360, %v16359
    %v16362 = vrot.slane %v16011, 7
    %v16363 = vsel %vm5711, %v16362, %v16009
    %v16364 = vrot.slane %v16013, 6
    %v16365 = vsel %vm5714, %v16364, %v16363
    %v16366 = vrot.slane %v16015, 5
    %v16367 = vsel %vm5717, %v16366, %v16365
    %v16368 = vrot.slane %v16017, 4
    %v16369 = vsel %vm5720, %v16368, %v16367
    %v16370 = vrot.slane %v16019, 3
    %v16371 = vsel %vm5723, %v16370, %v16369
    %v16372 = vrot.slane %v16021, 2
    %v16373 = vsel %vm5726, %v16372, %v16371
    %v16374 = vrot.slane %v16023, 1
    %v16375 = vsel %vm5729, %v16374, %v16373
    %16392 = vst [vmem:[#allocation2] sm:$0xff] %v16165
    %16393 = vst [vmem:[#allocation2 + $0x8] sm:$0xff] %v16179
    %16394 = vst [vmem:[#allocation2 + $0x10] sm:$0xff] %v16193
    %16395 = vst [vmem:[#allocation2 + $0x18] sm:$0xff] %v16207
    %16396 = vst [vmem:[#allocation2 + $0x20] sm:$0xff] %v16221
    %16397 = vst [vmem:[#allocation2 + $0x28] sm:$0xff] %v16235
    %16398 = vst [vmem:[#allocation2 + $0x30] sm:$0xff] %v16249
    %16399 = vst [vmem:[#allocation2 + $0x38] sm:$0xff] %v16263
    %16400 = vst [vmem:[#allocation2 + $0x40] sm:$0xff] %v16277
    %16401 = vst [vmem:[#allocation2 + $0x48] sm:$0xff] %v16291
    %16402 = vst [vmem:[#allocation2 + $0x50] sm:$0xff] %v16305
    %16403 = vst [vmem:[#allocation2 + $0x58] sm:$0xff] %v16319
    %16404 = vst [vmem:[#allocation2 + $0x60] sm:$0xff] %v16333
    %16405 = vst [vmem:[#allocation2 + $0x68] sm:$0xff] %v16347
    %16406 = vst [vmem:[#allocation2 + $0x70] sm:$0xff] %v16361
    %16407 = vst [vmem:[#allocation2 + $0x78] sm:$0xff] %v16375
    // Predicated region
    $region18: #{nf_encode_forward.1} parent=1 // pred_check
      _
    $region19: #{nf_encode_forward.1} parent=1 // pred_check_branch
      %16409 = sbr.rel (0) target = $region21
    $region20: #{nf_encode_forward.1} parent=1 // pred_region
      %s16411 = ssub.s32 2048, 2048
      %16412 = vsyncadd [#allocation3], %s16411
      %s16413 = sshll.u32 [#allocation2], 4
      %s16414 = int_to_ptr.vmem [resolvable:$true] %s16413
      %16419 = dma.vmem_to_hbm [thread:$0]  %s16414, 2048, %s4, [#allocation3], 128, 128, 8
    $region21: #{nf_encode_forward.1} parent=1 // pred_fallthru
      _
    // Predicated region
    $region22: #{nf_encode_forward.1} parent=1 // pred_check
      _
    $region23: #{nf_encode_forward.1} parent=1 // pred_check_branch
      %16421 = sbr.rel (0) target = $region25
    $region24: #{nf_encode_forward.1} parent=1 // pred_region
      %16422 = dma.done [#allocation3], 2048
    $region25: #{nf_encode_forward.1} parent=1 // pred_fallthru
      _
    %16423 = vsyncpa [#allocation3], 1

</llo_original>
